<compile_context>
chip_gen: v7x
topology: tpu7x:2x2x1
jax: 0.10.0
libtpu: 0.0.40
codegen_flags: <defaults>
</compile_context>

<pallas_src>
import functools

import jax
import jax.numpy as jnp
from jax.experimental import pallas as pl
from jax.experimental.pallas import tpu as pltpu

NUM_CLASSES = 80
NUM_ANCHORS = 5
BOX_ATTRS = 5 + NUM_CLASSES              # 85
HEAD_CH = NUM_ANCHORS * BOX_ATTRS        # 425
HEAD_PAD = 432                           # 425 -> next multiple of 16 (bf16 sublane tile)
CIN_PAD = 8                              # RGB (3) zero-padded to 8 input channels

IMG = 32                                 # synthetic input size (real YOLOv2 is 416/544)
GRID = IMG // 4                          # two 2x2 maxpools -> 8x8 detection grid
GRID_PAD = 128                           # 64 grid cells padded to one full lane tile

# YOLOv2 / COCO anchors (yolo.cfg region layer)
ANCHORS = [[0.57273, 0.677385], [1.87446, 2.06253], [3.33843, 5.47434],
           [7.88282, 3.52778], [9.77052, 9.16828]]


def _layer_dims(h):
    """(padded width, output-slab length) for a 3x3 SAME conv over an h x h map."""
    wp = h + 2
    return wp, (h - 1) * wp + h


# ----------------------------- Pallas kernel --------------------------------
def _yolo_fused_kernel(x_ref, s1_ref, s2_ref, s3_ref,
                       w1_ref, b1_ref, w2_ref, b2_ref, w3_ref, b3_ref,
                       wh_ref, bh_ref, o_ref, *, dims):
    def conv3x3(x_bf16, w_ref, b_ref, wp, lout):
        # x_bf16: (Cin, Np) zero-padded flat input (row-major over the padded frame).
        # Each 3x3 tap is a contiguous lane slice; 9 bf16 MXU dots accumulate in f32.
        cout = w_ref.shape[1]
        acc = jnp.zeros((cout, lout), jnp.float32)
        for ky in range(3):
            for kx in range(3):
                start = ky * wp + kx
                acc = acc + jnp.dot(w_ref[ky * 3 + kx],
                                    x_bf16[:, start:start + lout],
                                    preferred_element_type=jnp.float32)
        acc = acc + b_ref[...]                       # bias (Cout, 1) f32
        return jnp.maximum(acc, 0.1 * acc)           # Darknet LeakyReLU(0.1)

    def pool2_pad(a_f32, sel_ref, wp, h):
        # 2x2 / stride-2 max pool.  Column-pair max over the whole slab (one shifted
        # lane max), then per pooled row take the two CONTIGUOUS (h-1)-lane slices
        # belonging to conv rows 2yy / 2yy+1, max them, and concatenate the ho rows
        # into a compact (C, ho*(h-1)) slab.  A small 0/1 matmul then picks the even
        # columns AND scatters them into the next layer's zero-padded flat frame
        # (pad ring stays zero because those selector columns are all-zero).
        ho = h // 2
        m1 = jnp.maximum(a_f32[:, :-1], a_f32[:, 1:])          # (C, l-1)
        pieces = []
        for yy in range(ho):
            top = m1[:, 2 * yy * wp: 2 * yy * wp + (h - 1)]
            bot = m1[:, (2 * yy + 1) * wp: (2 * yy + 1) * wp + (h - 1)]
            pieces.append(jnp.maximum(top, bot))
        compact = jnp.concatenate(pieces, axis=1)              # (C, ho*(h-1))
        return jnp.dot(compact.astype(jnp.bfloat16), sel_ref[...],
                       preferred_element_type=jnp.float32)

    (wp1, l1, h1), (wp2, l2, h2), (wp3, l3) = dims

    x1 = x_ref[0]                                              # (CIN_PAD, Np1) bf16
    a1 = conv3x3(x1, w1_ref, b1_ref, wp1, l1)                  # (16, 1086) f32
    x2 = pool2_pad(a1, s1_ref, wp1, h1).astype(jnp.bfloat16)   # (16, 324)  bf16
    a2 = conv3x3(x2, w2_ref, b2_ref, wp2, l2)                  # (32, 286)  f32
    x3 = pool2_pad(a2, s2_ref, wp2, h2).astype(jnp.bfloat16)   # (32, 100)  bf16
    a3 = conv3x3(x3, w3_ref, b3_ref, wp3, l3)                  # (64, 78)   f32

    # drop pad-frame junk columns, widen spatial 64 -> 128 lanes (lane-dense head)
    xh = jnp.dot(a3.astype(jnp.bfloat16), s3_ref[...],
                 preferred_element_type=jnp.float32).astype(jnp.bfloat16)   # (64, 128)

    # 1x1 detection head: ONE matmul (432 x 64) @ (64 x 128), bias in f32, stored bf16.
    head = jnp.dot(wh_ref[...], xh, preferred_element_type=jnp.float32) + bh_ref[...]
    o_ref[0, :, :] = head.astype(o_ref.dtype)


def yolo_backbone(x_flat, params, sel):
    """x_flat: (B, CIN_PAD, (IMG+2)^2) bf16 padded flat image -> (B, 432, 128) bf16."""
    B = x_flat.shape[0]
    np1 = x_flat.shape[2]
    wp1, l1 = _layer_dims(IMG)
    wp2, l2 = _layer_dims(IMG // 2)
    wp3, l3 = _layer_dims(IMG // 4)
    dims = ((wp1, l1, IMG), (wp2, l2, IMG // 2), (wp3, l3))
    kernel = functools.partial(_yolo_fused_kernel, dims=dims)
    return pl.pallas_call(
        kernel,
        out_shape=jax.ShapeDtypeStruct((B, HEAD_PAD, GRID_PAD), jnp.bfloat16),
        grid=(B,),
        in_specs=[
            pl.BlockSpec((1, CIN_PAD, np1), lambda i: (i, 0, 0)),
            pl.BlockSpec(sel['s1'].shape, lambda i: (0, 0)),
            pl.BlockSpec(sel['s2'].shape, lambda i: (0, 0)),
            pl.BlockSpec(sel['s3'].shape, lambda i: (0, 0)),
            pl.BlockSpec(params['w1'].shape, lambda i: (0, 0, 0)),
            pl.BlockSpec(params['b1'].shape, lambda i: (0, 0)),
            pl.BlockSpec(params['w2'].shape, lambda i: (0, 0, 0)),
            pl.BlockSpec(params['b2'].shape, lambda i: (0, 0)),
            pl.BlockSpec(params['w3'].shape, lambda i: (0, 0, 0)),
            pl.BlockSpec(params['b3'].shape, lambda i: (0, 0)),
            pl.BlockSpec(params['wh'].shape, lambda i: (0, 0)),
            pl.BlockSpec(params['bh'].shape, lambda i: (0, 0)),
        ],
        out_specs=pl.BlockSpec((1, HEAD_PAD, GRID_PAD), lambda i: (i, 0, 0)),
        compiler_params=pltpu.CompilerParams(
            dimension_semantics=("parallel",),        # 2-TC chips split the batch grid
            vmem_limit_bytes=32 * 1024 * 1024),
    )(x_flat, sel['s1'], sel['s2'], sel['s3'],
      params['w1'], params['b1'], params['w2'], params['b2'],
      params['w3'], params['b3'], params['wh'], params['bh'])


# ------------------------------- JAX glue ------------------------------------
def _pool_select_matrix(h):
    """0/1 (bf16): compact pooled slab (ho*(h-1) cols) -> next layer's padded flat frame."""
    ho = h // 2
    won = ho + 2
    npn = won * won
    k = ho * (h - 1)
    yy, xx = jnp.meshgrid(jnp.arange(ho), jnp.arange(ho), indexing="ij")
    src = (yy * (h - 1) + 2 * xx).reshape(-1)
    dst = ((yy + 1) * won + (xx + 1)).reshape(-1)
    return jnp.zeros((k, npn), jnp.float32).at[src, dst].set(1.0).astype(jnp.bfloat16)


def _extract_matrix(h, out_cols):
    """0/1 (bf16): conv3 slab columns (with pad-frame junk) -> dense h*h grid cells."""
    wp, l = _layer_dims(h)
    yy, xx = jnp.meshgrid(jnp.arange(h), jnp.arange(h), indexing="ij")
    src = (yy * wp + xx).reshape(-1)
    dst = (yy * h + xx).reshape(-1)
    return jnp.zeros((l, out_cols), jnp.float32).at[src, dst].set(1.0).astype(jnp.bfloat16)


def make_selectors():
    return {
        's1': _pool_select_matrix(IMG),             # (496, 324)  -- was (1051, 324)
        's2': _pool_select_matrix(IMG // 2),        # (120, 100)  -- was (267, 100)
        's3': _extract_matrix(IMG // 4, GRID_PAD),  # (78, 128)
    }


def init_params(key):
    """Deterministic synthetic Darknet-style parameters, transposed (Cout, Cin) tap layout."""
    ks = jax.random.split(key, 8)

    def conv_w(k, cout, cin, taps=9):
        w = jax.random.normal(k, (taps, cout, cin), jnp.float32) / jnp.sqrt(taps * cin)
        return w.astype(jnp.bfloat16)

    def bias(k, cout):
        return jax.random.normal(k, (cout, 1), jnp.float32) * 0.01

    p = {}
    w1 = conv_w(ks[0], 16, 3)
    p['w1'] = jnp.pad(w1, ((0, 0), (0, 0), (0, CIN_PAD - 3)))   # zero taps for pad channels
    p['b1'] = bias(ks[1], 16)
    p['w2'] = conv_w(ks[2], 32, 16)
    p['b2'] = bias(ks[3], 32)
    p['w3'] = conv_w(ks[4], 64, 32)
    p['b3'] = bias(ks[5], 64)
    # 1x1 head: 64 -> 425 (COCO, 5 anchors * 85), zero-padded to 432 output channels
    wh = jax.random.normal(ks[6], (HEAD_CH, 64), jnp.float32) / jnp.sqrt(64.0)
    p['wh'] = jnp.pad(wh, ((0, HEAD_PAD - HEAD_CH), (0, 0))).astype(jnp.bfloat16)
    p['bh'] = jnp.pad(bias(ks[7], HEAD_CH), ((0, HEAD_PAD - HEAD_CH), (0, 0)))
    return p


@jax.jit
def yolov2_forward(params, sel, img_nchw):
    """Mirrors YOLOv2OD.forward: returns (score, anchors, logits)."""
    B = img_nchw.shape[0]
    x = img_nchw.astype(jnp.float32)
    # zero-pad: channels 3 -> CIN_PAD, spatial +1 ring (SAME padding for conv1)
    x = jnp.pad(x, ((0, 0), (0, CIN_PAD - x.shape[1]), (1, 1), (1, 1)))
    x_flat = x.reshape(B, CIN_PAD, (IMG + 2) * (IMG + 2)).astype(jnp.bfloat16)

    out = yolo_backbone(x_flat, params, sel)        # (B, 432, 128) bf16

    hw = GRID * GRID
    # transposed-flat layout gives NCHW directly: (B, channel, y*W + x)
    score = out[:, :HEAD_CH, :hw].astype(jnp.float32).reshape(B, HEAD_CH, GRID, GRID)

    # exactly the view/transpose sequence from YOLOv2OD.forward
    output = score.reshape(B, HEAD_CH, hw)
    output = jnp.transpose(output, (0, 2, 1))
    output = output.reshape(B, hw * NUM_ANCHORS, BOX_ATTRS)
    logits = output[:, :, 5:]                       # (B, Hg*Wg*5, 80)
    # TODO(synk): non_max_suppression (torchvision nms, data-dependent output counts)
    # has no static-shape Pallas equivalent; returning the pre-NMS logits instead.

    anchors = jnp.asarray(ANCHORS, dtype=jnp.float32)
    return score, anchors, logits


def yolov2_reference_score(params, img_nchw):
    """Pure-JAX f32 reference of the fused backbone (guards layout/index invariants)."""
    x = img_nchw.astype(jnp.float32)
    x = jnp.pad(x, ((0, 0), (0, CIN_PAD - x.shape[1]), (0, 0), (0, 0)))

    def conv(x, w_taps, b):
        t = w_taps.astype(jnp.float32).reshape(3, 3, w_taps.shape[1], w_taps.shape[2])
        w = jnp.transpose(t, (2, 3, 0, 1))          # (Cout, Cin, kh, kw)
        y = jax.lax.conv_general_dilated(x, w, (1, 1), 'SAME',
                                         dimension_numbers=('NCHW', 'OIHW', 'NCHW'))
        y = y + b.reshape(1, -1, 1, 1)
        return jnp.maximum(y, 0.1 * y)

    def pool(x):
        return jax.lax.reduce_window(x, -jnp.inf, jax.lax.max,
                                     (1, 1, 2, 2), (1, 1, 2, 2), 'VALID')

    a1 = conv(x, params['w1'], params['b1'])
    a2 = conv(pool(a1), params['w2'], params['b2'])
    a3 = conv(pool(a2), params['w3'], params['b3'])
    wh = params['wh'].astype(jnp.float32)[:HEAD_CH]
    bh = params['bh'][:HEAD_CH]
    return jnp.einsum('oc,bchw->bohw', wh, a3) + bh.reshape(1, -1, 1, 1)


# --------------------------------- main ---------------------------------------
if __name__ == "__main__":
    key = jax.random.PRNGKey(0)
    k_param, k_img = jax.random.split(key)

    params = init_params(k_param)
    sel = make_selectors()
    img = jax.random.normal(k_img, (2, 3, IMG, IMG), jnp.float32)   # NCHW like PyTorch

    score, anchors, logits = yolov2_forward(params, sel, img)
    jax.block_until_ready((score, anchors, logits))

    assert score.shape == (2, HEAD_CH, GRID, GRID)
    assert anchors.shape == (NUM_ANCHORS, 2)
    assert logits.shape == (2, GRID * GRID * NUM_ANCHORS, NUM_CLASSES)
    assert bool(jnp.isfinite(score).all())

    # loose-tolerance check vs f32 XLA reference (kernel uses bf16 MXU inputs + bf16 store)
    ref = yolov2_reference_score(params, img)
    max_err = float(jnp.max(jnp.abs(score - ref)))
    scale = float(jnp.max(jnp.abs(ref)))
    assert max_err <= 0.1 * scale + 0.1, f"mismatch: max_err={max_err} scale={scale}"

    print("KERNEL_OK")
</pallas_src>

<mosaic_0001>
module attributes {stable_mosaic.version = 11 : i64} {
  func.func @_yolo_fused_kernel(%arg0: i32, %arg1: memref<1x8x1156xbf16, #tpu.memory_space<vmem>>, %arg2: memref<496x324xbf16, #tpu.memory_space<vmem>>, %arg3: memref<120x100xbf16, #tpu.memory_space<vmem>>, %arg4: memref<78x128xbf16, #tpu.memory_space<vmem>>, %arg5: memref<9x16x8xbf16, #tpu.memory_space<vmem>>, %arg6: memref<16x1xf32, #tpu.memory_space<vmem>>, %arg7: memref<9x32x16xbf16, #tpu.memory_space<vmem>>, %arg8: memref<32x1xf32, #tpu.memory_space<vmem>>, %arg9: memref<9x64x32xbf16, #tpu.memory_space<vmem>>, %arg10: memref<64x1xf32, #tpu.memory_space<vmem>>, %arg11: memref<432x64xbf16, #tpu.memory_space<vmem>>, %arg12: memref<432x1xf32, #tpu.memory_space<vmem>>, %arg13: memref<1x432x128xbf16, #tpu.memory_space<vmem>>) attributes {dimension_semantics = [#tpu.dimension_semantics<parallel>], iteration_bounds = array<i64: 2>, scalar_prefetch = 0 : i64, scratch_operands = 0 : i64, tpu.core_type = #tpu.core_type<tc>, window_params = [{transform_indices = @transform_0, window_bounds = array<i64: 1, 8, 1156>}, {pipeline_mode = #tpu.pipeline_mode<synchronous>, transform_indices = @transform_1, window_bounds = array<i64: 496, 324>}, {pipeline_mode = #tpu.pipeline_mode<synchronous>, transform_indices = @transform_2, window_bounds = array<i64: 120, 100>}, {pipeline_mode = #tpu.pipeline_mode<synchronous>, transform_indices = @transform_3, window_bounds = array<i64: 78, 128>}, {pipeline_mode = #tpu.pipeline_mode<synchronous>, transform_indices = @transform_4, window_bounds = array<i64: 9, 16, 8>}, {pipeline_mode = #tpu.pipeline_mode<synchronous>, transform_indices = @transform_5, window_bounds = array<i64: 16, 1>}, {pipeline_mode = #tpu.pipeline_mode<synchronous>, transform_indices = @transform_6, window_bounds = array<i64: 9, 32, 16>}, {pipeline_mode = #tpu.pipeline_mode<synchronous>, transform_indices = @transform_7, window_bounds = array<i64: 32, 1>}, {pipeline_mode = #tpu.pipeline_mode<synchronous>, transform_indices = @transform_8, window_bounds = array<i64: 9, 64, 32>}, {pipeline_mode = #tpu.pipeline_mode<synchronous>, transform_indices = @transform_9, window_bounds = array<i64: 64, 1>}, {pipeline_mode = #tpu.pipeline_mode<synchronous>, transform_indices = @transform_10, window_bounds = array<i64: 432, 64>}, {pipeline_mode = #tpu.pipeline_mode<synchronous>, transform_indices = @transform_11, window_bounds = array<i64: 432, 1>}, {transform_indices = @transform_12, window_bounds = array<i64: 1, 432, 128>}]} {
    %c0 = arith.constant 0 : index
    %c0_0 = arith.constant 0 : index
    %c0_1 = arith.constant 0 : index
    %0 = vector.load %arg1[%c0, %c0_0, %c0_1] : memref<1x8x1156xbf16, #tpu.memory_space<vmem>>, vector<1x8x1156xbf16>
    %1 = vector.shape_cast %0 : vector<1x8x1156xbf16> to vector<8x1156xbf16>
    %cst = arith.constant 0.000000e+00 : f32
    %2 = vector.broadcast %cst : f32 to vector<16x1086xf32>
    %c0_2 = arith.constant 0 : index
    %c0_3 = arith.constant 0 : index
    %c0_4 = arith.constant 0 : index
    %3 = vector.load %arg5[%c0_2, %c0_3, %c0_4] : memref<9x16x8xbf16, #tpu.memory_space<vmem>>, vector<1x16x8xbf16>
    %4 = vector.shape_cast %3 : vector<1x16x8xbf16> to vector<16x8xbf16>
    %5 = vector.extract_strided_slice %1 {offsets = [0, 0], sizes = [8, 1086], strides = [1, 1]} : vector<8x1156xbf16> to vector<8x1086xbf16>
    %cst_5 = arith.constant dense<0.000000e+00> : vector<16x1086xf32>
    %6 = tpu.matmul %4, %5, %cst_5 {dimension_numbers = #tpu.dot_dimension_numbers<[1], [0], [0], [1], [0, 0, 1, 1], [], []>} : vector<16x8xbf16>, vector<8x1086xbf16>, vector<16x1086xf32> -> vector<16x1086xf32>
    %7 = arith.addf %2, %6 : vector<16x1086xf32>
    %c1 = arith.constant 1 : index
    %c0_6 = arith.constant 0 : index
    %c0_7 = arith.constant 0 : index
    %8 = vector.load %arg5[%c1, %c0_6, %c0_7] : memref<9x16x8xbf16, #tpu.memory_space<vmem>>, vector<1x16x8xbf16>
    %9 = vector.shape_cast %8 : vector<1x16x8xbf16> to vector<16x8xbf16>
    %10 = vector.extract_strided_slice %1 {offsets = [0, 1], sizes = [8, 1086], strides = [1, 1]} : vector<8x1156xbf16> to vector<8x1086xbf16>
    %cst_8 = arith.constant dense<0.000000e+00> : vector<16x1086xf32>
    %11 = tpu.matmul %9, %10, %cst_8 {dimension_numbers = #tpu.dot_dimension_numbers<[1], [0], [0], [1], [0, 0, 1, 1], [], []>} : vector<16x8xbf16>, vector<8x1086xbf16>, vector<16x1086xf32> -> vector<16x1086xf32>
    %12 = arith.addf %7, %11 : vector<16x1086xf32>
    %c2 = arith.constant 2 : index
    %c0_9 = arith.constant 0 : index
    %c0_10 = arith.constant 0 : index
    %13 = vector.load %arg5[%c2, %c0_9, %c0_10] : memref<9x16x8xbf16, #tpu.memory_space<vmem>>, vector<1x16x8xbf16>
    %14 = vector.shape_cast %13 : vector<1x16x8xbf16> to vector<16x8xbf16>
    %15 = vector.extract_strided_slice %1 {offsets = [0, 2], sizes = [8, 1086], strides = [1, 1]} : vector<8x1156xbf16> to vector<8x1086xbf16>
    %cst_11 = arith.constant dense<0.000000e+00> : vector<16x1086xf32>
    %16 = tpu.matmul %14, %15, %cst_11 {dimension_numbers = #tpu.dot_dimension_numbers<[1], [0], [0], [1], [0, 0, 1, 1], [], []>} : vector<16x8xbf16>, vector<8x1086xbf16>, vector<16x1086xf32> -> vector<16x1086xf32>
    %17 = arith.addf %12, %16 : vector<16x1086xf32>
    %c3 = arith.constant 3 : index
    %c0_12 = arith.constant 0 : index
    %c0_13 = arith.constant 0 : index
    %18 = vector.load %arg5[%c3, %c0_12, %c0_13] : memref<9x16x8xbf16, #tpu.memory_space<vmem>>, vector<1x16x8xbf16>
    %19 = vector.shape_cast %18 : vector<1x16x8xbf16> to vector<16x8xbf16>
    %20 = vector.extract_strided_slice %1 {offsets = [0, 34], sizes = [8, 1086], strides = [1, 1]} : vector<8x1156xbf16> to vector<8x1086xbf16>
    %cst_14 = arith.constant dense<0.000000e+00> : vector<16x1086xf32>
    %21 = tpu.matmul %19, %20, %cst_14 {dimension_numbers = #tpu.dot_dimension_numbers<[1], [0], [0], [1], [0, 0, 1, 1], [], []>} : vector<16x8xbf16>, vector<8x1086xbf16>, vector<16x1086xf32> -> vector<16x1086xf32>
    %22 = arith.addf %17, %21 : vector<16x1086xf32>
    %c4 = arith.constant 4 : index
    %c0_15 = arith.constant 0 : index
    %c0_16 = arith.constant 0 : index
    %23 = vector.load %arg5[%c4, %c0_15, %c0_16] : memref<9x16x8xbf16, #tpu.memory_space<vmem>>, vector<1x16x8xbf16>
    %24 = vector.shape_cast %23 : vector<1x16x8xbf16> to vector<16x8xbf16>
    %25 = vector.extract_strided_slice %1 {offsets = [0, 35], sizes = [8, 1086], strides = [1, 1]} : vector<8x1156xbf16> to vector<8x1086xbf16>
    %cst_17 = arith.constant dense<0.000000e+00> : vector<16x1086xf32>
    %26 = tpu.matmul %24, %25, %cst_17 {dimension_numbers = #tpu.dot_dimension_numbers<[1], [0], [0], [1], [0, 0, 1, 1], [], []>} : vector<16x8xbf16>, vector<8x1086xbf16>, vector<16x1086xf32> -> vector<16x1086xf32>
    %27 = arith.addf %22, %26 : vector<16x1086xf32>
    %c5 = arith.constant 5 : index
    %c0_18 = arith.constant 0 : index
    %c0_19 = arith.constant 0 : index
    %28 = vector.load %arg5[%c5, %c0_18, %c0_19] : memref<9x16x8xbf16, #tpu.memory_space<vmem>>, vector<1x16x8xbf16>
    %29 = vector.shape_cast %28 : vector<1x16x8xbf16> to vector<16x8xbf16>
    %30 = vector.extract_strided_slice %1 {offsets = [0, 36], sizes = [8, 1086], strides = [1, 1]} : vector<8x1156xbf16> to vector<8x1086xbf16>
    %cst_20 = arith.constant dense<0.000000e+00> : vector<16x1086xf32>
    %31 = tpu.matmul %29, %30, %cst_20 {dimension_numbers = #tpu.dot_dimension_numbers<[1], [0], [0], [1], [0, 0, 1, 1], [], []>} : vector<16x8xbf16>, vector<8x1086xbf16>, vector<16x1086xf32> -> vector<16x1086xf32>
    %32 = arith.addf %27, %31 : vector<16x1086xf32>
    %c6 = arith.constant 6 : index
    %c0_21 = arith.constant 0 : index
    %c0_22 = arith.constant 0 : index
    %33 = vector.load %arg5[%c6, %c0_21, %c0_22] : memref<9x16x8xbf16, #tpu.memory_space<vmem>>, vector<1x16x8xbf16>
    %34 = vector.shape_cast %33 : vector<1x16x8xbf16> to vector<16x8xbf16>
    %35 = vector.extract_strided_slice %1 {offsets = [0, 68], sizes = [8, 1086], strides = [1, 1]} : vector<8x1156xbf16> to vector<8x1086xbf16>
    %cst_23 = arith.constant dense<0.000000e+00> : vector<16x1086xf32>
    %36 = tpu.matmul %34, %35, %cst_23 {dimension_numbers = #tpu.dot_dimension_numbers<[1], [0], [0], [1], [0, 0, 1, 1], [], []>} : vector<16x8xbf16>, vector<8x1086xbf16>, vector<16x1086xf32> -> vector<16x1086xf32>
    %37 = arith.addf %32, %36 : vector<16x1086xf32>
    %c7 = arith.constant 7 : index
    %c0_24 = arith.constant 0 : index
    %c0_25 = arith.constant 0 : index
    %38 = vector.load %arg5[%c7, %c0_24, %c0_25] : memref<9x16x8xbf16, #tpu.memory_space<vmem>>, vector<1x16x8xbf16>
    %39 = vector.shape_cast %38 : vector<1x16x8xbf16> to vector<16x8xbf16>
    %40 = vector.extract_strided_slice %1 {offsets = [0, 69], sizes = [8, 1086], strides = [1, 1]} : vector<8x1156xbf16> to vector<8x1086xbf16>
    %cst_26 = arith.constant dense<0.000000e+00> : vector<16x1086xf32>
    %41 = tpu.matmul %39, %40, %cst_26 {dimension_numbers = #tpu.dot_dimension_numbers<[1], [0], [0], [1], [0, 0, 1, 1], [], []>} : vector<16x8xbf16>, vector<8x1086xbf16>, vector<16x1086xf32> -> vector<16x1086xf32>
    %42 = arith.addf %37, %41 : vector<16x1086xf32>
    %c8 = arith.constant 8 : index
    %c0_27 = arith.constant 0 : index
    %c0_28 = arith.constant 0 : index
    %43 = vector.load %arg5[%c8, %c0_27, %c0_28] : memref<9x16x8xbf16, #tpu.memory_space<vmem>>, vector<1x16x8xbf16>
    %44 = vector.shape_cast %43 : vector<1x16x8xbf16> to vector<16x8xbf16>
    %45 = vector.extract_strided_slice %1 {offsets = [0, 70], sizes = [8, 1086], strides = [1, 1]} : vector<8x1156xbf16> to vector<8x1086xbf16>
    %cst_29 = arith.constant dense<0.000000e+00> : vector<16x1086xf32>
    %46 = tpu.matmul %44, %45, %cst_29 {dimension_numbers = #tpu.dot_dimension_numbers<[1], [0], [0], [1], [0, 0, 1, 1], [], []>} : vector<16x8xbf16>, vector<8x1086xbf16>, vector<16x1086xf32> -> vector<16x1086xf32>
    %47 = arith.addf %42, %46 : vector<16x1086xf32>
    %c0_30 = arith.constant 0 : index
    %c0_31 = arith.constant 0 : index
    %48 = vector.load %arg6[%c0_30, %c0_31] : memref<16x1xf32, #tpu.memory_space<vmem>>, vector<16x1xf32>
    %49 = vector.broadcast %48 : vector<16x1xf32> to vector<16x1086xf32>
    %50 = arith.addf %47, %49 : vector<16x1086xf32>
    %cst_32 = arith.constant 1.000000e-01 : f32
    %51 = vector.broadcast %cst_32 : f32 to vector<16x1086xf32>
    %52 = arith.mulf %51, %50 : vector<16x1086xf32>
    %53 = arith.maximumf %50, %52 : vector<16x1086xf32>
    %54 = vector.extract_strided_slice %53 {offsets = [0, 0], sizes = [16, 1085], strides = [1, 1]} : vector<16x1086xf32> to vector<16x1085xf32>
    %55 = vector.extract_strided_slice %53 {offsets = [0, 1], sizes = [16, 1085], strides = [1, 1]} : vector<16x1086xf32> to vector<16x1085xf32>
    %56 = arith.maximumf %54, %55 : vector<16x1085xf32>
    %57 = vector.extract_strided_slice %56 {offsets = [0, 0], sizes = [16, 31], strides = [1, 1]} : vector<16x1085xf32> to vector<16x31xf32>
    %58 = vector.extract_strided_slice %56 {offsets = [0, 34], sizes = [16, 31], strides = [1, 1]} : vector<16x1085xf32> to vector<16x31xf32>
    %59 = arith.maximumf %57, %58 : vector<16x31xf32>
    %60 = vector.extract_strided_slice %56 {offsets = [0, 68], sizes = [16, 31], strides = [1, 1]} : vector<16x1085xf32> to vector<16x31xf32>
    %61 = vector.extract_strided_slice %56 {offsets = [0, 102], sizes = [16, 31], strides = [1, 1]} : vector<16x1085xf32> to vector<16x31xf32>
    %62 = arith.maximumf %60, %61 : vector<16x31xf32>
    %63 = vector.extract_strided_slice %56 {offsets = [0, 136], sizes = [16, 31], strides = [1, 1]} : vector<16x1085xf32> to vector<16x31xf32>
    %64 = vector.extract_strided_slice %56 {offsets = [0, 170], sizes = [16, 31], strides = [1, 1]} : vector<16x1085xf32> to vector<16x31xf32>
    %65 = arith.maximumf %63, %64 : vector<16x31xf32>
    %66 = vector.extract_strided_slice %56 {offsets = [0, 204], sizes = [16, 31], strides = [1, 1]} : vector<16x1085xf32> to vector<16x31xf32>
    %67 = vector.extract_strided_slice %56 {offsets = [0, 238], sizes = [16, 31], strides = [1, 1]} : vector<16x1085xf32> to vector<16x31xf32>
    %68 = arith.maximumf %66, %67 : vector<16x31xf32>
    %69 = vector.extract_strided_slice %56 {offsets = [0, 272], sizes = [16, 31], strides = [1, 1]} : vector<16x1085xf32> to vector<16x31xf32>
    %70 = vector.extract_strided_slice %56 {offsets = [0, 306], sizes = [16, 31], strides = [1, 1]} : vector<16x1085xf32> to vector<16x31xf32>
    %71 = arith.maximumf %69, %70 : vector<16x31xf32>
    %72 = vector.extract_strided_slice %56 {offsets = [0, 340], sizes = [16, 31], strides = [1, 1]} : vector<16x1085xf32> to vector<16x31xf32>
    %73 = vector.extract_strided_slice %56 {offsets = [0, 374], sizes = [16, 31], strides = [1, 1]} : vector<16x1085xf32> to vector<16x31xf32>
    %74 = arith.maximumf %72, %73 : vector<16x31xf32>
    %75 = vector.extract_strided_slice %56 {offsets = [0, 408], sizes = [16, 31], strides = [1, 1]} : vector<16x1085xf32> to vector<16x31xf32>
    %76 = vector.extract_strided_slice %56 {offsets = [0, 442], sizes = [16, 31], strides = [1, 1]} : vector<16x1085xf32> to vector<16x31xf32>
    %77 = arith.maximumf %75, %76 : vector<16x31xf32>
    %78 = vector.extract_strided_slice %56 {offsets = [0, 476], sizes = [16, 31], strides = [1, 1]} : vector<16x1085xf32> to vector<16x31xf32>
    %79 = vector.extract_strided_slice %56 {offsets = [0, 510], sizes = [16, 31], strides = [1, 1]} : vector<16x1085xf32> to vector<16x31xf32>
    %80 = arith.maximumf %78, %79 : vector<16x31xf32>
    %81 = vector.extract_strided_slice %56 {offsets = [0, 544], sizes = [16, 31], strides = [1, 1]} : vector<16x1085xf32> to vector<16x31xf32>
    %82 = vector.extract_strided_slice %56 {offsets = [0, 578], sizes = [16, 31], strides = [1, 1]} : vector<16x1085xf32> to vector<16x31xf32>
    %83 = arith.maximumf %81, %82 : vector<16x31xf32>
    %84 = vector.extract_strided_slice %56 {offsets = [0, 612], sizes = [16, 31], strides = [1, 1]} : vector<16x1085xf32> to vector<16x31xf32>
    %85 = vector.extract_strided_slice %56 {offsets = [0, 646], sizes = [16, 31], strides = [1, 1]} : vector<16x1085xf32> to vector<16x31xf32>
    %86 = arith.maximumf %84, %85 : vector<16x31xf32>
    %87 = vector.extract_strided_slice %56 {offsets = [0, 680], sizes = [16, 31], strides = [1, 1]} : vector<16x1085xf32> to vector<16x31xf32>
    %88 = vector.extract_strided_slice %56 {offsets = [0, 714], sizes = [16, 31], strides = [1, 1]} : vector<16x1085xf32> to vector<16x31xf32>
    %89 = arith.maximumf %87, %88 : vector<16x31xf32>
    %90 = vector.extract_strided_slice %56 {offsets = [0, 748], sizes = [16, 31], strides = [1, 1]} : vector<16x1085xf32> to vector<16x31xf32>
    %91 = vector.extract_strided_slice %56 {offsets = [0, 782], sizes = [16, 31], strides = [1, 1]} : vector<16x1085xf32> to vector<16x31xf32>
    %92 = arith.maximumf %90, %91 : vector<16x31xf32>
    %93 = vector.extract_strided_slice %56 {offsets = [0, 816], sizes = [16, 31], strides = [1, 1]} : vector<16x1085xf32> to vector<16x31xf32>
    %94 = vector.extract_strided_slice %56 {offsets = [0, 850], sizes = [16, 31], strides = [1, 1]} : vector<16x1085xf32> to vector<16x31xf32>
    %95 = arith.maximumf %93, %94 : vector<16x31xf32>
    %96 = vector.extract_strided_slice %56 {offsets = [0, 884], sizes = [16, 31], strides = [1, 1]} : vector<16x1085xf32> to vector<16x31xf32>
    %97 = vector.extract_strided_slice %56 {offsets = [0, 918], sizes = [16, 31], strides = [1, 1]} : vector<16x1085xf32> to vector<16x31xf32>
    %98 = arith.maximumf %96, %97 : vector<16x31xf32>
    %99 = vector.extract_strided_slice %56 {offsets = [0, 952], sizes = [16, 31], strides = [1, 1]} : vector<16x1085xf32> to vector<16x31xf32>
    %100 = vector.extract_strided_slice %56 {offsets = [0, 986], sizes = [16, 31], strides = [1, 1]} : vector<16x1085xf32> to vector<16x31xf32>
    %101 = arith.maximumf %99, %100 : vector<16x31xf32>
    %102 = vector.extract_strided_slice %56 {offsets = [0, 1020], sizes = [16, 31], strides = [1, 1]} : vector<16x1085xf32> to vector<16x31xf32>
    %103 = vector.extract_strided_slice %56 {offsets = [0, 1054], sizes = [16, 31], strides = [1, 1]} : vector<16x1085xf32> to vector<16x31xf32>
    %104 = arith.maximumf %102, %103 : vector<16x31xf32>
    %105 = tpu.concatenate %59, %62, %65, %68, %71, %74, %77, %80, %83, %86, %89, %92, %95, %98, %101, %104 in 1 : vector<16x31xf32>, vector<16x31xf32>, vector<16x31xf32>, vector<16x31xf32>, vector<16x31xf32>, vector<16x31xf32>, vector<16x31xf32>, vector<16x31xf32>, vector<16x31xf32>, vector<16x31xf32>, vector<16x31xf32>, vector<16x31xf32>, vector<16x31xf32>, vector<16x31xf32>, vector<16x31xf32>, vector<16x31xf32> -> vector<16x496xf32>
    %106 = arith.truncf %105 : vector<16x496xf32> to vector<16x496xbf16>
    %c0_33 = arith.constant 0 : index
    %c0_34 = arith.constant 0 : index
    %107 = vector.load %arg2[%c0_33, %c0_34] : memref<496x324xbf16, #tpu.memory_space<vmem>>, vector<496x324xbf16>
    %cst_35 = arith.constant dense<0.000000e+00> : vector<16x324xf32>
    %108 = tpu.matmul %106, %107, %cst_35 {dimension_numbers = #tpu.dot_dimension_numbers<[1], [0], [0], [1], [0, 0, 1, 1], [], []>} : vector<16x496xbf16>, vector<496x324xbf16>, vector<16x324xf32> -> vector<16x324xf32>
    %109 = arith.truncf %108 : vector<16x324xf32> to vector<16x324xbf16>
    %cst_36 = arith.constant 0.000000e+00 : f32
    %110 = vector.broadcast %cst_36 : f32 to vector<32x286xf32>
    %c0_37 = arith.constant 0 : index
    %c0_38 = arith.constant 0 : index
    %c0_39 = arith.constant 0 : index
    %111 = vector.load %arg7[%c0_37, %c0_38, %c0_39] : memref<9x32x16xbf16, #tpu.memory_space<vmem>>, vector<1x32x16xbf16>
    %112 = vector.shape_cast %111 : vector<1x32x16xbf16> to vector<32x16xbf16>
    %113 = vector.extract_strided_slice %109 {offsets = [0, 0], sizes = [16, 286], strides = [1, 1]} : vector<16x324xbf16> to vector<16x286xbf16>
    %cst_40 = arith.constant dense<0.000000e+00> : vector<32x286xf32>
    %114 = tpu.matmul %112, %113, %cst_40 {dimension_numbers = #tpu.dot_dimension_numbers<[1], [0], [0], [1], [0, 0, 1, 1], [], []>} : vector<32x16xbf16>, vector<16x286xbf16>, vector<32x286xf32> -> vector<32x286xf32>
    %115 = arith.addf %110, %114 : vector<32x286xf32>
    %c1_41 = arith.constant 1 : index
    %c0_42 = arith.constant 0 : index
    %c0_43 = arith.constant 0 : index
    %116 = vector.load %arg7[%c1_41, %c0_42, %c0_43] : memref<9x32x16xbf16, #tpu.memory_space<vmem>>, vector<1x32x16xbf16>
    %117 = vector.shape_cast %116 : vector<1x32x16xbf16> to vector<32x16xbf16>
    %118 = vector.extract_strided_slice %109 {offsets = [0, 1], sizes = [16, 286], strides = [1, 1]} : vector<16x324xbf16> to vector<16x286xbf16>
    %cst_44 = arith.constant dense<0.000000e+00> : vector<32x286xf32>
    %119 = tpu.matmul %117, %118, %cst_44 {dimension_numbers = #tpu.dot_dimension_numbers<[1], [0], [0], [1], [0, 0, 1, 1], [], []>} : vector<32x16xbf16>, vector<16x286xbf16>, vector<32x286xf32> -> vector<32x286xf32>
    %120 = arith.addf %115, %119 : vector<32x286xf32>
    %c2_45 = arith.constant 2 : index
    %c0_46 = arith.constant 0 : index
    %c0_47 = arith.constant 0 : index
    %121 = vector.load %arg7[%c2_45, %c0_46, %c0_47] : memref<9x32x16xbf16, #tpu.memory_space<vmem>>, vector<1x32x16xbf16>
    %122 = vector.shape_cast %121 : vector<1x32x16xbf16> to vector<32x16xbf16>
    %123 = vector.extract_strided_slice %109 {offsets = [0, 2], sizes = [16, 286], strides = [1, 1]} : vector<16x324xbf16> to vector<16x286xbf16>
    %cst_48 = arith.constant dense<0.000000e+00> : vector<32x286xf32>
    %124 = tpu.matmul %122, %123, %cst_48 {dimension_numbers = #tpu.dot_dimension_numbers<[1], [0], [0], [1], [0, 0, 1, 1], [], []>} : vector<32x16xbf16>, vector<16x286xbf16>, vector<32x286xf32> -> vector<32x286xf32>
    %125 = arith.addf %120, %124 : vector<32x286xf32>
    %c3_49 = arith.constant 3 : index
    %c0_50 = arith.constant 0 : index
    %c0_51 = arith.constant 0 : index
    %126 = vector.load %arg7[%c3_49, %c0_50, %c0_51] : memref<9x32x16xbf16, #tpu.memory_space<vmem>>, vector<1x32x16xbf16>
    %127 = vector.shape_cast %126 : vector<1x32x16xbf16> to vector<32x16xbf16>
    %128 = vector.extract_strided_slice %109 {offsets = [0, 18], sizes = [16, 286], strides = [1, 1]} : vector<16x324xbf16> to vector<16x286xbf16>
    %cst_52 = arith.constant dense<0.000000e+00> : vector<32x286xf32>
    %129 = tpu.matmul %127, %128, %cst_52 {dimension_numbers = #tpu.dot_dimension_numbers<[1], [0], [0], [1], [0, 0, 1, 1], [], []>} : vector<32x16xbf16>, vector<16x286xbf16>, vector<32x286xf32> -> vector<32x286xf32>
    %130 = arith.addf %125, %129 : vector<32x286xf32>
    %c4_53 = arith.constant 4 : index
    %c0_54 = arith.constant 0 : index
    %c0_55 = arith.constant 0 : index
    %131 = vector.load %arg7[%c4_53, %c0_54, %c0_55] : memref<9x32x16xbf16, #tpu.memory_space<vmem>>, vector<1x32x16xbf16>
    %132 = vector.shape_cast %131 : vector<1x32x16xbf16> to vector<32x16xbf16>
    %133 = vector.extract_strided_slice %109 {offsets = [0, 19], sizes = [16, 286], strides = [1, 1]} : vector<16x324xbf16> to vector<16x286xbf16>
    %cst_56 = arith.constant dense<0.000000e+00> : vector<32x286xf32>
    %134 = tpu.matmul %132, %133, %cst_56 {dimension_numbers = #tpu.dot_dimension_numbers<[1], [0], [0], [1], [0, 0, 1, 1], [], []>} : vector<32x16xbf16>, vector<16x286xbf16>, vector<32x286xf32> -> vector<32x286xf32>
    %135 = arith.addf %130, %134 : vector<32x286xf32>
    %c5_57 = arith.constant 5 : index
    %c0_58 = arith.constant 0 : index
    %c0_59 = arith.constant 0 : index
    %136 = vector.load %arg7[%c5_57, %c0_58, %c0_59] : memref<9x32x16xbf16, #tpu.memory_space<vmem>>, vector<1x32x16xbf16>
    %137 = vector.shape_cast %136 : vector<1x32x16xbf16> to vector<32x16xbf16>
    %138 = vector.extract_strided_slice %109 {offsets = [0, 20], sizes = [16, 286], strides = [1, 1]} : vector<16x324xbf16> to vector<16x286xbf16>
    %cst_60 = arith.constant dense<0.000000e+00> : vector<32x286xf32>
    %139 = tpu.matmul %137, %138, %cst_60 {dimension_numbers = #tpu.dot_dimension_numbers<[1], [0], [0], [1], [0, 0, 1, 1], [], []>} : vector<32x16xbf16>, vector<16x286xbf16>, vector<32x286xf32> -> vector<32x286xf32>
    %140 = arith.addf %135, %139 : vector<32x286xf32>
    %c6_61 = arith.constant 6 : index
    %c0_62 = arith.constant 0 : index
    %c0_63 = arith.constant 0 : index
    %141 = vector.load %arg7[%c6_61, %c0_62, %c0_63] : memref<9x32x16xbf16, #tpu.memory_space<vmem>>, vector<1x32x16xbf16>
    %142 = vector.shape_cast %141 : vector<1x32x16xbf16> to vector<32x16xbf16>
    %143 = vector.extract_strided_slice %109 {offsets = [0, 36], sizes = [16, 286], strides = [1, 1]} : vector<16x324xbf16> to vector<16x286xbf16>
    %cst_64 = arith.constant dense<0.000000e+00> : vector<32x286xf32>
    %144 = tpu.matmul %142, %143, %cst_64 {dimension_numbers = #tpu.dot_dimension_numbers<[1], [0], [0], [1], [0, 0, 1, 1], [], []>} : vector<32x16xbf16>, vector<16x286xbf16>, vector<32x286xf32> -> vector<32x286xf32>
    %145 = arith.addf %140, %144 : vector<32x286xf32>
    %c7_65 = arith.constant 7 : index
    %c0_66 = arith.constant 0 : index
    %c0_67 = arith.constant 0 : index
    %146 = vector.load %arg7[%c7_65, %c0_66, %c0_67] : memref<9x32x16xbf16, #tpu.memory_space<vmem>>, vector<1x32x16xbf16>
    %147 = vector.shape_cast %146 : vector<1x32x16xbf16> to vector<32x16xbf16>
    %148 = vector.extract_strided_slice %109 {offsets = [0, 37], sizes = [16, 286], strides = [1, 1]} : vector<16x324xbf16> to vector<16x286xbf16>
    %cst_68 = arith.constant dense<0.000000e+00> : vector<32x286xf32>
    %149 = tpu.matmul %147, %148, %cst_68 {dimension_numbers = #tpu.dot_dimension_numbers<[1], [0], [0], [1], [0, 0, 1, 1], [], []>} : vector<32x16xbf16>, vector<16x286xbf16>, vector<32x286xf32> -> vector<32x286xf32>
    %150 = arith.addf %145, %149 : vector<32x286xf32>
    %c8_69 = arith.constant 8 : index
    %c0_70 = arith.constant 0 : index
    %c0_71 = arith.constant 0 : index
    %151 = vector.load %arg7[%c8_69, %c0_70, %c0_71] : memref<9x32x16xbf16, #tpu.memory_space<vmem>>, vector<1x32x16xbf16>
    %152 = vector.shape_cast %151 : vector<1x32x16xbf16> to vector<32x16xbf16>
    %153 = vector.extract_strided_slice %109 {offsets = [0, 38], sizes = [16, 286], strides = [1, 1]} : vector<16x324xbf16> to vector<16x286xbf16>
    %cst_72 = arith.constant dense<0.000000e+00> : vector<32x286xf32>
    %154 = tpu.matmul %152, %153, %cst_72 {dimension_numbers = #tpu.dot_dimension_numbers<[1], [0], [0], [1], [0, 0, 1, 1], [], []>} : vector<32x16xbf16>, vector<16x286xbf16>, vector<32x286xf32> -> vector<32x286xf32>
    %155 = arith.addf %150, %154 : vector<32x286xf32>
    %c0_73 = arith.constant 0 : index
    %c0_74 = arith.constant 0 : index
    %156 = vector.load %arg8[%c0_73, %c0_74] : memref<32x1xf32, #tpu.memory_space<vmem>>, vector<32x1xf32>
    %157 = vector.broadcast %156 : vector<32x1xf32> to vector<32x286xf32>
    %158 = arith.addf %155, %157 : vector<32x286xf32>
    %cst_75 = arith.constant 1.000000e-01 : f32
    %159 = vector.broadcast %cst_75 : f32 to vector<32x286xf32>
    %160 = arith.mulf %159, %158 : vector<32x286xf32>
    %161 = arith.maximumf %158, %160 : vector<32x286xf32>
    %162 = vector.extract_strided_slice %161 {offsets = [0, 0], sizes = [32, 285], strides = [1, 1]} : vector<32x286xf32> to vector<32x285xf32>
    %163 = vector.extract_strided_slice %161 {offsets = [0, 1], sizes = [32, 285], strides = [1, 1]} : vector<32x286xf32> to vector<32x285xf32>
    %164 = arith.maximumf %162, %163 : vector<32x285xf32>
    %165 = vector.extract_strided_slice %164 {offsets = [0, 0], sizes = [32, 15], strides = [1, 1]} : vector<32x285xf32> to vector<32x15xf32>
    %166 = vector.extract_strided_slice %164 {offsets = [0, 18], sizes = [32, 15], strides = [1, 1]} : vector<32x285xf32> to vector<32x15xf32>
    %167 = arith.maximumf %165, %166 : vector<32x15xf32>
    %168 = vector.extract_strided_slice %164 {offsets = [0, 36], sizes = [32, 15], strides = [1, 1]} : vector<32x285xf32> to vector<32x15xf32>
    %169 = vector.extract_strided_slice %164 {offsets = [0, 54], sizes = [32, 15], strides = [1, 1]} : vector<32x285xf32> to vector<32x15xf32>
    %170 = arith.maximumf %168, %169 : vector<32x15xf32>
    %171 = vector.extract_strided_slice %164 {offsets = [0, 72], sizes = [32, 15], strides = [1, 1]} : vector<32x285xf32> to vector<32x15xf32>
    %172 = vector.extract_strided_slice %164 {offsets = [0, 90], sizes = [32, 15], strides = [1, 1]} : vector<32x285xf32> to vector<32x15xf32>
    %173 = arith.maximumf %171, %172 : vector<32x15xf32>
    %174 = vector.extract_strided_slice %164 {offsets = [0, 108], sizes = [32, 15], strides = [1, 1]} : vector<32x285xf32> to vector<32x15xf32>
    %175 = vector.extract_strided_slice %164 {offsets = [0, 126], sizes = [32, 15], strides = [1, 1]} : vector<32x285xf32> to vector<32x15xf32>
    %176 = arith.maximumf %174, %175 : vector<32x15xf32>
    %177 = vector.extract_strided_slice %164 {offsets = [0, 144], sizes = [32, 15], strides = [1, 1]} : vector<32x285xf32> to vector<32x15xf32>
    %178 = vector.extract_strided_slice %164 {offsets = [0, 162], sizes = [32, 15], strides = [1, 1]} : vector<32x285xf32> to vector<32x15xf32>
    %179 = arith.maximumf %177, %178 : vector<32x15xf32>
    %180 = vector.extract_strided_slice %164 {offsets = [0, 180], sizes = [32, 15], strides = [1, 1]} : vector<32x285xf32> to vector<32x15xf32>
    %181 = vector.extract_strided_slice %164 {offsets = [0, 198], sizes = [32, 15], strides = [1, 1]} : vector<32x285xf32> to vector<32x15xf32>
    %182 = arith.maximumf %180, %181 : vector<32x15xf32>
    %183 = vector.extract_strided_slice %164 {offsets = [0, 216], sizes = [32, 15], strides = [1, 1]} : vector<32x285xf32> to vector<32x15xf32>
    %184 = vector.extract_strided_slice %164 {offsets = [0, 234], sizes = [32, 15], strides = [1, 1]} : vector<32x285xf32> to vector<32x15xf32>
    %185 = arith.maximumf %183, %184 : vector<32x15xf32>
    %186 = vector.extract_strided_slice %164 {offsets = [0, 252], sizes = [32, 15], strides = [1, 1]} : vector<32x285xf32> to vector<32x15xf32>
    %187 = vector.extract_strided_slice %164 {offsets = [0, 270], sizes = [32, 15], strides = [1, 1]} : vector<32x285xf32> to vector<32x15xf32>
    %188 = arith.maximumf %186, %187 : vector<32x15xf32>
    %189 = tpu.concatenate %167, %170, %173, %176, %179, %182, %185, %188 in 1 : vector<32x15xf32>, vector<32x15xf32>, vector<32x15xf32>, vector<32x15xf32>, vector<32x15xf32>, vector<32x15xf32>, vector<32x15xf32>, vector<32x15xf32> -> vector<32x120xf32>
    %190 = arith.truncf %189 : vector<32x120xf32> to vector<32x120xbf16>
    %c0_76 = arith.constant 0 : index
    %c0_77 = arith.constant 0 : index
    %191 = vector.load %arg3[%c0_76, %c0_77] : memref<120x100xbf16, #tpu.memory_space<vmem>>, vector<120x100xbf16>
    %cst_78 = arith.constant dense<0.000000e+00> : vector<32x100xf32>
    %192 = tpu.matmul %190, %191, %cst_78 {dimension_numbers = #tpu.dot_dimension_numbers<[1], [0], [0], [1], [0, 0, 1, 1], [], []>} : vector<32x120xbf16>, vector<120x100xbf16>, vector<32x100xf32> -> vector<32x100xf32>
    %193 = arith.truncf %192 : vector<32x100xf32> to vector<32x100xbf16>
    %cst_79 = arith.constant 0.000000e+00 : f32
    %194 = vector.broadcast %cst_79 : f32 to vector<64x78xf32>
    %c0_80 = arith.constant 0 : index
    %c0_81 = arith.constant 0 : index
    %c0_82 = arith.constant 0 : index
    %195 = vector.load %arg9[%c0_80, %c0_81, %c0_82] : memref<9x64x32xbf16, #tpu.memory_space<vmem>>, vector<1x64x32xbf16>
    %196 = vector.shape_cast %195 : vector<1x64x32xbf16> to vector<64x32xbf16>
    %197 = vector.extract_strided_slice %193 {offsets = [0, 0], sizes = [32, 78], strides = [1, 1]} : vector<32x100xbf16> to vector<32x78xbf16>
    %cst_83 = arith.constant dense<0.000000e+00> : vector<64x78xf32>
    %198 = tpu.matmul %196, %197, %cst_83 {dimension_numbers = #tpu.dot_dimension_numbers<[1], [0], [0], [1], [0, 0, 1, 1], [], []>} : vector<64x32xbf16>, vector<32x78xbf16>, vector<64x78xf32> -> vector<64x78xf32>
    %199 = arith.addf %194, %198 : vector<64x78xf32>
    %c1_84 = arith.constant 1 : index
    %c0_85 = arith.constant 0 : index
    %c0_86 = arith.constant 0 : index
    %200 = vector.load %arg9[%c1_84, %c0_85, %c0_86] : memref<9x64x32xbf16, #tpu.memory_space<vmem>>, vector<1x64x32xbf16>
    %201 = vector.shape_cast %200 : vector<1x64x32xbf16> to vector<64x32xbf16>
    %202 = vector.extract_strided_slice %193 {offsets = [0, 1], sizes = [32, 78], strides = [1, 1]} : vector<32x100xbf16> to vector<32x78xbf16>
    %cst_87 = arith.constant dense<0.000000e+00> : vector<64x78xf32>
    %203 = tpu.matmul %201, %202, %cst_87 {dimension_numbers = #tpu.dot_dimension_numbers<[1], [0], [0], [1], [0, 0, 1, 1], [], []>} : vector<64x32xbf16>, vector<32x78xbf16>, vector<64x78xf32> -> vector<64x78xf32>
    %204 = arith.addf %199, %203 : vector<64x78xf32>
    %c2_88 = arith.constant 2 : index
    %c0_89 = arith.constant 0 : index
    %c0_90 = arith.constant 0 : index
    %205 = vector.load %arg9[%c2_88, %c0_89, %c0_90] : memref<9x64x32xbf16, #tpu.memory_space<vmem>>, vector<1x64x32xbf16>
    %206 = vector.shape_cast %205 : vector<1x64x32xbf16> to vector<64x32xbf16>
    %207 = vector.extract_strided_slice %193 {offsets = [0, 2], sizes = [32, 78], strides = [1, 1]} : vector<32x100xbf16> to vector<32x78xbf16>
    %cst_91 = arith.constant dense<0.000000e+00> : vector<64x78xf32>
    %208 = tpu.matmul %206, %207, %cst_91 {dimension_numbers = #tpu.dot_dimension_numbers<[1], [0], [0], [1], [0, 0, 1, 1], [], []>} : vector<64x32xbf16>, vector<32x78xbf16>, vector<64x78xf32> -> vector<64x78xf32>
    %209 = arith.addf %204, %208 : vector<64x78xf32>
    %c3_92 = arith.constant 3 : index
    %c0_93 = arith.constant 0 : index
    %c0_94 = arith.constant 0 : index
    %210 = vector.load %arg9[%c3_92, %c0_93, %c0_94] : memref<9x64x32xbf16, #tpu.memory_space<vmem>>, vector<1x64x32xbf16>
    %211 = vector.shape_cast %210 : vector<1x64x32xbf16> to vector<64x32xbf16>
    %212 = vector.extract_strided_slice %193 {offsets = [0, 10], sizes = [32, 78], strides = [1, 1]} : vector<32x100xbf16> to vector<32x78xbf16>
    %cst_95 = arith.constant dense<0.000000e+00> : vector<64x78xf32>
    %213 = tpu.matmul %211, %212, %cst_95 {dimension_numbers = #tpu.dot_dimension_numbers<[1], [0], [0], [1], [0, 0, 1, 1], [], []>} : vector<64x32xbf16>, vector<32x78xbf16>, vector<64x78xf32> -> vector<64x78xf32>
    %214 = arith.addf %209, %213 : vector<64x78xf32>
    %c4_96 = arith.constant 4 : index
    %c0_97 = arith.constant 0 : index
    %c0_98 = arith.constant 0 : index
    %215 = vector.load %arg9[%c4_96, %c0_97, %c0_98] : memref<9x64x32xbf16, #tpu.memory_space<vmem>>, vector<1x64x32xbf16>
    %216 = vector.shape_cast %215 : vector<1x64x32xbf16> to vector<64x32xbf16>
    %217 = vector.extract_strided_slice %193 {offsets = [0, 11], sizes = [32, 78], strides = [1, 1]} : vector<32x100xbf16> to vector<32x78xbf16>
    %cst_99 = arith.constant dense<0.000000e+00> : vector<64x78xf32>
    %218 = tpu.matmul %216, %217, %cst_99 {dimension_numbers = #tpu.dot_dimension_numbers<[1], [0], [0], [1], [0, 0, 1, 1], [], []>} : vector<64x32xbf16>, vector<32x78xbf16>, vector<64x78xf32> -> vector<64x78xf32>
    %219 = arith.addf %214, %218 : vector<64x78xf32>
    %c5_100 = arith.constant 5 : index
    %c0_101 = arith.constant 0 : index
    %c0_102 = arith.constant 0 : index
    %220 = vector.load %arg9[%c5_100, %c0_101, %c0_102] : memref<9x64x32xbf16, #tpu.memory_space<vmem>>, vector<1x64x32xbf16>
    %221 = vector.shape_cast %220 : vector<1x64x32xbf16> to vector<64x32xbf16>
    %222 = vector.extract_strided_slice %193 {offsets = [0, 12], sizes = [32, 78], strides = [1, 1]} : vector<32x100xbf16> to vector<32x78xbf16>
    %cst_103 = arith.constant dense<0.000000e+00> : vector<64x78xf32>
    %223 = tpu.matmul %221, %222, %cst_103 {dimension_numbers = #tpu.dot_dimension_numbers<[1], [0], [0], [1], [0, 0, 1, 1], [], []>} : vector<64x32xbf16>, vector<32x78xbf16>, vector<64x78xf32> -> vector<64x78xf32>
    %224 = arith.addf %219, %223 : vector<64x78xf32>
    %c6_104 = arith.constant 6 : index
    %c0_105 = arith.constant 0 : index
    %c0_106 = arith.constant 0 : index
    %225 = vector.load %arg9[%c6_104, %c0_105, %c0_106] : memref<9x64x32xbf16, #tpu.memory_space<vmem>>, vector<1x64x32xbf16>
    %226 = vector.shape_cast %225 : vector<1x64x32xbf16> to vector<64x32xbf16>
    %227 = vector.extract_strided_slice %193 {offsets = [0, 20], sizes = [32, 78], strides = [1, 1]} : vector<32x100xbf16> to vector<32x78xbf16>
    %cst_107 = arith.constant dense<0.000000e+00> : vector<64x78xf32>
    %228 = tpu.matmul %226, %227, %cst_107 {dimension_numbers = #tpu.dot_dimension_numbers<[1], [0], [0], [1], [0, 0, 1, 1], [], []>} : vector<64x32xbf16>, vector<32x78xbf16>, vector<64x78xf32> -> vector<64x78xf32>
    %229 = arith.addf %224, %228 : vector<64x78xf32>
    %c7_108 = arith.constant 7 : index
    %c0_109 = arith.constant 0 : index
    %c0_110 = arith.constant 0 : index
    %230 = vector.load %arg9[%c7_108, %c0_109, %c0_110] : memref<9x64x32xbf16, #tpu.memory_space<vmem>>, vector<1x64x32xbf16>
    %231 = vector.shape_cast %230 : vector<1x64x32xbf16> to vector<64x32xbf16>
    %232 = vector.extract_strided_slice %193 {offsets = [0, 21], sizes = [32, 78], strides = [1, 1]} : vector<32x100xbf16> to vector<32x78xbf16>
    %cst_111 = arith.constant dense<0.000000e+00> : vector<64x78xf32>
    %233 = tpu.matmul %231, %232, %cst_111 {dimension_numbers = #tpu.dot_dimension_numbers<[1], [0], [0], [1], [0, 0, 1, 1], [], []>} : vector<64x32xbf16>, vector<32x78xbf16>, vector<64x78xf32> -> vector<64x78xf32>
    %234 = arith.addf %229, %233 : vector<64x78xf32>
    %c8_112 = arith.constant 8 : index
    %c0_113 = arith.constant 0 : index
    %c0_114 = arith.constant 0 : index
    %235 = vector.load %arg9[%c8_112, %c0_113, %c0_114] : memref<9x64x32xbf16, #tpu.memory_space<vmem>>, vector<1x64x32xbf16>
    %236 = vector.shape_cast %235 : vector<1x64x32xbf16> to vector<64x32xbf16>
    %237 = vector.extract_strided_slice %193 {offsets = [0, 22], sizes = [32, 78], strides = [1, 1]} : vector<32x100xbf16> to vector<32x78xbf16>
    %cst_115 = arith.constant dense<0.000000e+00> : vector<64x78xf32>
    %238 = tpu.matmul %236, %237, %cst_115 {dimension_numbers = #tpu.dot_dimension_numbers<[1], [0], [0], [1], [0, 0, 1, 1], [], []>} : vector<64x32xbf16>, vector<32x78xbf16>, vector<64x78xf32> -> vector<64x78xf32>
    %239 = arith.addf %234, %238 : vector<64x78xf32>
    %c0_116 = arith.constant 0 : index
    %c0_117 = arith.constant 0 : index
    %240 = vector.load %arg10[%c0_116, %c0_117] : memref<64x1xf32, #tpu.memory_space<vmem>>, vector<64x1xf32>
    %241 = vector.broadcast %240 : vector<64x1xf32> to vector<64x78xf32>
    %242 = arith.addf %239, %241 : vector<64x78xf32>
    %cst_118 = arith.constant 1.000000e-01 : f32
    %243 = vector.broadcast %cst_118 : f32 to vector<64x78xf32>
    %244 = arith.mulf %243, %242 : vector<64x78xf32>
    %245 = arith.maximumf %242, %244 : vector<64x78xf32>
    %246 = arith.truncf %245 : vector<64x78xf32> to vector<64x78xbf16>
    %c0_119 = arith.constant 0 : index
    %c0_120 = arith.constant 0 : index
    %247 = vector.load %arg4[%c0_119, %c0_120] : memref<78x128xbf16, #tpu.memory_space<vmem>>, vector<78x128xbf16>
    %cst_121 = arith.constant dense<0.000000e+00> : vector<64x128xf32>
    %248 = tpu.matmul %246, %247, %cst_121 {dimension_numbers = #tpu.dot_dimension_numbers<[1], [0], [0], [1], [0, 0, 1, 1], [], []>} : vector<64x78xbf16>, vector<78x128xbf16>, vector<64x128xf32> -> vector<64x128xf32>
    %249 = arith.truncf %248 : vector<64x128xf32> to vector<64x128xbf16>
    %c0_122 = arith.constant 0 : index
    %c0_123 = arith.constant 0 : index
    %250 = vector.load %arg11[%c0_122, %c0_123] : memref<432x64xbf16, #tpu.memory_space<vmem>>, vector<432x64xbf16>
    %cst_124 = arith.constant dense<0.000000e+00> : vector<432x128xf32>
    %251 = tpu.matmul %250, %249, %cst_124 {dimension_numbers = #tpu.dot_dimension_numbers<[1], [0], [0], [1], [0, 0, 1, 1], [], []>} : vector<432x64xbf16>, vector<64x128xbf16>, vector<432x128xf32> -> vector<432x128xf32>
    %c0_125 = arith.constant 0 : index
    %c0_126 = arith.constant 0 : index
    %252 = vector.load %arg12[%c0_125, %c0_126] : memref<432x1xf32, #tpu.memory_space<vmem>>, vector<432x1xf32>
    %253 = vector.broadcast %252 : vector<432x1xf32> to vector<432x128xf32>
    %254 = arith.addf %251, %253 : vector<432x128xf32>
    %255 = arith.truncf %254 : vector<432x128xf32> to vector<432x128xbf16>
    %c0_127 = arith.constant 0 : index
    %c0_128 = arith.constant 0 : index
    %c0_129 = arith.constant 0 : index
    %256 = vector.load %arg13[%c0_127, %c0_128, %c0_129] : memref<1x432x128xbf16, #tpu.memory_space<vmem>>, vector<1x432x128xbf16>
    %257 = vector.shape_cast %256 : vector<1x432x128xbf16> to vector<432x128xbf16>
    %258 = vector.shape_cast %255 : vector<432x128xbf16> to vector<1x432x128xbf16>
    tpu.vector_store %arg13[%c0_127, %c0_128, %c0_129], %258 {strides = array<i32>} : memref<1x432x128xbf16, #tpu.memory_space<vmem>>, vector<1x432x128xbf16>,
    return
  }
  func.func @transform_0(%arg0: i32) -> (i32, i32, i32) {
    %c0_i32 = arith.constant 0 : i32
    %c0_i32_0 = arith.constant 0 : i32
    %c0_i32_1 = arith.constant 0 : i32
    return %arg0, %c0_i32, %c0_i32_0 : i32, i32, i32
  }
  func.func @transform_1(%arg0: i32) -> (i32, i32) {
    %c0_i32 = arith.constant 0 : i32
    %c0_i32_0 = arith.constant 0 : i32
    %c0_i32_1 = arith.constant 0 : i32
    return %c0_i32, %c0_i32_0 : i32, i32
  }
  func.func @transform_2(%arg0: i32) -> (i32, i32) {
    %c0_i32 = arith.constant 0 : i32
    %c0_i32_0 = arith.constant 0 : i32
    %c0_i32_1 = arith.constant 0 : i32
    return %c0_i32, %c0_i32_0 : i32, i32
  }
  func.func @transform_3(%arg0: i32) -> (i32, i32) {
    %c0_i32 = arith.constant 0 : i32
    %c0_i32_0 = arith.constant 0 : i32
    %c0_i32_1 = arith.constant 0 : i32
    return %c0_i32, %c0_i32_0 : i32, i32
  }
  func.func @transform_4(%arg0: i32) -> (i32, i32, i32) {
    %c0_i32 = arith.constant 0 : i32
    %c0_i32_0 = arith.constant 0 : i32
    %c0_i32_1 = arith.constant 0 : i32
    %c0_i32_2 = arith.constant 0 : i32
    return %c0_i32, %c0_i32_0, %c0_i32_1 : i32, i32, i32
  }
  func.func @transform_5(%arg0: i32) -> (i32, i32) {
    %c0_i32 = arith.constant 0 : i32
    %c0_i32_0 = arith.constant 0 : i32
    %c0_i32_1 = arith.constant 0 : i32
    return %c0_i32, %c0_i32_0 : i32, i32
  }
  func.func @transform_6(%arg0: i32) -> (i32, i32, i32) {
    %c0_i32 = arith.constant 0 : i32
    %c0_i32_0 = arith.constant 0 : i32
    %c0_i32_1 = arith.constant 0 : i32
    %c0_i32_2 = arith.constant 0 : i32
    return %c0_i32, %c0_i32_0, %c0_i32_1 : i32, i32, i32
  }
  func.func @transform_7(%arg0: i32) -> (i32, i32) {
    %c0_i32 = arith.constant 0 : i32
    %c0_i32_0 = arith.constant 0 : i32
    %c0_i32_1 = arith.constant 0 : i32
    return %c0_i32, %c0_i32_0 : i32, i32
  }
  func.func @transform_8(%arg0: i32) -> (i32, i32, i32) {
    %c0_i32 = arith.constant 0 : i32
    %c0_i32_0 = arith.constant 0 : i32
    %c0_i32_1 = arith.constant 0 : i32
    %c0_i32_2 = arith.constant 0 : i32
    return %c0_i32, %c0_i32_0, %c0_i32_1 : i32, i32, i32
  }
  func.func @transform_9(%arg0: i32) -> (i32, i32) {
    %c0_i32 = arith.constant 0 : i32
    %c0_i32_0 = arith.constant 0 : i32
    %c0_i32_1 = arith.constant 0 : i32
    return %c0_i32, %c0_i32_0 : i32, i32
  }
  func.func @transform_10(%arg0: i32) -> (i32, i32) {
    %c0_i32 = arith.constant 0 : i32
    %c0_i32_0 = arith.constant 0 : i32
    %c0_i32_1 = arith.constant 0 : i32
    return %c0_i32, %c0_i32_0 : i32, i32
  }
  func.func @transform_11(%arg0: i32) -> (i32, i32) {
    %c0_i32 = arith.constant 0 : i32
    %c0_i32_0 = arith.constant 0 : i32
    %c0_i32_1 = arith.constant 0 : i32
    return %c0_i32, %c0_i32_0 : i32, i32
  }
  func.func @transform_12(%arg0: i32) -> (i32, i32, i32) {
    %c0_i32 = arith.constant 0 : i32
    %c0_i32_0 = arith.constant 0 : i32
    %c0_i32_1 = arith.constant 0 : i32
    return %arg0, %c0_i32, %c0_i32_0 : i32, i32, i32
  }
}

</mosaic_0001>

<llo_original>
// kernel: yolov2_forward.1
$region0: #{yolov2_forward.1}
  #allocation0 [shape = 'u32[]', space=smem, size = 0x4, offset = 0x4, fixed_abs, tag = 'smem constant byte address 0x4 - core index']
  #allocation1 [shape = 'u32[144,128]{1,0:T(1,128)}', space=vmem, size = 0x12000, scoped, tag = 'internal scratch']
  %s0 = inlined_call_operand.vmem [shape: bf16[2,8,1156], index: 0, kind: input, shape index: {}]
  %s1 = inlined_call_operand.vmem [shape: bf16[496,324], index: 1, kind: input, shape index: {}]
  %s2 = inlined_call_operand.vmem [shape: bf16[120,100], index: 2, kind: input, shape index: {}]
  %s3 = inlined_call_operand.vmem [shape: bf16[78,128], index: 3, kind: input, shape index: {}]
  %s4 = inlined_call_operand.vmem [shape: bf16[9,16,8], index: 4, kind: input, shape index: {}]
  %s5 = inlined_call_operand.vmem [shape: f32[16,1], index: 5, kind: input, shape index: {}]
  %s6 = inlined_call_operand.vmem [shape: bf16[9,32,16], index: 6, kind: input, shape index: {}]
  %s7 = inlined_call_operand.vmem [shape: f32[32,1], index: 7, kind: input, shape index: {}]
  %s8 = inlined_call_operand.vmem [shape: bf16[9,64,32], index: 8, kind: input, shape index: {}]
  %s9 = inlined_call_operand.vmem [shape: f32[64,1], index: 9, kind: input, shape index: {}]
  %s10 = inlined_call_operand.vmem [shape: bf16[432,64], index: 10, kind: input, shape index: {}]
  %s11 = inlined_call_operand.vmem [shape: f32[432,1], index: 11, kind: input, shape index: {}]
  %s12 = inlined_call_operand.vmem [shape: bf16[2,432,128], index: 12, kind: output, shape index: {}]
  %s13 = sld [smem:[#allocation0]]
  $region81: #{yolov2_forward.1} parent=0
    _
  %s15 = ssub.s32 1, %s13
  %s16 = scalar_select 0, %s15, %s13
  loop: start=0, step=1, limit=4
  $region2: #{yolov2_forward.1} parent=0 // loop_pre_header
    _
  $region3: #{yolov2_forward.1} parent=0 // loop_header
    %s18 = sphi 0, %s22
    %p19 = scmp.ge.s32.totalorder %s18, 4
    %s28 = sphi 0, %s30
    %s31 = sphi 0, %s28
    %s32 = sphi 0, %s31
    %s48 = sphi 0, %s32
    %s52 = sphi 0, %s52
    %s54 = sphi 0, %s52
    %s55 = sphi 0, %s54
    %s69 = sphi 0, %s55
    %s73 = sphi 0, %s73
    %s75 = sphi 0, %s73
    %s76 = sphi 0, %s75
    %s90 = sphi 0, %s76
    %s94 = sphi 0, %s94
    %s96 = sphi 0, %s94
    %s97 = sphi 0, %s96
    %s111 = sphi 0, %s97
    %s115 = sphi 0, %s115
    %s117 = sphi 0, %s115
    %s118 = sphi 0, %s117
    %s132 = sphi 0, %s118
    %s136 = sphi 0, %s136
    %s138 = sphi 0, %s136
    %s139 = sphi 0, %s138
    %s153 = sphi 0, %s139
    %s157 = sphi 0, %s157
    %s159 = sphi 0, %s157
    %s160 = sphi 0, %s159
    %s174 = sphi 0, %s160
    %s178 = sphi 0, %s178
    %s180 = sphi 0, %s178
    %s181 = sphi 0, %s180
    %s195 = sphi 0, %s181
    %s199 = sphi 0, %s199
    %s201 = sphi 0, %s199
    %s202 = sphi 0, %s201
    %s216 = sphi 0, %s202
    %s220 = sphi 0, %s220
    %s222 = sphi 0, %s220
    %s223 = sphi 0, %s222
    %s237 = sphi 0, %s223
    %s241 = sphi 0, %s241
    %s243 = sphi 0, %s241
    %s244 = sphi 0, %s243
    %s258 = sphi 0, %s244
    %s262 = sphi 0, %s262
    %s264 = sphi 0, %s262
    %s265 = sphi 0, %s264
    %s279 = sphi 0, %s265
    %s285 = sphi 0, %s287
    %s288 = sphi 0, %s285
    %s289 = sphi 0, %s288
    %s305 = sphi 0, %s289
  $region4: #{yolov2_forward.1} parent=0 // loop_header_branch
    %21 = sbr.rel (%p19) target = $region8
  $region5: #{yolov2_forward.1} parent=0 // loop_body
    %s23 = ssub.s32 %s18, 1
    %s24 = ssub.s32 %s18, 2
    %s25 = sadd.s32 %s18, 1
    %s26 = ssub.s32 %s18, %s25
    %p27 = scmp.eq.s32.totalorder %s26, 0
    %s29 = sadd.s32 %s28, 1
    %s30 = scalar_select %p27, %s28, %s29
    %p33 = pneg %p27
    %p34 = scmp.eq.s32.totalorder %s18, 1
    %p35 = por %p33, %p34
    %p36 = scmp.ne.s32.totalorder %s28, %s31
    %p37 = scmp.eq.s32.totalorder %s18, 0
    %p38 = por %p36, %p37
    %p39 = scmp.ne.s32.totalorder %s28, %s31
    %p40 = scmp.eq.s32.totalorder %s23, 1
    %p41 = por %p39, %p40
    %p42 = scmp.ne.s32.totalorder %s31, %s32
    %p43 = scmp.eq.s32.totalorder %s23, 0
    %p44 = por %p42, %p43
    %p45 = scmp.ne.s32.totalorder %s31, %s32
    %p46 = scmp.eq.s32.totalorder %s24, 1
    %p47 = por %p45, %p46
    %p49 = scmp.ne.s32.totalorder %s32, %s48
    %p50 = scmp.eq.s32.totalorder %s24, 0
    %p51 = por %p49, %p50
    %s53 = sadd.s32 %s52, 1
    %p56 = scmp.eq.s32.totalorder %s18, 1
    %p57 = scmp.ne.s32.totalorder %s52, %s54
    %p58 = scmp.eq.s32.totalorder %s18, 0
    %p59 = por %p57, %p58
    %p60 = scmp.ne.s32.totalorder %s52, %s54
    %p61 = scmp.eq.s32.totalorder %s23, 1
    %p62 = por %p60, %p61
    %p63 = scmp.ne.s32.totalorder %s54, %s55
    %p64 = scmp.eq.s32.totalorder %s23, 0
    %p65 = por %p63, %p64
    %p66 = scmp.ne.s32.totalorder %s54, %s55
    %p67 = scmp.eq.s32.totalorder %s24, 1
    %p68 = por %p66, %p67
    %p70 = scmp.ne.s32.totalorder %s55, %s69
    %p71 = scmp.eq.s32.totalorder %s24, 0
    %p72 = por %p70, %p71
    %s74 = sadd.s32 %s73, 1
    %p77 = scmp.eq.s32.totalorder %s18, 1
    %p78 = scmp.ne.s32.totalorder %s73, %s75
    %p79 = scmp.eq.s32.totalorder %s18, 0
    %p80 = por %p78, %p79
    %p81 = scmp.ne.s32.totalorder %s73, %s75
    %p82 = scmp.eq.s32.totalorder %s23, 1
    %p83 = por %p81, %p82
    %p84 = scmp.ne.s32.totalorder %s75, %s76
    %p85 = scmp.eq.s32.totalorder %s23, 0
    %p86 = por %p84, %p85
    %p87 = scmp.ne.s32.totalorder %s75, %s76
    %p88 = scmp.eq.s32.totalorder %s24, 1
    %p89 = por %p87, %p88
    %p91 = scmp.ne.s32.totalorder %s76, %s90
    %p92 = scmp.eq.s32.totalorder %s24, 0
    %p93 = por %p91, %p92
    %s95 = sadd.s32 %s94, 1
    %p98 = scmp.eq.s32.totalorder %s18, 1
    %p99 = scmp.ne.s32.totalorder %s94, %s96
    %p100 = scmp.eq.s32.totalorder %s18, 0
    %p101 = por %p99, %p100
    %p102 = scmp.ne.s32.totalorder %s94, %s96
    %p103 = scmp.eq.s32.totalorder %s23, 1
    %p104 = por %p102, %p103
    %p105 = scmp.ne.s32.totalorder %s96, %s97
    %p106 = scmp.eq.s32.totalorder %s23, 0
    %p107 = por %p105, %p106
    %p108 = scmp.ne.s32.totalorder %s96, %s97
    %p109 = scmp.eq.s32.totalorder %s24, 1
    %p110 = por %p108, %p109
    %p112 = scmp.ne.s32.totalorder %s97, %s111
    %p113 = scmp.eq.s32.totalorder %s24, 0
    %p114 = por %p112, %p113
    %s116 = sadd.s32 %s115, 1
    %p119 = scmp.eq.s32.totalorder %s18, 1
    %p120 = scmp.ne.s32.totalorder %s115, %s117
    %p121 = scmp.eq.s32.totalorder %s18, 0
    %p122 = por %p120, %p121
    %p123 = scmp.ne.s32.totalorder %s115, %s117
    %p124 = scmp.eq.s32.totalorder %s23, 1
    %p125 = por %p123, %p124
    %p126 = scmp.ne.s32.totalorder %s117, %s118
    %p127 = scmp.eq.s32.totalorder %s23, 0
    %p128 = por %p126, %p127
    %p129 = scmp.ne.s32.totalorder %s117, %s118
    %p130 = scmp.eq.s32.totalorder %s24, 1
    %p131 = por %p129, %p130
    %p133 = scmp.ne.s32.totalorder %s118, %s132
    %p134 = scmp.eq.s32.totalorder %s24, 0
    %p135 = por %p133, %p134
    %s137 = sadd.s32 %s136, 1
    %p140 = scmp.eq.s32.totalorder %s18, 1
    %p141 = scmp.ne.s32.totalorder %s136, %s138
    %p142 = scmp.eq.s32.totalorder %s18, 0
    %p143 = por %p141, %p142
    %p144 = scmp.ne.s32.totalorder %s136, %s138
    %p145 = scmp.eq.s32.totalorder %s23, 1
    %p146 = por %p144, %p145
    %p147 = scmp.ne.s32.totalorder %s138, %s139
    %p148 = scmp.eq.s32.totalorder %s23, 0
    %p149 = por %p147, %p148
    %p150 = scmp.ne.s32.totalorder %s138, %s139
    %p151 = scmp.eq.s32.totalorder %s24, 1
    %p152 = por %p150, %p151
    %p154 = scmp.ne.s32.totalorder %s139, %s153
    %p155 = scmp.eq.s32.totalorder %s24, 0
    %p156 = por %p154, %p155
    %s158 = sadd.s32 %s157, 1
    %p161 = scmp.eq.s32.totalorder %s18, 1
    %p162 = scmp.ne.s32.totalorder %s157, %s159
    %p163 = scmp.eq.s32.totalorder %s18, 0
    %p164 = por %p162, %p163
    %p165 = scmp.ne.s32.totalorder %s157, %s159
    %p166 = scmp.eq.s32.totalorder %s23, 1
    %p167 = por %p165, %p166
    %p168 = scmp.ne.s32.totalorder %s159, %s160
    %p169 = scmp.eq.s32.totalorder %s23, 0
    %p170 = por %p168, %p169
    %p171 = scmp.ne.s32.totalorder %s159, %s160
    %p172 = scmp.eq.s32.totalorder %s24, 1
    %p173 = por %p171, %p172
    %p175 = scmp.ne.s32.totalorder %s160, %s174
    %p176 = scmp.eq.s32.totalorder %s24, 0
    %p177 = por %p175, %p176
    %s179 = sadd.s32 %s178, 1
    %p182 = scmp.eq.s32.totalorder %s18, 1
    %p183 = scmp.ne.s32.totalorder %s178, %s180
    %p184 = scmp.eq.s32.totalorder %s18, 0
    %p185 = por %p183, %p184
    %p186 = scmp.ne.s32.totalorder %s178, %s180
    %p187 = scmp.eq.s32.totalorder %s23, 1
    %p188 = por %p186, %p187
    %p189 = scmp.ne.s32.totalorder %s180, %s181
    %p190 = scmp.eq.s32.totalorder %s23, 0
    %p191 = por %p189, %p190
    %p192 = scmp.ne.s32.totalorder %s180, %s181
    %p193 = scmp.eq.s32.totalorder %s24, 1
    %p194 = por %p192, %p193
    %p196 = scmp.ne.s32.totalorder %s181, %s195
    %p197 = scmp.eq.s32.totalorder %s24, 0
    %p198 = por %p196, %p197
    %s200 = sadd.s32 %s199, 1
    %p203 = scmp.eq.s32.totalorder %s18, 1
    %p204 = scmp.ne.s32.totalorder %s199, %s201
    %p205 = scmp.eq.s32.totalorder %s18, 0
    %p206 = por %p204, %p205
    %p207 = scmp.ne.s32.totalorder %s199, %s201
    %p208 = scmp.eq.s32.totalorder %s23, 1
    %p209 = por %p207, %p208
    %p210 = scmp.ne.s32.totalorder %s201, %s202
    %p211 = scmp.eq.s32.totalorder %s23, 0
    %p212 = por %p210, %p211
    %p213 = scmp.ne.s32.totalorder %s201, %s202
    %p214 = scmp.eq.s32.totalorder %s24, 1
    %p215 = por %p213, %p214
    %p217 = scmp.ne.s32.totalorder %s202, %s216
    %p218 = scmp.eq.s32.totalorder %s24, 0
    %p219 = por %p217, %p218
    %s221 = sadd.s32 %s220, 1
    %p224 = scmp.eq.s32.totalorder %s18, 1
    %p225 = scmp.ne.s32.totalorder %s220, %s222
    %p226 = scmp.eq.s32.totalorder %s18, 0
    %p227 = por %p225, %p226
    %p228 = scmp.ne.s32.totalorder %s220, %s222
    %p229 = scmp.eq.s32.totalorder %s23, 1
    %p230 = por %p228, %p229
    %p231 = scmp.ne.s32.totalorder %s222, %s223
    %p232 = scmp.eq.s32.totalorder %s23, 0
    %p233 = por %p231, %p232
    %p234 = scmp.ne.s32.totalorder %s222, %s223
    %p235 = scmp.eq.s32.totalorder %s24, 1
    %p236 = por %p234, %p235
    %p238 = scmp.ne.s32.totalorder %s223, %s237
    %p239 = scmp.eq.s32.totalorder %s24, 0
    %p240 = por %p238, %p239
    %s242 = sadd.s32 %s241, 1
    %p245 = scmp.eq.s32.totalorder %s18, 1
    %p246 = scmp.ne.s32.totalorder %s241, %s243
    %p247 = scmp.eq.s32.totalorder %s18, 0
    %p248 = por %p246, %p247
    %p249 = scmp.ne.s32.totalorder %s241, %s243
    %p250 = scmp.eq.s32.totalorder %s23, 1
    %p251 = por %p249, %p250
    %p252 = scmp.ne.s32.totalorder %s243, %s244
    %p253 = scmp.eq.s32.totalorder %s23, 0
    %p254 = por %p252, %p253
    %p255 = scmp.ne.s32.totalorder %s243, %s244
    %p256 = scmp.eq.s32.totalorder %s24, 1
    %p257 = por %p255, %p256
    %p259 = scmp.ne.s32.totalorder %s244, %s258
    %p260 = scmp.eq.s32.totalorder %s24, 0
    %p261 = por %p259, %p260
    %s263 = sadd.s32 %s262, 1
    %p266 = scmp.eq.s32.totalorder %s18, 1
    %p267 = scmp.ne.s32.totalorder %s262, %s264
    %p268 = scmp.eq.s32.totalorder %s18, 0
    %p269 = por %p267, %p268
    %p270 = scmp.ne.s32.totalorder %s262, %s264
    %p271 = scmp.eq.s32.totalorder %s23, 1
    %p272 = por %p270, %p271
    %p273 = scmp.ne.s32.totalorder %s264, %s265
    %p274 = scmp.eq.s32.totalorder %s23, 0
    %p275 = por %p273, %p274
    %p276 = scmp.ne.s32.totalorder %s264, %s265
    %p277 = scmp.eq.s32.totalorder %s24, 1
    %p278 = por %p276, %p277
    %p280 = scmp.ne.s32.totalorder %s265, %s279
    %p281 = scmp.eq.s32.totalorder %s24, 0
    %p282 = por %p280, %p281
    %s283 = ssub.s32 %s18, %s25
    %p284 = scmp.eq.s32.totalorder %s283, 0
    %s286 = sadd.s32 %s285, 1
    %s287 = scalar_select %p284, %s285, %s286
    %p290 = pneg %p284
    %p291 = scmp.eq.s32.totalorder %s18, 1
    %p292 = por %p290, %p291
    %p293 = scmp.ne.s32.totalorder %s285, %s288
    %p294 = scmp.eq.s32.totalorder %s18, 0
    %p295 = por %p293, %p294
    %p296 = scmp.ne.s32.totalorder %s285, %s288
    %p297 = scmp.eq.s32.totalorder %s23, 1
    %p298 = por %p296, %p297
    %p299 = scmp.ne.s32.totalorder %s288, %s289
    %p300 = scmp.eq.s32.totalorder %s23, 0
    %p301 = por %p299, %p300
    %p302 = scmp.ne.s32.totalorder %s288, %s289
    %p303 = scmp.eq.s32.totalorder %s24, 1
    %p304 = por %p302, %p303
    %p306 = scmp.ne.s32.totalorder %s289, %s305
    %p307 = scmp.eq.s32.totalorder %s24, 0
    %p308 = por %p306, %p307
    %p309 = scmp.le.s32.totalorder 1, %s18
    %p310 = scmp.lt.s32.totalorder %s18, 3
    %p311 = pnand %p309, %p310
    %p312 = pneg %p311
    // Predicated region
    $region9: #{yolov2_forward.1} parent=5 // pred_check
      _
    $region10: #{yolov2_forward.1} parent=5 // pred_check_branch
      %314 = sbr.rel (%p311) target = $region12
    $region11: #{yolov2_forward.1} parent=5 // pred_region
      %s315 = ssub.s32 %s18, 1
      // Predicated region
      $region13: #{yolov2_forward.1} parent=11 // pred_check
        %p316 = pneg %p65
      $region14: #{yolov2_forward.1} parent=11 // pred_check_branch
        %318 = sbr.rel (%p316) target = $region16
      $region15: #{yolov2_forward.1} parent=11 // pred_region
        _
      $region16: #{yolov2_forward.1} parent=11 // pred_fallthru
        _
      // Predicated region
      $region17: #{yolov2_forward.1} parent=11 // pred_check
        %p319 = pneg %p86
      $region18: #{yolov2_forward.1} parent=11 // pred_check_branch
        %321 = sbr.rel (%p319) target = $region20
      $region19: #{yolov2_forward.1} parent=11 // pred_region
        _
      $region20: #{yolov2_forward.1} parent=11 // pred_fallthru
        _
      // Predicated region
      $region21: #{yolov2_forward.1} parent=11 // pred_check
        %p322 = pneg %p107
      $region22: #{yolov2_forward.1} parent=11 // pred_check_branch
        %324 = sbr.rel (%p322) target = $region24
      $region23: #{yolov2_forward.1} parent=11 // pred_region
        _
      $region24: #{yolov2_forward.1} parent=11 // pred_fallthru
        _
      // Predicated region
      $region25: #{yolov2_forward.1} parent=11 // pred_check
        %p325 = pneg %p128
      $region26: #{yolov2_forward.1} parent=11 // pred_check_branch
        %327 = sbr.rel (%p325) target = $region28
      $region27: #{yolov2_forward.1} parent=11 // pred_region
        _
      $region28: #{yolov2_forward.1} parent=11 // pred_fallthru
        _
      // Predicated region
      $region29: #{yolov2_forward.1} parent=11 // pred_check
        %p328 = pneg %p149
      $region30: #{yolov2_forward.1} parent=11 // pred_check_branch
        %330 = sbr.rel (%p328) target = $region32
      $region31: #{yolov2_forward.1} parent=11 // pred_region
        _
      $region32: #{yolov2_forward.1} parent=11 // pred_fallthru
        _
      // Predicated region
      $region33: #{yolov2_forward.1} parent=11 // pred_check
        %p331 = pneg %p170
      $region34: #{yolov2_forward.1} parent=11 // pred_check_branch
        %333 = sbr.rel (%p331) target = $region36
      $region35: #{yolov2_forward.1} parent=11 // pred_region
        _
      $region36: #{yolov2_forward.1} parent=11 // pred_fallthru
        _
      // Predicated region
      $region37: #{yolov2_forward.1} parent=11 // pred_check
        %p334 = pneg %p191
      $region38: #{yolov2_forward.1} parent=11 // pred_check_branch
        %336 = sbr.rel (%p334) target = $region40
      $region39: #{yolov2_forward.1} parent=11 // pred_region
        _
      $region40: #{yolov2_forward.1} parent=11 // pred_fallthru
        _
      // Predicated region
      $region41: #{yolov2_forward.1} parent=11 // pred_check
        %p337 = pneg %p212
      $region42: #{yolov2_forward.1} parent=11 // pred_check_branch
        %339 = sbr.rel (%p337) target = $region44
      $region43: #{yolov2_forward.1} parent=11 // pred_region
        _
      $region44: #{yolov2_forward.1} parent=11 // pred_fallthru
        _
      // Predicated region
      $region45: #{yolov2_forward.1} parent=11 // pred_check
        %p340 = pneg %p233
      $region46: #{yolov2_forward.1} parent=11 // pred_check_branch
        %342 = sbr.rel (%p340) target = $region48
      $region47: #{yolov2_forward.1} parent=11 // pred_region
        _
      $region48: #{yolov2_forward.1} parent=11 // pred_fallthru
        _
      // Predicated region
      $region49: #{yolov2_forward.1} parent=11 // pred_check
        %p343 = pneg %p254
      $region50: #{yolov2_forward.1} parent=11 // pred_check_branch
        %345 = sbr.rel (%p343) target = $region52
      $region51: #{yolov2_forward.1} parent=11 // pred_region
        _
      $region52: #{yolov2_forward.1} parent=11 // pred_fallthru
        _
      // Predicated region
      $region53: #{yolov2_forward.1} parent=11 // pred_check
        %p346 = pneg %p275
      $region54: #{yolov2_forward.1} parent=11 // pred_check_branch
        %348 = sbr.rel (%p346) target = $region56
      $region55: #{yolov2_forward.1} parent=11 // pred_region
        _
      $region56: #{yolov2_forward.1} parent=11 // pred_fallthru
        _
    $region12: #{yolov2_forward.1} parent=5 // pred_fallthru
      _
    %p349 = scmp.lt.s32.totalorder %s18, 2
    // Predicated region
    $region57: #{yolov2_forward.1} parent=5 // pred_check
      %p350 = pneg %p349
    $region58: #{yolov2_forward.1} parent=5 // pred_check_branch
      %352 = sbr.rel (%p350) target = $region60
    $region59: #{yolov2_forward.1} parent=5 // pred_region
      // Predicated region
      $region61: #{yolov2_forward.1} parent=59 // pred_check
        %p353 = pneg %p38
      $region62: #{yolov2_forward.1} parent=59 // pred_check_branch
        %355 = sbr.rel (%p353) target = $region64
      $region63: #{yolov2_forward.1} parent=59 // pred_region
        %p356 = scmp.lt.s32.totalorder %s18, 1
        %s357 = scalar_select %p356, %s18, 1
        %s358 = smul.addr %s357, 10
        %s359 = smul.addr %s358, 4
        %s360 = scalar_lea.vmem %s0, %s359
      $region64: #{yolov2_forward.1} parent=59 // pred_fallthru
        _
    $region60: #{yolov2_forward.1} parent=5 // pred_fallthru
      _
    %p361 = scmp.le.s32.totalorder 1, %s18
    %p362 = scmp.lt.s32.totalorder %s18, 3
    %p363 = pnand %p361, %p362
    %p364 = pneg %p363
    // Predicated region
    $region65: #{yolov2_forward.1} parent=5 // pred_check
      _
    $region66: #{yolov2_forward.1} parent=5 // pred_check_branch
      %366 = sbr.rel (%p363) target = $region68
    $region67: #{yolov2_forward.1} parent=5 // pred_region
      %s367 = ssub.s32 %s18, 1
      %p368 = scmp.lt.s32.totalorder %s23, 1
      %s369 = scalar_select %p368, %s23, 1
      %s370 = smul.addr %s369, 10
      %s371 = smul.addr %s370, 4
      %s372 = scalar_lea.vmem %s0, %s371
      %p373 = pneg %p44
      %p374 = pneg %p41
      %p375 = pneg %p65
      %p376 = pneg %p62
      %p377 = pneg %p86
      %p378 = pneg %p83
      %p379 = pneg %p107
      %p380 = pneg %p104
      %p381 = pneg %p128
      %p382 = pneg %p125
      %p383 = pneg %p149
      %p384 = pneg %p146
      %p385 = pneg %p170
      %p386 = pneg %p167
      %p387 = pneg %p191
      %p388 = pneg %p188
      %p389 = pneg %p212
      %p390 = pneg %p209
      %p391 = pneg %p233
      %p392 = pneg %p230
      %p393 = pneg %p254
      %p394 = pneg %p251
      %p395 = pneg %p275
      %p396 = pneg %p272
      %p397 = pneg %p301
      %p398 = pneg %p298
      %p399 = scmp.lt.s32.totalorder %s23, 1
      %s400 = scalar_select %p399, %s23, 1
      %s401 = smul.addr %s400, 54
      %s402 = smul.addr %s401, 4
      %s403 = scalar_lea.vmem %s12, %s402
      %p404 = scmp.lt.s32.totalorder %s23, 1
      %s405 = scalar_select %p404, %s23, 1
      %s406 = smul.addr %s405, 10
      %s407 = smul.addr %s406, 4
      %s408 = scalar_lea.vmem %s0, %s407
      %p409 = scmp.lt.s32.totalorder %s23, 1
      %s410 = scalar_select %p409, %s23, 1
      %s411 = smul.addr %s410, 54
      %s412 = smul.addr %s411, 4
      %s413 = scalar_lea.vmem %s12, %s412
      %v415 = vld [vmem:[%s408] sm:$0xff]
      %v416 = vld [vmem:[%s408 + $0x8] sm:$0xff]
      %v417 = vld [vmem:[%s408 + $0x10] sm:$0xff]
      %v418 = vld [vmem:[%s408 + $0x18] sm:$0xff]
      %v419 = vld [vmem:[%s408 + $0x20] sm:$0xff]
      %v420 = vld [vmem:[%s4] sm:$0xf]
      %v421 = vld [vmem:[%s4 + $0x4] sm:$0xf]
      %s422 = scalar_lea.vmem %s4, 8
      %v423 = vld [vmem:[%s422] sm:$0xf]
      %v424 = vld [vmem:[%s422 + $0x4] sm:$0xf]
      %v427 = vunpack.c.l.b16 %v423
      %v428 = vunpack.c.l.b16 %v424
      %v429 = vpack.c.b16 %v428, %v427
      %v435 = vunpack.c.l.b16 %v415
      %v436 = vunpack.c.h.b16 %v415
      %v437 = vunpack.c.l.b16 %v416
      %v438 = vunpack.c.h.b16 %v416
      %v439 = vunpack.c.l.b16 %v417
      %v440 = vunpack.c.h.b16 %v417
      %v441 = vunpack.c.l.b16 %v418
      %v442 = vunpack.c.h.b16 %v418
      %v443 = vunpack.c.l.b16 %v419
      %v444 = vpack.c.b16 %v435, %v435
      %v445 = vpack.c.b16 %v436, %v436
      %v446 = vpack.c.b16 %v437, %v437
      %v447 = vpack.c.b16 %v438, %v438
      %v448 = vpack.c.b16 %v439, %v439
      %v449 = vpack.c.b16 %v440, %v440
      %v450 = vpack.c.b16 %v441, %v441
      %v451 = vpack.c.b16 %v442, %v442
      %v452 = vpack.c.b16 %v443, %v443
      %453 = vrot.lane.b32.xlu0 %v444, 127
      %v454 = vpop.permute.xlu0 %453
      %455 = vrot.lane.b32.xlu0 %v445, 127
      %v456 = vpop.permute.xlu0 %455
      %457 = vrot.lane.b32.xlu0 %v446, 127
      %v458 = vpop.permute.xlu0 %457
      %459 = vrot.lane.b32.xlu0 %v447, 127
      %v460 = vpop.permute.xlu0 %459
      %461 = vrot.lane.b32.xlu0 %v448, 127
      %v462 = vpop.permute.xlu0 %461
      %463 = vrot.lane.b32.xlu0 %v449, 127
      %v464 = vpop.permute.xlu0 %463
      %465 = vrot.lane.b32.xlu0 %v450, 127
      %v466 = vpop.permute.xlu0 %465
      %467 = vrot.lane.b32.xlu0 %v451, 127
      %v468 = vpop.permute.xlu0 %467
      %469 = vrot.lane.b32.xlu0 %v452, 127
      %v470 = vpop.permute.xlu0 %469
      %vm471 = vcmask 1039360
      %v472 = vsel %vm471, %v454, %v456
      %v473 = vsel %vm471, %v456, %v458
      %v474 = vsel %vm471, %v458, %v460
      %v475 = vsel %vm471, %v460, %v462
      %v476 = vsel %vm471, %v462, %v464
      %v477 = vsel %vm471, %v464, %v466
      %v478 = vsel %vm471, %v466, %v468
      %v479 = vsel %vm471, %v468, %v470
      %vm480 = vcmask 64512
      %v482 = vsel %vm480, %v429, 0
      %vm484 = vcmask 1043456
      %v486 = vsel %vm484, %v472, 0
      %v489 = vsel %vm484, %v473, 0
      %v492 = vsel %vm484, %v474, 0
      %v495 = vsel %vm484, %v475, 0
      %v498 = vsel %vm484, %v476, 0
      %v501 = vsel %vm484, %v477, 0
      %v504 = vsel %vm484, %v478, 0
      %v507 = vsel %vm484, %v479, 0
      %v510 = vsel %vm484, %v470, 0
      %512 = vmatprep.subr.bf16.mxu0 %v489
      %513 = vmatpush1.bf16.msra.mxu0 %v486
      %514 = vmatprep.subr.bf16.mxu0 0
      %515 = vmatpush1.bf16.msra.mxu0 0
      %516 = vmatprep.subr.bf16.mxu0 0
      %517 = vmatpush1.bf16.msra.mxu0 0
      %518 = vmatprep.subr.bf16.mxu0 0
      %519 = vmatpush1.bf16.msra.mxu0 0
      %520 = vmatprep.subr.bf16.mxu0 0
      %521 = vmatpush1.bf16.msra.mxu0 0
      %522 = vmatprep.subr.bf16.mxu0 0
      %523 = vmatpush1.bf16.msra.mxu0 0
      %524 = vmatprep.subr.bf16.mxu0 0
      %525 = vmatpush1.bf16.msra.mxu0 0
      %526 = vmatprep.subr.bf16.mxu0 0
      %527 = vmatpush1.bf16.msra.mxu0 0
      %528 = vmatprep.subr.bf16.mxu0 0
      %529 = vmatpush1.bf16.msra.mxu0 0
      %530 = vmatprep.subr.bf16.mxu0 0
      %531 = vmatpush1.bf16.msra.mxu0 0
      %532 = vmatprep.subr.bf16.mxu0 0
      %533 = vmatpush1.bf16.msra.mxu0 0
      %534 = vmatprep.subr.bf16.mxu0 0
      %535 = vmatpush1.bf16.msra.mxu0 0
      %536 = vmatprep.subr.bf16.mxu0 0
      %537 = vmatpush1.bf16.msra.mxu0 0
      %538 = vmatprep.subr.bf16.mxu0 0
      %539 = vmatpush1.bf16.msra.mxu0 0
      %540 = vmatprep.subr.bf16.mxu0 0
      %541 = vmatpush1.bf16.msra.mxu0 0
      %542 = vmatprep.subr.bf16.mxu0 0
      %543 = vmatpush1.bf16.msra.mxu0 0
      %544 = vmatprep.mubr.bf16.mxu0 0
      %545 = vmatmul.mubr.bf16.gmra.mrb[0].mxu0 %v482
      %v546 = vpop.f32.mrb[0].mxu0
      %v547 = vadd.f32 0.0, %v546
      %v548 = vpop.f32.mrb[0].mxu0
      %v549 = vadd.f32 0.0, %v548
      %v550 = vpop.f32.mrb[0].mxu0
      %v551 = vadd.f32 0.0, %v550
      %v552 = vpop.f32.mrb[0].mxu0
      %v553 = vadd.f32 0.0, %v552
      %554 = vdwg.mxu0
      %555 = vmatprep.subr.bf16.mxu0 %v495
      %556 = vmatpush1.bf16.msra.mxu0 %v492
      %557 = vmatprep.subr.bf16.mxu0 0
      %558 = vmatpush1.bf16.msra.mxu0 0
      %559 = vmatprep.subr.bf16.mxu0 0
      %560 = vmatpush1.bf16.msra.mxu0 0
      %561 = vmatprep.subr.bf16.mxu0 0
      %562 = vmatpush1.bf16.msra.mxu0 0
      %563 = vmatprep.subr.bf16.mxu0 0
      %564 = vmatpush1.bf16.msra.mxu0 0
      %565 = vmatprep.subr.bf16.mxu0 0
      %566 = vmatpush1.bf16.msra.mxu0 0
      %567 = vmatprep.subr.bf16.mxu0 0
      %568 = vmatpush1.bf16.msra.mxu0 0
      %569 = vmatprep.subr.bf16.mxu0 0
      %570 = vmatpush1.bf16.msra.mxu0 0
      %571 = vmatprep.subr.bf16.mxu0 0
      %572 = vmatpush1.bf16.msra.mxu0 0
      %573 = vmatprep.subr.bf16.mxu0 0
      %574 = vmatpush1.bf16.msra.mxu0 0
      %575 = vmatprep.subr.bf16.mxu0 0
      %576 = vmatpush1.bf16.msra.mxu0 0
      %577 = vmatprep.subr.bf16.mxu0 0
      %578 = vmatpush1.bf16.msra.mxu0 0
      %579 = vmatprep.subr.bf16.mxu0 0
      %580 = vmatpush1.bf16.msra.mxu0 0
      %581 = vmatprep.subr.bf16.mxu0 0
      %582 = vmatpush1.bf16.msra.mxu0 0
      %583 = vmatprep.subr.bf16.mxu0 0
      %584 = vmatpush1.bf16.msra.mxu0 0
      %585 = vmatprep.subr.bf16.mxu0 0
      %586 = vmatpush1.bf16.msra.mxu0 0
      %587 = vmatprep.mubr.bf16.mxu0 0
      %588 = vmatmul.mubr.bf16.gmra.mrb[0].mxu0 %v482
      %v589 = vpop.f32.mrb[0].mxu0
      %v590 = vadd.f32 0.0, %v589
      %v591 = vpop.f32.mrb[0].mxu0
      %v592 = vadd.f32 0.0, %v591
      %v593 = vpop.f32.mrb[0].mxu0
      %v594 = vadd.f32 0.0, %v593
      %v595 = vpop.f32.mrb[0].mxu0
      %v596 = vadd.f32 0.0, %v595
      %597 = vdwg.mxu0
      %598 = vmatprep.subr.bf16.mxu0 %v501
      %599 = vmatpush1.bf16.msra.mxu0 %v498
      %600 = vmatprep.subr.bf16.mxu0 0
      %601 = vmatpush1.bf16.msra.mxu0 0
      %602 = vmatprep.subr.bf16.mxu0 0
      %603 = vmatpush1.bf16.msra.mxu0 0
      %604 = vmatprep.subr.bf16.mxu0 0
      %605 = vmatpush1.bf16.msra.mxu0 0
      %606 = vmatprep.subr.bf16.mxu0 0
      %607 = vmatpush1.bf16.msra.mxu0 0
      %608 = vmatprep.subr.bf16.mxu0 0
      %609 = vmatpush1.bf16.msra.mxu0 0
      %610 = vmatprep.subr.bf16.mxu0 0
      %611 = vmatpush1.bf16.msra.mxu0 0
      %612 = vmatprep.subr.bf16.mxu0 0
      %613 = vmatpush1.bf16.msra.mxu0 0
      %614 = vmatprep.subr.bf16.mxu0 0
      %615 = vmatpush1.bf16.msra.mxu0 0
      %616 = vmatprep.subr.bf16.mxu0 0
      %617 = vmatpush1.bf16.msra.mxu0 0
      %618 = vmatprep.subr.bf16.mxu0 0
      %619 = vmatpush1.bf16.msra.mxu0 0
      %620 = vmatprep.subr.bf16.mxu0 0
      %621 = vmatpush1.bf16.msra.mxu0 0
      %622 = vmatprep.subr.bf16.mxu0 0
      %623 = vmatpush1.bf16.msra.mxu0 0
      %624 = vmatprep.subr.bf16.mxu0 0
      %625 = vmatpush1.bf16.msra.mxu0 0
      %626 = vmatprep.subr.bf16.mxu0 0
      %627 = vmatpush1.bf16.msra.mxu0 0
      %628 = vmatprep.subr.bf16.mxu0 0
      %629 = vmatpush1.bf16.msra.mxu0 0
      %630 = vmatprep.mubr.bf16.mxu0 0
      %631 = vmatmul.mubr.bf16.gmra.mrb[0].mxu0 %v482
      %v632 = vpop.f32.mrb[0].mxu0
      %v633 = vadd.f32 0.0, %v632
      %v634 = vpop.f32.mrb[0].mxu0
      %v635 = vadd.f32 0.0, %v634
      %v636 = vpop.f32.mrb[0].mxu0
      %v637 = vadd.f32 0.0, %v636
      %v638 = vpop.f32.mrb[0].mxu0
      %v639 = vadd.f32 0.0, %v638
      %640 = vdwg.mxu0
      %641 = vmatprep.subr.bf16.mxu0 %v507
      %642 = vmatpush1.bf16.msra.mxu0 %v504
      %643 = vmatprep.subr.bf16.mxu0 0
      %644 = vmatpush1.bf16.msra.mxu0 0
      %645 = vmatprep.subr.bf16.mxu0 0
      %646 = vmatpush1.bf16.msra.mxu0 0
      %647 = vmatprep.subr.bf16.mxu0 0
      %648 = vmatpush1.bf16.msra.mxu0 0
      %649 = vmatprep.subr.bf16.mxu0 0
      %650 = vmatpush1.bf16.msra.mxu0 0
      %651 = vmatprep.subr.bf16.mxu0 0
      %652 = vmatpush1.bf16.msra.mxu0 0
      %653 = vmatprep.subr.bf16.mxu0 0
      %654 = vmatpush1.bf16.msra.mxu0 0
      %655 = vmatprep.subr.bf16.mxu0 0
      %656 = vmatpush1.bf16.msra.mxu0 0
      %657 = vmatprep.subr.bf16.mxu0 0
      %658 = vmatpush1.bf16.msra.mxu0 0
      %659 = vmatprep.subr.bf16.mxu0 0
      %660 = vmatpush1.bf16.msra.mxu0 0
      %661 = vmatprep.subr.bf16.mxu0 0
      %662 = vmatpush1.bf16.msra.mxu0 0
      %663 = vmatprep.subr.bf16.mxu0 0
      %664 = vmatpush1.bf16.msra.mxu0 0
      %665 = vmatprep.subr.bf16.mxu0 0
      %666 = vmatpush1.bf16.msra.mxu0 0
      %667 = vmatprep.subr.bf16.mxu0 0
      %668 = vmatpush1.bf16.msra.mxu0 0
      %669 = vmatprep.subr.bf16.mxu0 0
      %670 = vmatpush1.bf16.msra.mxu0 0
      %671 = vmatprep.subr.bf16.mxu0 0
      %672 = vmatpush1.bf16.msra.mxu0 0
      %673 = vmatprep.mubr.bf16.mxu0 0
      %674 = vmatmul.mubr.bf16.gmra.mrb[0].mxu0 %v482
      %v675 = vpop.f32.mrb[0].mxu0
      %v676 = vadd.f32 0.0, %v675
      %v677 = vpop.f32.mrb[0].mxu0
      %v678 = vadd.f32 0.0, %v677
      %v679 = vpop.f32.mrb[0].mxu0
      %v680 = vadd.f32 0.0, %v679
      %v681 = vpop.f32.mrb[0].mxu0
      %v682 = vadd.f32 0.0, %v681
      %683 = vdwg.mxu0
      %684 = vmatprep.subr.bf16.mxu0 0
      %685 = vmatpush1.bf16.msra.mxu0 %v510
      %686 = vmatprep.subr.bf16.mxu0 0
      %687 = vmatpush1.bf16.msra.mxu0 0
      %688 = vmatprep.subr.bf16.mxu0 0
      %689 = vmatpush1.bf16.msra.mxu0 0
      %690 = vmatprep.subr.bf16.mxu0 0
      %691 = vmatpush1.bf16.msra.mxu0 0
      %692 = vmatprep.subr.bf16.mxu0 0
      %693 = vmatpush1.bf16.msra.mxu0 0
      %694 = vmatprep.subr.bf16.mxu0 0
      %695 = vmatpush1.bf16.msra.mxu0 0
      %696 = vmatprep.subr.bf16.mxu0 0
      %697 = vmatpush1.bf16.msra.mxu0 0
      %698 = vmatprep.subr.bf16.mxu0 0
      %699 = vmatpush1.bf16.msra.mxu0 0
      %700 = vmatprep.subr.bf16.mxu0 0
      %701 = vmatpush1.bf16.msra.mxu0 0
      %702 = vmatprep.subr.bf16.mxu0 0
      %703 = vmatpush1.bf16.msra.mxu0 0
      %704 = vmatprep.subr.bf16.mxu0 0
      %705 = vmatpush1.bf16.msra.mxu0 0
      %706 = vmatprep.subr.bf16.mxu0 0
      %707 = vmatpush1.bf16.msra.mxu0 0
      %708 = vmatprep.subr.bf16.mxu0 0
      %709 = vmatpush1.bf16.msra.mxu0 0
      %710 = vmatprep.subr.bf16.mxu0 0
      %711 = vmatpush1.bf16.msra.mxu0 0
      %712 = vmatprep.subr.bf16.mxu0 0
      %713 = vmatpush1.bf16.msra.mxu0 0
      %714 = vmatprep.subr.bf16.mxu0 0
      %715 = vmatpush1.bf16.msra.mxu0 0
      %716 = vmatprep.mubr.bf16.mxu0 0
      %717 = vmatmul.mubr.bf16.gmra.mrb[0].mxu0 %v482
      %v718 = vpop.f32.mrb[0].mxu0
      %v719 = vadd.f32 0.0, %v718
      %v720 = vpop.f32.mrb[0].mxu0
      %v721 = vpop.f32.mrb[0].mxu0
      %v722 = vadd.f32 0.0, %v721
      %v723 = vpop.f32.mrb[0].mxu0
      %724 = vdwg.mxu0
      %v727 = vunpack.c.l.b16 %v420
      %v728 = vunpack.c.l.b16 %v421
      %v729 = vpack.c.b16 %v728, %v727
      %v731 = vsel %vm480, %v729, 0
      %v734 = vsel %vm484, %v444, 0
      %v737 = vsel %vm484, %v445, 0
      %v740 = vsel %vm484, %v446, 0
      %v743 = vsel %vm484, %v447, 0
      %v746 = vsel %vm484, %v448, 0
      %v749 = vsel %vm484, %v449, 0
      %v752 = vsel %vm484, %v450, 0
      %v755 = vsel %vm484, %v451, 0
      %v758 = vsel %vm484, %v452, 0
      %760 = vmatprep.subr.bf16.mxu0 %v737
      %761 = vmatpush1.bf16.msra.mxu0 %v734
      %762 = vmatprep.subr.bf16.mxu0 0
      %763 = vmatpush1.bf16.msra.mxu0 0
      %764 = vmatprep.subr.bf16.mxu0 0
      %765 = vmatpush1.bf16.msra.mxu0 0
      %766 = vmatprep.subr.bf16.mxu0 0
      %767 = vmatpush1.bf16.msra.mxu0 0
      %768 = vmatprep.subr.bf16.mxu0 0
      %769 = vmatpush1.bf16.msra.mxu0 0
      %770 = vmatprep.subr.bf16.mxu0 0
      %771 = vmatpush1.bf16.msra.mxu0 0
      %772 = vmatprep.subr.bf16.mxu0 0
      %773 = vmatpush1.bf16.msra.mxu0 0
      %774 = vmatprep.subr.bf16.mxu0 0
      %775 = vmatpush1.bf16.msra.mxu0 0
      %776 = vmatprep.subr.bf16.mxu0 0
      %777 = vmatpush1.bf16.msra.mxu0 0
      %778 = vmatprep.subr.bf16.mxu0 0
      %779 = vmatpush1.bf16.msra.mxu0 0
      %780 = vmatprep.subr.bf16.mxu0 0
      %781 = vmatpush1.bf16.msra.mxu0 0
      %782 = vmatprep.subr.bf16.mxu0 0
      %783 = vmatpush1.bf16.msra.mxu0 0
      %784 = vmatprep.subr.bf16.mxu0 0
      %785 = vmatpush1.bf16.msra.mxu0 0
      %786 = vmatprep.subr.bf16.mxu0 0
      %787 = vmatpush1.bf16.msra.mxu0 0
      %788 = vmatprep.subr.bf16.mxu0 0
      %789 = vmatpush1.bf16.msra.mxu0 0
      %790 = vmatprep.subr.bf16.mxu0 0
      %791 = vmatpush1.bf16.msra.mxu0 0
      %792 = vmatprep.mubr.bf16.mxu0 0
      %793 = vmatmul.mubr.bf16.gmra.mrb[0].mxu0 %v731
      %v794 = vpop.f32.mrb[0].mxu0
      %v795 = vadd.f32 %v547, %v794
      %v796 = vpop.f32.mrb[0].mxu0
      %v797 = vadd.f32 %v549, %v796
      %v798 = vpop.f32.mrb[0].mxu0
      %v799 = vadd.f32 %v551, %v798
      %v800 = vpop.f32.mrb[0].mxu0
      %v801 = vadd.f32 %v553, %v800
      %802 = vdwg.mxu0
      %803 = vmatprep.subr.bf16.mxu0 %v743
      %804 = vmatpush1.bf16.msra.mxu0 %v740
      %805 = vmatprep.subr.bf16.mxu0 0
      %806 = vmatpush1.bf16.msra.mxu0 0
      %807 = vmatprep.subr.bf16.mxu0 0
      %808 = vmatpush1.bf16.msra.mxu0 0
      %809 = vmatprep.subr.bf16.mxu0 0
      %810 = vmatpush1.bf16.msra.mxu0 0
      %811 = vmatprep.subr.bf16.mxu0 0
      %812 = vmatpush1.bf16.msra.mxu0 0
      %813 = vmatprep.subr.bf16.mxu0 0
      %814 = vmatpush1.bf16.msra.mxu0 0
      %815 = vmatprep.subr.bf16.mxu0 0
      %816 = vmatpush1.bf16.msra.mxu0 0
      %817 = vmatprep.subr.bf16.mxu0 0
      %818 = vmatpush1.bf16.msra.mxu0 0
      %819 = vmatprep.subr.bf16.mxu0 0
      %820 = vmatpush1.bf16.msra.mxu0 0
      %821 = vmatprep.subr.bf16.mxu0 0
      %822 = vmatpush1.bf16.msra.mxu0 0
      %823 = vmatprep.subr.bf16.mxu0 0
      %824 = vmatpush1.bf16.msra.mxu0 0
      %825 = vmatprep.subr.bf16.mxu0 0
      %826 = vmatpush1.bf16.msra.mxu0 0
      %827 = vmatprep.subr.bf16.mxu0 0
      %828 = vmatpush1.bf16.msra.mxu0 0
      %829 = vmatprep.subr.bf16.mxu0 0
      %830 = vmatpush1.bf16.msra.mxu0 0
      %831 = vmatprep.subr.bf16.mxu0 0
      %832 = vmatpush1.bf16.msra.mxu0 0
      %833 = vmatprep.subr.bf16.mxu0 0
      %834 = vmatpush1.bf16.msra.mxu0 0
      %835 = vmatprep.mubr.bf16.mxu0 0
      %836 = vmatmul.mubr.bf16.gmra.mrb[0].mxu0 %v731
      %v837 = vpop.f32.mrb[0].mxu0
      %v838 = vadd.f32 %v590, %v837
      %v839 = vpop.f32.mrb[0].mxu0
      %v840 = vadd.f32 %v592, %v839
      %v841 = vpop.f32.mrb[0].mxu0
      %v842 = vadd.f32 %v594, %v841
      %v843 = vpop.f32.mrb[0].mxu0
      %v844 = vadd.f32 %v596, %v843
      %845 = vdwg.mxu0
      %846 = vmatprep.subr.bf16.mxu0 %v749
      %847 = vmatpush1.bf16.msra.mxu0 %v746
      %848 = vmatprep.subr.bf16.mxu0 0
      %849 = vmatpush1.bf16.msra.mxu0 0
      %850 = vmatprep.subr.bf16.mxu0 0
      %851 = vmatpush1.bf16.msra.mxu0 0
      %852 = vmatprep.subr.bf16.mxu0 0
      %853 = vmatpush1.bf16.msra.mxu0 0
      %854 = vmatprep.subr.bf16.mxu0 0
      %855 = vmatpush1.bf16.msra.mxu0 0
      %856 = vmatprep.subr.bf16.mxu0 0
      %857 = vmatpush1.bf16.msra.mxu0 0
      %858 = vmatprep.subr.bf16.mxu0 0
      %859 = vmatpush1.bf16.msra.mxu0 0
      %860 = vmatprep.subr.bf16.mxu0 0
      %861 = vmatpush1.bf16.msra.mxu0 0
      %862 = vmatprep.subr.bf16.mxu0 0
      %863 = vmatpush1.bf16.msra.mxu0 0
      %864 = vmatprep.subr.bf16.mxu0 0
      %865 = vmatpush1.bf16.msra.mxu0 0
      %866 = vmatprep.subr.bf16.mxu0 0
      %867 = vmatpush1.bf16.msra.mxu0 0
      %868 = vmatprep.subr.bf16.mxu0 0
      %869 = vmatpush1.bf16.msra.mxu0 0
      %870 = vmatprep.subr.bf16.mxu0 0
      %871 = vmatpush1.bf16.msra.mxu0 0
      %872 = vmatprep.subr.bf16.mxu0 0
      %873 = vmatpush1.bf16.msra.mxu0 0
      %874 = vmatprep.subr.bf16.mxu0 0
      %875 = vmatpush1.bf16.msra.mxu0 0
      %876 = vmatprep.subr.bf16.mxu0 0
      %877 = vmatpush1.bf16.msra.mxu0 0
      %878 = vmatprep.mubr.bf16.mxu0 0
      %879 = vmatmul.mubr.bf16.gmra.mrb[0].mxu0 %v731
      %v880 = vpop.f32.mrb[0].mxu0
      %v881 = vadd.f32 %v633, %v880
      %v882 = vpop.f32.mrb[0].mxu0
      %v883 = vadd.f32 %v635, %v882
      %v884 = vpop.f32.mrb[0].mxu0
      %v885 = vadd.f32 %v637, %v884
      %v886 = vpop.f32.mrb[0].mxu0
      %v887 = vadd.f32 %v639, %v886
      %888 = vdwg.mxu0
      %889 = vmatprep.subr.bf16.mxu0 %v755
      %890 = vmatpush1.bf16.msra.mxu0 %v752
      %891 = vmatprep.subr.bf16.mxu0 0
      %892 = vmatpush1.bf16.msra.mxu0 0
      %893 = vmatprep.subr.bf16.mxu0 0
      %894 = vmatpush1.bf16.msra.mxu0 0
      %895 = vmatprep.subr.bf16.mxu0 0
      %896 = vmatpush1.bf16.msra.mxu0 0
      %897 = vmatprep.subr.bf16.mxu0 0
      %898 = vmatpush1.bf16.msra.mxu0 0
      %899 = vmatprep.subr.bf16.mxu0 0
      %900 = vmatpush1.bf16.msra.mxu0 0
      %901 = vmatprep.subr.bf16.mxu0 0
      %902 = vmatpush1.bf16.msra.mxu0 0
      %903 = vmatprep.subr.bf16.mxu0 0
      %904 = vmatpush1.bf16.msra.mxu0 0
      %905 = vmatprep.subr.bf16.mxu0 0
      %906 = vmatpush1.bf16.msra.mxu0 0
      %907 = vmatprep.subr.bf16.mxu0 0
      %908 = vmatpush1.bf16.msra.mxu0 0
      %909 = vmatprep.subr.bf16.mxu0 0
      %910 = vmatpush1.bf16.msra.mxu0 0
      %911 = vmatprep.subr.bf16.mxu0 0
      %912 = vmatpush1.bf16.msra.mxu0 0
      %913 = vmatprep.subr.bf16.mxu0 0
      %914 = vmatpush1.bf16.msra.mxu0 0
      %915 = vmatprep.subr.bf16.mxu0 0
      %916 = vmatpush1.bf16.msra.mxu0 0
      %917 = vmatprep.subr.bf16.mxu0 0
      %918 = vmatpush1.bf16.msra.mxu0 0
      %919 = vmatprep.subr.bf16.mxu0 0
      %920 = vmatpush1.bf16.msra.mxu0 0
      %921 = vmatprep.mubr.bf16.mxu0 0
      %922 = vmatmul.mubr.bf16.gmra.mrb[0].mxu0 %v731
      %v923 = vpop.f32.mrb[0].mxu0
      %v924 = vadd.f32 %v676, %v923
      %v925 = vpop.f32.mrb[0].mxu0
      %v926 = vadd.f32 %v678, %v925
      %v927 = vpop.f32.mrb[0].mxu0
      %v928 = vadd.f32 %v680, %v927
      %v929 = vpop.f32.mrb[0].mxu0
      %v930 = vadd.f32 %v682, %v929
      %931 = vdwg.mxu0
      %932 = vmatprep.subr.bf16.mxu0 0
      %933 = vmatpush1.bf16.msra.mxu0 %v758
      %934 = vmatprep.subr.bf16.mxu0 0
      %935 = vmatpush1.bf16.msra.mxu0 0
      %936 = vmatprep.subr.bf16.mxu0 0
      %937 = vmatpush1.bf16.msra.mxu0 0
      %938 = vmatprep.subr.bf16.mxu0 0
      %939 = vmatpush1.bf16.msra.mxu0 0
      %940 = vmatprep.subr.bf16.mxu0 0
      %941 = vmatpush1.bf16.msra.mxu0 0
      %942 = vmatprep.subr.bf16.mxu0 0
      %943 = vmatpush1.bf16.msra.mxu0 0
      %944 = vmatprep.subr.bf16.mxu0 0
      %945 = vmatpush1.bf16.msra.mxu0 0
      %946 = vmatprep.subr.bf16.mxu0 0
      %947 = vmatpush1.bf16.msra.mxu0 0
      %948 = vmatprep.subr.bf16.mxu0 0
      %949 = vmatpush1.bf16.msra.mxu0 0
      %950 = vmatprep.subr.bf16.mxu0 0
      %951 = vmatpush1.bf16.msra.mxu0 0
      %952 = vmatprep.subr.bf16.mxu0 0
      %953 = vmatpush1.bf16.msra.mxu0 0
      %954 = vmatprep.subr.bf16.mxu0 0
      %955 = vmatpush1.bf16.msra.mxu0 0
      %956 = vmatprep.subr.bf16.mxu0 0
      %957 = vmatpush1.bf16.msra.mxu0 0
      %958 = vmatprep.subr.bf16.mxu0 0
      %959 = vmatpush1.bf16.msra.mxu0 0
      %960 = vmatprep.subr.bf16.mxu0 0
      %961 = vmatpush1.bf16.msra.mxu0 0
      %962 = vmatprep.subr.bf16.mxu0 0
      %963 = vmatpush1.bf16.msra.mxu0 0
      %964 = vmatprep.mubr.bf16.mxu0 0
      %965 = vmatmul.mubr.bf16.gmra.mrb[0].mxu0 %v731
      %v966 = vpop.f32.mrb[0].mxu0
      %v967 = vadd.f32 %v719, %v966
      %v968 = vpop.f32.mrb[0].mxu0
      %v969 = vpop.f32.mrb[0].mxu0
      %v970 = vadd.f32 %v722, %v969
      %v971 = vpop.f32.mrb[0].mxu0
      %972 = vdwg.mxu0
      %s973 = scalar_lea.vmem %s4, 16
      %v974 = vld [vmem:[%s973] sm:$0xf]
      %v975 = vld [vmem:[%s973 + $0x4] sm:$0xf]
      %v978 = vunpack.c.l.b16 %v974
      %v979 = vunpack.c.l.b16 %v975
      %v980 = vpack.c.b16 %v979, %v978
      %981 = vrot.lane.b32.xlu0 %v444, 126
      %v982 = vpop.permute.xlu0 %981
      %983 = vrot.lane.b32.xlu0 %v445, 126
      %v984 = vpop.permute.xlu0 %983
      %985 = vrot.lane.b32.xlu0 %v446, 126
      %v986 = vpop.permute.xlu0 %985
      %987 = vrot.lane.b32.xlu0 %v447, 126
      %v988 = vpop.permute.xlu0 %987
      %989 = vrot.lane.b32.xlu0 %v448, 126
      %v990 = vpop.permute.xlu0 %989
      %991 = vrot.lane.b32.xlu0 %v449, 126
      %v992 = vpop.permute.xlu0 %991
      %993 = vrot.lane.b32.xlu0 %v450, 126
      %v994 = vpop.permute.xlu0 %993
      %995 = vrot.lane.b32.xlu0 %v451, 126
      %v996 = vpop.permute.xlu0 %995
      %997 = vrot.lane.b32.xlu0 %v452, 126
      %v998 = vpop.permute.xlu0 %997
      %vm999 = vcmask 1031168
      %v1000 = vsel %vm999, %v982, %v984
      %v1001 = vsel %vm999, %v984, %v986
      %v1002 = vsel %vm999, %v986, %v988
      %v1003 = vsel %vm999, %v988, %v990
      %v1004 = vsel %vm999, %v990, %v992
      %v1005 = vsel %vm999, %v992, %v994
      %v1006 = vsel %vm999, %v994, %v996
      %v1007 = vsel %vm999, %v996, %v998
      %v1009 = vsel %vm480, %v980, 0
      %v1012 = vsel %vm484, %v1000, 0
      %v1015 = vsel %vm484, %v1001, 0
      %v1018 = vsel %vm484, %v1002, 0
      %v1021 = vsel %vm484, %v1003, 0
      %v1024 = vsel %vm484, %v1004, 0
      %v1027 = vsel %vm484, %v1005, 0
      %v1030 = vsel %vm484, %v1006, 0
      %v1033 = vsel %vm484, %v1007, 0
      %v1036 = vsel %vm484, %v998, 0
      %1038 = vmatprep.subr.bf16.mxu0 %v1015
      %1039 = vmatpush1.bf16.msra.mxu0 %v1012
      %1040 = vmatprep.subr.bf16.mxu0 0
      %1041 = vmatpush1.bf16.msra.mxu0 0
      %1042 = vmatprep.subr.bf16.mxu0 0
      %1043 = vmatpush1.bf16.msra.mxu0 0
      %1044 = vmatprep.subr.bf16.mxu0 0
      %1045 = vmatpush1.bf16.msra.mxu0 0
      %1046 = vmatprep.subr.bf16.mxu0 0
      %1047 = vmatpush1.bf16.msra.mxu0 0
      %1048 = vmatprep.subr.bf16.mxu0 0
      %1049 = vmatpush1.bf16.msra.mxu0 0
      %1050 = vmatprep.subr.bf16.mxu0 0
      %1051 = vmatpush1.bf16.msra.mxu0 0
      %1052 = vmatprep.subr.bf16.mxu0 0
      %1053 = vmatpush1.bf16.msra.mxu0 0
      %1054 = vmatprep.subr.bf16.mxu0 0
      %1055 = vmatpush1.bf16.msra.mxu0 0
      %1056 = vmatprep.subr.bf16.mxu0 0
      %1057 = vmatpush1.bf16.msra.mxu0 0
      %1058 = vmatprep.subr.bf16.mxu0 0
      %1059 = vmatpush1.bf16.msra.mxu0 0
      %1060 = vmatprep.subr.bf16.mxu0 0
      %1061 = vmatpush1.bf16.msra.mxu0 0
      %1062 = vmatprep.subr.bf16.mxu0 0
      %1063 = vmatpush1.bf16.msra.mxu0 0
      %1064 = vmatprep.subr.bf16.mxu0 0
      %1065 = vmatpush1.bf16.msra.mxu0 0
      %1066 = vmatprep.subr.bf16.mxu0 0
      %1067 = vmatpush1.bf16.msra.mxu0 0
      %1068 = vmatprep.subr.bf16.mxu0 0
      %1069 = vmatpush1.bf16.msra.mxu0 0
      %1070 = vmatprep.mubr.bf16.mxu0 0
      %1071 = vmatmul.mubr.bf16.gmra.mrb[0].mxu0 %v1009
      %v1072 = vpop.f32.mrb[0].mxu0
      %v1073 = vadd.f32 0.0, %v1072
      %v1074 = vpop.f32.mrb[0].mxu0
      %v1075 = vadd.f32 0.0, %v1074
      %v1076 = vpop.f32.mrb[0].mxu0
      %v1077 = vadd.f32 0.0, %v1076
      %v1078 = vpop.f32.mrb[0].mxu0
      %v1079 = vadd.f32 0.0, %v1078
      %1080 = vdwg.mxu0
      %1081 = vmatprep.subr.bf16.mxu0 %v1021
      %1082 = vmatpush1.bf16.msra.mxu0 %v1018
      %1083 = vmatprep.subr.bf16.mxu0 0
      %1084 = vmatpush1.bf16.msra.mxu0 0
      %1085 = vmatprep.subr.bf16.mxu0 0
      %1086 = vmatpush1.bf16.msra.mxu0 0
      %1087 = vmatprep.subr.bf16.mxu0 0
      %1088 = vmatpush1.bf16.msra.mxu0 0
      %1089 = vmatprep.subr.bf16.mxu0 0
      %1090 = vmatpush1.bf16.msra.mxu0 0
      %1091 = vmatprep.subr.bf16.mxu0 0
      %1092 = vmatpush1.bf16.msra.mxu0 0
      %1093 = vmatprep.subr.bf16.mxu0 0
      %1094 = vmatpush1.bf16.msra.mxu0 0
      %1095 = vmatprep.subr.bf16.mxu0 0
      %1096 = vmatpush1.bf16.msra.mxu0 0
      %1097 = vmatprep.subr.bf16.mxu0 0
      %1098 = vmatpush1.bf16.msra.mxu0 0
      %1099 = vmatprep.subr.bf16.mxu0 0
      %1100 = vmatpush1.bf16.msra.mxu0 0
      %1101 = vmatprep.subr.bf16.mxu0 0
      %1102 = vmatpush1.bf16.msra.mxu0 0
      %1103 = vmatprep.subr.bf16.mxu0 0
      %1104 = vmatpush1.bf16.msra.mxu0 0
      %1105 = vmatprep.subr.bf16.mxu0 0
      %1106 = vmatpush1.bf16.msra.mxu0 0
      %1107 = vmatprep.subr.bf16.mxu0 0
      %1108 = vmatpush1.bf16.msra.mxu0 0
      %1109 = vmatprep.subr.bf16.mxu0 0
      %1110 = vmatpush1.bf16.msra.mxu0 0
      %1111 = vmatprep.subr.bf16.mxu0 0
      %1112 = vmatpush1.bf16.msra.mxu0 0
      %1113 = vmatprep.mubr.bf16.mxu0 0
      %1114 = vmatmul.mubr.bf16.gmra.mrb[0].mxu0 %v1009
      %v1115 = vpop.f32.mrb[0].mxu0
      %v1116 = vadd.f32 0.0, %v1115
      %v1117 = vpop.f32.mrb[0].mxu0
      %v1118 = vadd.f32 0.0, %v1117
      %v1119 = vpop.f32.mrb[0].mxu0
      %v1120 = vadd.f32 0.0, %v1119
      %v1121 = vpop.f32.mrb[0].mxu0
      %v1122 = vadd.f32 0.0, %v1121
      %1123 = vdwg.mxu0
      %1124 = vmatprep.subr.bf16.mxu0 %v1027
      %1125 = vmatpush1.bf16.msra.mxu0 %v1024
      %1126 = vmatprep.subr.bf16.mxu0 0
      %1127 = vmatpush1.bf16.msra.mxu0 0
      %1128 = vmatprep.subr.bf16.mxu0 0
      %1129 = vmatpush1.bf16.msra.mxu0 0
      %1130 = vmatprep.subr.bf16.mxu0 0
      %1131 = vmatpush1.bf16.msra.mxu0 0
      %1132 = vmatprep.subr.bf16.mxu0 0
      %1133 = vmatpush1.bf16.msra.mxu0 0
      %1134 = vmatprep.subr.bf16.mxu0 0
      %1135 = vmatpush1.bf16.msra.mxu0 0
      %1136 = vmatprep.subr.bf16.mxu0 0
      %1137 = vmatpush1.bf16.msra.mxu0 0
      %1138 = vmatprep.subr.bf16.mxu0 0
      %1139 = vmatpush1.bf16.msra.mxu0 0
      %1140 = vmatprep.subr.bf16.mxu0 0
      %1141 = vmatpush1.bf16.msra.mxu0 0
      %1142 = vmatprep.subr.bf16.mxu0 0
      %1143 = vmatpush1.bf16.msra.mxu0 0
      %1144 = vmatprep.subr.bf16.mxu0 0
      %1145 = vmatpush1.bf16.msra.mxu0 0
      %1146 = vmatprep.subr.bf16.mxu0 0
      %1147 = vmatpush1.bf16.msra.mxu0 0
      %1148 = vmatprep.subr.bf16.mxu0 0
      %1149 = vmatpush1.bf16.msra.mxu0 0
      %1150 = vmatprep.subr.bf16.mxu0 0
      %1151 = vmatpush1.bf16.msra.mxu0 0
      %1152 = vmatprep.subr.bf16.mxu0 0
      %1153 = vmatpush1.bf16.msra.mxu0 0
      %1154 = vmatprep.subr.bf16.mxu0 0
      %1155 = vmatpush1.bf16.msra.mxu0 0
      %1156 = vmatprep.mubr.bf16.mxu0 0
      %1157 = vmatmul.mubr.bf16.gmra.mrb[0].mxu0 %v1009
      %v1158 = vpop.f32.mrb[0].mxu0
      %v1159 = vadd.f32 0.0, %v1158
      %v1160 = vpop.f32.mrb[0].mxu0
      %v1161 = vadd.f32 0.0, %v1160
      %v1162 = vpop.f32.mrb[0].mxu0
      %v1163 = vadd.f32 0.0, %v1162
      %v1164 = vpop.f32.mrb[0].mxu0
      %v1165 = vadd.f32 0.0, %v1164
      %1166 = vdwg.mxu0
      %1167 = vmatprep.subr.bf16.mxu0 %v1033
      %1168 = vmatpush1.bf16.msra.mxu0 %v1030
      %1169 = vmatprep.subr.bf16.mxu0 0
      %1170 = vmatpush1.bf16.msra.mxu0 0
      %1171 = vmatprep.subr.bf16.mxu0 0
      %1172 = vmatpush1.bf16.msra.mxu0 0
      %1173 = vmatprep.subr.bf16.mxu0 0
      %1174 = vmatpush1.bf16.msra.mxu0 0
      %1175 = vmatprep.subr.bf16.mxu0 0
      %1176 = vmatpush1.bf16.msra.mxu0 0
      %1177 = vmatprep.subr.bf16.mxu0 0
      %1178 = vmatpush1.bf16.msra.mxu0 0
      %1179 = vmatprep.subr.bf16.mxu0 0
      %1180 = vmatpush1.bf16.msra.mxu0 0
      %1181 = vmatprep.subr.bf16.mxu0 0
      %1182 = vmatpush1.bf16.msra.mxu0 0
      %1183 = vmatprep.subr.bf16.mxu0 0
      %1184 = vmatpush1.bf16.msra.mxu0 0
      %1185 = vmatprep.subr.bf16.mxu0 0
      %1186 = vmatpush1.bf16.msra.mxu0 0
      %1187 = vmatprep.subr.bf16.mxu0 0
      %1188 = vmatpush1.bf16.msra.mxu0 0
      %1189 = vmatprep.subr.bf16.mxu0 0
      %1190 = vmatpush1.bf16.msra.mxu0 0
      %1191 = vmatprep.subr.bf16.mxu0 0
      %1192 = vmatpush1.bf16.msra.mxu0 0
      %1193 = vmatprep.subr.bf16.mxu0 0
      %1194 = vmatpush1.bf16.msra.mxu0 0
      %1195 = vmatprep.subr.bf16.mxu0 0
      %1196 = vmatpush1.bf16.msra.mxu0 0
      %1197 = vmatprep.subr.bf16.mxu0 0
      %1198 = vmatpush1.bf16.msra.mxu0 0
      %1199 = vmatprep.mubr.bf16.mxu0 0
      %1200 = vmatmul.mubr.bf16.gmra.mrb[0].mxu0 %v1009
      %v1201 = vpop.f32.mrb[0].mxu0
      %v1202 = vadd.f32 0.0, %v1201
      %v1203 = vpop.f32.mrb[0].mxu0
      %v1204 = vadd.f32 0.0, %v1203
      %v1205 = vpop.f32.mrb[0].mxu0
      %v1206 = vadd.f32 0.0, %v1205
      %v1207 = vpop.f32.mrb[0].mxu0
      %v1208 = vadd.f32 0.0, %v1207
      %1209 = vdwg.mxu0
      %1210 = vmatprep.subr.bf16.mxu0 0
      %1211 = vmatpush1.bf16.msra.mxu0 %v1036
      %1212 = vmatprep.subr.bf16.mxu0 0
      %1213 = vmatpush1.bf16.msra.mxu0 0
      %1214 = vmatprep.subr.bf16.mxu0 0
      %1215 = vmatpush1.bf16.msra.mxu0 0
      %1216 = vmatprep.subr.bf16.mxu0 0
      %1217 = vmatpush1.bf16.msra.mxu0 0
      %1218 = vmatprep.subr.bf16.mxu0 0
      %1219 = vmatpush1.bf16.msra.mxu0 0
      %1220 = vmatprep.subr.bf16.mxu0 0
      %1221 = vmatpush1.bf16.msra.mxu0 0
      %1222 = vmatprep.subr.bf16.mxu0 0
      %1223 = vmatpush1.bf16.msra.mxu0 0
      %1224 = vmatprep.subr.bf16.mxu0 0
      %1225 = vmatpush1.bf16.msra.mxu0 0
      %1226 = vmatprep.subr.bf16.mxu0 0
      %1227 = vmatpush1.bf16.msra.mxu0 0
      %1228 = vmatprep.subr.bf16.mxu0 0
      %1229 = vmatpush1.bf16.msra.mxu0 0
      %1230 = vmatprep.subr.bf16.mxu0 0
      %1231 = vmatpush1.bf16.msra.mxu0 0
      %1232 = vmatprep.subr.bf16.mxu0 0
      %1233 = vmatpush1.bf16.msra.mxu0 0
      %1234 = vmatprep.subr.bf16.mxu0 0
      %1235 = vmatpush1.bf16.msra.mxu0 0
      %1236 = vmatprep.subr.bf16.mxu0 0
      %1237 = vmatpush1.bf16.msra.mxu0 0
      %1238 = vmatprep.subr.bf16.mxu0 0
      %1239 = vmatpush1.bf16.msra.mxu0 0
      %1240 = vmatprep.subr.bf16.mxu0 0
      %1241 = vmatpush1.bf16.msra.mxu0 0
      %1242 = vmatprep.mubr.bf16.mxu0 0
      %1243 = vmatmul.mubr.bf16.gmra.mrb[0].mxu0 %v1009
      %v1244 = vpop.f32.mrb[0].mxu0
      %v1245 = vadd.f32 0.0, %v1244
      %v1246 = vpop.f32.mrb[0].mxu0
      %v1247 = vpop.f32.mrb[0].mxu0
      %v1248 = vadd.f32 0.0, %v1247
      %v1249 = vpop.f32.mrb[0].mxu0
      %1250 = vdwg.mxu0
      %v1251 = vadd.f32 %v795, %v1073
      %v1252 = vadd.f32 %v797, %v1075
      %v1253 = vadd.f32 %v838, %v1116
      %v1254 = vadd.f32 %v840, %v1118
      %v1255 = vadd.f32 %v881, %v1159
      %v1256 = vadd.f32 %v883, %v1161
      %v1257 = vadd.f32 %v924, %v1202
      %v1258 = vadd.f32 %v926, %v1204
      %v1259 = vadd.f32 %v967, %v1245
      %v1260 = vadd.f32 %v799, %v1077
      %v1261 = vadd.f32 %v801, %v1079
      %v1262 = vadd.f32 %v842, %v1120
      %v1263 = vadd.f32 %v844, %v1122
      %v1264 = vadd.f32 %v885, %v1163
      %v1265 = vadd.f32 %v887, %v1165
      %v1266 = vadd.f32 %v928, %v1206
      %v1267 = vadd.f32 %v930, %v1208
      %v1268 = vadd.f32 %v970, %v1248
      %s1269 = scalar_lea.vmem %s4, 24
      %v1270 = vld [vmem:[%s1269] sm:$0xf]
      %v1271 = vld [vmem:[%s1269 + $0x4] sm:$0xf]
      %v1274 = vunpack.c.l.b16 %v1270
      %v1275 = vunpack.c.l.b16 %v1271
      %v1276 = vpack.c.b16 %v1275, %v1274
      %1277 = vrot.lane.b32.xlu0 %v444, 94
      %v1278 = vpop.permute.xlu0 %1277
      %1279 = vrot.lane.b32.xlu0 %v445, 94
      %v1280 = vpop.permute.xlu0 %1279
      %1281 = vrot.lane.b32.xlu0 %v446, 94
      %v1282 = vpop.permute.xlu0 %1281
      %1283 = vrot.lane.b32.xlu0 %v447, 94
      %v1284 = vpop.permute.xlu0 %1283
      %1285 = vrot.lane.b32.xlu0 %v448, 94
      %v1286 = vpop.permute.xlu0 %1285
      %1287 = vrot.lane.b32.xlu0 %v449, 94
      %v1288 = vpop.permute.xlu0 %1287
      %1289 = vrot.lane.b32.xlu0 %v450, 94
      %v1290 = vpop.permute.xlu0 %1289
      %1291 = vrot.lane.b32.xlu0 %v451, 94
      %v1292 = vpop.permute.xlu0 %1291
      %1293 = vrot.lane.b32.xlu0 %v452, 94
      %v1294 = vpop.permute.xlu0 %1293
      %vm1295 = vcmask 769024
      %v1296 = vsel %vm1295, %v1278, %v1280
      %v1297 = vsel %vm1295, %v1280, %v1282
      %v1298 = vsel %vm1295, %v1282, %v1284
      %v1299 = vsel %vm1295, %v1284, %v1286
      %v1300 = vsel %vm1295, %v1286, %v1288
      %v1301 = vsel %vm1295, %v1288, %v1290
      %v1302 = vsel %vm1295, %v1290, %v1292
      %v1303 = vsel %vm1295, %v1292, %v1294
      %v1305 = vsel %vm480, %v1276, 0
      %v1308 = vsel %vm484, %v1296, 0
      %v1311 = vsel %vm484, %v1297, 0
      %v1314 = vsel %vm484, %v1298, 0
      %v1317 = vsel %vm484, %v1299, 0
      %v1320 = vsel %vm484, %v1300, 0
      %v1323 = vsel %vm484, %v1301, 0
      %v1326 = vsel %vm484, %v1302, 0
      %v1329 = vsel %vm484, %v1303, 0
      %v1332 = vsel %vm484, %v1294, 0
      %1334 = vmatprep.subr.bf16.mxu0 %v1311
      %1335 = vmatpush1.bf16.msra.mxu0 %v1308
      %1336 = vmatprep.subr.bf16.mxu0 0
      %1337 = vmatpush1.bf16.msra.mxu0 0
      %1338 = vmatprep.subr.bf16.mxu0 0
      %1339 = vmatpush1.bf16.msra.mxu0 0
      %1340 = vmatprep.subr.bf16.mxu0 0
      %1341 = vmatpush1.bf16.msra.mxu0 0
      %1342 = vmatprep.subr.bf16.mxu0 0
      %1343 = vmatpush1.bf16.msra.mxu0 0
      %1344 = vmatprep.subr.bf16.mxu0 0
      %1345 = vmatpush1.bf16.msra.mxu0 0
      %1346 = vmatprep.subr.bf16.mxu0 0
      %1347 = vmatpush1.bf16.msra.mxu0 0
      %1348 = vmatprep.subr.bf16.mxu0 0
      %1349 = vmatpush1.bf16.msra.mxu0 0
      %1350 = vmatprep.subr.bf16.mxu0 0
      %1351 = vmatpush1.bf16.msra.mxu0 0
      %1352 = vmatprep.subr.bf16.mxu0 0
      %1353 = vmatpush1.bf16.msra.mxu0 0
      %1354 = vmatprep.subr.bf16.mxu0 0
      %1355 = vmatpush1.bf16.msra.mxu0 0
      %1356 = vmatprep.subr.bf16.mxu0 0
      %1357 = vmatpush1.bf16.msra.mxu0 0
      %1358 = vmatprep.subr.bf16.mxu0 0
      %1359 = vmatpush1.bf16.msra.mxu0 0
      %1360 = vmatprep.subr.bf16.mxu0 0
      %1361 = vmatpush1.bf16.msra.mxu0 0
      %1362 = vmatprep.subr.bf16.mxu0 0
      %1363 = vmatpush1.bf16.msra.mxu0 0
      %1364 = vmatprep.subr.bf16.mxu0 0
      %1365 = vmatpush1.bf16.msra.mxu0 0
      %1366 = vmatprep.mubr.bf16.mxu0 0
      %1367 = vmatmul.mubr.bf16.gmra.mrb[0].mxu0 %v1305
      %v1368 = vpop.f32.mrb[0].mxu0
      %v1369 = vadd.f32 0.0, %v1368
      %v1370 = vpop.f32.mrb[0].mxu0
      %v1371 = vadd.f32 0.0, %v1370
      %v1372 = vpop.f32.mrb[0].mxu0
      %v1373 = vadd.f32 0.0, %v1372
      %v1374 = vpop.f32.mrb[0].mxu0
      %v1375 = vadd.f32 0.0, %v1374
      %1376 = vdwg.mxu0
      %1377 = vmatprep.subr.bf16.mxu0 %v1317
      %1378 = vmatpush1.bf16.msra.mxu0 %v1314
      %1379 = vmatprep.subr.bf16.mxu0 0
      %1380 = vmatpush1.bf16.msra.mxu0 0
      %1381 = vmatprep.subr.bf16.mxu0 0
      %1382 = vmatpush1.bf16.msra.mxu0 0
      %1383 = vmatprep.subr.bf16.mxu0 0
      %1384 = vmatpush1.bf16.msra.mxu0 0
      %1385 = vmatprep.subr.bf16.mxu0 0
      %1386 = vmatpush1.bf16.msra.mxu0 0
      %1387 = vmatprep.subr.bf16.mxu0 0
      %1388 = vmatpush1.bf16.msra.mxu0 0
      %1389 = vmatprep.subr.bf16.mxu0 0
      %1390 = vmatpush1.bf16.msra.mxu0 0
      %1391 = vmatprep.subr.bf16.mxu0 0
      %1392 = vmatpush1.bf16.msra.mxu0 0
      %1393 = vmatprep.subr.bf16.mxu0 0
      %1394 = vmatpush1.bf16.msra.mxu0 0
      %1395 = vmatprep.subr.bf16.mxu0 0
      %1396 = vmatpush1.bf16.msra.mxu0 0
      %1397 = vmatprep.subr.bf16.mxu0 0
      %1398 = vmatpush1.bf16.msra.mxu0 0
      %1399 = vmatprep.subr.bf16.mxu0 0
      %1400 = vmatpush1.bf16.msra.mxu0 0
      %1401 = vmatprep.subr.bf16.mxu0 0
      %1402 = vmatpush1.bf16.msra.mxu0 0
      %1403 = vmatprep.subr.bf16.mxu0 0
      %1404 = vmatpush1.bf16.msra.mxu0 0
      %1405 = vmatprep.subr.bf16.mxu0 0
      %1406 = vmatpush1.bf16.msra.mxu0 0
      %1407 = vmatprep.subr.bf16.mxu0 0
      %1408 = vmatpush1.bf16.msra.mxu0 0
      %1409 = vmatprep.mubr.bf16.mxu0 0
      %1410 = vmatmul.mubr.bf16.gmra.mrb[0].mxu0 %v1305
      %v1411 = vpop.f32.mrb[0].mxu0
      %v1412 = vadd.f32 0.0, %v1411
      %v1413 = vpop.f32.mrb[0].mxu0
      %v1414 = vadd.f32 0.0, %v1413
      %v1415 = vpop.f32.mrb[0].mxu0
      %v1416 = vadd.f32 0.0, %v1415
      %v1417 = vpop.f32.mrb[0].mxu0
      %v1418 = vadd.f32 0.0, %v1417
      %1419 = vdwg.mxu0
      %1420 = vmatprep.subr.bf16.mxu0 %v1323
      %1421 = vmatpush1.bf16.msra.mxu0 %v1320
      %1422 = vmatprep.subr.bf16.mxu0 0
      %1423 = vmatpush1.bf16.msra.mxu0 0
      %1424 = vmatprep.subr.bf16.mxu0 0
      %1425 = vmatpush1.bf16.msra.mxu0 0
      %1426 = vmatprep.subr.bf16.mxu0 0
      %1427 = vmatpush1.bf16.msra.mxu0 0
      %1428 = vmatprep.subr.bf16.mxu0 0
      %1429 = vmatpush1.bf16.msra.mxu0 0
      %1430 = vmatprep.subr.bf16.mxu0 0
      %1431 = vmatpush1.bf16.msra.mxu0 0
      %1432 = vmatprep.subr.bf16.mxu0 0
      %1433 = vmatpush1.bf16.msra.mxu0 0
      %1434 = vmatprep.subr.bf16.mxu0 0
      %1435 = vmatpush1.bf16.msra.mxu0 0
      %1436 = vmatprep.subr.bf16.mxu0 0
      %1437 = vmatpush1.bf16.msra.mxu0 0
      %1438 = vmatprep.subr.bf16.mxu0 0
      %1439 = vmatpush1.bf16.msra.mxu0 0
      %1440 = vmatprep.subr.bf16.mxu0 0
      %1441 = vmatpush1.bf16.msra.mxu0 0
      %1442 = vmatprep.subr.bf16.mxu0 0
      %1443 = vmatpush1.bf16.msra.mxu0 0
      %1444 = vmatprep.subr.bf16.mxu0 0
      %1445 = vmatpush1.bf16.msra.mxu0 0
      %1446 = vmatprep.subr.bf16.mxu0 0
      %1447 = vmatpush1.bf16.msra.mxu0 0
      %1448 = vmatprep.subr.bf16.mxu0 0
      %1449 = vmatpush1.bf16.msra.mxu0 0
      %1450 = vmatprep.subr.bf16.mxu0 0
      %1451 = vmatpush1.bf16.msra.mxu0 0
      %1452 = vmatprep.mubr.bf16.mxu0 0
      %1453 = vmatmul.mubr.bf16.gmra.mrb[0].mxu0 %v1305
      %v1454 = vpop.f32.mrb[0].mxu0
      %v1455 = vadd.f32 0.0, %v1454
      %v1456 = vpop.f32.mrb[0].mxu0
      %v1457 = vadd.f32 0.0, %v1456
      %v1458 = vpop.f32.mrb[0].mxu0
      %v1459 = vadd.f32 0.0, %v1458
      %v1460 = vpop.f32.mrb[0].mxu0
      %v1461 = vadd.f32 0.0, %v1460
      %1462 = vdwg.mxu0
      %1463 = vmatprep.subr.bf16.mxu0 %v1329
      %1464 = vmatpush1.bf16.msra.mxu0 %v1326
      %1465 = vmatprep.subr.bf16.mxu0 0
      %1466 = vmatpush1.bf16.msra.mxu0 0
      %1467 = vmatprep.subr.bf16.mxu0 0
      %1468 = vmatpush1.bf16.msra.mxu0 0
      %1469 = vmatprep.subr.bf16.mxu0 0
      %1470 = vmatpush1.bf16.msra.mxu0 0
      %1471 = vmatprep.subr.bf16.mxu0 0
      %1472 = vmatpush1.bf16.msra.mxu0 0
      %1473 = vmatprep.subr.bf16.mxu0 0
      %1474 = vmatpush1.bf16.msra.mxu0 0
      %1475 = vmatprep.subr.bf16.mxu0 0
      %1476 = vmatpush1.bf16.msra.mxu0 0
      %1477 = vmatprep.subr.bf16.mxu0 0
      %1478 = vmatpush1.bf16.msra.mxu0 0
      %1479 = vmatprep.subr.bf16.mxu0 0
      %1480 = vmatpush1.bf16.msra.mxu0 0
      %1481 = vmatprep.subr.bf16.mxu0 0
      %1482 = vmatpush1.bf16.msra.mxu0 0
      %1483 = vmatprep.subr.bf16.mxu0 0
      %1484 = vmatpush1.bf16.msra.mxu0 0
      %1485 = vmatprep.subr.bf16.mxu0 0
      %1486 = vmatpush1.bf16.msra.mxu0 0
      %1487 = vmatprep.subr.bf16.mxu0 0
      %1488 = vmatpush1.bf16.msra.mxu0 0
      %1489 = vmatprep.subr.bf16.mxu0 0
      %1490 = vmatpush1.bf16.msra.mxu0 0
      %1491 = vmatprep.subr.bf16.mxu0 0
      %1492 = vmatpush1.bf16.msra.mxu0 0
      %1493 = vmatprep.subr.bf16.mxu0 0
      %1494 = vmatpush1.bf16.msra.mxu0 0
      %1495 = vmatprep.mubr.bf16.mxu0 0
      %1496 = vmatmul.mubr.bf16.gmra.mrb[0].mxu0 %v1305
      %v1497 = vpop.f32.mrb[0].mxu0
      %v1498 = vadd.f32 0.0, %v1497
      %v1499 = vpop.f32.mrb[0].mxu0
      %v1500 = vadd.f32 0.0, %v1499
      %v1501 = vpop.f32.mrb[0].mxu0
      %v1502 = vadd.f32 0.0, %v1501
      %v1503 = vpop.f32.mrb[0].mxu0
      %v1504 = vadd.f32 0.0, %v1503
      %1505 = vdwg.mxu0
      %1506 = vmatprep.subr.bf16.mxu0 0
      %1507 = vmatpush1.bf16.msra.mxu0 %v1332
      %1508 = vmatprep.subr.bf16.mxu0 0
      %1509 = vmatpush1.bf16.msra.mxu0 0
      %1510 = vmatprep.subr.bf16.mxu0 0
      %1511 = vmatpush1.bf16.msra.mxu0 0
      %1512 = vmatprep.subr.bf16.mxu0 0
      %1513 = vmatpush1.bf16.msra.mxu0 0
      %1514 = vmatprep.subr.bf16.mxu0 0
      %1515 = vmatpush1.bf16.msra.mxu0 0
      %1516 = vmatprep.subr.bf16.mxu0 0
      %1517 = vmatpush1.bf16.msra.mxu0 0
      %1518 = vmatprep.subr.bf16.mxu0 0
      %1519 = vmatpush1.bf16.msra.mxu0 0
      %1520 = vmatprep.subr.bf16.mxu0 0
      %1521 = vmatpush1.bf16.msra.mxu0 0
      %1522 = vmatprep.subr.bf16.mxu0 0
      %1523 = vmatpush1.bf16.msra.mxu0 0
      %1524 = vmatprep.subr.bf16.mxu0 0
      %1525 = vmatpush1.bf16.msra.mxu0 0
      %1526 = vmatprep.subr.bf16.mxu0 0
      %1527 = vmatpush1.bf16.msra.mxu0 0
      %1528 = vmatprep.subr.bf16.mxu0 0
      %1529 = vmatpush1.bf16.msra.mxu0 0
      %1530 = vmatprep.subr.bf16.mxu0 0
      %1531 = vmatpush1.bf16.msra.mxu0 0
      %1532 = vmatprep.subr.bf16.mxu0 0
      %1533 = vmatpush1.bf16.msra.mxu0 0
      %1534 = vmatprep.subr.bf16.mxu0 0
      %1535 = vmatpush1.bf16.msra.mxu0 0
      %1536 = vmatprep.subr.bf16.mxu0 0
      %1537 = vmatpush1.bf16.msra.mxu0 0
      %1538 = vmatprep.mubr.bf16.mxu0 0
      %1539 = vmatmul.mubr.bf16.gmra.mrb[0].mxu0 %v1305
      %v1540 = vpop.f32.mrb[0].mxu0
      %v1541 = vadd.f32 0.0, %v1540
      %v1542 = vpop.f32.mrb[0].mxu0
      %v1543 = vpop.f32.mrb[0].mxu0
      %v1544 = vadd.f32 0.0, %v1543
      %v1545 = vpop.f32.mrb[0].mxu0
      %1546 = vdwg.mxu0
      %v1547 = vadd.f32 %v1251, %v1369
      %v1548 = vadd.f32 %v1252, %v1371
      %v1549 = vadd.f32 %v1253, %v1412
      %v1550 = vadd.f32 %v1254, %v1414
      %v1551 = vadd.f32 %v1255, %v1455
      %v1552 = vadd.f32 %v1256, %v1457
      %v1553 = vadd.f32 %v1257, %v1498
      %v1554 = vadd.f32 %v1258, %v1500
      %v1555 = vadd.f32 %v1259, %v1541
      %v1556 = vadd.f32 %v1260, %v1373
      %v1557 = vadd.f32 %v1261, %v1375
      %v1558 = vadd.f32 %v1262, %v1416
      %v1559 = vadd.f32 %v1263, %v1418
      %v1560 = vadd.f32 %v1264, %v1459
      %v1561 = vadd.f32 %v1265, %v1461
      %v1562 = vadd.f32 %v1266, %v1502
      %v1563 = vadd.f32 %v1267, %v1504
      %v1564 = vadd.f32 %v1268, %v1544
      %s1565 = scalar_lea.vmem %s4, 32
      %v1566 = vld [vmem:[%s1565] sm:$0xf]
      %v1567 = vld [vmem:[%s1565 + $0x4] sm:$0xf]
      %v1570 = vunpack.c.l.b16 %v1566
      %v1571 = vunpack.c.l.b16 %v1567
      %v1572 = vpack.c.b16 %v1571, %v1570
      %1573 = vrot.lane.b32.xlu0 %v444, 93
      %v1574 = vpop.permute.xlu0 %1573
      %1575 = vrot.lane.b32.xlu0 %v445, 93
      %v1576 = vpop.permute.xlu0 %1575
      %1577 = vrot.lane.b32.xlu0 %v446, 93
      %v1578 = vpop.permute.xlu0 %1577
      %1579 = vrot.lane.b32.xlu0 %v447, 93
      %v1580 = vpop.permute.xlu0 %1579
      %1581 = vrot.lane.b32.xlu0 %v448, 93
      %v1582 = vpop.permute.xlu0 %1581
      %1583 = vrot.lane.b32.xlu0 %v449, 93
      %v1584 = vpop.permute.xlu0 %1583
      %1585 = vrot.lane.b32.xlu0 %v450, 93
      %v1586 = vpop.permute.xlu0 %1585
      %1587 = vrot.lane.b32.xlu0 %v451, 93
      %v1588 = vpop.permute.xlu0 %1587
      %1589 = vrot.lane.b32.xlu0 %v452, 93
      %v1590 = vpop.permute.xlu0 %1589
      %vm1591 = vcmask 760832
      %v1592 = vsel %vm1591, %v1574, %v1576
      %v1593 = vsel %vm1591, %v1576, %v1578
      %v1594 = vsel %vm1591, %v1578, %v1580
      %v1595 = vsel %vm1591, %v1580, %v1582
      %v1596 = vsel %vm1591, %v1582, %v1584
      %v1597 = vsel %vm1591, %v1584, %v1586
      %v1598 = vsel %vm1591, %v1586, %v1588
      %v1599 = vsel %vm1591, %v1588, %v1590
      %v1601 = vsel %vm480, %v1572, 0
      %v1604 = vsel %vm484, %v1592, 0
      %v1607 = vsel %vm484, %v1593, 0
      %v1610 = vsel %vm484, %v1594, 0
      %v1613 = vsel %vm484, %v1595, 0
      %v1616 = vsel %vm484, %v1596, 0
      %v1619 = vsel %vm484, %v1597, 0
      %v1622 = vsel %vm484, %v1598, 0
      %v1625 = vsel %vm484, %v1599, 0
      %v1628 = vsel %vm484, %v1590, 0
      %1630 = vmatprep.subr.bf16.mxu0 %v1607
      %1631 = vmatpush1.bf16.msra.mxu0 %v1604
      %1632 = vmatprep.subr.bf16.mxu0 0
      %1633 = vmatpush1.bf16.msra.mxu0 0
      %1634 = vmatprep.subr.bf16.mxu0 0
      %1635 = vmatpush1.bf16.msra.mxu0 0
      %1636 = vmatprep.subr.bf16.mxu0 0
      %1637 = vmatpush1.bf16.msra.mxu0 0
      %1638 = vmatprep.subr.bf16.mxu0 0
      %1639 = vmatpush1.bf16.msra.mxu0 0
      %1640 = vmatprep.subr.bf16.mxu0 0
      %1641 = vmatpush1.bf16.msra.mxu0 0
      %1642 = vmatprep.subr.bf16.mxu0 0
      %1643 = vmatpush1.bf16.msra.mxu0 0
      %1644 = vmatprep.subr.bf16.mxu0 0
      %1645 = vmatpush1.bf16.msra.mxu0 0
      %1646 = vmatprep.subr.bf16.mxu0 0
      %1647 = vmatpush1.bf16.msra.mxu0 0
      %1648 = vmatprep.subr.bf16.mxu0 0
      %1649 = vmatpush1.bf16.msra.mxu0 0
      %1650 = vmatprep.subr.bf16.mxu0 0
      %1651 = vmatpush1.bf16.msra.mxu0 0
      %1652 = vmatprep.subr.bf16.mxu0 0
      %1653 = vmatpush1.bf16.msra.mxu0 0
      %1654 = vmatprep.subr.bf16.mxu0 0
      %1655 = vmatpush1.bf16.msra.mxu0 0
      %1656 = vmatprep.subr.bf16.mxu0 0
      %1657 = vmatpush1.bf16.msra.mxu0 0
      %1658 = vmatprep.subr.bf16.mxu0 0
      %1659 = vmatpush1.bf16.msra.mxu0 0
      %1660 = vmatprep.subr.bf16.mxu0 0
      %1661 = vmatpush1.bf16.msra.mxu0 0
      %1662 = vmatprep.mubr.bf16.mxu0 0
      %1663 = vmatmul.mubr.bf16.gmra.mrb[0].mxu0 %v1601
      %v1664 = vpop.f32.mrb[0].mxu0
      %v1665 = vadd.f32 0.0, %v1664
      %v1666 = vpop.f32.mrb[0].mxu0
      %v1667 = vadd.f32 0.0, %v1666
      %v1668 = vpop.f32.mrb[0].mxu0
      %v1669 = vadd.f32 0.0, %v1668
      %v1670 = vpop.f32.mrb[0].mxu0
      %v1671 = vadd.f32 0.0, %v1670
      %1672 = vdwg.mxu0
      %1673 = vmatprep.subr.bf16.mxu0 %v1613
      %1674 = vmatpush1.bf16.msra.mxu0 %v1610
      %1675 = vmatprep.subr.bf16.mxu0 0
      %1676 = vmatpush1.bf16.msra.mxu0 0
      %1677 = vmatprep.subr.bf16.mxu0 0
      %1678 = vmatpush1.bf16.msra.mxu0 0
      %1679 = vmatprep.subr.bf16.mxu0 0
      %1680 = vmatpush1.bf16.msra.mxu0 0
      %1681 = vmatprep.subr.bf16.mxu0 0
      %1682 = vmatpush1.bf16.msra.mxu0 0
      %1683 = vmatprep.subr.bf16.mxu0 0
      %1684 = vmatpush1.bf16.msra.mxu0 0
      %1685 = vmatprep.subr.bf16.mxu0 0
      %1686 = vmatpush1.bf16.msra.mxu0 0
      %1687 = vmatprep.subr.bf16.mxu0 0
      %1688 = vmatpush1.bf16.msra.mxu0 0
      %1689 = vmatprep.subr.bf16.mxu0 0
      %1690 = vmatpush1.bf16.msra.mxu0 0
      %1691 = vmatprep.subr.bf16.mxu0 0
      %1692 = vmatpush1.bf16.msra.mxu0 0
      %1693 = vmatprep.subr.bf16.mxu0 0
      %1694 = vmatpush1.bf16.msra.mxu0 0
      %1695 = vmatprep.subr.bf16.mxu0 0
      %1696 = vmatpush1.bf16.msra.mxu0 0
      %1697 = vmatprep.subr.bf16.mxu0 0
      %1698 = vmatpush1.bf16.msra.mxu0 0
      %1699 = vmatprep.subr.bf16.mxu0 0
      %1700 = vmatpush1.bf16.msra.mxu0 0
      %1701 = vmatprep.subr.bf16.mxu0 0
      %1702 = vmatpush1.bf16.msra.mxu0 0
      %1703 = vmatprep.subr.bf16.mxu0 0
      %1704 = vmatpush1.bf16.msra.mxu0 0
      %1705 = vmatprep.mubr.bf16.mxu0 0
      %1706 = vmatmul.mubr.bf16.gmra.mrb[0].mxu0 %v1601
      %v1707 = vpop.f32.mrb[0].mxu0
      %v1708 = vadd.f32 0.0, %v1707
      %v1709 = vpop.f32.mrb[0].mxu0
      %v1710 = vadd.f32 0.0, %v1709
      %v1711 = vpop.f32.mrb[0].mxu0
      %v1712 = vadd.f32 0.0, %v1711
      %v1713 = vpop.f32.mrb[0].mxu0
      %v1714 = vadd.f32 0.0, %v1713
      %1715 = vdwg.mxu0
      %1716 = vmatprep.subr.bf16.mxu0 %v1619
      %1717 = vmatpush1.bf16.msra.mxu0 %v1616
      %1718 = vmatprep.subr.bf16.mxu0 0
      %1719 = vmatpush1.bf16.msra.mxu0 0
      %1720 = vmatprep.subr.bf16.mxu0 0
      %1721 = vmatpush1.bf16.msra.mxu0 0
      %1722 = vmatprep.subr.bf16.mxu0 0
      %1723 = vmatpush1.bf16.msra.mxu0 0
      %1724 = vmatprep.subr.bf16.mxu0 0
      %1725 = vmatpush1.bf16.msra.mxu0 0
      %1726 = vmatprep.subr.bf16.mxu0 0
      %1727 = vmatpush1.bf16.msra.mxu0 0
      %1728 = vmatprep.subr.bf16.mxu0 0
      %1729 = vmatpush1.bf16.msra.mxu0 0
      %1730 = vmatprep.subr.bf16.mxu0 0
      %1731 = vmatpush1.bf16.msra.mxu0 0
      %1732 = vmatprep.subr.bf16.mxu0 0
      %1733 = vmatpush1.bf16.msra.mxu0 0
      %1734 = vmatprep.subr.bf16.mxu0 0
      %1735 = vmatpush1.bf16.msra.mxu0 0
      %1736 = vmatprep.subr.bf16.mxu0 0
      %1737 = vmatpush1.bf16.msra.mxu0 0
      %1738 = vmatprep.subr.bf16.mxu0 0
      %1739 = vmatpush1.bf16.msra.mxu0 0
      %1740 = vmatprep.subr.bf16.mxu0 0
      %1741 = vmatpush1.bf16.msra.mxu0 0
      %1742 = vmatprep.subr.bf16.mxu0 0
      %1743 = vmatpush1.bf16.msra.mxu0 0
      %1744 = vmatprep.subr.bf16.mxu0 0
      %1745 = vmatpush1.bf16.msra.mxu0 0
      %1746 = vmatprep.subr.bf16.mxu0 0
      %1747 = vmatpush1.bf16.msra.mxu0 0
      %1748 = vmatprep.mubr.bf16.mxu0 0
      %1749 = vmatmul.mubr.bf16.gmra.mrb[0].mxu0 %v1601
      %v1750 = vpop.f32.mrb[0].mxu0
      %v1751 = vadd.f32 0.0, %v1750
      %v1752 = vpop.f32.mrb[0].mxu0
      %v1753 = vadd.f32 0.0, %v1752
      %v1754 = vpop.f32.mrb[0].mxu0
      %v1755 = vadd.f32 0.0, %v1754
      %v1756 = vpop.f32.mrb[0].mxu0
      %v1757 = vadd.f32 0.0, %v1756
      %1758 = vdwg.mxu0
      %1759 = vmatprep.subr.bf16.mxu0 %v1625
      %1760 = vmatpush1.bf16.msra.mxu0 %v1622
      %1761 = vmatprep.subr.bf16.mxu0 0
      %1762 = vmatpush1.bf16.msra.mxu0 0
      %1763 = vmatprep.subr.bf16.mxu0 0
      %1764 = vmatpush1.bf16.msra.mxu0 0
      %1765 = vmatprep.subr.bf16.mxu0 0
      %1766 = vmatpush1.bf16.msra.mxu0 0
      %1767 = vmatprep.subr.bf16.mxu0 0
      %1768 = vmatpush1.bf16.msra.mxu0 0
      %1769 = vmatprep.subr.bf16.mxu0 0
      %1770 = vmatpush1.bf16.msra.mxu0 0
      %1771 = vmatprep.subr.bf16.mxu0 0
      %1772 = vmatpush1.bf16.msra.mxu0 0
      %1773 = vmatprep.subr.bf16.mxu0 0
      %1774 = vmatpush1.bf16.msra.mxu0 0
      %1775 = vmatprep.subr.bf16.mxu0 0
      %1776 = vmatpush1.bf16.msra.mxu0 0
      %1777 = vmatprep.subr.bf16.mxu0 0
      %1778 = vmatpush1.bf16.msra.mxu0 0
      %1779 = vmatprep.subr.bf16.mxu0 0
      %1780 = vmatpush1.bf16.msra.mxu0 0
      %1781 = vmatprep.subr.bf16.mxu0 0
      %1782 = vmatpush1.bf16.msra.mxu0 0
      %1783 = vmatprep.subr.bf16.mxu0 0
      %1784 = vmatpush1.bf16.msra.mxu0 0
      %1785 = vmatprep.subr.bf16.mxu0 0
      %1786 = vmatpush1.bf16.msra.mxu0 0
      %1787 = vmatprep.subr.bf16.mxu0 0
      %1788 = vmatpush1.bf16.msra.mxu0 0
      %1789 = vmatprep.subr.bf16.mxu0 0
      %1790 = vmatpush1.bf16.msra.mxu0 0
      %1791 = vmatprep.mubr.bf16.mxu0 0
      %1792 = vmatmul.mubr.bf16.gmra.mrb[0].mxu0 %v1601
      %v1793 = vpop.f32.mrb[0].mxu0
      %v1794 = vadd.f32 0.0, %v1793
      %v1795 = vpop.f32.mrb[0].mxu0
      %v1796 = vadd.f32 0.0, %v1795
      %v1797 = vpop.f32.mrb[0].mxu0
      %v1798 = vadd.f32 0.0, %v1797
      %v1799 = vpop.f32.mrb[0].mxu0
      %v1800 = vadd.f32 0.0, %v1799
      %1801 = vdwg.mxu0
      %1802 = vmatprep.subr.bf16.mxu0 0
      %1803 = vmatpush1.bf16.msra.mxu0 %v1628
      %1804 = vmatprep.subr.bf16.mxu0 0
      %1805 = vmatpush1.bf16.msra.mxu0 0
      %1806 = vmatprep.subr.bf16.mxu0 0
      %1807 = vmatpush1.bf16.msra.mxu0 0
      %1808 = vmatprep.subr.bf16.mxu0 0
      %1809 = vmatpush1.bf16.msra.mxu0 0
      %1810 = vmatprep.subr.bf16.mxu0 0
      %1811 = vmatpush1.bf16.msra.mxu0 0
      %1812 = vmatprep.subr.bf16.mxu0 0
      %1813 = vmatpush1.bf16.msra.mxu0 0
      %1814 = vmatprep.subr.bf16.mxu0 0
      %1815 = vmatpush1.bf16.msra.mxu0 0
      %1816 = vmatprep.subr.bf16.mxu0 0
      %1817 = vmatpush1.bf16.msra.mxu0 0
      %1818 = vmatprep.subr.bf16.mxu0 0
      %1819 = vmatpush1.bf16.msra.mxu0 0
      %1820 = vmatprep.subr.bf16.mxu0 0
      %1821 = vmatpush1.bf16.msra.mxu0 0
      %1822 = vmatprep.subr.bf16.mxu0 0
      %1823 = vmatpush1.bf16.msra.mxu0 0
      %1824 = vmatprep.subr.bf16.mxu0 0
      %1825 = vmatpush1.bf16.msra.mxu0 0
      %1826 = vmatprep.subr.bf16.mxu0 0
      %1827 = vmatpush1.bf16.msra.mxu0 0
      %1828 = vmatprep.subr.bf16.mxu0 0
      %1829 = vmatpush1.bf16.msra.mxu0 0
      %1830 = vmatprep.subr.bf16.mxu0 0
      %1831 = vmatpush1.bf16.msra.mxu0 0
      %1832 = vmatprep.subr.bf16.mxu0 0
      %1833 = vmatpush1.bf16.msra.mxu0 0
      %1834 = vmatprep.mubr.bf16.mxu0 0
      %1835 = vmatmul.mubr.bf16.gmra.mrb[0].mxu0 %v1601
      %v1836 = vpop.f32.mrb[0].mxu0
      %v1837 = vadd.f32 0.0, %v1836
      %v1838 = vpop.f32.mrb[0].mxu0
      %v1839 = vpop.f32.mrb[0].mxu0
      %v1840 = vadd.f32 0.0, %v1839
      %v1841 = vpop.f32.mrb[0].mxu0
      %1842 = vdwg.mxu0
      %v1843 = vadd.f32 %v1547, %v1665
      %v1844 = vadd.f32 %v1548, %v1667
      %v1845 = vadd.f32 %v1549, %v1708
      %v1846 = vadd.f32 %v1550, %v1710
      %v1847 = vadd.f32 %v1551, %v1751
      %v1848 = vadd.f32 %v1552, %v1753
      %v1849 = vadd.f32 %v1553, %v1794
      %v1850 = vadd.f32 %v1554, %v1796
      %v1851 = vadd.f32 %v1555, %v1837
      %v1852 = vadd.f32 %v1556, %v1669
      %v1853 = vadd.f32 %v1557, %v1671
      %v1854 = vadd.f32 %v1558, %v1712
      %v1855 = vadd.f32 %v1559, %v1714
      %v1856 = vadd.f32 %v1560, %v1755
      %v1857 = vadd.f32 %v1561, %v1757
      %v1858 = vadd.f32 %v1562, %v1798
      %v1859 = vadd.f32 %v1563, %v1800
      %v1860 = vadd.f32 %v1564, %v1840
      %s1861 = scalar_lea.vmem %s4, 40
      %v1862 = vld [vmem:[%s1861] sm:$0xf]
      %v1863 = vld [vmem:[%s1861 + $0x4] sm:$0xf]
      %v1866 = vunpack.c.l.b16 %v1862
      %v1867 = vunpack.c.l.b16 %v1863
      %v1868 = vpack.c.b16 %v1867, %v1866
      %1869 = vrot.lane.b32.xlu0 %v444, 92
      %v1870 = vpop.permute.xlu0 %1869
      %1871 = vrot.lane.b32.xlu0 %v445, 92
      %v1872 = vpop.permute.xlu0 %1871
      %1873 = vrot.lane.b32.xlu0 %v446, 92
      %v1874 = vpop.permute.xlu0 %1873
      %1875 = vrot.lane.b32.xlu0 %v447, 92
      %v1876 = vpop.permute.xlu0 %1875
      %1877 = vrot.lane.b32.xlu0 %v448, 92
      %v1878 = vpop.permute.xlu0 %1877
      %1879 = vrot.lane.b32.xlu0 %v449, 92
      %v1880 = vpop.permute.xlu0 %1879
      %1881 = vrot.lane.b32.xlu0 %v450, 92
      %v1882 = vpop.permute.xlu0 %1881
      %1883 = vrot.lane.b32.xlu0 %v451, 92
      %v1884 = vpop.permute.xlu0 %1883
      %1885 = vrot.lane.b32.xlu0 %v452, 92
      %v1886 = vpop.permute.xlu0 %1885
      %vm1887 = vcmask 752640
      %v1888 = vsel %vm1887, %v1870, %v1872
      %v1889 = vsel %vm1887, %v1872, %v1874
      %v1890 = vsel %vm1887, %v1874, %v1876
      %v1891 = vsel %vm1887, %v1876, %v1878
      %v1892 = vsel %vm1887, %v1878, %v1880
      %v1893 = vsel %vm1887, %v1880, %v1882
      %v1894 = vsel %vm1887, %v1882, %v1884
      %v1895 = vsel %vm1887, %v1884, %v1886
      %v1897 = vsel %vm480, %v1868, 0
      %v1900 = vsel %vm484, %v1888, 0
      %v1903 = vsel %vm484, %v1889, 0
      %v1906 = vsel %vm484, %v1890, 0
      %v1909 = vsel %vm484, %v1891, 0
      %v1912 = vsel %vm484, %v1892, 0
      %v1915 = vsel %vm484, %v1893, 0
      %v1918 = vsel %vm484, %v1894, 0
      %v1921 = vsel %vm484, %v1895, 0
      %v1924 = vsel %vm484, %v1886, 0
      %1926 = vmatprep.subr.bf16.mxu0 %v1903
      %1927 = vmatpush1.bf16.msra.mxu0 %v1900
      %1928 = vmatprep.subr.bf16.mxu0 0
      %1929 = vmatpush1.bf16.msra.mxu0 0
      %1930 = vmatprep.subr.bf16.mxu0 0
      %1931 = vmatpush1.bf16.msra.mxu0 0
      %1932 = vmatprep.subr.bf16.mxu0 0
      %1933 = vmatpush1.bf16.msra.mxu0 0
      %1934 = vmatprep.subr.bf16.mxu0 0
      %1935 = vmatpush1.bf16.msra.mxu0 0
      %1936 = vmatprep.subr.bf16.mxu0 0
      %1937 = vmatpush1.bf16.msra.mxu0 0
      %1938 = vmatprep.subr.bf16.mxu0 0
      %1939 = vmatpush1.bf16.msra.mxu0 0
      %1940 = vmatprep.subr.bf16.mxu0 0
      %1941 = vmatpush1.bf16.msra.mxu0 0
      %1942 = vmatprep.subr.bf16.mxu0 0
      %1943 = vmatpush1.bf16.msra.mxu0 0
      %1944 = vmatprep.subr.bf16.mxu0 0
      %1945 = vmatpush1.bf16.msra.mxu0 0
      %1946 = vmatprep.subr.bf16.mxu0 0
      %1947 = vmatpush1.bf16.msra.mxu0 0
      %1948 = vmatprep.subr.bf16.mxu0 0
      %1949 = vmatpush1.bf16.msra.mxu0 0
      %1950 = vmatprep.subr.bf16.mxu0 0
      %1951 = vmatpush1.bf16.msra.mxu0 0
      %1952 = vmatprep.subr.bf16.mxu0 0
      %1953 = vmatpush1.bf16.msra.mxu0 0
      %1954 = vmatprep.subr.bf16.mxu0 0
      %1955 = vmatpush1.bf16.msra.mxu0 0
      %1956 = vmatprep.subr.bf16.mxu0 0
      %1957 = vmatpush1.bf16.msra.mxu0 0
      %1958 = vmatprep.mubr.bf16.mxu0 0
      %1959 = vmatmul.mubr.bf16.gmra.mrb[0].mxu0 %v1897
      %v1960 = vpop.f32.mrb[0].mxu0
      %v1961 = vadd.f32 0.0, %v1960
      %v1962 = vpop.f32.mrb[0].mxu0
      %v1963 = vadd.f32 0.0, %v1962
      %v1964 = vpop.f32.mrb[0].mxu0
      %v1965 = vadd.f32 0.0, %v1964
      %v1966 = vpop.f32.mrb[0].mxu0
      %v1967 = vadd.f32 0.0, %v1966
      %1968 = vdwg.mxu0
      %1969 = vmatprep.subr.bf16.mxu0 %v1909
      %1970 = vmatpush1.bf16.msra.mxu0 %v1906
      %1971 = vmatprep.subr.bf16.mxu0 0
      %1972 = vmatpush1.bf16.msra.mxu0 0
      %1973 = vmatprep.subr.bf16.mxu0 0
      %1974 = vmatpush1.bf16.msra.mxu0 0
      %1975 = vmatprep.subr.bf16.mxu0 0
      %1976 = vmatpush1.bf16.msra.mxu0 0
      %1977 = vmatprep.subr.bf16.mxu0 0
      %1978 = vmatpush1.bf16.msra.mxu0 0
      %1979 = vmatprep.subr.bf16.mxu0 0
      %1980 = vmatpush1.bf16.msra.mxu0 0
      %1981 = vmatprep.subr.bf16.mxu0 0
      %1982 = vmatpush1.bf16.msra.mxu0 0
      %1983 = vmatprep.subr.bf16.mxu0 0
      %1984 = vmatpush1.bf16.msra.mxu0 0
      %1985 = vmatprep.subr.bf16.mxu0 0
      %1986 = vmatpush1.bf16.msra.mxu0 0
      %1987 = vmatprep.subr.bf16.mxu0 0
      %1988 = vmatpush1.bf16.msra.mxu0 0
      %1989 = vmatprep.subr.bf16.mxu0 0
      %1990 = vmatpush1.bf16.msra.mxu0 0
      %1991 = vmatprep.subr.bf16.mxu0 0
      %1992 = vmatpush1.bf16.msra.mxu0 0
      %1993 = vmatprep.subr.bf16.mxu0 0
      %1994 = vmatpush1.bf16.msra.mxu0 0
      %1995 = vmatprep.subr.bf16.mxu0 0
      %1996 = vmatpush1.bf16.msra.mxu0 0
      %1997 = vmatprep.subr.bf16.mxu0 0
      %1998 = vmatpush1.bf16.msra.mxu0 0
      %1999 = vmatprep.subr.bf16.mxu0 0
      %2000 = vmatpush1.bf16.msra.mxu0 0
      %2001 = vmatprep.mubr.bf16.mxu0 0
      %2002 = vmatmul.mubr.bf16.gmra.mrb[0].mxu0 %v1897
      %v2003 = vpop.f32.mrb[0].mxu0
      %v2004 = vadd.f32 0.0, %v2003
      %v2005 = vpop.f32.mrb[0].mxu0
      %v2006 = vadd.f32 0.0, %v2005
      %v2007 = vpop.f32.mrb[0].mxu0
      %v2008 = vadd.f32 0.0, %v2007
      %v2009 = vpop.f32.mrb[0].mxu0
      %v2010 = vadd.f32 0.0, %v2009
      %2011 = vdwg.mxu0
      %2012 = vmatprep.subr.bf16.mxu0 %v1915
      %2013 = vmatpush1.bf16.msra.mxu0 %v1912
      %2014 = vmatprep.subr.bf16.mxu0 0
      %2015 = vmatpush1.bf16.msra.mxu0 0
      %2016 = vmatprep.subr.bf16.mxu0 0
      %2017 = vmatpush1.bf16.msra.mxu0 0
      %2018 = vmatprep.subr.bf16.mxu0 0
      %2019 = vmatpush1.bf16.msra.mxu0 0
      %2020 = vmatprep.subr.bf16.mxu0 0
      %2021 = vmatpush1.bf16.msra.mxu0 0
      %2022 = vmatprep.subr.bf16.mxu0 0
      %2023 = vmatpush1.bf16.msra.mxu0 0
      %2024 = vmatprep.subr.bf16.mxu0 0
      %2025 = vmatpush1.bf16.msra.mxu0 0
      %2026 = vmatprep.subr.bf16.mxu0 0
      %2027 = vmatpush1.bf16.msra.mxu0 0
      %2028 = vmatprep.subr.bf16.mxu0 0
      %2029 = vmatpush1.bf16.msra.mxu0 0
      %2030 = vmatprep.subr.bf16.mxu0 0
      %2031 = vmatpush1.bf16.msra.mxu0 0
      %2032 = vmatprep.subr.bf16.mxu0 0
      %2033 = vmatpush1.bf16.msra.mxu0 0
      %2034 = vmatprep.subr.bf16.mxu0 0
      %2035 = vmatpush1.bf16.msra.mxu0 0
      %2036 = vmatprep.subr.bf16.mxu0 0
      %2037 = vmatpush1.bf16.msra.mxu0 0
      %2038 = vmatprep.subr.bf16.mxu0 0
      %2039 = vmatpush1.bf16.msra.mxu0 0
      %2040 = vmatprep.subr.bf16.mxu0 0
      %2041 = vmatpush1.bf16.msra.mxu0 0
      %2042 = vmatprep.subr.bf16.mxu0 0
      %2043 = vmatpush1.bf16.msra.mxu0 0
      %2044 = vmatprep.mubr.bf16.mxu0 0
      %2045 = vmatmul.mubr.bf16.gmra.mrb[0].mxu0 %v1897
      %v2046 = vpop.f32.mrb[0].mxu0
      %v2047 = vadd.f32 0.0, %v2046
      %v2048 = vpop.f32.mrb[0].mxu0
      %v2049 = vadd.f32 0.0, %v2048
      %v2050 = vpop.f32.mrb[0].mxu0
      %v2051 = vadd.f32 0.0, %v2050
      %v2052 = vpop.f32.mrb[0].mxu0
      %v2053 = vadd.f32 0.0, %v2052
      %2054 = vdwg.mxu0
      %2055 = vmatprep.subr.bf16.mxu0 %v1921
      %2056 = vmatpush1.bf16.msra.mxu0 %v1918
      %2057 = vmatprep.subr.bf16.mxu0 0
      %2058 = vmatpush1.bf16.msra.mxu0 0
      %2059 = vmatprep.subr.bf16.mxu0 0
      %2060 = vmatpush1.bf16.msra.mxu0 0
      %2061 = vmatprep.subr.bf16.mxu0 0
      %2062 = vmatpush1.bf16.msra.mxu0 0
      %2063 = vmatprep.subr.bf16.mxu0 0
      %2064 = vmatpush1.bf16.msra.mxu0 0
      %2065 = vmatprep.subr.bf16.mxu0 0
      %2066 = vmatpush1.bf16.msra.mxu0 0
      %2067 = vmatprep.subr.bf16.mxu0 0
      %2068 = vmatpush1.bf16.msra.mxu0 0
      %2069 = vmatprep.subr.bf16.mxu0 0
      %2070 = vmatpush1.bf16.msra.mxu0 0
      %2071 = vmatprep.subr.bf16.mxu0 0
      %2072 = vmatpush1.bf16.msra.mxu0 0
      %2073 = vmatprep.subr.bf16.mxu0 0
      %2074 = vmatpush1.bf16.msra.mxu0 0
      %2075 = vmatprep.subr.bf16.mxu0 0
      %2076 = vmatpush1.bf16.msra.mxu0 0
      %2077 = vmatprep.subr.bf16.mxu0 0
      %2078 = vmatpush1.bf16.msra.mxu0 0
      %2079 = vmatprep.subr.bf16.mxu0 0
      %2080 = vmatpush1.bf16.msra.mxu0 0
      %2081 = vmatprep.subr.bf16.mxu0 0
      %2082 = vmatpush1.bf16.msra.mxu0 0
      %2083 = vmatprep.subr.bf16.mxu0 0
      %2084 = vmatpush1.bf16.msra.mxu0 0
      %2085 = vmatprep.subr.bf16.mxu0 0
      %2086 = vmatpush1.bf16.msra.mxu0 0
      %2087 = vmatprep.mubr.bf16.mxu0 0
      %2088 = vmatmul.mubr.bf16.gmra.mrb[0].mxu0 %v1897
      %v2089 = vpop.f32.mrb[0].mxu0
      %v2090 = vadd.f32 0.0, %v2089
      %v2091 = vpop.f32.mrb[0].mxu0
      %v2092 = vadd.f32 0.0, %v2091
      %v2093 = vpop.f32.mrb[0].mxu0
      %v2094 = vadd.f32 0.0, %v2093
      %v2095 = vpop.f32.mrb[0].mxu0
      %v2096 = vadd.f32 0.0, %v2095
      %2097 = vdwg.mxu0
      %2098 = vmatprep.subr.bf16.mxu0 0
      %2099 = vmatpush1.bf16.msra.mxu0 %v1924
      %2100 = vmatprep.subr.bf16.mxu0 0
      %2101 = vmatpush1.bf16.msra.mxu0 0
      %2102 = vmatprep.subr.bf16.mxu0 0
      %2103 = vmatpush1.bf16.msra.mxu0 0
      %2104 = vmatprep.subr.bf16.mxu0 0
      %2105 = vmatpush1.bf16.msra.mxu0 0
      %2106 = vmatprep.subr.bf16.mxu0 0
      %2107 = vmatpush1.bf16.msra.mxu0 0
      %2108 = vmatprep.subr.bf16.mxu0 0
      %2109 = vmatpush1.bf16.msra.mxu0 0
      %2110 = vmatprep.subr.bf16.mxu0 0
      %2111 = vmatpush1.bf16.msra.mxu0 0
      %2112 = vmatprep.subr.bf16.mxu0 0
      %2113 = vmatpush1.bf16.msra.mxu0 0
      %2114 = vmatprep.subr.bf16.mxu0 0
      %2115 = vmatpush1.bf16.msra.mxu0 0
      %2116 = vmatprep.subr.bf16.mxu0 0
      %2117 = vmatpush1.bf16.msra.mxu0 0
      %2118 = vmatprep.subr.bf16.mxu0 0
      %2119 = vmatpush1.bf16.msra.mxu0 0
      %2120 = vmatprep.subr.bf16.mxu0 0
      %2121 = vmatpush1.bf16.msra.mxu0 0
      %2122 = vmatprep.subr.bf16.mxu0 0
      %2123 = vmatpush1.bf16.msra.mxu0 0
      %2124 = vmatprep.subr.bf16.mxu0 0
      %2125 = vmatpush1.bf16.msra.mxu0 0
      %2126 = vmatprep.subr.bf16.mxu0 0
      %2127 = vmatpush1.bf16.msra.mxu0 0
      %2128 = vmatprep.subr.bf16.mxu0 0
      %2129 = vmatpush1.bf16.msra.mxu0 0
      %2130 = vmatprep.mubr.bf16.mxu0 0
      %2131 = vmatmul.mubr.bf16.gmra.mrb[0].mxu0 %v1897
      %v2132 = vpop.f32.mrb[0].mxu0
      %v2133 = vadd.f32 0.0, %v2132
      %v2134 = vpop.f32.mrb[0].mxu0
      %v2135 = vpop.f32.mrb[0].mxu0
      %v2136 = vadd.f32 0.0, %v2135
      %v2137 = vpop.f32.mrb[0].mxu0
      %2138 = vdwg.mxu0
      %v2139 = vadd.f32 %v1843, %v1961
      %v2140 = vadd.f32 %v1844, %v1963
      %v2141 = vadd.f32 %v1845, %v2004
      %v2142 = vadd.f32 %v1846, %v2006
      %v2143 = vadd.f32 %v1847, %v2047
      %v2144 = vadd.f32 %v1848, %v2049
      %v2145 = vadd.f32 %v1849, %v2090
      %v2146 = vadd.f32 %v1850, %v2092
      %v2147 = vadd.f32 %v1851, %v2133
      %v2148 = vadd.f32 %v1852, %v1965
      %v2149 = vadd.f32 %v1853, %v1967
      %v2150 = vadd.f32 %v1854, %v2008
      %v2151 = vadd.f32 %v1855, %v2010
      %v2152 = vadd.f32 %v1856, %v2051
      %v2153 = vadd.f32 %v1857, %v2053
      %v2154 = vadd.f32 %v1858, %v2094
      %v2155 = vadd.f32 %v1859, %v2096
      %v2156 = vadd.f32 %v1860, %v2136
      %s2157 = scalar_lea.vmem %s4, 48
      %v2158 = vld [vmem:[%s2157] sm:$0xf]
      %v2159 = vld [vmem:[%s2157 + $0x4] sm:$0xf]
      %v2162 = vunpack.c.l.b16 %v2158
      %v2163 = vunpack.c.l.b16 %v2159
      %v2164 = vpack.c.b16 %v2163, %v2162
      %v2165 = vunpack.c.h.b16 %v419
      %v2166 = vpack.c.b16 %v2165, %v2165
      %2167 = vrot.lane.b32.xlu0 %v444, 60
      %v2168 = vpop.permute.xlu0 %2167
      %2169 = vrot.lane.b32.xlu0 %v445, 60
      %v2170 = vpop.permute.xlu0 %2169
      %2171 = vrot.lane.b32.xlu0 %v446, 60
      %v2172 = vpop.permute.xlu0 %2171
      %2173 = vrot.lane.b32.xlu0 %v447, 60
      %v2174 = vpop.permute.xlu0 %2173
      %2175 = vrot.lane.b32.xlu0 %v448, 60
      %v2176 = vpop.permute.xlu0 %2175
      %2177 = vrot.lane.b32.xlu0 %v449, 60
      %v2178 = vpop.permute.xlu0 %2177
      %2179 = vrot.lane.b32.xlu0 %v450, 60
      %v2180 = vpop.permute.xlu0 %2179
      %2181 = vrot.lane.b32.xlu0 %v451, 60
      %v2182 = vpop.permute.xlu0 %2181
      %2183 = vrot.lane.b32.xlu0 %v452, 60
      %v2184 = vpop.permute.xlu0 %2183
      %2185 = vrot.lane.b32.xlu0 %v2166, 60
      %v2186 = vpop.permute.xlu0 %2185
      %vm2187 = vcmask 490496
      %v2188 = vsel %vm2187, %v2168, %v2170
      %v2189 = vsel %vm2187, %v2170, %v2172
      %v2190 = vsel %vm2187, %v2172, %v2174
      %v2191 = vsel %vm2187, %v2174, %v2176
      %v2192 = vsel %vm2187, %v2176, %v2178
      %v2193 = vsel %vm2187, %v2178, %v2180
      %v2194 = vsel %vm2187, %v2180, %v2182
      %v2195 = vsel %vm2187, %v2182, %v2184
      %v2196 = vsel %vm2187, %v2184, %v2186
      %v2198 = vsel %vm480, %v2164, 0
      %v2201 = vsel %vm484, %v2188, 0
      %v2204 = vsel %vm484, %v2189, 0
      %v2207 = vsel %vm484, %v2190, 0
      %v2210 = vsel %vm484, %v2191, 0
      %v2213 = vsel %vm484, %v2192, 0
      %v2216 = vsel %vm484, %v2193, 0
      %v2219 = vsel %vm484, %v2194, 0
      %v2222 = vsel %vm484, %v2195, 0
      %v2225 = vsel %vm484, %v2196, 0
      %2227 = vmatprep.subr.bf16.mxu0 %v2204
      %2228 = vmatpush1.bf16.msra.mxu0 %v2201
      %2229 = vmatprep.subr.bf16.mxu0 0
      %2230 = vmatpush1.bf16.msra.mxu0 0
      %2231 = vmatprep.subr.bf16.mxu0 0
      %2232 = vmatpush1.bf16.msra.mxu0 0
      %2233 = vmatprep.subr.bf16.mxu0 0
      %2234 = vmatpush1.bf16.msra.mxu0 0
      %2235 = vmatprep.subr.bf16.mxu0 0
      %2236 = vmatpush1.bf16.msra.mxu0 0
      %2237 = vmatprep.subr.bf16.mxu0 0
      %2238 = vmatpush1.bf16.msra.mxu0 0
      %2239 = vmatprep.subr.bf16.mxu0 0
      %2240 = vmatpush1.bf16.msra.mxu0 0
      %2241 = vmatprep.subr.bf16.mxu0 0
      %2242 = vmatpush1.bf16.msra.mxu0 0
      %2243 = vmatprep.subr.bf16.mxu0 0
      %2244 = vmatpush1.bf16.msra.mxu0 0
      %2245 = vmatprep.subr.bf16.mxu0 0
      %2246 = vmatpush1.bf16.msra.mxu0 0
      %2247 = vmatprep.subr.bf16.mxu0 0
      %2248 = vmatpush1.bf16.msra.mxu0 0
      %2249 = vmatprep.subr.bf16.mxu0 0
      %2250 = vmatpush1.bf16.msra.mxu0 0
      %2251 = vmatprep.subr.bf16.mxu0 0
      %2252 = vmatpush1.bf16.msra.mxu0 0
      %2253 = vmatprep.subr.bf16.mxu0 0
      %2254 = vmatpush1.bf16.msra.mxu0 0
      %2255 = vmatprep.subr.bf16.mxu0 0
      %2256 = vmatpush1.bf16.msra.mxu0 0
      %2257 = vmatprep.subr.bf16.mxu0 0
      %2258 = vmatpush1.bf16.msra.mxu0 0
      %2259 = vmatprep.mubr.bf16.mxu0 0
      %2260 = vmatmul.mubr.bf16.gmra.mrb[0].mxu0 %v2198
      %v2261 = vpop.f32.mrb[0].mxu0
      %v2262 = vadd.f32 0.0, %v2261
      %v2263 = vpop.f32.mrb[0].mxu0
      %v2264 = vadd.f32 0.0, %v2263
      %v2265 = vpop.f32.mrb[0].mxu0
      %v2266 = vadd.f32 0.0, %v2265
      %v2267 = vpop.f32.mrb[0].mxu0
      %v2268 = vadd.f32 0.0, %v2267
      %2269 = vdwg.mxu0
      %2270 = vmatprep.subr.bf16.mxu0 %v2210
      %2271 = vmatpush1.bf16.msra.mxu0 %v2207
      %2272 = vmatprep.subr.bf16.mxu0 0
      %2273 = vmatpush1.bf16.msra.mxu0 0
      %2274 = vmatprep.subr.bf16.mxu0 0
      %2275 = vmatpush1.bf16.msra.mxu0 0
      %2276 = vmatprep.subr.bf16.mxu0 0
      %2277 = vmatpush1.bf16.msra.mxu0 0
      %2278 = vmatprep.subr.bf16.mxu0 0
      %2279 = vmatpush1.bf16.msra.mxu0 0
      %2280 = vmatprep.subr.bf16.mxu0 0
      %2281 = vmatpush1.bf16.msra.mxu0 0
      %2282 = vmatprep.subr.bf16.mxu0 0
      %2283 = vmatpush1.bf16.msra.mxu0 0
      %2284 = vmatprep.subr.bf16.mxu0 0
      %2285 = vmatpush1.bf16.msra.mxu0 0
      %2286 = vmatprep.subr.bf16.mxu0 0
      %2287 = vmatpush1.bf16.msra.mxu0 0
      %2288 = vmatprep.subr.bf16.mxu0 0
      %2289 = vmatpush1.bf16.msra.mxu0 0
      %2290 = vmatprep.subr.bf16.mxu0 0
      %2291 = vmatpush1.bf16.msra.mxu0 0
      %2292 = vmatprep.subr.bf16.mxu0 0
      %2293 = vmatpush1.bf16.msra.mxu0 0
      %2294 = vmatprep.subr.bf16.mxu0 0
      %2295 = vmatpush1.bf16.msra.mxu0 0
      %2296 = vmatprep.subr.bf16.mxu0 0
      %2297 = vmatpush1.bf16.msra.mxu0 0
      %2298 = vmatprep.subr.bf16.mxu0 0
      %2299 = vmatpush1.bf16.msra.mxu0 0
      %2300 = vmatprep.subr.bf16.mxu0 0
      %2301 = vmatpush1.bf16.msra.mxu0 0
      %2302 = vmatprep.mubr.bf16.mxu0 0
      %2303 = vmatmul.mubr.bf16.gmra.mrb[0].mxu0 %v2198
      %v2304 = vpop.f32.mrb[0].mxu0
      %v2305 = vadd.f32 0.0, %v2304
      %v2306 = vpop.f32.mrb[0].mxu0
      %v2307 = vadd.f32 0.0, %v2306
      %v2308 = vpop.f32.mrb[0].mxu0
      %v2309 = vadd.f32 0.0, %v2308
      %v2310 = vpop.f32.mrb[0].mxu0
      %v2311 = vadd.f32 0.0, %v2310
      %2312 = vdwg.mxu0
      %2313 = vmatprep.subr.bf16.mxu0 %v2216
      %2314 = vmatpush1.bf16.msra.mxu0 %v2213
      %2315 = vmatprep.subr.bf16.mxu0 0
      %2316 = vmatpush1.bf16.msra.mxu0 0
      %2317 = vmatprep.subr.bf16.mxu0 0
      %2318 = vmatpush1.bf16.msra.mxu0 0
      %2319 = vmatprep.subr.bf16.mxu0 0
      %2320 = vmatpush1.bf16.msra.mxu0 0
      %2321 = vmatprep.subr.bf16.mxu0 0
      %2322 = vmatpush1.bf16.msra.mxu0 0
      %2323 = vmatprep.subr.bf16.mxu0 0
      %2324 = vmatpush1.bf16.msra.mxu0 0
      %2325 = vmatprep.subr.bf16.mxu0 0
      %2326 = vmatpush1.bf16.msra.mxu0 0
      %2327 = vmatprep.subr.bf16.mxu0 0
      %2328 = vmatpush1.bf16.msra.mxu0 0
      %2329 = vmatprep.subr.bf16.mxu0 0
      %2330 = vmatpush1.bf16.msra.mxu0 0
      %2331 = vmatprep.subr.bf16.mxu0 0
      %2332 = vmatpush1.bf16.msra.mxu0 0
      %2333 = vmatprep.subr.bf16.mxu0 0
      %2334 = vmatpush1.bf16.msra.mxu0 0
      %2335 = vmatprep.subr.bf16.mxu0 0
      %2336 = vmatpush1.bf16.msra.mxu0 0
      %2337 = vmatprep.subr.bf16.mxu0 0
      %2338 = vmatpush1.bf16.msra.mxu0 0
      %2339 = vmatprep.subr.bf16.mxu0 0
      %2340 = vmatpush1.bf16.msra.mxu0 0
      %2341 = vmatprep.subr.bf16.mxu0 0
      %2342 = vmatpush1.bf16.msra.mxu0 0
      %2343 = vmatprep.subr.bf16.mxu0 0
      %2344 = vmatpush1.bf16.msra.mxu0 0
      %2345 = vmatprep.mubr.bf16.mxu0 0
      %2346 = vmatmul.mubr.bf16.gmra.mrb[0].mxu0 %v2198
      %v2347 = vpop.f32.mrb[0].mxu0
      %v2348 = vadd.f32 0.0, %v2347
      %v2349 = vpop.f32.mrb[0].mxu0
      %v2350 = vadd.f32 0.0, %v2349
      %v2351 = vpop.f32.mrb[0].mxu0
      %v2352 = vadd.f32 0.0, %v2351
      %v2353 = vpop.f32.mrb[0].mxu0
      %v2354 = vadd.f32 0.0, %v2353
      %2355 = vdwg.mxu0
      %2356 = vmatprep.subr.bf16.mxu0 %v2222
      %2357 = vmatpush1.bf16.msra.mxu0 %v2219
      %2358 = vmatprep.subr.bf16.mxu0 0
      %2359 = vmatpush1.bf16.msra.mxu0 0
      %2360 = vmatprep.subr.bf16.mxu0 0
      %2361 = vmatpush1.bf16.msra.mxu0 0
      %2362 = vmatprep.subr.bf16.mxu0 0
      %2363 = vmatpush1.bf16.msra.mxu0 0
      %2364 = vmatprep.subr.bf16.mxu0 0
      %2365 = vmatpush1.bf16.msra.mxu0 0
      %2366 = vmatprep.subr.bf16.mxu0 0
      %2367 = vmatpush1.bf16.msra.mxu0 0
      %2368 = vmatprep.subr.bf16.mxu0 0
      %2369 = vmatpush1.bf16.msra.mxu0 0
      %2370 = vmatprep.subr.bf16.mxu0 0
      %2371 = vmatpush1.bf16.msra.mxu0 0
      %2372 = vmatprep.subr.bf16.mxu0 0
      %2373 = vmatpush1.bf16.msra.mxu0 0
      %2374 = vmatprep.subr.bf16.mxu0 0
      %2375 = vmatpush1.bf16.msra.mxu0 0
      %2376 = vmatprep.subr.bf16.mxu0 0
      %2377 = vmatpush1.bf16.msra.mxu0 0
      %2378 = vmatprep.subr.bf16.mxu0 0
      %2379 = vmatpush1.bf16.msra.mxu0 0
      %2380 = vmatprep.subr.bf16.mxu0 0
      %2381 = vmatpush1.bf16.msra.mxu0 0
      %2382 = vmatprep.subr.bf16.mxu0 0
      %2383 = vmatpush1.bf16.msra.mxu0 0
      %2384 = vmatprep.subr.bf16.mxu0 0
      %2385 = vmatpush1.bf16.msra.mxu0 0
      %2386 = vmatprep.subr.bf16.mxu0 0
      %2387 = vmatpush1.bf16.msra.mxu0 0
      %2388 = vmatprep.mubr.bf16.mxu0 0
      %2389 = vmatmul.mubr.bf16.gmra.mrb[0].mxu0 %v2198
      %v2390 = vpop.f32.mrb[0].mxu0
      %v2391 = vadd.f32 0.0, %v2390
      %v2392 = vpop.f32.mrb[0].mxu0
      %v2393 = vadd.f32 0.0, %v2392
      %v2394 = vpop.f32.mrb[0].mxu0
      %v2395 = vadd.f32 0.0, %v2394
      %v2396 = vpop.f32.mrb[0].mxu0
      %v2397 = vadd.f32 0.0, %v2396
      %2398 = vdwg.mxu0
      %2399 = vmatprep.subr.bf16.mxu0 0
      %2400 = vmatpush1.bf16.msra.mxu0 %v2225
      %2401 = vmatprep.subr.bf16.mxu0 0
      %2402 = vmatpush1.bf16.msra.mxu0 0
      %2403 = vmatprep.subr.bf16.mxu0 0
      %2404 = vmatpush1.bf16.msra.mxu0 0
      %2405 = vmatprep.subr.bf16.mxu0 0
      %2406 = vmatpush1.bf16.msra.mxu0 0
      %2407 = vmatprep.subr.bf16.mxu0 0
      %2408 = vmatpush1.bf16.msra.mxu0 0
      %2409 = vmatprep.subr.bf16.mxu0 0
      %2410 = vmatpush1.bf16.msra.mxu0 0
      %2411 = vmatprep.subr.bf16.mxu0 0
      %2412 = vmatpush1.bf16.msra.mxu0 0
      %2413 = vmatprep.subr.bf16.mxu0 0
      %2414 = vmatpush1.bf16.msra.mxu0 0
      %2415 = vmatprep.subr.bf16.mxu0 0
      %2416 = vmatpush1.bf16.msra.mxu0 0
      %2417 = vmatprep.subr.bf16.mxu0 0
      %2418 = vmatpush1.bf16.msra.mxu0 0
      %2419 = vmatprep.subr.bf16.mxu0 0
      %2420 = vmatpush1.bf16.msra.mxu0 0
      %2421 = vmatprep.subr.bf16.mxu0 0
      %2422 = vmatpush1.bf16.msra.mxu0 0
      %2423 = vmatprep.subr.bf16.mxu0 0
      %2424 = vmatpush1.bf16.msra.mxu0 0
      %2425 = vmatprep.subr.bf16.mxu0 0
      %2426 = vmatpush1.bf16.msra.mxu0 0
      %2427 = vmatprep.subr.bf16.mxu0 0
      %2428 = vmatpush1.bf16.msra.mxu0 0
      %2429 = vmatprep.subr.bf16.mxu0 0
      %2430 = vmatpush1.bf16.msra.mxu0 0
      %2431 = vmatprep.mubr.bf16.mxu0 0
      %2432 = vmatmul.mubr.bf16.gmra.mrb[0].mxu0 %v2198
      %v2433 = vpop.f32.mrb[0].mxu0
      %v2434 = vadd.f32 0.0, %v2433
      %v2435 = vpop.f32.mrb[0].mxu0
      %v2436 = vpop.f32.mrb[0].mxu0
      %v2437 = vadd.f32 0.0, %v2436
      %v2438 = vpop.f32.mrb[0].mxu0
      %2439 = vdwg.mxu0
      %v2440 = vadd.f32 %v2139, %v2262
      %v2441 = vadd.f32 %v2140, %v2264
      %v2442 = vadd.f32 %v2141, %v2305
      %v2443 = vadd.f32 %v2142, %v2307
      %v2444 = vadd.f32 %v2143, %v2348
      %v2445 = vadd.f32 %v2144, %v2350
      %v2446 = vadd.f32 %v2145, %v2391
      %v2447 = vadd.f32 %v2146, %v2393
      %v2448 = vadd.f32 %v2147, %v2434
      %v2449 = vadd.f32 %v2148, %v2266
      %v2450 = vadd.f32 %v2149, %v2268
      %v2451 = vadd.f32 %v2150, %v2309
      %v2452 = vadd.f32 %v2151, %v2311
      %v2453 = vadd.f32 %v2152, %v2352
      %v2454 = vadd.f32 %v2153, %v2354
      %v2455 = vadd.f32 %v2154, %v2395
      %v2456 = vadd.f32 %v2155, %v2397
      %v2457 = vadd.f32 %v2156, %v2437
      %s2458 = scalar_lea.vmem %s4, 56
      %v2459 = vld [vmem:[%s2458] sm:$0xf]
      %v2460 = vld [vmem:[%s2458 + $0x4] sm:$0xf]
      %v2463 = vunpack.c.l.b16 %v2459
      %v2464 = vunpack.c.l.b16 %v2460
      %v2465 = vpack.c.b16 %v2464, %v2463
      %2466 = vrot.lane.b32.xlu0 %v444, 59
      %v2467 = vpop.permute.xlu0 %2466
      %2468 = vrot.lane.b32.xlu0 %v445, 59
      %v2469 = vpop.permute.xlu0 %2468
      %2470 = vrot.lane.b32.xlu0 %v446, 59
      %v2471 = vpop.permute.xlu0 %2470
      %2472 = vrot.lane.b32.xlu0 %v447, 59
      %v2473 = vpop.permute.xlu0 %2472
      %2474 = vrot.lane.b32.xlu0 %v448, 59
      %v2475 = vpop.permute.xlu0 %2474
      %2476 = vrot.lane.b32.xlu0 %v449, 59
      %v2477 = vpop.permute.xlu0 %2476
      %2478 = vrot.lane.b32.xlu0 %v450, 59
      %v2479 = vpop.permute.xlu0 %2478
      %2480 = vrot.lane.b32.xlu0 %v451, 59
      %v2481 = vpop.permute.xlu0 %2480
      %2482 = vrot.lane.b32.xlu0 %v452, 59
      %v2483 = vpop.permute.xlu0 %2482
      %2484 = vrot.lane.b32.xlu0 %v2166, 59
      %v2485 = vpop.permute.xlu0 %2484
      %vm2486 = vcmask 482304
      %v2487 = vsel %vm2486, %v2467, %v2469
      %v2488 = vsel %vm2486, %v2469, %v2471
      %v2489 = vsel %vm2486, %v2471, %v2473
      %v2490 = vsel %vm2486, %v2473, %v2475
      %v2491 = vsel %vm2486, %v2475, %v2477
      %v2492 = vsel %vm2486, %v2477, %v2479
      %v2493 = vsel %vm2486, %v2479, %v2481
      %v2494 = vsel %vm2486, %v2481, %v2483
      %v2495 = vsel %vm2486, %v2483, %v2485
      %v2497 = vsel %vm480, %v2465, 0
      %v2500 = vsel %vm484, %v2487, 0
      %v2503 = vsel %vm484, %v2488, 0
      %v2506 = vsel %vm484, %v2489, 0
      %v2509 = vsel %vm484, %v2490, 0
      %v2512 = vsel %vm484, %v2491, 0
      %v2515 = vsel %vm484, %v2492, 0
      %v2518 = vsel %vm484, %v2493, 0
      %v2521 = vsel %vm484, %v2494, 0
      %v2524 = vsel %vm484, %v2495, 0
      %2526 = vmatprep.subr.bf16.mxu0 %v2503
      %2527 = vmatpush1.bf16.msra.mxu0 %v2500
      %2528 = vmatprep.subr.bf16.mxu0 0
      %2529 = vmatpush1.bf16.msra.mxu0 0
      %2530 = vmatprep.subr.bf16.mxu0 0
      %2531 = vmatpush1.bf16.msra.mxu0 0
      %2532 = vmatprep.subr.bf16.mxu0 0
      %2533 = vmatpush1.bf16.msra.mxu0 0
      %2534 = vmatprep.subr.bf16.mxu0 0
      %2535 = vmatpush1.bf16.msra.mxu0 0
      %2536 = vmatprep.subr.bf16.mxu0 0
      %2537 = vmatpush1.bf16.msra.mxu0 0
      %2538 = vmatprep.subr.bf16.mxu0 0
      %2539 = vmatpush1.bf16.msra.mxu0 0
      %2540 = vmatprep.subr.bf16.mxu0 0
      %2541 = vmatpush1.bf16.msra.mxu0 0
      %2542 = vmatprep.subr.bf16.mxu0 0
      %2543 = vmatpush1.bf16.msra.mxu0 0
      %2544 = vmatprep.subr.bf16.mxu0 0
      %2545 = vmatpush1.bf16.msra.mxu0 0
      %2546 = vmatprep.subr.bf16.mxu0 0
      %2547 = vmatpush1.bf16.msra.mxu0 0
      %2548 = vmatprep.subr.bf16.mxu0 0
      %2549 = vmatpush1.bf16.msra.mxu0 0
      %2550 = vmatprep.subr.bf16.mxu0 0
      %2551 = vmatpush1.bf16.msra.mxu0 0
      %2552 = vmatprep.subr.bf16.mxu0 0
      %2553 = vmatpush1.bf16.msra.mxu0 0
      %2554 = vmatprep.subr.bf16.mxu0 0
      %2555 = vmatpush1.bf16.msra.mxu0 0
      %2556 = vmatprep.subr.bf16.mxu0 0
      %2557 = vmatpush1.bf16.msra.mxu0 0
      %2558 = vmatprep.mubr.bf16.mxu0 0
      %2559 = vmatmul.mubr.bf16.gmra.mrb[0].mxu0 %v2497
      %v2560 = vpop.f32.mrb[0].mxu0
      %v2561 = vadd.f32 0.0, %v2560
      %v2562 = vpop.f32.mrb[0].mxu0
      %v2563 = vadd.f32 0.0, %v2562
      %v2564 = vpop.f32.mrb[0].mxu0
      %v2565 = vadd.f32 0.0, %v2564
      %v2566 = vpop.f32.mrb[0].mxu0
      %v2567 = vadd.f32 0.0, %v2566
      %2568 = vdwg.mxu0
      %2569 = vmatprep.subr.bf16.mxu0 %v2509
      %2570 = vmatpush1.bf16.msra.mxu0 %v2506
      %2571 = vmatprep.subr.bf16.mxu0 0
      %2572 = vmatpush1.bf16.msra.mxu0 0
      %2573 = vmatprep.subr.bf16.mxu0 0
      %2574 = vmatpush1.bf16.msra.mxu0 0
      %2575 = vmatprep.subr.bf16.mxu0 0
      %2576 = vmatpush1.bf16.msra.mxu0 0
      %2577 = vmatprep.subr.bf16.mxu0 0
      %2578 = vmatpush1.bf16.msra.mxu0 0
      %2579 = vmatprep.subr.bf16.mxu0 0
      %2580 = vmatpush1.bf16.msra.mxu0 0
      %2581 = vmatprep.subr.bf16.mxu0 0
      %2582 = vmatpush1.bf16.msra.mxu0 0
      %2583 = vmatprep.subr.bf16.mxu0 0
      %2584 = vmatpush1.bf16.msra.mxu0 0
      %2585 = vmatprep.subr.bf16.mxu0 0
      %2586 = vmatpush1.bf16.msra.mxu0 0
      %2587 = vmatprep.subr.bf16.mxu0 0
      %2588 = vmatpush1.bf16.msra.mxu0 0
      %2589 = vmatprep.subr.bf16.mxu0 0
      %2590 = vmatpush1.bf16.msra.mxu0 0
      %2591 = vmatprep.subr.bf16.mxu0 0
      %2592 = vmatpush1.bf16.msra.mxu0 0
      %2593 = vmatprep.subr.bf16.mxu0 0
      %2594 = vmatpush1.bf16.msra.mxu0 0
      %2595 = vmatprep.subr.bf16.mxu0 0
      %2596 = vmatpush1.bf16.msra.mxu0 0
      %2597 = vmatprep.subr.bf16.mxu0 0
      %2598 = vmatpush1.bf16.msra.mxu0 0
      %2599 = vmatprep.subr.bf16.mxu0 0
      %2600 = vmatpush1.bf16.msra.mxu0 0
      %2601 = vmatprep.mubr.bf16.mxu0 0
      %2602 = vmatmul.mubr.bf16.gmra.mrb[0].mxu0 %v2497
      %v2603 = vpop.f32.mrb[0].mxu0
      %v2604 = vadd.f32 0.0, %v2603
      %v2605 = vpop.f32.mrb[0].mxu0
      %v2606 = vadd.f32 0.0, %v2605
      %v2607 = vpop.f32.mrb[0].mxu0
      %v2608 = vadd.f32 0.0, %v2607
      %v2609 = vpop.f32.mrb[0].mxu0
      %v2610 = vadd.f32 0.0, %v2609
      %2611 = vdwg.mxu0
      %2612 = vmatprep.subr.bf16.mxu0 %v2515
      %2613 = vmatpush1.bf16.msra.mxu0 %v2512
      %2614 = vmatprep.subr.bf16.mxu0 0
      %2615 = vmatpush1.bf16.msra.mxu0 0
      %2616 = vmatprep.subr.bf16.mxu0 0
      %2617 = vmatpush1.bf16.msra.mxu0 0
      %2618 = vmatprep.subr.bf16.mxu0 0
      %2619 = vmatpush1.bf16.msra.mxu0 0
      %2620 = vmatprep.subr.bf16.mxu0 0
      %2621 = vmatpush1.bf16.msra.mxu0 0
      %2622 = vmatprep.subr.bf16.mxu0 0
      %2623 = vmatpush1.bf16.msra.mxu0 0
      %2624 = vmatprep.subr.bf16.mxu0 0
      %2625 = vmatpush1.bf16.msra.mxu0 0
      %2626 = vmatprep.subr.bf16.mxu0 0
      %2627 = vmatpush1.bf16.msra.mxu0 0
      %2628 = vmatprep.subr.bf16.mxu0 0
      %2629 = vmatpush1.bf16.msra.mxu0 0
      %2630 = vmatprep.subr.bf16.mxu0 0
      %2631 = vmatpush1.bf16.msra.mxu0 0
      %2632 = vmatprep.subr.bf16.mxu0 0
      %2633 = vmatpush1.bf16.msra.mxu0 0
      %2634 = vmatprep.subr.bf16.mxu0 0
      %2635 = vmatpush1.bf16.msra.mxu0 0
      %2636 = vmatprep.subr.bf16.mxu0 0
      %2637 = vmatpush1.bf16.msra.mxu0 0
      %2638 = vmatprep.subr.bf16.mxu0 0
      %2639 = vmatpush1.bf16.msra.mxu0 0
      %2640 = vmatprep.subr.bf16.mxu0 0
      %2641 = vmatpush1.bf16.msra.mxu0 0
      %2642 = vmatprep.subr.bf16.mxu0 0
      %2643 = vmatpush1.bf16.msra.mxu0 0
      %2644 = vmatprep.mubr.bf16.mxu0 0
      %2645 = vmatmul.mubr.bf16.gmra.mrb[0].mxu0 %v2497
      %v2646 = vpop.f32.mrb[0].mxu0
      %v2647 = vadd.f32 0.0, %v2646
      %v2648 = vpop.f32.mrb[0].mxu0
      %v2649 = vadd.f32 0.0, %v2648
      %v2650 = vpop.f32.mrb[0].mxu0
      %v2651 = vadd.f32 0.0, %v2650
      %v2652 = vpop.f32.mrb[0].mxu0
      %v2653 = vadd.f32 0.0, %v2652
      %2654 = vdwg.mxu0
      %2655 = vmatprep.subr.bf16.mxu0 %v2521
      %2656 = vmatpush1.bf16.msra.mxu0 %v2518
      %2657 = vmatprep.subr.bf16.mxu0 0
      %2658 = vmatpush1.bf16.msra.mxu0 0
      %2659 = vmatprep.subr.bf16.mxu0 0
      %2660 = vmatpush1.bf16.msra.mxu0 0
      %2661 = vmatprep.subr.bf16.mxu0 0
      %2662 = vmatpush1.bf16.msra.mxu0 0
      %2663 = vmatprep.subr.bf16.mxu0 0
      %2664 = vmatpush1.bf16.msra.mxu0 0
      %2665 = vmatprep.subr.bf16.mxu0 0
      %2666 = vmatpush1.bf16.msra.mxu0 0
      %2667 = vmatprep.subr.bf16.mxu0 0
      %2668 = vmatpush1.bf16.msra.mxu0 0
      %2669 = vmatprep.subr.bf16.mxu0 0
      %2670 = vmatpush1.bf16.msra.mxu0 0
      %2671 = vmatprep.subr.bf16.mxu0 0
      %2672 = vmatpush1.bf16.msra.mxu0 0
      %2673 = vmatprep.subr.bf16.mxu0 0
      %2674 = vmatpush1.bf16.msra.mxu0 0
      %2675 = vmatprep.subr.bf16.mxu0 0
      %2676 = vmatpush1.bf16.msra.mxu0 0
      %2677 = vmatprep.subr.bf16.mxu0 0
      %2678 = vmatpush1.bf16.msra.mxu0 0
      %2679 = vmatprep.subr.bf16.mxu0 0
      %2680 = vmatpush1.bf16.msra.mxu0 0
      %2681 = vmatprep.subr.bf16.mxu0 0
      %2682 = vmatpush1.bf16.msra.mxu0 0
      %2683 = vmatprep.subr.bf16.mxu0 0
      %2684 = vmatpush1.bf16.msra.mxu0 0
      %2685 = vmatprep.subr.bf16.mxu0 0
      %2686 = vmatpush1.bf16.msra.mxu0 0
      %2687 = vmatprep.mubr.bf16.mxu0 0
      %2688 = vmatmul.mubr.bf16.gmra.mrb[0].mxu0 %v2497
      %v2689 = vpop.f32.mrb[0].mxu0
      %v2690 = vadd.f32 0.0, %v2689
      %v2691 = vpop.f32.mrb[0].mxu0
      %v2692 = vadd.f32 0.0, %v2691
      %v2693 = vpop.f32.mrb[0].mxu0
      %v2694 = vadd.f32 0.0, %v2693
      %v2695 = vpop.f32.mrb[0].mxu0
      %v2696 = vadd.f32 0.0, %v2695
      %2697 = vdwg.mxu0
      %2698 = vmatprep.subr.bf16.mxu0 0
      %2699 = vmatpush1.bf16.msra.mxu0 %v2524
      %2700 = vmatprep.subr.bf16.mxu0 0
      %2701 = vmatpush1.bf16.msra.mxu0 0
      %2702 = vmatprep.subr.bf16.mxu0 0
      %2703 = vmatpush1.bf16.msra.mxu0 0
      %2704 = vmatprep.subr.bf16.mxu0 0
      %2705 = vmatpush1.bf16.msra.mxu0 0
      %2706 = vmatprep.subr.bf16.mxu0 0
      %2707 = vmatpush1.bf16.msra.mxu0 0
      %2708 = vmatprep.subr.bf16.mxu0 0
      %2709 = vmatpush1.bf16.msra.mxu0 0
      %2710 = vmatprep.subr.bf16.mxu0 0
      %2711 = vmatpush1.bf16.msra.mxu0 0
      %2712 = vmatprep.subr.bf16.mxu0 0
      %2713 = vmatpush1.bf16.msra.mxu0 0
      %2714 = vmatprep.subr.bf16.mxu0 0
      %2715 = vmatpush1.bf16.msra.mxu0 0
      %2716 = vmatprep.subr.bf16.mxu0 0
      %2717 = vmatpush1.bf16.msra.mxu0 0
      %2718 = vmatprep.subr.bf16.mxu0 0
      %2719 = vmatpush1.bf16.msra.mxu0 0
      %2720 = vmatprep.subr.bf16.mxu0 0
      %2721 = vmatpush1.bf16.msra.mxu0 0
      %2722 = vmatprep.subr.bf16.mxu0 0
      %2723 = vmatpush1.bf16.msra.mxu0 0
      %2724 = vmatprep.subr.bf16.mxu0 0
      %2725 = vmatpush1.bf16.msra.mxu0 0
      %2726 = vmatprep.subr.bf16.mxu0 0
      %2727 = vmatpush1.bf16.msra.mxu0 0
      %2728 = vmatprep.subr.bf16.mxu0 0
      %2729 = vmatpush1.bf16.msra.mxu0 0
      %2730 = vmatprep.mubr.bf16.mxu0 0
      %2731 = vmatmul.mubr.bf16.gmra.mrb[0].mxu0 %v2497
      %v2732 = vpop.f32.mrb[0].mxu0
      %v2733 = vadd.f32 0.0, %v2732
      %v2734 = vpop.f32.mrb[0].mxu0
      %v2735 = vpop.f32.mrb[0].mxu0
      %v2736 = vadd.f32 0.0, %v2735
      %v2737 = vpop.f32.mrb[0].mxu0
      %2738 = vdwg.mxu0
      %v2739 = vadd.f32 %v2440, %v2561
      %v2740 = vadd.f32 %v2441, %v2563
      %v2741 = vadd.f32 %v2442, %v2604
      %v2742 = vadd.f32 %v2443, %v2606
      %v2743 = vadd.f32 %v2444, %v2647
      %v2744 = vadd.f32 %v2445, %v2649
      %v2745 = vadd.f32 %v2446, %v2690
      %v2746 = vadd.f32 %v2447, %v2692
      %v2747 = vadd.f32 %v2448, %v2733
      %v2748 = vadd.f32 %v2449, %v2565
      %v2749 = vadd.f32 %v2450, %v2567
      %v2750 = vadd.f32 %v2451, %v2608
      %v2751 = vadd.f32 %v2452, %v2610
      %v2752 = vadd.f32 %v2453, %v2651
      %v2753 = vadd.f32 %v2454, %v2653
      %v2754 = vadd.f32 %v2455, %v2694
      %v2755 = vadd.f32 %v2456, %v2696
      %v2756 = vadd.f32 %v2457, %v2736
      %s2757 = scalar_lea.vmem %s4, 64
      %v2758 = vld [vmem:[%s2757] sm:$0xf]
      %v2759 = vld [vmem:[%s2757 + $0x4] sm:$0xf]
      %v2762 = vunpack.c.l.b16 %v2758
      %v2763 = vunpack.c.l.b16 %v2759
      %v2764 = vpack.c.b16 %v2763, %v2762
      %2765 = vrot.lane.b32.xlu0 %v444, 58
      %v2766 = vpop.permute.xlu0 %2765
      %2767 = vrot.lane.b32.xlu0 %v445, 58
      %v2768 = vpop.permute.xlu0 %2767
      %2769 = vrot.lane.b32.xlu0 %v446, 58
      %v2770 = vpop.permute.xlu0 %2769
      %2771 = vrot.lane.b32.xlu0 %v447, 58
      %v2772 = vpop.permute.xlu0 %2771
      %2773 = vrot.lane.b32.xlu0 %v448, 58
      %v2774 = vpop.permute.xlu0 %2773
      %2775 = vrot.lane.b32.xlu0 %v449, 58
      %v2776 = vpop.permute.xlu0 %2775
      %2777 = vrot.lane.b32.xlu0 %v450, 58
      %v2778 = vpop.permute.xlu0 %2777
      %2779 = vrot.lane.b32.xlu0 %v451, 58
      %v2780 = vpop.permute.xlu0 %2779
      %2781 = vrot.lane.b32.xlu0 %v452, 58
      %v2782 = vpop.permute.xlu0 %2781
      %2783 = vrot.lane.b32.xlu0 %v2166, 58
      %v2784 = vpop.permute.xlu0 %2783
      %vm2785 = vcmask 474112
      %v2786 = vsel %vm2785, %v2766, %v2768
      %v2787 = vsel %vm2785, %v2768, %v2770
      %v2788 = vsel %vm2785, %v2770, %v2772
      %v2789 = vsel %vm2785, %v2772, %v2774
      %v2790 = vsel %vm2785, %v2774, %v2776
      %v2791 = vsel %vm2785, %v2776, %v2778
      %v2792 = vsel %vm2785, %v2778, %v2780
      %v2793 = vsel %vm2785, %v2780, %v2782
      %v2794 = vsel %vm2785, %v2782, %v2784
      %v2796 = vsel %vm480, %v2764, 0
      %v2799 = vsel %vm484, %v2786, 0
      %v2802 = vsel %vm484, %v2787, 0
      %v2805 = vsel %vm484, %v2788, 0
      %v2808 = vsel %vm484, %v2789, 0
      %v2811 = vsel %vm484, %v2790, 0
      %v2814 = vsel %vm484, %v2791, 0
      %v2817 = vsel %vm484, %v2792, 0
      %v2820 = vsel %vm484, %v2793, 0
      %v2823 = vsel %vm484, %v2794, 0
      %2825 = vmatprep.subr.bf16.mxu0 %v2802
      %2826 = vmatpush1.bf16.msra.mxu0 %v2799
      %2827 = vmatprep.subr.bf16.mxu0 0
      %2828 = vmatpush1.bf16.msra.mxu0 0
      %2829 = vmatprep.subr.bf16.mxu0 0
      %2830 = vmatpush1.bf16.msra.mxu0 0
      %2831 = vmatprep.subr.bf16.mxu0 0
      %2832 = vmatpush1.bf16.msra.mxu0 0
      %2833 = vmatprep.subr.bf16.mxu0 0
      %2834 = vmatpush1.bf16.msra.mxu0 0
      %2835 = vmatprep.subr.bf16.mxu0 0
      %2836 = vmatpush1.bf16.msra.mxu0 0
      %2837 = vmatprep.subr.bf16.mxu0 0
      %2838 = vmatpush1.bf16.msra.mxu0 0
      %2839 = vmatprep.subr.bf16.mxu0 0
      %2840 = vmatpush1.bf16.msra.mxu0 0
      %2841 = vmatprep.subr.bf16.mxu0 0
      %2842 = vmatpush1.bf16.msra.mxu0 0
      %2843 = vmatprep.subr.bf16.mxu0 0
      %2844 = vmatpush1.bf16.msra.mxu0 0
      %2845 = vmatprep.subr.bf16.mxu0 0
      %2846 = vmatpush1.bf16.msra.mxu0 0
      %2847 = vmatprep.subr.bf16.mxu0 0
      %2848 = vmatpush1.bf16.msra.mxu0 0
      %2849 = vmatprep.subr.bf16.mxu0 0
      %2850 = vmatpush1.bf16.msra.mxu0 0
      %2851 = vmatprep.subr.bf16.mxu0 0
      %2852 = vmatpush1.bf16.msra.mxu0 0
      %2853 = vmatprep.subr.bf16.mxu0 0
      %2854 = vmatpush1.bf16.msra.mxu0 0
      %2855 = vmatprep.subr.bf16.mxu0 0
      %2856 = vmatpush1.bf16.msra.mxu0 0
      %2857 = vmatprep.mubr.bf16.mxu0 0
      %2858 = vmatmul.mubr.bf16.gmra.mrb[0].mxu0 %v2796
      %v2859 = vpop.f32.mrb[0].mxu0
      %v2860 = vadd.f32 0.0, %v2859
      %v2861 = vpop.f32.mrb[0].mxu0
      %v2862 = vadd.f32 0.0, %v2861
      %v2863 = vpop.f32.mrb[0].mxu0
      %v2864 = vadd.f32 0.0, %v2863
      %v2865 = vpop.f32.mrb[0].mxu0
      %v2866 = vadd.f32 0.0, %v2865
      %2867 = vdwg.mxu0
      %2868 = vmatprep.subr.bf16.mxu0 %v2808
      %2869 = vmatpush1.bf16.msra.mxu0 %v2805
      %2870 = vmatprep.subr.bf16.mxu0 0
      %2871 = vmatpush1.bf16.msra.mxu0 0
      %2872 = vmatprep.subr.bf16.mxu0 0
      %2873 = vmatpush1.bf16.msra.mxu0 0
      %2874 = vmatprep.subr.bf16.mxu0 0
      %2875 = vmatpush1.bf16.msra.mxu0 0
      %2876 = vmatprep.subr.bf16.mxu0 0
      %2877 = vmatpush1.bf16.msra.mxu0 0
      %2878 = vmatprep.subr.bf16.mxu0 0
      %2879 = vmatpush1.bf16.msra.mxu0 0
      %2880 = vmatprep.subr.bf16.mxu0 0
      %2881 = vmatpush1.bf16.msra.mxu0 0
      %2882 = vmatprep.subr.bf16.mxu0 0
      %2883 = vmatpush1.bf16.msra.mxu0 0
      %2884 = vmatprep.subr.bf16.mxu0 0
      %2885 = vmatpush1.bf16.msra.mxu0 0
      %2886 = vmatprep.subr.bf16.mxu0 0
      %2887 = vmatpush1.bf16.msra.mxu0 0
      %2888 = vmatprep.subr.bf16.mxu0 0
      %2889 = vmatpush1.bf16.msra.mxu0 0
      %2890 = vmatprep.subr.bf16.mxu0 0
      %2891 = vmatpush1.bf16.msra.mxu0 0
      %2892 = vmatprep.subr.bf16.mxu0 0
      %2893 = vmatpush1.bf16.msra.mxu0 0
      %2894 = vmatprep.subr.bf16.mxu0 0
      %2895 = vmatpush1.bf16.msra.mxu0 0
      %2896 = vmatprep.subr.bf16.mxu0 0
      %2897 = vmatpush1.bf16.msra.mxu0 0
      %2898 = vmatprep.subr.bf16.mxu0 0
      %2899 = vmatpush1.bf16.msra.mxu0 0
      %2900 = vmatprep.mubr.bf16.mxu0 0
      %2901 = vmatmul.mubr.bf16.gmra.mrb[0].mxu0 %v2796
      %v2902 = vpop.f32.mrb[0].mxu0
      %v2903 = vadd.f32 0.0, %v2902
      %v2904 = vpop.f32.mrb[0].mxu0
      %v2905 = vadd.f32 0.0, %v2904
      %v2906 = vpop.f32.mrb[0].mxu0
      %v2907 = vadd.f32 0.0, %v2906
      %v2908 = vpop.f32.mrb[0].mxu0
      %v2909 = vadd.f32 0.0, %v2908
      %2910 = vdwg.mxu0
      %2911 = vmatprep.subr.bf16.mxu0 %v2814
      %2912 = vmatpush1.bf16.msra.mxu0 %v2811
      %2913 = vmatprep.subr.bf16.mxu0 0
      %2914 = vmatpush1.bf16.msra.mxu0 0
      %2915 = vmatprep.subr.bf16.mxu0 0
      %2916 = vmatpush1.bf16.msra.mxu0 0
      %2917 = vmatprep.subr.bf16.mxu0 0
      %2918 = vmatpush1.bf16.msra.mxu0 0
      %2919 = vmatprep.subr.bf16.mxu0 0
      %2920 = vmatpush1.bf16.msra.mxu0 0
      %2921 = vmatprep.subr.bf16.mxu0 0
      %2922 = vmatpush1.bf16.msra.mxu0 0
      %2923 = vmatprep.subr.bf16.mxu0 0
      %2924 = vmatpush1.bf16.msra.mxu0 0
      %2925 = vmatprep.subr.bf16.mxu0 0
      %2926 = vmatpush1.bf16.msra.mxu0 0
      %2927 = vmatprep.subr.bf16.mxu0 0
      %2928 = vmatpush1.bf16.msra.mxu0 0
      %2929 = vmatprep.subr.bf16.mxu0 0
      %2930 = vmatpush1.bf16.msra.mxu0 0
      %2931 = vmatprep.subr.bf16.mxu0 0
      %2932 = vmatpush1.bf16.msra.mxu0 0
      %2933 = vmatprep.subr.bf16.mxu0 0
      %2934 = vmatpush1.bf16.msra.mxu0 0
      %2935 = vmatprep.subr.bf16.mxu0 0
      %2936 = vmatpush1.bf16.msra.mxu0 0
      %2937 = vmatprep.subr.bf16.mxu0 0
      %2938 = vmatpush1.bf16.msra.mxu0 0
      %2939 = vmatprep.subr.bf16.mxu0 0
      %2940 = vmatpush1.bf16.msra.mxu0 0
      %2941 = vmatprep.subr.bf16.mxu0 0
      %2942 = vmatpush1.bf16.msra.mxu0 0
      %2943 = vmatprep.mubr.bf16.mxu0 0
      %2944 = vmatmul.mubr.bf16.gmra.mrb[0].mxu0 %v2796
      %v2945 = vpop.f32.mrb[0].mxu0
      %v2946 = vadd.f32 0.0, %v2945
      %v2947 = vpop.f32.mrb[0].mxu0
      %v2948 = vadd.f32 0.0, %v2947
      %v2949 = vpop.f32.mrb[0].mxu0
      %v2950 = vadd.f32 0.0, %v2949
      %v2951 = vpop.f32.mrb[0].mxu0
      %v2952 = vadd.f32 0.0, %v2951
      %2953 = vdwg.mxu0
      %2954 = vmatprep.subr.bf16.mxu0 %v2820
      %2955 = vmatpush1.bf16.msra.mxu0 %v2817
      %2956 = vmatprep.subr.bf16.mxu0 0
      %2957 = vmatpush1.bf16.msra.mxu0 0
      %2958 = vmatprep.subr.bf16.mxu0 0
      %2959 = vmatpush1.bf16.msra.mxu0 0
      %2960 = vmatprep.subr.bf16.mxu0 0
      %2961 = vmatpush1.bf16.msra.mxu0 0
      %2962 = vmatprep.subr.bf16.mxu0 0
      %2963 = vmatpush1.bf16.msra.mxu0 0
      %2964 = vmatprep.subr.bf16.mxu0 0
      %2965 = vmatpush1.bf16.msra.mxu0 0
      %2966 = vmatprep.subr.bf16.mxu0 0
      %2967 = vmatpush1.bf16.msra.mxu0 0
      %2968 = vmatprep.subr.bf16.mxu0 0
      %2969 = vmatpush1.bf16.msra.mxu0 0
      %2970 = vmatprep.subr.bf16.mxu0 0
      %2971 = vmatpush1.bf16.msra.mxu0 0
      %2972 = vmatprep.subr.bf16.mxu0 0
      %2973 = vmatpush1.bf16.msra.mxu0 0
      %2974 = vmatprep.subr.bf16.mxu0 0
      %2975 = vmatpush1.bf16.msra.mxu0 0
      %2976 = vmatprep.subr.bf16.mxu0 0
      %2977 = vmatpush1.bf16.msra.mxu0 0
      %2978 = vmatprep.subr.bf16.mxu0 0
      %2979 = vmatpush1.bf16.msra.mxu0 0
      %2980 = vmatprep.subr.bf16.mxu0 0
      %2981 = vmatpush1.bf16.msra.mxu0 0
      %2982 = vmatprep.subr.bf16.mxu0 0
      %2983 = vmatpush1.bf16.msra.mxu0 0
      %2984 = vmatprep.subr.bf16.mxu0 0
      %2985 = vmatpush1.bf16.msra.mxu0 0
      %2986 = vmatprep.mubr.bf16.mxu0 0
      %2987 = vmatmul.mubr.bf16.gmra.mrb[0].mxu0 %v2796
      %v2988 = vpop.f32.mrb[0].mxu0
      %v2989 = vadd.f32 0.0, %v2988
      %v2990 = vpop.f32.mrb[0].mxu0
      %v2991 = vadd.f32 0.0, %v2990
      %v2992 = vpop.f32.mrb[0].mxu0
      %v2993 = vadd.f32 0.0, %v2992
      %v2994 = vpop.f32.mrb[0].mxu0
      %v2995 = vadd.f32 0.0, %v2994
      %2996 = vdwg.mxu0
      %2997 = vmatprep.subr.bf16.mxu0 0
      %2998 = vmatpush1.bf16.msra.mxu0 %v2823
      %2999 = vmatprep.subr.bf16.mxu0 0
      %3000 = vmatpush1.bf16.msra.mxu0 0
      %3001 = vmatprep.subr.bf16.mxu0 0
      %3002 = vmatpush1.bf16.msra.mxu0 0
      %3003 = vmatprep.subr.bf16.mxu0 0
      %3004 = vmatpush1.bf16.msra.mxu0 0
      %3005 = vmatprep.subr.bf16.mxu0 0
      %3006 = vmatpush1.bf16.msra.mxu0 0
      %3007 = vmatprep.subr.bf16.mxu0 0
      %3008 = vmatpush1.bf16.msra.mxu0 0
      %3009 = vmatprep.subr.bf16.mxu0 0
      %3010 = vmatpush1.bf16.msra.mxu0 0
      %3011 = vmatprep.subr.bf16.mxu0 0
      %3012 = vmatpush1.bf16.msra.mxu0 0
      %3013 = vmatprep.subr.bf16.mxu0 0
      %3014 = vmatpush1.bf16.msra.mxu0 0
      %3015 = vmatprep.subr.bf16.mxu0 0
      %3016 = vmatpush1.bf16.msra.mxu0 0
      %3017 = vmatprep.subr.bf16.mxu0 0
      %3018 = vmatpush1.bf16.msra.mxu0 0
      %3019 = vmatprep.subr.bf16.mxu0 0
      %3020 = vmatpush1.bf16.msra.mxu0 0
      %3021 = vmatprep.subr.bf16.mxu0 0
      %3022 = vmatpush1.bf16.msra.mxu0 0
      %3023 = vmatprep.subr.bf16.mxu0 0
      %3024 = vmatpush1.bf16.msra.mxu0 0
      %3025 = vmatprep.subr.bf16.mxu0 0
      %3026 = vmatpush1.bf16.msra.mxu0 0
      %3027 = vmatprep.subr.bf16.mxu0 0
      %3028 = vmatpush1.bf16.msra.mxu0 0
      %3029 = vmatprep.mubr.bf16.mxu0 0
      %3030 = vmatmul.mubr.bf16.gmra.mrb[0].mxu0 %v2796
      %v3031 = vpop.f32.mrb[0].mxu0
      %v3032 = vadd.f32 0.0, %v3031
      %v3033 = vpop.f32.mrb[0].mxu0
      %v3034 = vpop.f32.mrb[0].mxu0
      %v3035 = vadd.f32 0.0, %v3034
      %v3036 = vpop.f32.mrb[0].mxu0
      %3037 = vdwg.mxu0
      %v3038 = vadd.f32 %v2739, %v2860
      %v3039 = vadd.f32 %v2740, %v2862
      %v3040 = vadd.f32 %v2741, %v2903
      %v3041 = vadd.f32 %v2742, %v2905
      %v3042 = vadd.f32 %v2743, %v2946
      %v3043 = vadd.f32 %v2744, %v2948
      %v3044 = vadd.f32 %v2745, %v2989
      %v3045 = vadd.f32 %v2746, %v2991
      %v3046 = vadd.f32 %v2747, %v3032
      %v3047 = vadd.f32 %v2748, %v2864
      %v3048 = vadd.f32 %v2749, %v2866
      %v3049 = vadd.f32 %v2750, %v2907
      %v3050 = vadd.f32 %v2751, %v2909
      %v3051 = vadd.f32 %v2752, %v2950
      %v3052 = vadd.f32 %v2753, %v2952
      %v3053 = vadd.f32 %v2754, %v2993
      %v3054 = vadd.f32 %v2755, %v2995
      %v3055 = vadd.f32 %v2756, %v3035
      %v3056 = vld [vmem:[%s5] sm:$0xff]
      %v3057 = vld [vmem:[%s5 + $0x8] sm:$0xff]
      %3059 = vset.pattern.permute.xlu0 0
      %3060 = vperm.xlu0 %3059, %v3056
      %v3061 = vpop.permute.xlu0 %3060
      %3064 = vset.pattern.permute.xlu0 0
      %3065 = vperm.xlu0 %3064, %v3057
      %v3066 = vpop.permute.xlu0 %3065
      %v3068 = vadd.f32 %v3038, %v3061
      %v3069 = vadd.f32 %v3039, %v3061
      %v3070 = vadd.f32 %v3040, %v3061
      %v3071 = vadd.f32 %v3041, %v3061
      %v3072 = vadd.f32 %v3042, %v3061
      %v3073 = vadd.f32 %v3043, %v3061
      %v3074 = vadd.f32 %v3044, %v3061
      %v3075 = vadd.f32 %v3045, %v3061
      %v3076 = vadd.f32 %v3046, %v3061
      %v3077 = vadd.f32 %v3047, %v3066
      %v3078 = vadd.f32 %v3048, %v3066
      %v3079 = vadd.f32 %v3049, %v3066
      %v3080 = vadd.f32 %v3050, %v3066
      %v3081 = vadd.f32 %v3051, %v3066
      %v3082 = vadd.f32 %v3052, %v3066
      %v3083 = vadd.f32 %v3053, %v3066
      %v3084 = vadd.f32 %v3054, %v3066
      %v3085 = vadd.f32 %v3055, %v3066
      %v3086 = vmul.f32 %v3068, 0.1
      %v3087 = vmul.f32 %v3069, 0.1
      %v3088 = vmul.f32 %v3070, 0.1
      %v3089 = vmul.f32 %v3071, 0.1
      %v3090 = vmul.f32 %v3072, 0.1
      %v3091 = vmul.f32 %v3073, 0.1
      %v3092 = vmul.f32 %v3074, 0.1
      %v3093 = vmul.f32 %v3075, 0.1
      %v3094 = vmul.f32 %v3076, 0.1
      %v3095 = vmul.f32 %v3077, 0.1
      %v3096 = vmul.f32 %v3078, 0.1
      %v3097 = vmul.f32 %v3079, 0.1
      %v3098 = vmul.f32 %v3080, 0.1
      %v3099 = vmul.f32 %v3081, 0.1
      %v3100 = vmul.f32 %v3082, 0.1
      %v3101 = vmul.f32 %v3083, 0.1
      %v3102 = vmul.f32 %v3084, 0.1
      %v3103 = vmul.f32 %v3085, 0.1
      %v3104 = vmax.f32 %v3068, %v3086
      %v3105 = vmax.f32 %v3069, %v3087
      %v3106 = vmax.f32 %v3070, %v3088
      %v3107 = vmax.f32 %v3071, %v3089
      %v3108 = vmax.f32 %v3072, %v3090
      %v3109 = vmax.f32 %v3073, %v3091
      %v3110 = vmax.f32 %v3074, %v3092
      %v3111 = vmax.f32 %v3075, %v3093
      %v3112 = vmax.f32 %v3076, %v3094
      %v3113 = vmax.f32 %v3077, %v3095
      %v3114 = vmax.f32 %v3078, %v3096
      %v3115 = vmax.f32 %v3079, %v3097
      %v3116 = vmax.f32 %v3080, %v3098
      %v3117 = vmax.f32 %v3081, %v3099
      %v3118 = vmax.f32 %v3082, %v3100
      %v3119 = vmax.f32 %v3083, %v3101
      %v3120 = vmax.f32 %v3084, %v3102
      %v3121 = vmax.f32 %v3085, %v3103
      %3140 = vrot.lane.b32.xlu0 %v3104, 127
      %v3141 = vpop.permute.xlu0 %3140
      %3142 = vrot.lane.b32.xlu0 %v3105, 127
      %v3143 = vpop.permute.xlu0 %3142
      %3144 = vrot.lane.b32.xlu0 %v3106, 127
      %v3145 = vpop.permute.xlu0 %3144
      %3146 = vrot.lane.b32.xlu0 %v3107, 127
      %v3147 = vpop.permute.xlu0 %3146
      %3148 = vrot.lane.b32.xlu0 %v3108, 127
      %v3149 = vpop.permute.xlu0 %3148
      %3150 = vrot.lane.b32.xlu0 %v3109, 127
      %v3151 = vpop.permute.xlu0 %3150
      %3152 = vrot.lane.b32.xlu0 %v3110, 127
      %v3153 = vpop.permute.xlu0 %3152
      %3154 = vrot.lane.b32.xlu0 %v3111, 127
      %v3155 = vpop.permute.xlu0 %3154
      %3156 = vrot.lane.b32.xlu0 %v3112, 127
      %v3157 = vpop.permute.xlu0 %3156
      %3158 = vrot.lane.b32.xlu0 %v3113, 127
      %v3159 = vpop.permute.xlu0 %3158
      %3160 = vrot.lane.b32.xlu0 %v3114, 127
      %v3161 = vpop.permute.xlu0 %3160
      %3162 = vrot.lane.b32.xlu0 %v3115, 127
      %v3163 = vpop.permute.xlu0 %3162
      %3164 = vrot.lane.b32.xlu0 %v3116, 127
      %v3165 = vpop.permute.xlu0 %3164
      %3166 = vrot.lane.b32.xlu0 %v3117, 127
      %v3167 = vpop.permute.xlu0 %3166
      %3168 = vrot.lane.b32.xlu0 %v3118, 127
      %v3169 = vpop.permute.xlu0 %3168
      %3170 = vrot.lane.b32.xlu0 %v3119, 127
      %v3171 = vpop.permute.xlu0 %3170
      %3172 = vrot.lane.b32.xlu0 %v3120, 127
      %v3173 = vpop.permute.xlu0 %3172
      %3174 = vrot.lane.b32.xlu0 %v3121, 127
      %v3175 = vpop.permute.xlu0 %3174
      %vm3176 = vcmask 1039360
      %v3177 = vsel %vm3176, %v3141, %v3143
      %v3178 = vsel %vm3176, %v3143, %v3145
      %v3179 = vsel %vm3176, %v3145, %v3147
      %v3180 = vsel %vm3176, %v3147, %v3149
      %v3181 = vsel %vm3176, %v3149, %v3151
      %v3182 = vsel %vm3176, %v3151, %v3153
      %v3183 = vsel %vm3176, %v3153, %v3155
      %v3184 = vsel %vm3176, %v3155, %v3157
      %v3185 = vsel %vm3176, %v3159, %v3161
      %v3186 = vsel %vm3176, %v3161, %v3163
      %v3187 = vsel %vm3176, %v3163, %v3165
      %v3188 = vsel %vm3176, %v3165, %v3167
      %v3189 = vsel %vm3176, %v3167, %v3169
      %v3190 = vsel %vm3176, %v3169, %v3171
      %v3191 = vsel %vm3176, %v3171, %v3173
      %v3192 = vsel %vm3176, %v3173, %v3175
      %v3211 = vmax.f32 %v3104, %v3177
      %v3212 = vmax.f32 %v3105, %v3178
      %v3213 = vmax.f32 %v3106, %v3179
      %v3214 = vmax.f32 %v3107, %v3180
      %v3215 = vmax.f32 %v3108, %v3181
      %v3216 = vmax.f32 %v3109, %v3182
      %v3217 = vmax.f32 %v3110, %v3183
      %v3218 = vmax.f32 %v3111, %v3184
      %v3219 = vmax.f32 %v3112, %v3157
      %v3220 = vmax.f32 %v3113, %v3185
      %v3221 = vmax.f32 %v3114, %v3186
      %v3222 = vmax.f32 %v3115, %v3187
      %v3223 = vmax.f32 %v3116, %v3188
      %v3224 = vmax.f32 %v3117, %v3189
      %v3225 = vmax.f32 %v3118, %v3190
      %v3226 = vmax.f32 %v3119, %v3191
      %v3227 = vmax.f32 %v3120, %v3192
      %v3228 = vmax.f32 %v3121, %v3175
      %3231 = vrot.lane.b32.xlu0 %v3211, 94
      %v3232 = vpop.permute.xlu0 %3231
      %3233 = vrot.lane.b32.xlu0 %v3220, 94
      %v3234 = vpop.permute.xlu0 %3233
      %v3237 = vmax.f32 %v3211, %v3232
      %v3238 = vmax.f32 %v3220, %v3234
      %3241 = vrot.lane.b32.xlu0 %v3212, 94
      %v3242 = vpop.permute.xlu0 %3241
      %3243 = vrot.lane.b32.xlu0 %v3221, 94
      %v3244 = vpop.permute.xlu0 %3243
      %vm3245 = vcmask 769024
      %v3246 = vsel %vm3245, %v3232, %v3242
      %v3247 = vsel %vm3245, %v3234, %v3244
      %v3250 = vmax.f32 %v3211, %v3246
      %v3251 = vmax.f32 %v3220, %v3247
      %v3254 = vmax.f32 %v3212, %v3242
      %v3255 = vmax.f32 %v3221, %v3244
      %3258 = vrot.lane.b32.xlu0 %v3213, 94
      %v3259 = vpop.permute.xlu0 %3258
      %3260 = vrot.lane.b32.xlu0 %v3222, 94
      %v3261 = vpop.permute.xlu0 %3260
      %v3262 = vsel %vm3245, %v3242, %v3259
      %v3263 = vsel %vm3245, %v3244, %v3261
      %v3266 = vmax.f32 %v3212, %v3262
      %v3267 = vmax.f32 %v3221, %v3263
      %v3270 = vmax.f32 %v3213, %v3259
      %v3271 = vmax.f32 %v3222, %v3261
      %3274 = vrot.lane.b32.xlu0 %v3214, 94
      %v3275 = vpop.permute.xlu0 %3274
      %3276 = vrot.lane.b32.xlu0 %v3223, 94
      %v3277 = vpop.permute.xlu0 %3276
      %v3278 = vsel %vm3245, %v3259, %v3275
      %v3279 = vsel %vm3245, %v3261, %v3277
      %v3282 = vmax.f32 %v3213, %v3278
      %v3283 = vmax.f32 %v3222, %v3279
      %v3286 = vmax.f32 %v3214, %v3275
      %v3287 = vmax.f32 %v3223, %v3277
      %3290 = vrot.lane.b32.xlu0 %v3215, 94
      %v3291 = vpop.permute.xlu0 %3290
      %3292 = vrot.lane.b32.xlu0 %v3224, 94
      %v3293 = vpop.permute.xlu0 %3292
      %v3294 = vsel %vm3245, %v3275, %v3291
      %v3295 = vsel %vm3245, %v3277, %v3293
      %v3298 = vmax.f32 %v3214, %v3294
      %v3299 = vmax.f32 %v3223, %v3295
      %v3302 = vmax.f32 %v3215, %v3291
      %v3303 = vmax.f32 %v3224, %v3293
      %3306 = vrot.lane.b32.xlu0 %v3216, 94
      %v3307 = vpop.permute.xlu0 %3306
      %3308 = vrot.lane.b32.xlu0 %v3225, 94
      %v3309 = vpop.permute.xlu0 %3308
      %v3312 = vmax.f32 %v3215, %v3307
      %v3313 = vmax.f32 %v3216, %v3307
      %v3314 = vmax.f32 %v3224, %v3309
      %v3315 = vmax.f32 %v3225, %v3309
      %3318 = vrot.lane.b32.xlu0 %v3217, 94
      %v3319 = vpop.permute.xlu0 %3318
      %3320 = vrot.lane.b32.xlu0 %v3226, 94
      %v3321 = vpop.permute.xlu0 %3320
      %v3324 = vmax.f32 %v3216, %v3319
      %v3325 = vmax.f32 %v3217, %v3319
      %v3326 = vmax.f32 %v3225, %v3321
      %v3327 = vmax.f32 %v3226, %v3321
      %3330 = vrot.lane.b32.xlu0 %v3218, 94
      %v3331 = vpop.permute.xlu0 %3330
      %3332 = vrot.lane.b32.xlu0 %v3227, 94
      %v3333 = vpop.permute.xlu0 %3332
      %v3336 = vmax.f32 %v3217, %v3331
      %v3337 = vmax.f32 %v3218, %v3331
      %v3338 = vmax.f32 %v3226, %v3333
      %v3339 = vmax.f32 %v3227, %v3333
      %3342 = vrot.lane.b32.xlu0 %v3219, 94
      %v3343 = vpop.permute.xlu0 %3342
      %3344 = vrot.lane.b32.xlu0 %v3228, 94
      %v3345 = vpop.permute.xlu0 %3344
      %v3348 = vmax.f32 %v3218, %v3343
      %v3349 = vmax.f32 %v3219, %v3343
      %v3350 = vmax.f32 %v3227, %v3345
      %v3351 = vmax.f32 %v3228, %v3345
      %3354 = vrot.lane.b32.xlu0 %v3250, 91
      %v3355 = vpop.permute.xlu0 %3354
      %3356 = vrot.lane.b32.xlu0 %v3251, 91
      %v3357 = vpop.permute.xlu0 %3356
      %3362 = vrot.lane.b32.xlu0 %v3254, 54
      %v3363 = vpop.permute.xlu0 %3362
      %3364 = vrot.lane.b32.xlu0 %v3255, 54
      %v3365 = vpop.permute.xlu0 %3364
      %3370 = vrot.lane.b32.xlu0 %v3266, 17
      %v3371 = vpop.permute.xlu0 %3370
      %3372 = vrot.lane.b32.xlu0 %v3267, 17
      %v3373 = vpop.permute.xlu0 %3372
      %3378 = vrot.lane.b32.xlu0 %v3270, 108
      %v3379 = vpop.permute.xlu0 %3378
      %3380 = vrot.lane.b32.xlu0 %v3271, 108
      %v3381 = vpop.permute.xlu0 %3380
      %3386 = vrot.lane.b32.xlu0 %v3282, 71
      %v3387 = vpop.permute.xlu0 %3386
      %3388 = vrot.lane.b32.xlu0 %v3283, 71
      %v3389 = vpop.permute.xlu0 %3388
      %3394 = vrot.lane.b32.xlu0 %v3286, 34
      %v3395 = vpop.permute.xlu0 %3394
      %3396 = vrot.lane.b32.xlu0 %v3287, 34
      %v3397 = vpop.permute.xlu0 %3396
      %3402 = vrot.lane.b32.xlu0 %v3298, 125
      %v3403 = vpop.permute.xlu0 %3402
      %3404 = vrot.lane.b32.xlu0 %v3299, 125
      %v3405 = vpop.permute.xlu0 %3404
      %3410 = vrot.lane.b32.xlu0 %v3302, 88
      %v3411 = vpop.permute.xlu0 %3410
      %3412 = vrot.lane.b32.xlu0 %v3303, 88
      %v3413 = vpop.permute.xlu0 %3412
      %3420 = vrot.lane.b32.xlu0 %v3312, 51
      %v3421 = vpop.permute.xlu0 %3420
      %3422 = vrot.lane.b32.xlu0 %v3313, 51
      %v3423 = vpop.permute.xlu0 %3422
      %3424 = vrot.lane.b32.xlu0 %v3314, 51
      %v3425 = vpop.permute.xlu0 %3424
      %3426 = vrot.lane.b32.xlu0 %v3315, 51
      %v3427 = vpop.permute.xlu0 %3426
      %vm3428 = vcmask 416768
      %v3429 = vsel %vm3428, %v3421, %v3423
      %v3430 = vsel %vm3428, %v3425, %v3427
      %3433 = vrot.lane.b32.xlu0 %v3313, 14
      %v3434 = vpop.permute.xlu0 %3433
      %3435 = vrot.lane.b32.xlu0 %v3315, 14
      %v3436 = vpop.permute.xlu0 %3435
      %3443 = vrot.lane.b32.xlu0 %v3324, 105
      %v3444 = vpop.permute.xlu0 %3443
      %3445 = vrot.lane.b32.xlu0 %v3325, 105
      %v3446 = vpop.permute.xlu0 %3445
      %3447 = vrot.lane.b32.xlu0 %v3326, 105
      %v3448 = vpop.permute.xlu0 %3447
      %3449 = vrot.lane.b32.xlu0 %v3327, 105
      %v3450 = vpop.permute.xlu0 %3449
      %vm3451 = vcmask 859136
      %v3452 = vsel %vm3451, %v3444, %v3446
      %v3453 = vsel %vm3451, %v3448, %v3450
      %3456 = vrot.lane.b32.xlu0 %v3325, 68
      %v3457 = vpop.permute.xlu0 %3456
      %3458 = vrot.lane.b32.xlu0 %v3327, 68
      %v3459 = vpop.permute.xlu0 %3458
      %3466 = vrot.lane.b32.xlu0 %v3336, 31
      %v3467 = vpop.permute.xlu0 %3466
      %3468 = vrot.lane.b32.xlu0 %v3337, 31
      %v3469 = vpop.permute.xlu0 %3468
      %3470 = vrot.lane.b32.xlu0 %v3338, 31
      %v3471 = vpop.permute.xlu0 %3470
      %3472 = vrot.lane.b32.xlu0 %v3339, 31
      %v3473 = vpop.permute.xlu0 %3472
      %vm3474 = vcmask 252928
      %v3475 = vsel %vm3474, %v3467, %v3469
      %v3476 = vsel %vm3474, %v3471, %v3473
      %3479 = vrot.lane.b32.xlu0 %v3337, 122
      %v3480 = vpop.permute.xlu0 %3479
      %3481 = vrot.lane.b32.xlu0 %v3339, 122
      %v3482 = vpop.permute.xlu0 %3481
      %3489 = vrot.lane.b32.xlu0 %v3348, 85
      %v3490 = vpop.permute.xlu0 %3489
      %3491 = vrot.lane.b32.xlu0 %v3349, 85
      %v3492 = vpop.permute.xlu0 %3491
      %3493 = vrot.lane.b32.xlu0 %v3350, 85
      %v3494 = vpop.permute.xlu0 %3493
      %3495 = vrot.lane.b32.xlu0 %v3351, 85
      %v3496 = vpop.permute.xlu0 %3495
      %vm3497 = vcmask 695296
      %v3498 = vsel %vm3497, %v3490, %v3492
      %v3499 = vsel %vm3497, %v3494, %v3496
      %v3502 = vsel %vm3474, %v3237, %v3355
      %v3503 = vsel %vm3474, %v3238, %v3357
      %vm3504 = vcmask 506880
      %v3505 = vsel %vm3504, %v3502, %v3363
      %v3506 = vsel %vm3504, %v3503, %v3365
      %vm3507 = vcmask 760832
      %v3508 = vsel %vm3507, %v3505, %v3371
      %v3509 = vsel %vm3507, %v3506, %v3373
      %vm3510 = vcmask 1014784
      %v3511 = vsel %vm3510, %v3508, %v3379
      %v3512 = vsel %vm3510, %v3509, %v3381
      %vm3513 = vcmask 220160
      %v3514 = vsel %vm3513, %v3379, %v3387
      %v3515 = vsel %vm3513, %v3381, %v3389
      %vm3516 = vcmask 474112
      %v3517 = vsel %vm3516, %v3514, %v3395
      %v3518 = vsel %vm3516, %v3515, %v3397
      %vm3519 = vcmask 728064
      %v3520 = vsel %vm3519, %v3517, %v3403
      %v3521 = vsel %vm3519, %v3518, %v3405
      %vm3522 = vcmask 982016
      %v3523 = vsel %vm3522, %v3520, %v3411
      %v3524 = vsel %vm3522, %v3521, %v3413
      %vm3525 = vcmask 187392
      %v3526 = vsel %vm3525, %v3411, %v3429
      %v3527 = vsel %vm3525, %v3413, %v3430
      %vm3528 = vcmask 441344
      %v3529 = vsel %vm3528, %v3526, %v3434
      %v3530 = vsel %vm3528, %v3527, %v3436
      %v3531 = vsel %vm3497, %v3529, %v3452
      %v3532 = vsel %vm3497, %v3530, %v3453
      %vm3533 = vcmask 949248
      %v3534 = vsel %vm3533, %v3531, %v3457
      %v3535 = vsel %vm3533, %v3532, %v3459
      %vm3536 = vcmask 154624
      %v3537 = vsel %vm3536, %v3457, %v3475
      %v3538 = vsel %vm3536, %v3459, %v3476
      %vm3539 = vcmask 408576
      %v3540 = vsel %vm3539, %v3537, %v3480
      %v3541 = vsel %vm3539, %v3538, %v3482
      %vm3542 = vcmask 662528
      %v3543 = vsel %vm3542, %v3540, %v3498
      %v3544 = vsel %vm3542, %v3541, %v3499
      %v3545 = vpack.c.bf16 %v3512, %v3511
      %v3546 = vpack.c.bf16 %v3524, %v3523
      %v3547 = vpack.c.bf16 %v3535, %v3534
      %v3548 = vpack.c.bf16 %v3544, %v3543
      %v3549 = vld [vmem:[%s1] sm:$0xff]
      %v3550 = vld [vmem:[%s1 + $0x8] sm:$0xf]
      %v3551 = vld [vmem:[%s1 + $0xc] sm:$0xff]
      %v3552 = vld [vmem:[%s1 + $0x14] sm:$0xf]
      %v3553 = vld [vmem:[%s1 + $0x18] sm:$0xff]
      %v3554 = vld [vmem:[%s1 + $0x20] sm:$0xf]
      %v3555 = vld [vmem:[%s1 + $0x24] sm:$0xff]
      %v3556 = vld [vmem:[%s1 + $0x2c] sm:$0xf]
      %v3557 = vld [vmem:[%s1 + $0x30] sm:$0xff]
      %v3558 = vld [vmem:[%s1 + $0x38] sm:$0xf]
      %v3559 = vld [vmem:[%s1 + $0x3c] sm:$0xff]
      %v3560 = vld [vmem:[%s1 + $0x44] sm:$0xf]
      %v3561 = vld [vmem:[%s1 + $0x48] sm:$0xff]
      %v3562 = vld [vmem:[%s1 + $0x50] sm:$0xf]
      %v3563 = vld [vmem:[%s1 + $0x54] sm:$0xff]
      %v3564 = vld [vmem:[%s1 + $0x5c] sm:$0xf]
      %v3565 = vld [vmem:[%s1 + $0x60] sm:$0xff]
      %v3566 = vld [vmem:[%s1 + $0x68] sm:$0xf]
      %v3567 = vld [vmem:[%s1 + $0x6c] sm:$0xff]
      %v3568 = vld [vmem:[%s1 + $0x74] sm:$0xf]
      %v3569 = vld [vmem:[%s1 + $0x78] sm:$0xff]
      %v3570 = vld [vmem:[%s1 + $0x80] sm:$0xf]
      %v3571 = vld [vmem:[%s1 + $0x84] sm:$0xff]
      %v3572 = vld [vmem:[%s1 + $0x8c] sm:$0xf]
      %v3573 = vld [vmem:[%s1 + $0x90] sm:$0xff]
      %v3574 = vld [vmem:[%s1 + $0x98] sm:$0xf]
      %v3575 = vld [vmem:[%s1 + $0x9c] sm:$0xff]
      %v3576 = vld [vmem:[%s1 + $0xa4] sm:$0xf]
      %v3577 = vld [vmem:[%s1 + $0xa8] sm:$0xff]
      %v3578 = vld [vmem:[%s1 + $0xb0] sm:$0xf]
      %v3579 = vld [vmem:[%s1 + $0xb4] sm:$0xff]
      %v3580 = vld [vmem:[%s1 + $0xbc] sm:$0xf]
      %v3581 = vld [vmem:[%s1 + $0xc0] sm:$0xff]
      %v3582 = vld [vmem:[%s1 + $0xc8] sm:$0xf]
      %v3583 = vld [vmem:[%s1 + $0xcc] sm:$0xff]
      %v3584 = vld [vmem:[%s1 + $0xd4] sm:$0xf]
      %v3585 = vld [vmem:[%s1 + $0xd8] sm:$0xff]
      %v3586 = vld [vmem:[%s1 + $0xe0] sm:$0xf]
      %v3587 = vld [vmem:[%s1 + $0xe4] sm:$0xff]
      %v3588 = vld [vmem:[%s1 + $0xec] sm:$0xf]
      %v3589 = vld [vmem:[%s1 + $0xf0] sm:$0xff]
      %v3590 = vld [vmem:[%s1 + $0xf8] sm:$0xf]
      %v3591 = vld [vmem:[%s1 + $0xfc] sm:$0xff]
      %v3592 = vld [vmem:[%s1 + $0x104] sm:$0xf]
      %v3593 = vld [vmem:[%s1 + $0x108] sm:$0xff]
      %v3594 = vld [vmem:[%s1 + $0x110] sm:$0xf]
      %v3595 = vld [vmem:[%s1 + $0x114] sm:$0xff]
      %v3596 = vld [vmem:[%s1 + $0x11c] sm:$0xf]
      %v3597 = vld [vmem:[%s1 + $0x120] sm:$0xff]
      %v3598 = vld [vmem:[%s1 + $0x128] sm:$0xf]
      %v3599 = vld [vmem:[%s1 + $0x12c] sm:$0xff]
      %v3600 = vld [vmem:[%s1 + $0x134] sm:$0xf]
      %v3601 = vld [vmem:[%s1 + $0x138] sm:$0xff]
      %v3602 = vld [vmem:[%s1 + $0x140] sm:$0xf]
      %v3603 = vld [vmem:[%s1 + $0x144] sm:$0xff]
      %v3604 = vld [vmem:[%s1 + $0x14c] sm:$0xf]
      %v3605 = vld [vmem:[%s1 + $0x150] sm:$0xff]
      %v3606 = vld [vmem:[%s1 + $0x158] sm:$0xf]
      %v3607 = vld [vmem:[%s1 + $0x15c] sm:$0xff]
      %v3608 = vld [vmem:[%s1 + $0x164] sm:$0xf]
      %v3609 = vld [vmem:[%s1 + $0x168] sm:$0xff]
      %v3610 = vld [vmem:[%s1 + $0x170] sm:$0xf]
      %v3611 = vld [vmem:[%s1 + $0x174] sm:$0xff]
      %v3612 = vld [vmem:[%s1 + $0x17c] sm:$0xf]
      %v3613 = vld [vmem:[%s1 + $0x180] sm:$0xff]
      %v3614 = vld [vmem:[%s1 + $0x188] sm:$0xf]
      %v3615 = vld [vmem:[%s1 + $0x18c] sm:$0xff]
      %v3616 = vld [vmem:[%s1 + $0x194] sm:$0xf]
      %v3617 = vld [vmem:[%s1 + $0x198] sm:$0xff]
      %v3618 = vld [vmem:[%s1 + $0x1a0] sm:$0xf]
      %v3619 = vld [vmem:[%s1 + $0x1a4] sm:$0xff]
      %v3620 = vld [vmem:[%s1 + $0x1ac] sm:$0xf]
      %v3621 = vld [vmem:[%s1 + $0x1b0] sm:$0xff]
      %v3622 = vld [vmem:[%s1 + $0x1b8] sm:$0xf]
      %v3623 = vld [vmem:[%s1 + $0x1bc] sm:$0xff]
      %v3624 = vld [vmem:[%s1 + $0x1c4] sm:$0xf]
      %v3625 = vld [vmem:[%s1 + $0x1c8] sm:$0xff]
      %v3626 = vld [vmem:[%s1 + $0x1d0] sm:$0xf]
      %v3627 = vld [vmem:[%s1 + $0x1d4] sm:$0xff]
      %v3628 = vld [vmem:[%s1 + $0x1dc] sm:$0xf]
      %v3629 = vld [vmem:[%s1 + $0x1e0] sm:$0xff]
      %v3630 = vld [vmem:[%s1 + $0x1e8] sm:$0xf]
      %v3631 = vld [vmem:[%s1 + $0x1ec] sm:$0xff]
      %v3632 = vld [vmem:[%s1 + $0x1f4] sm:$0xf]
      %v3633 = vld [vmem:[%s1 + $0x1f8] sm:$0xff]
      %v3634 = vld [vmem:[%s1 + $0x200] sm:$0xf]
      %v3635 = vld [vmem:[%s1 + $0x204] sm:$0xff]
      %v3636 = vld [vmem:[%s1 + $0x20c] sm:$0xf]
      %v3637 = vld [vmem:[%s1 + $0x210] sm:$0xff]
      %v3638 = vld [vmem:[%s1 + $0x218] sm:$0xf]
      %v3639 = vld [vmem:[%s1 + $0x21c] sm:$0xff]
      %v3640 = vld [vmem:[%s1 + $0x224] sm:$0xf]
      %v3641 = vld [vmem:[%s1 + $0x228] sm:$0xff]
      %v3642 = vld [vmem:[%s1 + $0x230] sm:$0xf]
      %v3643 = vld [vmem:[%s1 + $0x234] sm:$0xff]
      %v3644 = vld [vmem:[%s1 + $0x23c] sm:$0xf]
      %v3645 = vld [vmem:[%s1 + $0x240] sm:$0xff]
      %v3646 = vld [vmem:[%s1 + $0x248] sm:$0xf]
      %v3647 = vld [vmem:[%s1 + $0x24c] sm:$0xff]
      %v3648 = vld [vmem:[%s1 + $0x254] sm:$0xf]
      %v3649 = vld [vmem:[%s1 + $0x258] sm:$0xff]
      %v3650 = vld [vmem:[%s1 + $0x260] sm:$0xf]
      %v3651 = vld [vmem:[%s1 + $0x264] sm:$0xff]
      %v3652 = vld [vmem:[%s1 + $0x26c] sm:$0xf]
      %v3653 = vld [vmem:[%s1 + $0x270] sm:$0xff]
      %v3654 = vld [vmem:[%s1 + $0x278] sm:$0xf]
      %v3655 = vld [vmem:[%s1 + $0x27c] sm:$0xff]
      %v3656 = vld [vmem:[%s1 + $0x284] sm:$0xf]
      %v3657 = vld [vmem:[%s1 + $0x288] sm:$0xff]
      %v3658 = vld [vmem:[%s1 + $0x290] sm:$0xf]
      %v3659 = vld [vmem:[%s1 + $0x294] sm:$0xff]
      %v3660 = vld [vmem:[%s1 + $0x29c] sm:$0xf]
      %v3661 = vld [vmem:[%s1 + $0x2a0] sm:$0xff]
      %v3662 = vld [vmem:[%s1 + $0x2a8] sm:$0xf]
      %v3663 = vld [vmem:[%s1 + $0x2ac] sm:$0xff]
      %v3664 = vld [vmem:[%s1 + $0x2b4] sm:$0xf]
      %v3665 = vld [vmem:[%s1 + $0x2b8] sm:$0xff]
      %v3666 = vld [vmem:[%s1 + $0x2c0] sm:$0xf]
      %v3667 = vld [vmem:[%s1 + $0x2c4] sm:$0xff]
      %v3668 = vld [vmem:[%s1 + $0x2cc] sm:$0xf]
      %v3669 = vld [vmem:[%s1 + $0x2d0] sm:$0xff]
      %v3670 = vld [vmem:[%s1 + $0x2d8] sm:$0xf]
      %v3671 = vld [vmem:[%s1 + $0x2dc] sm:$0xff]
      %v3672 = vld [vmem:[%s1 + $0x2e4] sm:$0xf]
      %v3797 = vunpack.c.l.b16 %v3549
      %v3798 = vunpack.c.h.b16 %v3549
      %v3799 = vunpack.c.l.b16 %v3550
      %v3800 = vunpack.c.l.b16 %v3551
      %v3801 = vunpack.c.h.b16 %v3551
      %v3802 = vunpack.c.l.b16 %v3552
      %v3803 = vunpack.c.l.b16 %v3553
      %v3804 = vunpack.c.h.b16 %v3553
      %v3805 = vunpack.c.l.b16 %v3554
      %v3806 = vunpack.c.l.b16 %v3555
      %v3807 = vunpack.c.h.b16 %v3555
      %v3808 = vunpack.c.l.b16 %v3556
      %v3809 = vunpack.c.l.b16 %v3557
      %v3810 = vunpack.c.h.b16 %v3557
      %v3811 = vunpack.c.l.b16 %v3558
      %v3812 = vunpack.c.l.b16 %v3559
      %v3813 = vunpack.c.h.b16 %v3559
      %v3814 = vunpack.c.l.b16 %v3560
      %v3815 = vunpack.c.l.b16 %v3561
      %v3816 = vunpack.c.h.b16 %v3561
      %v3817 = vunpack.c.l.b16 %v3562
      %v3818 = vunpack.c.l.b16 %v3563
      %v3819 = vunpack.c.h.b16 %v3563
      %v3820 = vunpack.c.l.b16 %v3564
      %v3821 = vunpack.c.l.b16 %v3565
      %v3822 = vunpack.c.h.b16 %v3565
      %v3823 = vunpack.c.l.b16 %v3566
      %v3824 = vunpack.c.l.b16 %v3567
      %v3825 = vunpack.c.h.b16 %v3567
      %v3826 = vunpack.c.l.b16 %v3568
      %v3827 = vunpack.c.l.b16 %v3569
      %v3828 = vunpack.c.h.b16 %v3569
      %v3829 = vunpack.c.l.b16 %v3570
      %v3830 = vunpack.c.l.b16 %v3571
      %v3831 = vunpack.c.h.b16 %v3571
      %v3832 = vunpack.c.l.b16 %v3572
      %v3833 = vunpack.c.l.b16 %v3573
      %v3834 = vunpack.c.h.b16 %v3573
      %v3835 = vunpack.c.l.b16 %v3574
      %v3836 = vunpack.c.l.b16 %v3575
      %v3837 = vunpack.c.h.b16 %v3575
      %v3838 = vunpack.c.l.b16 %v3576
      %v3839 = vunpack.c.l.b16 %v3577
      %v3840 = vunpack.c.h.b16 %v3577
      %v3841 = vunpack.c.l.b16 %v3578
      %v3842 = vunpack.c.l.b16 %v3579
      %v3843 = vunpack.c.h.b16 %v3579
      %v3844 = vunpack.c.l.b16 %v3580
      %v3845 = vunpack.c.l.b16 %v3581
      %v3846 = vunpack.c.h.b16 %v3581
      %v3847 = vunpack.c.l.b16 %v3582
      %v3848 = vunpack.c.l.b16 %v3583
      %v3849 = vunpack.c.h.b16 %v3583
      %v3850 = vunpack.c.l.b16 %v3584
      %v3851 = vunpack.c.l.b16 %v3585
      %v3852 = vunpack.c.h.b16 %v3585
      %v3853 = vunpack.c.l.b16 %v3586
      %v3854 = vunpack.c.l.b16 %v3587
      %v3855 = vunpack.c.h.b16 %v3587
      %v3856 = vunpack.c.l.b16 %v3588
      %v3857 = vunpack.c.l.b16 %v3589
      %v3858 = vunpack.c.h.b16 %v3589
      %v3859 = vunpack.c.l.b16 %v3590
      %v3860 = vunpack.c.l.b16 %v3591
      %v3861 = vunpack.c.h.b16 %v3591
      %v3862 = vunpack.c.l.b16 %v3592
      %v3863 = vunpack.c.l.b16 %v3593
      %v3864 = vunpack.c.h.b16 %v3593
      %v3865 = vunpack.c.l.b16 %v3594
      %v3866 = vunpack.c.l.b16 %v3595
      %v3867 = vunpack.c.h.b16 %v3595
      %v3868 = vunpack.c.l.b16 %v3596
      %v3869 = vunpack.c.l.b16 %v3597
      %v3870 = vunpack.c.h.b16 %v3597
      %v3871 = vunpack.c.l.b16 %v3598
      %v3872 = vunpack.c.l.b16 %v3599
      %v3873 = vunpack.c.h.b16 %v3599
      %v3874 = vunpack.c.l.b16 %v3600
      %v3875 = vunpack.c.l.b16 %v3601
      %v3876 = vunpack.c.h.b16 %v3601
      %v3877 = vunpack.c.l.b16 %v3602
      %v3878 = vunpack.c.l.b16 %v3603
      %v3879 = vunpack.c.h.b16 %v3603
      %v3880 = vunpack.c.l.b16 %v3604
      %v3881 = vunpack.c.l.b16 %v3605
      %v3882 = vunpack.c.h.b16 %v3605
      %v3883 = vunpack.c.l.b16 %v3606
      %v3884 = vunpack.c.l.b16 %v3607
      %v3885 = vunpack.c.h.b16 %v3607
      %v3886 = vunpack.c.l.b16 %v3608
      %v3887 = vunpack.c.l.b16 %v3609
      %v3888 = vunpack.c.h.b16 %v3609
      %v3889 = vunpack.c.l.b16 %v3610
      %v3890 = vunpack.c.l.b16 %v3611
      %v3891 = vunpack.c.h.b16 %v3611
      %v3892 = vunpack.c.l.b16 %v3612
      %v3893 = vunpack.c.l.b16 %v3613
      %v3894 = vunpack.c.h.b16 %v3613
      %v3895 = vunpack.c.l.b16 %v3614
      %v3896 = vunpack.c.l.b16 %v3615
      %v3897 = vunpack.c.h.b16 %v3615
      %v3898 = vunpack.c.l.b16 %v3616
      %v3899 = vunpack.c.l.b16 %v3617
      %v3900 = vunpack.c.h.b16 %v3617
      %v3901 = vunpack.c.l.b16 %v3618
      %v3902 = vunpack.c.l.b16 %v3619
      %v3903 = vunpack.c.h.b16 %v3619
      %v3904 = vunpack.c.l.b16 %v3620
      %v3905 = vunpack.c.l.b16 %v3621
      %v3906 = vunpack.c.h.b16 %v3621
      %v3907 = vunpack.c.l.b16 %v3622
      %v3908 = vunpack.c.l.b16 %v3623
      %v3909 = vunpack.c.h.b16 %v3623
      %v3910 = vunpack.c.l.b16 %v3624
      %v3911 = vunpack.c.l.b16 %v3625
      %v3912 = vunpack.c.h.b16 %v3625
      %v3913 = vunpack.c.l.b16 %v3626
      %v3914 = vunpack.c.l.b16 %v3627
      %v3915 = vunpack.c.h.b16 %v3627
      %v3916 = vunpack.c.l.b16 %v3628
      %v3917 = vunpack.c.l.b16 %v3629
      %v3918 = vunpack.c.h.b16 %v3629
      %v3919 = vunpack.c.l.b16 %v3630
      %v3920 = vunpack.c.l.b16 %v3631
      %v3921 = vunpack.c.h.b16 %v3631
      %v3922 = vunpack.c.l.b16 %v3632
      %v3923 = vunpack.c.l.b16 %v3633
      %v3924 = vunpack.c.h.b16 %v3633
      %v3925 = vunpack.c.l.b16 %v3634
      %v3926 = vunpack.c.l.b16 %v3635
      %v3927 = vunpack.c.h.b16 %v3635
      %v3928 = vunpack.c.l.b16 %v3636
      %v3929 = vunpack.c.l.b16 %v3637
      %v3930 = vunpack.c.h.b16 %v3637
      %v3931 = vunpack.c.l.b16 %v3638
      %v3932 = vunpack.c.l.b16 %v3639
      %v3933 = vunpack.c.h.b16 %v3639
      %v3934 = vunpack.c.l.b16 %v3640
      %v3935 = vunpack.c.l.b16 %v3641
      %v3936 = vunpack.c.h.b16 %v3641
      %v3937 = vunpack.c.l.b16 %v3642
      %v3938 = vunpack.c.l.b16 %v3643
      %v3939 = vunpack.c.h.b16 %v3643
      %v3940 = vunpack.c.l.b16 %v3644
      %v3941 = vunpack.c.l.b16 %v3645
      %v3942 = vunpack.c.h.b16 %v3645
      %v3943 = vunpack.c.l.b16 %v3646
      %v3944 = vunpack.c.l.b16 %v3647
      %v3945 = vunpack.c.h.b16 %v3647
      %v3946 = vunpack.c.l.b16 %v3648
      %v3947 = vunpack.c.l.b16 %v3649
      %v3948 = vunpack.c.h.b16 %v3649
      %v3949 = vunpack.c.l.b16 %v3650
      %v3950 = vunpack.c.l.b16 %v3651
      %v3951 = vunpack.c.h.b16 %v3651
      %v3952 = vunpack.c.l.b16 %v3652
      %v3953 = vunpack.c.l.b16 %v3653
      %v3954 = vunpack.c.h.b16 %v3653
      %v3955 = vunpack.c.l.b16 %v3654
      %v3956 = vunpack.c.l.b16 %v3655
      %v3957 = vunpack.c.h.b16 %v3655
      %v3958 = vunpack.c.l.b16 %v3656
      %v3959 = vunpack.c.l.b16 %v3657
      %v3960 = vunpack.c.h.b16 %v3657
      %v3961 = vunpack.c.l.b16 %v3658
      %v3962 = vunpack.c.l.b16 %v3659
      %v3963 = vunpack.c.h.b16 %v3659
      %v3964 = vunpack.c.l.b16 %v3660
      %v3965 = vunpack.c.l.b16 %v3661
      %v3966 = vunpack.c.h.b16 %v3661
      %v3967 = vunpack.c.l.b16 %v3662
      %v3968 = vunpack.c.l.b16 %v3663
      %v3969 = vunpack.c.h.b16 %v3663
      %v3970 = vunpack.c.l.b16 %v3664
      %v3971 = vunpack.c.l.b16 %v3665
      %v3972 = vunpack.c.h.b16 %v3665
      %v3973 = vunpack.c.l.b16 %v3666
      %v3974 = vunpack.c.l.b16 %v3667
      %v3975 = vunpack.c.h.b16 %v3667
      %v3976 = vunpack.c.l.b16 %v3668
      %v3977 = vunpack.c.l.b16 %v3669
      %v3978 = vunpack.c.h.b16 %v3669
      %v3979 = vunpack.c.l.b16 %v3670
      %v3980 = vunpack.c.l.b16 %v3671
      %v3981 = vunpack.c.h.b16 %v3671
      %v3982 = vunpack.c.l.b16 %v3672
      %v3983 = vpack.c.b16 %v3800, %v3797
      %v3984 = vpack.c.b16 %v3801, %v3798
      %v3985 = vpack.c.b16 %v3802, %v3799
      %v3986 = vpack.c.b16 %v3806, %v3803
      %v3987 = vpack.c.b16 %v3807, %v3804
      %v3988 = vpack.c.b16 %v3808, %v3805
      %v3989 = vpack.c.b16 %v3812, %v3809
      %v3990 = vpack.c.b16 %v3813, %v3810
      %v3991 = vpack.c.b16 %v3814, %v3811
      %v3992 = vpack.c.b16 %v3818, %v3815
      %v3993 = vpack.c.b16 %v3819, %v3816
      %v3994 = vpack.c.b16 %v3820, %v3817
      %v3995 = vpack.c.b16 %v3824, %v3821
      %v3996 = vpack.c.b16 %v3825, %v3822
      %v3997 = vpack.c.b16 %v3826, %v3823
      %v3998 = vpack.c.b16 %v3830, %v3827
      %v3999 = vpack.c.b16 %v3831, %v3828
      %v4000 = vpack.c.b16 %v3832, %v3829
      %v4001 = vpack.c.b16 %v3836, %v3833
      %v4002 = vpack.c.b16 %v3837, %v3834
      %v4003 = vpack.c.b16 %v3838, %v3835
      %v4004 = vpack.c.b16 %v3842, %v3839
      %v4005 = vpack.c.b16 %v3843, %v3840
      %v4006 = vpack.c.b16 %v3844, %v3841
      %v4007 = vpack.c.b16 %v3848, %v3845
      %v4008 = vpack.c.b16 %v3849, %v3846
      %v4009 = vpack.c.b16 %v3850, %v3847
      %v4010 = vpack.c.b16 %v3854, %v3851
      %v4011 = vpack.c.b16 %v3855, %v3852
      %v4012 = vpack.c.b16 %v3856, %v3853
      %v4013 = vpack.c.b16 %v3860, %v3857
      %v4014 = vpack.c.b16 %v3861, %v3858
      %v4015 = vpack.c.b16 %v3862, %v3859
      %v4016 = vpack.c.b16 %v3866, %v3863
      %v4017 = vpack.c.b16 %v3867, %v3864
      %v4018 = vpack.c.b16 %v3868, %v3865
      %v4019 = vpack.c.b16 %v3872, %v3869
      %v4020 = vpack.c.b16 %v3873, %v3870
      %v4021 = vpack.c.b16 %v3874, %v3871
      %v4022 = vpack.c.b16 %v3878, %v3875
      %v4023 = vpack.c.b16 %v3879, %v3876
      %v4024 = vpack.c.b16 %v3880, %v3877
      %v4025 = vpack.c.b16 %v3884, %v3881
      %v4026 = vpack.c.b16 %v3885, %v3882
      %v4027 = vpack.c.b16 %v3886, %v3883
      %v4028 = vpack.c.b16 %v3890, %v3887
      %v4029 = vpack.c.b16 %v3891, %v3888
      %v4030 = vpack.c.b16 %v3892, %v3889
      %v4031 = vpack.c.b16 %v3896, %v3893
      %v4032 = vpack.c.b16 %v3897, %v3894
      %v4033 = vpack.c.b16 %v3898, %v3895
      %v4034 = vpack.c.b16 %v3902, %v3899
      %v4035 = vpack.c.b16 %v3903, %v3900
      %v4036 = vpack.c.b16 %v3904, %v3901
      %v4037 = vpack.c.b16 %v3908, %v3905
      %v4038 = vpack.c.b16 %v3909, %v3906
      %v4039 = vpack.c.b16 %v3910, %v3907
      %v4040 = vpack.c.b16 %v3914, %v3911
      %v4041 = vpack.c.b16 %v3915, %v3912
      %v4042 = vpack.c.b16 %v3916, %v3913
      %v4043 = vpack.c.b16 %v3920, %v3917
      %v4044 = vpack.c.b16 %v3921, %v3918
      %v4045 = vpack.c.b16 %v3922, %v3919
      %v4046 = vpack.c.b16 %v3926, %v3923
      %v4047 = vpack.c.b16 %v3927, %v3924
      %v4048 = vpack.c.b16 %v3928, %v3925
      %v4049 = vpack.c.b16 %v3932, %v3929
      %v4050 = vpack.c.b16 %v3933, %v3930
      %v4051 = vpack.c.b16 %v3934, %v3931
      %v4052 = vpack.c.b16 %v3938, %v3935
      %v4053 = vpack.c.b16 %v3939, %v3936
      %v4054 = vpack.c.b16 %v3940, %v3937
      %v4055 = vpack.c.b16 %v3944, %v3941
      %v4056 = vpack.c.b16 %v3945, %v3942
      %v4057 = vpack.c.b16 %v3946, %v3943
      %v4058 = vpack.c.b16 %v3950, %v3947
      %v4059 = vpack.c.b16 %v3951, %v3948
      %v4060 = vpack.c.b16 %v3952, %v3949
      %v4061 = vpack.c.b16 %v3956, %v3953
      %v4062 = vpack.c.b16 %v3957, %v3954
      %v4063 = vpack.c.b16 %v3958, %v3955
      %v4064 = vpack.c.b16 %v3962, %v3959
      %v4065 = vpack.c.b16 %v3963, %v3960
      %v4066 = vpack.c.b16 %v3964, %v3961
      %v4067 = vpack.c.b16 %v3968, %v3965
      %v4068 = vpack.c.b16 %v3969, %v3966
      %v4069 = vpack.c.b16 %v3970, %v3967
      %v4070 = vpack.c.b16 %v3974, %v3971
      %v4071 = vpack.c.b16 %v3975, %v3972
      %v4072 = vpack.c.b16 %v3976, %v3973
      %v4073 = vpack.c.b16 %v3980, %v3977
      %v4074 = vpack.c.b16 %v3981, %v3978
      %v4075 = vpack.c.b16 %v3982, %v3979
      %vm4169 = vcmask 916480
      %v4171 = vsel %vm4169, %v3548, 0
      %4173 = vmatprep.subr.bf16.mxu0 %v3984
      %4174 = vmatpush1.bf16.msra.mxu0 %v3983
      %4175 = vmatprep.subr.bf16.mxu0 %v3987
      %4176 = vmatpush1.bf16.msra.mxu0 %v3986
      %4177 = vmatprep.subr.bf16.mxu0 %v3990
      %4178 = vmatpush1.bf16.msra.mxu0 %v3989
      %4179 = vmatprep.subr.bf16.mxu0 %v3993
      %4180 = vmatpush1.bf16.msra.mxu0 %v3992
      %4181 = vmatprep.subr.bf16.mxu0 %v3996
      %4182 = vmatpush1.bf16.msra.mxu0 %v3995
      %4183 = vmatprep.subr.bf16.mxu0 %v3999
      %4184 = vmatpush1.bf16.msra.mxu0 %v3998
      %4185 = vmatprep.subr.bf16.mxu0 %v4002
      %4186 = vmatpush1.bf16.msra.mxu0 %v4001
      %4187 = vmatprep.subr.bf16.mxu0 %v4005
      %4188 = vmatpush1.bf16.msra.mxu0 %v4004
      %4189 = vmatprep.subr.bf16.mxu0 %v4008
      %4190 = vmatpush1.bf16.msra.mxu0 %v4007
      %4191 = vmatprep.subr.bf16.mxu0 %v4011
      %4192 = vmatpush1.bf16.msra.mxu0 %v4010
      %4193 = vmatprep.subr.bf16.mxu0 %v4014
      %4194 = vmatpush1.bf16.msra.mxu0 %v4013
      %4195 = vmatprep.subr.bf16.mxu0 %v4017
      %4196 = vmatpush1.bf16.msra.mxu0 %v4016
      %4197 = vmatprep.subr.bf16.mxu0 %v4020
      %4198 = vmatpush1.bf16.msra.mxu0 %v4019
      %4199 = vmatprep.subr.bf16.mxu0 %v4023
      %4200 = vmatpush1.bf16.msra.mxu0 %v4022
      %4201 = vmatprep.subr.bf16.mxu0 %v4026
      %4202 = vmatpush1.bf16.msra.mxu0 %v4025
      %4203 = vmatprep.subr.bf16.mxu0 %v4029
      %4204 = vmatpush1.bf16.msra.mxu0 %v4028
      %4205 = vmatprep.mubr.bf16.mxu0 %v3546
      %4206 = vmatmul.mubr.bf16.gmra.mrb[0].mxu0 %v3545
      %v4207 = vpop.f32.mrb[0].mxu0
      %v4208 = vadd.f32 0.0, %v4207
      %v4209 = vpop.f32.mrb[0].mxu0
      %v4210 = vadd.f32 0.0, %v4209
      %v4211 = vpop.f32.mrb[0].mxu0
      %v4212 = vadd.f32 0.0, %v4211
      %v4213 = vpop.f32.mrb[0].mxu0
      %v4214 = vadd.f32 0.0, %v4213
      %4215 = vdwg.mxu0
      %4216 = vmatprep.subr.bf16.mxu0 %v4032
      %4217 = vmatpush1.bf16.msra.mxu0 %v4031
      %4218 = vmatprep.subr.bf16.mxu0 %v4035
      %4219 = vmatpush1.bf16.msra.mxu0 %v4034
      %4220 = vmatprep.subr.bf16.mxu0 %v4038
      %4221 = vmatpush1.bf16.msra.mxu0 %v4037
      %4222 = vmatprep.subr.bf16.mxu0 %v4041
      %4223 = vmatpush1.bf16.msra.mxu0 %v4040
      %4224 = vmatprep.subr.bf16.mxu0 %v4044
      %4225 = vmatpush1.bf16.msra.mxu0 %v4043
      %4226 = vmatprep.subr.bf16.mxu0 %v4047
      %4227 = vmatpush1.bf16.msra.mxu0 %v4046
      %4228 = vmatprep.subr.bf16.mxu0 %v4050
      %4229 = vmatpush1.bf16.msra.mxu0 %v4049
      %4230 = vmatprep.subr.bf16.mxu0 %v4053
      %4231 = vmatpush1.bf16.msra.mxu0 %v4052
      %4232 = vmatprep.subr.bf16.mxu0 %v4056
      %4233 = vmatpush1.bf16.msra.mxu0 %v4055
      %4234 = vmatprep.subr.bf16.mxu0 %v4059
      %4235 = vmatpush1.bf16.msra.mxu0 %v4058
      %4236 = vmatprep.subr.bf16.mxu0 %v4062
      %4237 = vmatpush1.bf16.msra.mxu0 %v4061
      %4238 = vmatprep.subr.bf16.mxu0 %v4065
      %4239 = vmatpush1.bf16.msra.mxu0 %v4064
      %4240 = vmatprep.subr.bf16.mxu0 %v4068
      %4241 = vmatpush1.bf16.msra.mxu0 %v4067
      %4242 = vmatprep.subr.bf16.mxu0 %v4071
      %4243 = vmatpush1.bf16.msra.mxu0 %v4070
      %4244 = vmatprep.subr.bf16.mxu0 %v4074
      %4245 = vmatpush1.bf16.msra.mxu0 %v4073
      %4246 = vmatprep.subr.bf16.mxu0 0
      %4247 = vmatpush1.bf16.msra.mxu0 0
      %4248 = vmatprep.mubr.bf16.mxu0 %v4171
      %4249 = vmatmul.mubr.bf16.gmra.mrb[0].mxu0 %v3547
      %v4250 = vpop.f32.mrb[0].mxu0
      %v4251 = vadd.f32 %v4208, %v4250
      %v4252 = vpop.f32.mrb[0].mxu0
      %v4253 = vadd.f32 %v4210, %v4252
      %v4254 = vpop.f32.mrb[0].mxu0
      %v4255 = vadd.f32 %v4212, %v4254
      %v4256 = vpop.f32.mrb[0].mxu0
      %v4257 = vadd.f32 %v4214, %v4256
      %4258 = vdwg.mxu0
      %4259 = vmatprep.subr.bf16.mxu0 0
      %4260 = vmatpush1.bf16.msra.mxu0 %v3985
      %4261 = vmatprep.subr.bf16.mxu0 0
      %4262 = vmatpush1.bf16.msra.mxu0 %v3988
      %4263 = vmatprep.subr.bf16.mxu0 0
      %4264 = vmatpush1.bf16.msra.mxu0 %v3991
      %4265 = vmatprep.subr.bf16.mxu0 0
      %4266 = vmatpush1.bf16.msra.mxu0 %v3994
      %4267 = vmatprep.subr.bf16.mxu0 0
      %4268 = vmatpush1.bf16.msra.mxu0 %v3997
      %4269 = vmatprep.subr.bf16.mxu0 0
      %4270 = vmatpush1.bf16.msra.mxu0 %v4000
      %4271 = vmatprep.subr.bf16.mxu0 0
      %4272 = vmatpush1.bf16.msra.mxu0 %v4003
      %4273 = vmatprep.subr.bf16.mxu0 0
      %4274 = vmatpush1.bf16.msra.mxu0 %v4006
      %4275 = vmatprep.subr.bf16.mxu0 0
      %4276 = vmatpush1.bf16.msra.mxu0 %v4009
      %4277 = vmatprep.subr.bf16.mxu0 0
      %4278 = vmatpush1.bf16.msra.mxu0 %v4012
      %4279 = vmatprep.subr.bf16.mxu0 0
      %4280 = vmatpush1.bf16.msra.mxu0 %v4015
      %4281 = vmatprep.subr.bf16.mxu0 0
      %4282 = vmatpush1.bf16.msra.mxu0 %v4018
      %4283 = vmatprep.subr.bf16.mxu0 0
      %4284 = vmatpush1.bf16.msra.mxu0 %v4021
      %4285 = vmatprep.subr.bf16.mxu0 0
      %4286 = vmatpush1.bf16.msra.mxu0 %v4024
      %4287 = vmatprep.subr.bf16.mxu0 0
      %4288 = vmatpush1.bf16.msra.mxu0 %v4027
      %4289 = vmatprep.subr.bf16.mxu0 0
      %4290 = vmatpush1.bf16.msra.mxu0 %v4030
      %4291 = vmatprep.mubr.bf16.mxu0 %v3546
      %4292 = vmatmul.mubr.bf16.gmra.mrb[0].mxu0 %v3545
      %v4293 = vpop.f32.mrb[0].mxu0
      %v4294 = vadd.f32 0.0, %v4293
      %v4295 = vpop.f32.mrb[0].mxu0
      %v4296 = vpop.f32.mrb[0].mxu0
      %v4297 = vadd.f32 0.0, %v4296
      %v4298 = vpop.f32.mrb[0].mxu0
      %4299 = vdwg.mxu0
      %4300 = vmatprep.subr.bf16.mxu0 0
      %4301 = vmatpush1.bf16.msra.mxu0 %v4033
      %4302 = vmatprep.subr.bf16.mxu0 0
      %4303 = vmatpush1.bf16.msra.mxu0 %v4036
      %4304 = vmatprep.subr.bf16.mxu0 0
      %4305 = vmatpush1.bf16.msra.mxu0 %v4039
      %4306 = vmatprep.subr.bf16.mxu0 0
      %4307 = vmatpush1.bf16.msra.mxu0 %v4042
      %4308 = vmatprep.subr.bf16.mxu0 0
      %4309 = vmatpush1.bf16.msra.mxu0 %v4045
      %4310 = vmatprep.subr.bf16.mxu0 0
      %4311 = vmatpush1.bf16.msra.mxu0 %v4048
      %4312 = vmatprep.subr.bf16.mxu0 0
      %4313 = vmatpush1.bf16.msra.mxu0 %v4051
      %4314 = vmatprep.subr.bf16.mxu0 0
      %4315 = vmatpush1.bf16.msra.mxu0 %v4054
      %4316 = vmatprep.subr.bf16.mxu0 0
      %4317 = vmatpush1.bf16.msra.mxu0 %v4057
      %4318 = vmatprep.subr.bf16.mxu0 0
      %4319 = vmatpush1.bf16.msra.mxu0 %v4060
      %4320 = vmatprep.subr.bf16.mxu0 0
      %4321 = vmatpush1.bf16.msra.mxu0 %v4063
      %4322 = vmatprep.subr.bf16.mxu0 0
      %4323 = vmatpush1.bf16.msra.mxu0 %v4066
      %4324 = vmatprep.subr.bf16.mxu0 0
      %4325 = vmatpush1.bf16.msra.mxu0 %v4069
      %4326 = vmatprep.subr.bf16.mxu0 0
      %4327 = vmatpush1.bf16.msra.mxu0 %v4072
      %4328 = vmatprep.subr.bf16.mxu0 0
      %4329 = vmatpush1.bf16.msra.mxu0 %v4075
      %4330 = vmatprep.subr.bf16.mxu0 0
      %4331 = vmatpush1.bf16.msra.mxu0 0
      %4332 = vmatprep.mubr.bf16.mxu0 %v4171
      %4333 = vmatmul.mubr.bf16.gmra.mrb[0].mxu0 %v3547
      %v4334 = vpop.f32.mrb[0].mxu0
      %v4335 = vadd.f32 %v4294, %v4334
      %v4336 = vpop.f32.mrb[0].mxu0
      %v4337 = vpop.f32.mrb[0].mxu0
      %v4338 = vadd.f32 %v4297, %v4337
      %v4339 = vpop.f32.mrb[0].mxu0
      %4340 = vdwg.mxu0
      %v4341 = vpack.c.bf16 %v4255, %v4251
      %v4342 = vpack.c.bf16 %v4257, %v4253
      %v4343 = vpack.c.bf16 %v4338, %v4335
      %v4344 = vld [vmem:[%s6] sm:$0xf]
      %v4345 = vld [vmem:[%s6 + $0x4] sm:$0xf]
      %v4346 = vld [vmem:[%s6 + $0x8] sm:$0xf]
      %v4347 = vld [vmem:[%s6 + $0xc] sm:$0xf]
      %s4348 = scalar_lea.vmem %s6, 16
      %v4349 = vld [vmem:[%s4348] sm:$0xf]
      %v4350 = vld [vmem:[%s4348 + $0x4] sm:$0xf]
      %v4351 = vld [vmem:[%s4348 + $0x8] sm:$0xf]
      %v4352 = vld [vmem:[%s4348 + $0xc] sm:$0xf]
      %v4357 = vunpack.c.l.b16 %v4349
      %v4358 = vunpack.c.l.b16 %v4350
      %v4359 = vunpack.c.l.b16 %v4351
      %v4360 = vunpack.c.l.b16 %v4352
      %v4361 = vpack.c.b16 %v4358, %v4357
      %v4362 = vpack.c.b16 %v4360, %v4359
      %4366 = vrot.lane.b32.xlu0 %v4341, 127
      %v4367 = vpop.permute.xlu0 %4366
      %4368 = vrot.lane.b32.xlu0 %v4342, 127
      %v4369 = vpop.permute.xlu0 %4368
      %4370 = vrot.lane.b32.xlu0 %v4343, 127
      %v4371 = vpop.permute.xlu0 %4370
      %v4372 = vsel %vm471, %v4367, %v4369
      %v4373 = vsel %vm471, %v4369, %v4371
      %vm4377 = vcmask 130048
      %v4379 = vsel %vm4377, %v4361, 0
      %v4382 = vsel %vm4377, %v4362, 0
      %4384 = vmatprep.subr.bf16.mxu0 %v4373
      %4385 = vmatpush1.bf16.msra.mxu0 %v4372
      %4386 = vmatprep.subr.bf16.mxu0 0
      %4387 = vmatpush1.bf16.msra.mxu0 0
      %4388 = vmatprep.subr.bf16.mxu0 0
      %4389 = vmatpush1.bf16.msra.mxu0 0
      %4390 = vmatprep.subr.bf16.mxu0 0
      %4391 = vmatpush1.bf16.msra.mxu0 0
      %4392 = vmatprep.subr.bf16.mxu0 0
      %4393 = vmatpush1.bf16.msra.mxu0 0
      %4394 = vmatprep.subr.bf16.mxu0 0
      %4395 = vmatpush1.bf16.msra.mxu0 0
      %4396 = vmatprep.subr.bf16.mxu0 0
      %4397 = vmatpush1.bf16.msra.mxu0 0
      %4398 = vmatprep.subr.bf16.mxu0 0
      %4399 = vmatpush1.bf16.msra.mxu0 0
      %4400 = vmatprep.subr.bf16.mxu0 0
      %4401 = vmatpush1.bf16.msra.mxu0 0
      %4402 = vmatprep.subr.bf16.mxu0 0
      %4403 = vmatpush1.bf16.msra.mxu0 0
      %4404 = vmatprep.subr.bf16.mxu0 0
      %4405 = vmatpush1.bf16.msra.mxu0 0
      %4406 = vmatprep.subr.bf16.mxu0 0
      %4407 = vmatpush1.bf16.msra.mxu0 0
      %4408 = vmatprep.subr.bf16.mxu0 0
      %4409 = vmatpush1.bf16.msra.mxu0 0
      %4410 = vmatprep.subr.bf16.mxu0 0
      %4411 = vmatpush1.bf16.msra.mxu0 0
      %4412 = vmatprep.subr.bf16.mxu0 0
      %4413 = vmatpush1.bf16.msra.mxu0 0
      %4414 = vmatprep.subr.bf16.mxu0 0
      %4415 = vmatpush1.bf16.msra.mxu0 0
      %4416 = vmatprep.mubr.bf16.mxu0 0
      %4417 = vmatmul.mubr.bf16.gmra.mrb[0].mxu0 %v4379
      %v4418 = vpop.f32.mrb[0].mxu0
      %v4419 = vadd.f32 0.0, %v4418
      %v4420 = vpop.f32.mrb[0].mxu0
      %v4421 = vadd.f32 0.0, %v4420
      %v4422 = vpop.f32.mrb[0].mxu0
      %v4423 = vadd.f32 0.0, %v4422
      %v4424 = vpop.f32.mrb[0].mxu0
      %v4425 = vadd.f32 0.0, %v4424
      %4426 = vmatprep.mubr.bf16.mxu0 0
      %4427 = vmatmul.mubr.bf16.gmra.mrb[0].mxu0 %v4382
      %v4428 = vpop.f32.mrb[0].mxu0
      %v4429 = vadd.f32 0.0, %v4428
      %v4430 = vpop.f32.mrb[0].mxu0
      %v4431 = vadd.f32 0.0, %v4430
      %v4432 = vpop.f32.mrb[0].mxu0
      %v4433 = vadd.f32 0.0, %v4432
      %v4434 = vpop.f32.mrb[0].mxu0
      %v4435 = vadd.f32 0.0, %v4434
      %4436 = vdwg.mxu0
      %4437 = vmatprep.subr.bf16.mxu0 0
      %4438 = vmatpush1.bf16.msra.mxu0 %v4371
      %4439 = vmatprep.subr.bf16.mxu0 0
      %4440 = vmatpush1.bf16.msra.mxu0 0
      %4441 = vmatprep.subr.bf16.mxu0 0
      %4442 = vmatpush1.bf16.msra.mxu0 0
      %4443 = vmatprep.subr.bf16.mxu0 0
      %4444 = vmatpush1.bf16.msra.mxu0 0
      %4445 = vmatprep.subr.bf16.mxu0 0
      %4446 = vmatpush1.bf16.msra.mxu0 0
      %4447 = vmatprep.subr.bf16.mxu0 0
      %4448 = vmatpush1.bf16.msra.mxu0 0
      %4449 = vmatprep.subr.bf16.mxu0 0
      %4450 = vmatpush1.bf16.msra.mxu0 0
      %4451 = vmatprep.subr.bf16.mxu0 0
      %4452 = vmatpush1.bf16.msra.mxu0 0
      %4453 = vmatprep.subr.bf16.mxu0 0
      %4454 = vmatpush1.bf16.msra.mxu0 0
      %4455 = vmatprep.subr.bf16.mxu0 0
      %4456 = vmatpush1.bf16.msra.mxu0 0
      %4457 = vmatprep.subr.bf16.mxu0 0
      %4458 = vmatpush1.bf16.msra.mxu0 0
      %4459 = vmatprep.subr.bf16.mxu0 0
      %4460 = vmatpush1.bf16.msra.mxu0 0
      %4461 = vmatprep.subr.bf16.mxu0 0
      %4462 = vmatpush1.bf16.msra.mxu0 0
      %4463 = vmatprep.subr.bf16.mxu0 0
      %4464 = vmatpush1.bf16.msra.mxu0 0
      %4465 = vmatprep.subr.bf16.mxu0 0
      %4466 = vmatpush1.bf16.msra.mxu0 0
      %4467 = vmatprep.subr.bf16.mxu0 0
      %4468 = vmatpush1.bf16.msra.mxu0 0
      %4469 = vmatprep.mubr.bf16.mxu0 0
      %4470 = vmatmul.mubr.bf16.gmra.mrb[0].mxu0 %v4379
      %v4471 = vpop.f32.mrb[0].mxu0
      %v4472 = vadd.f32 0.0, %v4471
      %v4473 = vpop.f32.mrb[0].mxu0
      %v4474 = vpop.f32.mrb[0].mxu0
      %v4475 = vadd.f32 0.0, %v4474
      %v4476 = vpop.f32.mrb[0].mxu0
      %4477 = vmatprep.mubr.bf16.mxu0 0
      %4478 = vmatmul.mubr.bf16.gmra.mrb[0].mxu0 %v4382
      %v4479 = vpop.f32.mrb[0].mxu0
      %v4480 = vadd.f32 0.0, %v4479
      %v4481 = vpop.f32.mrb[0].mxu0
      %v4482 = vpop.f32.mrb[0].mxu0
      %v4483 = vadd.f32 0.0, %v4482
      %v4484 = vpop.f32.mrb[0].mxu0
      %4485 = vdwg.mxu0
      %v4490 = vunpack.c.l.b16 %v4344
      %v4491 = vunpack.c.l.b16 %v4345
      %v4492 = vunpack.c.l.b16 %v4346
      %v4493 = vunpack.c.l.b16 %v4347
      %v4494 = vpack.c.b16 %v4491, %v4490
      %v4495 = vpack.c.b16 %v4493, %v4492
      %v4497 = vsel %vm4377, %v4494, 0
      %v4500 = vsel %vm4377, %v4495, 0
      %4502 = vmatprep.subr.bf16.mxu0 %v4342
      %4503 = vmatpush1.bf16.msra.mxu0 %v4341
      %4504 = vmatprep.subr.bf16.mxu0 0
      %4505 = vmatpush1.bf16.msra.mxu0 0
      %4506 = vmatprep.subr.bf16.mxu0 0
      %4507 = vmatpush1.bf16.msra.mxu0 0
      %4508 = vmatprep.subr.bf16.mxu0 0
      %4509 = vmatpush1.bf16.msra.mxu0 0
      %4510 = vmatprep.subr.bf16.mxu0 0
      %4511 = vmatpush1.bf16.msra.mxu0 0
      %4512 = vmatprep.subr.bf16.mxu0 0
      %4513 = vmatpush1.bf16.msra.mxu0 0
      %4514 = vmatprep.subr.bf16.mxu0 0
      %4515 = vmatpush1.bf16.msra.mxu0 0
      %4516 = vmatprep.subr.bf16.mxu0 0
      %4517 = vmatpush1.bf16.msra.mxu0 0
      %4518 = vmatprep.subr.bf16.mxu0 0
      %4519 = vmatpush1.bf16.msra.mxu0 0
      %4520 = vmatprep.subr.bf16.mxu0 0
      %4521 = vmatpush1.bf16.msra.mxu0 0
      %4522 = vmatprep.subr.bf16.mxu0 0
      %4523 = vmatpush1.bf16.msra.mxu0 0
      %4524 = vmatprep.subr.bf16.mxu0 0
      %4525 = vmatpush1.bf16.msra.mxu0 0
      %4526 = vmatprep.subr.bf16.mxu0 0
      %4527 = vmatpush1.bf16.msra.mxu0 0
      %4528 = vmatprep.subr.bf16.mxu0 0
      %4529 = vmatpush1.bf16.msra.mxu0 0
      %4530 = vmatprep.subr.bf16.mxu0 0
      %4531 = vmatpush1.bf16.msra.mxu0 0
      %4532 = vmatprep.subr.bf16.mxu0 0
      %4533 = vmatpush1.bf16.msra.mxu0 0
      %4534 = vmatprep.mubr.bf16.mxu0 0
      %4535 = vmatmul.mubr.bf16.gmra.mrb[0].mxu0 %v4497
      %v4536 = vpop.f32.mrb[0].mxu0
      %v4537 = vadd.f32 %v4419, %v4536
      %v4538 = vpop.f32.mrb[0].mxu0
      %v4539 = vadd.f32 %v4421, %v4538
      %v4540 = vpop.f32.mrb[0].mxu0
      %v4541 = vadd.f32 %v4423, %v4540
      %v4542 = vpop.f32.mrb[0].mxu0
      %v4543 = vadd.f32 %v4425, %v4542
      %4544 = vmatprep.mubr.bf16.mxu0 0
      %4545 = vmatmul.mubr.bf16.gmra.mrb[0].mxu0 %v4500
      %v4546 = vpop.f32.mrb[0].mxu0
      %v4547 = vadd.f32 %v4429, %v4546
      %v4548 = vpop.f32.mrb[0].mxu0
      %v4549 = vadd.f32 %v4431, %v4548
      %v4550 = vpop.f32.mrb[0].mxu0
      %v4551 = vadd.f32 %v4433, %v4550
      %v4552 = vpop.f32.mrb[0].mxu0
      %v4553 = vadd.f32 %v4435, %v4552
      %4554 = vdwg.mxu0
      %4555 = vmatprep.subr.bf16.mxu0 0
      %4556 = vmatpush1.bf16.msra.mxu0 %v4343
      %4557 = vmatprep.subr.bf16.mxu0 0
      %4558 = vmatpush1.bf16.msra.mxu0 0
      %4559 = vmatprep.subr.bf16.mxu0 0
      %4560 = vmatpush1.bf16.msra.mxu0 0
      %4561 = vmatprep.subr.bf16.mxu0 0
      %4562 = vmatpush1.bf16.msra.mxu0 0
      %4563 = vmatprep.subr.bf16.mxu0 0
      %4564 = vmatpush1.bf16.msra.mxu0 0
      %4565 = vmatprep.subr.bf16.mxu0 0
      %4566 = vmatpush1.bf16.msra.mxu0 0
      %4567 = vmatprep.subr.bf16.mxu0 0
      %4568 = vmatpush1.bf16.msra.mxu0 0
      %4569 = vmatprep.subr.bf16.mxu0 0
      %4570 = vmatpush1.bf16.msra.mxu0 0
      %4571 = vmatprep.subr.bf16.mxu0 0
      %4572 = vmatpush1.bf16.msra.mxu0 0
      %4573 = vmatprep.subr.bf16.mxu0 0
      %4574 = vmatpush1.bf16.msra.mxu0 0
      %4575 = vmatprep.subr.bf16.mxu0 0
      %4576 = vmatpush1.bf16.msra.mxu0 0
      %4577 = vmatprep.subr.bf16.mxu0 0
      %4578 = vmatpush1.bf16.msra.mxu0 0
      %4579 = vmatprep.subr.bf16.mxu0 0
      %4580 = vmatpush1.bf16.msra.mxu0 0
      %4581 = vmatprep.subr.bf16.mxu0 0
      %4582 = vmatpush1.bf16.msra.mxu0 0
      %4583 = vmatprep.subr.bf16.mxu0 0
      %4584 = vmatpush1.bf16.msra.mxu0 0
      %4585 = vmatprep.subr.bf16.mxu0 0
      %4586 = vmatpush1.bf16.msra.mxu0 0
      %4587 = vmatprep.mubr.bf16.mxu0 0
      %4588 = vmatmul.mubr.bf16.gmra.mrb[0].mxu0 %v4497
      %v4589 = vpop.f32.mrb[0].mxu0
      %v4590 = vadd.f32 %v4472, %v4589
      %v4591 = vpop.f32.mrb[0].mxu0
      %v4592 = vpop.f32.mrb[0].mxu0
      %v4593 = vadd.f32 %v4475, %v4592
      %v4594 = vpop.f32.mrb[0].mxu0
      %4595 = vmatprep.mubr.bf16.mxu0 0
      %4596 = vmatmul.mubr.bf16.gmra.mrb[0].mxu0 %v4500
      %v4597 = vpop.f32.mrb[0].mxu0
      %v4598 = vadd.f32 %v4480, %v4597
      %v4599 = vpop.f32.mrb[0].mxu0
      %v4600 = vpop.f32.mrb[0].mxu0
      %v4601 = vadd.f32 %v4483, %v4600
      %v4602 = vpop.f32.mrb[0].mxu0
      %4603 = vdwg.mxu0
      %s4604 = scalar_lea.vmem %s6, 32
      %v4605 = vld [vmem:[%s4604] sm:$0xf]
      %v4606 = vld [vmem:[%s4604 + $0x4] sm:$0xf]
      %v4607 = vld [vmem:[%s4604 + $0x8] sm:$0xf]
      %v4608 = vld [vmem:[%s4604 + $0xc] sm:$0xf]
      %v4613 = vunpack.c.l.b16 %v4605
      %v4614 = vunpack.c.l.b16 %v4606
      %v4615 = vunpack.c.l.b16 %v4607
      %v4616 = vunpack.c.l.b16 %v4608
      %v4617 = vpack.c.b16 %v4614, %v4613
      %v4618 = vpack.c.b16 %v4616, %v4615
      %4619 = vrot.lane.b32.xlu0 %v4341, 126
      %v4620 = vpop.permute.xlu0 %4619
      %4621 = vrot.lane.b32.xlu0 %v4342, 126
      %v4622 = vpop.permute.xlu0 %4621
      %4623 = vrot.lane.b32.xlu0 %v4343, 126
      %v4624 = vpop.permute.xlu0 %4623
      %v4625 = vsel %vm999, %v4620, %v4622
      %v4626 = vsel %vm999, %v4622, %v4624
      %v4631 = vsel %vm4377, %v4617, 0
      %v4634 = vsel %vm4377, %v4618, 0
      %4636 = vmatprep.subr.bf16.mxu0 %v4626
      %4637 = vmatpush1.bf16.msra.mxu0 %v4625
      %4638 = vmatprep.subr.bf16.mxu0 0
      %4639 = vmatpush1.bf16.msra.mxu0 0
      %4640 = vmatprep.subr.bf16.mxu0 0
      %4641 = vmatpush1.bf16.msra.mxu0 0
      %4642 = vmatprep.subr.bf16.mxu0 0
      %4643 = vmatpush1.bf16.msra.mxu0 0
      %4644 = vmatprep.subr.bf16.mxu0 0
      %4645 = vmatpush1.bf16.msra.mxu0 0
      %4646 = vmatprep.subr.bf16.mxu0 0
      %4647 = vmatpush1.bf16.msra.mxu0 0
      %4648 = vmatprep.subr.bf16.mxu0 0
      %4649 = vmatpush1.bf16.msra.mxu0 0
      %4650 = vmatprep.subr.bf16.mxu0 0
      %4651 = vmatpush1.bf16.msra.mxu0 0
      %4652 = vmatprep.subr.bf16.mxu0 0
      %4653 = vmatpush1.bf16.msra.mxu0 0
      %4654 = vmatprep.subr.bf16.mxu0 0
      %4655 = vmatpush1.bf16.msra.mxu0 0
      %4656 = vmatprep.subr.bf16.mxu0 0
      %4657 = vmatpush1.bf16.msra.mxu0 0
      %4658 = vmatprep.subr.bf16.mxu0 0
      %4659 = vmatpush1.bf16.msra.mxu0 0
      %4660 = vmatprep.subr.bf16.mxu0 0
      %4661 = vmatpush1.bf16.msra.mxu0 0
      %4662 = vmatprep.subr.bf16.mxu0 0
      %4663 = vmatpush1.bf16.msra.mxu0 0
      %4664 = vmatprep.subr.bf16.mxu0 0
      %4665 = vmatpush1.bf16.msra.mxu0 0
      %4666 = vmatprep.subr.bf16.mxu0 0
      %4667 = vmatpush1.bf16.msra.mxu0 0
      %4668 = vmatprep.mubr.bf16.mxu0 0
      %4669 = vmatmul.mubr.bf16.gmra.mrb[0].mxu0 %v4631
      %v4670 = vpop.f32.mrb[0].mxu0
      %v4671 = vadd.f32 0.0, %v4670
      %v4672 = vpop.f32.mrb[0].mxu0
      %v4673 = vadd.f32 0.0, %v4672
      %v4674 = vpop.f32.mrb[0].mxu0
      %v4675 = vadd.f32 0.0, %v4674
      %v4676 = vpop.f32.mrb[0].mxu0
      %v4677 = vadd.f32 0.0, %v4676
      %4678 = vmatprep.mubr.bf16.mxu0 0
      %4679 = vmatmul.mubr.bf16.gmra.mrb[0].mxu0 %v4634
      %v4680 = vpop.f32.mrb[0].mxu0
      %v4681 = vadd.f32 0.0, %v4680
      %v4682 = vpop.f32.mrb[0].mxu0
      %v4683 = vadd.f32 0.0, %v4682
      %v4684 = vpop.f32.mrb[0].mxu0
      %v4685 = vadd.f32 0.0, %v4684
      %v4686 = vpop.f32.mrb[0].mxu0
      %v4687 = vadd.f32 0.0, %v4686
      %4688 = vdwg.mxu0
      %4689 = vmatprep.subr.bf16.mxu0 0
      %4690 = vmatpush1.bf16.msra.mxu0 %v4624
      %4691 = vmatprep.subr.bf16.mxu0 0
      %4692 = vmatpush1.bf16.msra.mxu0 0
      %4693 = vmatprep.subr.bf16.mxu0 0
      %4694 = vmatpush1.bf16.msra.mxu0 0
      %4695 = vmatprep.subr.bf16.mxu0 0
      %4696 = vmatpush1.bf16.msra.mxu0 0
      %4697 = vmatprep.subr.bf16.mxu0 0
      %4698 = vmatpush1.bf16.msra.mxu0 0
      %4699 = vmatprep.subr.bf16.mxu0 0
      %4700 = vmatpush1.bf16.msra.mxu0 0
      %4701 = vmatprep.subr.bf16.mxu0 0
      %4702 = vmatpush1.bf16.msra.mxu0 0
      %4703 = vmatprep.subr.bf16.mxu0 0
      %4704 = vmatpush1.bf16.msra.mxu0 0
      %4705 = vmatprep.subr.bf16.mxu0 0
      %4706 = vmatpush1.bf16.msra.mxu0 0
      %4707 = vmatprep.subr.bf16.mxu0 0
      %4708 = vmatpush1.bf16.msra.mxu0 0
      %4709 = vmatprep.subr.bf16.mxu0 0
      %4710 = vmatpush1.bf16.msra.mxu0 0
      %4711 = vmatprep.subr.bf16.mxu0 0
      %4712 = vmatpush1.bf16.msra.mxu0 0
      %4713 = vmatprep.subr.bf16.mxu0 0
      %4714 = vmatpush1.bf16.msra.mxu0 0
      %4715 = vmatprep.subr.bf16.mxu0 0
      %4716 = vmatpush1.bf16.msra.mxu0 0
      %4717 = vmatprep.subr.bf16.mxu0 0
      %4718 = vmatpush1.bf16.msra.mxu0 0
      %4719 = vmatprep.subr.bf16.mxu0 0
      %4720 = vmatpush1.bf16.msra.mxu0 0
      %4721 = vmatprep.mubr.bf16.mxu0 0
      %4722 = vmatmul.mubr.bf16.gmra.mrb[0].mxu0 %v4631
      %v4723 = vpop.f32.mrb[0].mxu0
      %v4724 = vadd.f32 0.0, %v4723
      %v4725 = vpop.f32.mrb[0].mxu0
      %v4726 = vpop.f32.mrb[0].mxu0
      %v4727 = vadd.f32 0.0, %v4726
      %v4728 = vpop.f32.mrb[0].mxu0
      %4729 = vmatprep.mubr.bf16.mxu0 0
      %4730 = vmatmul.mubr.bf16.gmra.mrb[0].mxu0 %v4634
      %v4731 = vpop.f32.mrb[0].mxu0
      %v4732 = vadd.f32 0.0, %v4731
      %v4733 = vpop.f32.mrb[0].mxu0
      %v4734 = vpop.f32.mrb[0].mxu0
      %v4735 = vadd.f32 0.0, %v4734
      %v4736 = vpop.f32.mrb[0].mxu0
      %4737 = vdwg.mxu0
      %v4738 = vadd.f32 %v4537, %v4671
      %v4739 = vadd.f32 %v4539, %v4673
      %v4740 = vadd.f32 %v4590, %v4724
      %v4741 = vadd.f32 %v4541, %v4675
      %v4742 = vadd.f32 %v4543, %v4677
      %v4743 = vadd.f32 %v4593, %v4727
      %v4744 = vadd.f32 %v4547, %v4681
      %v4745 = vadd.f32 %v4549, %v4683
      %v4746 = vadd.f32 %v4598, %v4732
      %v4747 = vadd.f32 %v4551, %v4685
      %v4748 = vadd.f32 %v4553, %v4687
      %v4749 = vadd.f32 %v4601, %v4735
      %s4750 = scalar_lea.vmem %s6, 48
      %v4751 = vld [vmem:[%s4750] sm:$0xf]
      %v4752 = vld [vmem:[%s4750 + $0x4] sm:$0xf]
      %v4753 = vld [vmem:[%s4750 + $0x8] sm:$0xf]
      %v4754 = vld [vmem:[%s4750 + $0xc] sm:$0xf]
      %v4759 = vunpack.c.l.b16 %v4751
      %v4760 = vunpack.c.l.b16 %v4752
      %v4761 = vunpack.c.l.b16 %v4753
      %v4762 = vunpack.c.l.b16 %v4754
      %v4763 = vpack.c.b16 %v4760, %v4759
      %v4764 = vpack.c.b16 %v4762, %v4761
      %4765 = vrot.lane.b32.xlu0 %v4341, 110
      %v4766 = vpop.permute.xlu0 %4765
      %4767 = vrot.lane.b32.xlu0 %v4342, 110
      %v4768 = vpop.permute.xlu0 %4767
      %4769 = vrot.lane.b32.xlu0 %v4343, 110
      %v4770 = vpop.permute.xlu0 %4769
      %vm4771 = vcmask 900096
      %v4772 = vsel %vm4771, %v4766, %v4768
      %v4773 = vsel %vm4771, %v4768, %v4770
      %v4778 = vsel %vm4377, %v4763, 0
      %v4781 = vsel %vm4377, %v4764, 0
      %4783 = vmatprep.subr.bf16.mxu0 %v4773
      %4784 = vmatpush1.bf16.msra.mxu0 %v4772
      %4785 = vmatprep.subr.bf16.mxu0 0
      %4786 = vmatpush1.bf16.msra.mxu0 0
      %4787 = vmatprep.subr.bf16.mxu0 0
      %4788 = vmatpush1.bf16.msra.mxu0 0
      %4789 = vmatprep.subr.bf16.mxu0 0
      %4790 = vmatpush1.bf16.msra.mxu0 0
      %4791 = vmatprep.subr.bf16.mxu0 0
      %4792 = vmatpush1.bf16.msra.mxu0 0
      %4793 = vmatprep.subr.bf16.mxu0 0
      %4794 = vmatpush1.bf16.msra.mxu0 0
      %4795 = vmatprep.subr.bf16.mxu0 0
      %4796 = vmatpush1.bf16.msra.mxu0 0
      %4797 = vmatprep.subr.bf16.mxu0 0
      %4798 = vmatpush1.bf16.msra.mxu0 0
      %4799 = vmatprep.subr.bf16.mxu0 0
      %4800 = vmatpush1.bf16.msra.mxu0 0
      %4801 = vmatprep.subr.bf16.mxu0 0
      %4802 = vmatpush1.bf16.msra.mxu0 0
      %4803 = vmatprep.subr.bf16.mxu0 0
      %4804 = vmatpush1.bf16.msra.mxu0 0
      %4805 = vmatprep.subr.bf16.mxu0 0
      %4806 = vmatpush1.bf16.msra.mxu0 0
      %4807 = vmatprep.subr.bf16.mxu0 0
      %4808 = vmatpush1.bf16.msra.mxu0 0
      %4809 = vmatprep.subr.bf16.mxu0 0
      %4810 = vmatpush1.bf16.msra.mxu0 0
      %4811 = vmatprep.subr.bf16.mxu0 0
      %4812 = vmatpush1.bf16.msra.mxu0 0
      %4813 = vmatprep.subr.bf16.mxu0 0
      %4814 = vmatpush1.bf16.msra.mxu0 0
      %4815 = vmatprep.mubr.bf16.mxu0 0
      %4816 = vmatmul.mubr.bf16.gmra.mrb[0].mxu0 %v4778
      %v4817 = vpop.f32.mrb[0].mxu0
      %v4818 = vadd.f32 0.0, %v4817
      %v4819 = vpop.f32.mrb[0].mxu0
      %v4820 = vadd.f32 0.0, %v4819
      %v4821 = vpop.f32.mrb[0].mxu0
      %v4822 = vadd.f32 0.0, %v4821
      %v4823 = vpop.f32.mrb[0].mxu0
      %v4824 = vadd.f32 0.0, %v4823
      %4825 = vmatprep.mubr.bf16.mxu0 0
      %4826 = vmatmul.mubr.bf16.gmra.mrb[0].mxu0 %v4781
      %v4827 = vpop.f32.mrb[0].mxu0
      %v4828 = vadd.f32 0.0, %v4827
      %v4829 = vpop.f32.mrb[0].mxu0
      %v4830 = vadd.f32 0.0, %v4829
      %v4831 = vpop.f32.mrb[0].mxu0
      %v4832 = vadd.f32 0.0, %v4831
      %v4833 = vpop.f32.mrb[0].mxu0
      %v4834 = vadd.f32 0.0, %v4833
      %4835 = vdwg.mxu0
      %4836 = vmatprep.subr.bf16.mxu0 0
      %4837 = vmatpush1.bf16.msra.mxu0 %v4770
      %4838 = vmatprep.subr.bf16.mxu0 0
      %4839 = vmatpush1.bf16.msra.mxu0 0
      %4840 = vmatprep.subr.bf16.mxu0 0
      %4841 = vmatpush1.bf16.msra.mxu0 0
      %4842 = vmatprep.subr.bf16.mxu0 0
      %4843 = vmatpush1.bf16.msra.mxu0 0
      %4844 = vmatprep.subr.bf16.mxu0 0
      %4845 = vmatpush1.bf16.msra.mxu0 0
      %4846 = vmatprep.subr.bf16.mxu0 0
      %4847 = vmatpush1.bf16.msra.mxu0 0
      %4848 = vmatprep.subr.bf16.mxu0 0
      %4849 = vmatpush1.bf16.msra.mxu0 0
      %4850 = vmatprep.subr.bf16.mxu0 0
      %4851 = vmatpush1.bf16.msra.mxu0 0
      %4852 = vmatprep.subr.bf16.mxu0 0
      %4853 = vmatpush1.bf16.msra.mxu0 0
      %4854 = vmatprep.subr.bf16.mxu0 0
      %4855 = vmatpush1.bf16.msra.mxu0 0
      %4856 = vmatprep.subr.bf16.mxu0 0
      %4857 = vmatpush1.bf16.msra.mxu0 0
      %4858 = vmatprep.subr.bf16.mxu0 0
      %4859 = vmatpush1.bf16.msra.mxu0 0
      %4860 = vmatprep.subr.bf16.mxu0 0
      %4861 = vmatpush1.bf16.msra.mxu0 0
      %4862 = vmatprep.subr.bf16.mxu0 0
      %4863 = vmatpush1.bf16.msra.mxu0 0
      %4864 = vmatprep.subr.bf16.mxu0 0
      %4865 = vmatpush1.bf16.msra.mxu0 0
      %4866 = vmatprep.subr.bf16.mxu0 0
      %4867 = vmatpush1.bf16.msra.mxu0 0
      %4868 = vmatprep.mubr.bf16.mxu0 0
      %4869 = vmatmul.mubr.bf16.gmra.mrb[0].mxu0 %v4778
      %v4870 = vpop.f32.mrb[0].mxu0
      %v4871 = vadd.f32 0.0, %v4870
      %v4872 = vpop.f32.mrb[0].mxu0
      %v4873 = vpop.f32.mrb[0].mxu0
      %v4874 = vadd.f32 0.0, %v4873
      %v4875 = vpop.f32.mrb[0].mxu0
      %4876 = vmatprep.mubr.bf16.mxu0 0
      %4877 = vmatmul.mubr.bf16.gmra.mrb[0].mxu0 %v4781
      %v4878 = vpop.f32.mrb[0].mxu0
      %v4879 = vadd.f32 0.0, %v4878
      %v4880 = vpop.f32.mrb[0].mxu0
      %v4881 = vpop.f32.mrb[0].mxu0
      %v4882 = vadd.f32 0.0, %v4881
      %v4883 = vpop.f32.mrb[0].mxu0
      %4884 = vdwg.mxu0
      %v4885 = vadd.f32 %v4738, %v4818
      %v4886 = vadd.f32 %v4739, %v4820
      %v4887 = vadd.f32 %v4740, %v4871
      %v4888 = vadd.f32 %v4741, %v4822
      %v4889 = vadd.f32 %v4742, %v4824
      %v4890 = vadd.f32 %v4743, %v4874
      %v4891 = vadd.f32 %v4744, %v4828
      %v4892 = vadd.f32 %v4745, %v4830
      %v4893 = vadd.f32 %v4746, %v4879
      %v4894 = vadd.f32 %v4747, %v4832
      %v4895 = vadd.f32 %v4748, %v4834
      %v4896 = vadd.f32 %v4749, %v4882
      %s4897 = scalar_lea.vmem %s6, 64
      %v4898 = vld [vmem:[%s4897] sm:$0xf]
      %v4899 = vld [vmem:[%s4897 + $0x4] sm:$0xf]
      %v4900 = vld [vmem:[%s4897 + $0x8] sm:$0xf]
      %v4901 = vld [vmem:[%s4897 + $0xc] sm:$0xf]
      %v4906 = vunpack.c.l.b16 %v4898
      %v4907 = vunpack.c.l.b16 %v4899
      %v4908 = vunpack.c.l.b16 %v4900
      %v4909 = vunpack.c.l.b16 %v4901
      %v4910 = vpack.c.b16 %v4907, %v4906
      %v4911 = vpack.c.b16 %v4909, %v4908
      %4912 = vrot.lane.b32.xlu0 %v4341, 109
      %v4913 = vpop.permute.xlu0 %4912
      %4914 = vrot.lane.b32.xlu0 %v4342, 109
      %v4915 = vpop.permute.xlu0 %4914
      %4916 = vrot.lane.b32.xlu0 %v4343, 109
      %v4917 = vpop.permute.xlu0 %4916
      %vm4918 = vcmask 891904
      %v4919 = vsel %vm4918, %v4913, %v4915
      %v4920 = vsel %vm4918, %v4915, %v4917
      %v4925 = vsel %vm4377, %v4910, 0
      %v4928 = vsel %vm4377, %v4911, 0
      %4930 = vmatprep.subr.bf16.mxu0 %v4920
      %4931 = vmatpush1.bf16.msra.mxu0 %v4919
      %4932 = vmatprep.subr.bf16.mxu0 0
      %4933 = vmatpush1.bf16.msra.mxu0 0
      %4934 = vmatprep.subr.bf16.mxu0 0
      %4935 = vmatpush1.bf16.msra.mxu0 0
      %4936 = vmatprep.subr.bf16.mxu0 0
      %4937 = vmatpush1.bf16.msra.mxu0 0
      %4938 = vmatprep.subr.bf16.mxu0 0
      %4939 = vmatpush1.bf16.msra.mxu0 0
      %4940 = vmatprep.subr.bf16.mxu0 0
      %4941 = vmatpush1.bf16.msra.mxu0 0
      %4942 = vmatprep.subr.bf16.mxu0 0
      %4943 = vmatpush1.bf16.msra.mxu0 0
      %4944 = vmatprep.subr.bf16.mxu0 0
      %4945 = vmatpush1.bf16.msra.mxu0 0
      %4946 = vmatprep.subr.bf16.mxu0 0
      %4947 = vmatpush1.bf16.msra.mxu0 0
      %4948 = vmatprep.subr.bf16.mxu0 0
      %4949 = vmatpush1.bf16.msra.mxu0 0
      %4950 = vmatprep.subr.bf16.mxu0 0
      %4951 = vmatpush1.bf16.msra.mxu0 0
      %4952 = vmatprep.subr.bf16.mxu0 0
      %4953 = vmatpush1.bf16.msra.mxu0 0
      %4954 = vmatprep.subr.bf16.mxu0 0
      %4955 = vmatpush1.bf16.msra.mxu0 0
      %4956 = vmatprep.subr.bf16.mxu0 0
      %4957 = vmatpush1.bf16.msra.mxu0 0
      %4958 = vmatprep.subr.bf16.mxu0 0
      %4959 = vmatpush1.bf16.msra.mxu0 0
      %4960 = vmatprep.subr.bf16.mxu0 0
      %4961 = vmatpush1.bf16.msra.mxu0 0
      %4962 = vmatprep.mubr.bf16.mxu0 0
      %4963 = vmatmul.mubr.bf16.gmra.mrb[0].mxu0 %v4925
      %v4964 = vpop.f32.mrb[0].mxu0
      %v4965 = vadd.f32 0.0, %v4964
      %v4966 = vpop.f32.mrb[0].mxu0
      %v4967 = vadd.f32 0.0, %v4966
      %v4968 = vpop.f32.mrb[0].mxu0
      %v4969 = vadd.f32 0.0, %v4968
      %v4970 = vpop.f32.mrb[0].mxu0
      %v4971 = vadd.f32 0.0, %v4970
      %4972 = vmatprep.mubr.bf16.mxu0 0
      %4973 = vmatmul.mubr.bf16.gmra.mrb[0].mxu0 %v4928
      %v4974 = vpop.f32.mrb[0].mxu0
      %v4975 = vadd.f32 0.0, %v4974
      %v4976 = vpop.f32.mrb[0].mxu0
      %v4977 = vadd.f32 0.0, %v4976
      %v4978 = vpop.f32.mrb[0].mxu0
      %v4979 = vadd.f32 0.0, %v4978
      %v4980 = vpop.f32.mrb[0].mxu0
      %v4981 = vadd.f32 0.0, %v4980
      %4982 = vdwg.mxu0
      %4983 = vmatprep.subr.bf16.mxu0 0
      %4984 = vmatpush1.bf16.msra.mxu0 %v4917
      %4985 = vmatprep.subr.bf16.mxu0 0
      %4986 = vmatpush1.bf16.msra.mxu0 0
      %4987 = vmatprep.subr.bf16.mxu0 0
      %4988 = vmatpush1.bf16.msra.mxu0 0
      %4989 = vmatprep.subr.bf16.mxu0 0
      %4990 = vmatpush1.bf16.msra.mxu0 0
      %4991 = vmatprep.subr.bf16.mxu0 0
      %4992 = vmatpush1.bf16.msra.mxu0 0
      %4993 = vmatprep.subr.bf16.mxu0 0
      %4994 = vmatpush1.bf16.msra.mxu0 0
      %4995 = vmatprep.subr.bf16.mxu0 0
      %4996 = vmatpush1.bf16.msra.mxu0 0
      %4997 = vmatprep.subr.bf16.mxu0 0
      %4998 = vmatpush1.bf16.msra.mxu0 0
      %4999 = vmatprep.subr.bf16.mxu0 0
      %5000 = vmatpush1.bf16.msra.mxu0 0
      %5001 = vmatprep.subr.bf16.mxu0 0
      %5002 = vmatpush1.bf16.msra.mxu0 0
      %5003 = vmatprep.subr.bf16.mxu0 0
      %5004 = vmatpush1.bf16.msra.mxu0 0
      %5005 = vmatprep.subr.bf16.mxu0 0
      %5006 = vmatpush1.bf16.msra.mxu0 0
      %5007 = vmatprep.subr.bf16.mxu0 0
      %5008 = vmatpush1.bf16.msra.mxu0 0
      %5009 = vmatprep.subr.bf16.mxu0 0
      %5010 = vmatpush1.bf16.msra.mxu0 0
      %5011 = vmatprep.subr.bf16.mxu0 0
      %5012 = vmatpush1.bf16.msra.mxu0 0
      %5013 = vmatprep.subr.bf16.mxu0 0
      %5014 = vmatpush1.bf16.msra.mxu0 0
      %5015 = vmatprep.mubr.bf16.mxu0 0
      %5016 = vmatmul.mubr.bf16.gmra.mrb[0].mxu0 %v4925
      %v5017 = vpop.f32.mrb[0].mxu0
      %v5018 = vadd.f32 0.0, %v5017
      %v5019 = vpop.f32.mrb[0].mxu0
      %v5020 = vpop.f32.mrb[0].mxu0
      %v5021 = vadd.f32 0.0, %v5020
      %v5022 = vpop.f32.mrb[0].mxu0
      %5023 = vmatprep.mubr.bf16.mxu0 0
      %5024 = vmatmul.mubr.bf16.gmra.mrb[0].mxu0 %v4928
      %v5025 = vpop.f32.mrb[0].mxu0
      %v5026 = vadd.f32 0.0, %v5025
      %v5027 = vpop.f32.mrb[0].mxu0
      %v5028 = vpop.f32.mrb[0].mxu0
      %v5029 = vadd.f32 0.0, %v5028
      %v5030 = vpop.f32.mrb[0].mxu0
      %5031 = vdwg.mxu0
      %v5032 = vadd.f32 %v4885, %v4965
      %v5033 = vadd.f32 %v4886, %v4967
      %v5034 = vadd.f32 %v4887, %v5018
      %v5035 = vadd.f32 %v4888, %v4969
      %v5036 = vadd.f32 %v4889, %v4971
      %v5037 = vadd.f32 %v4890, %v5021
      %v5038 = vadd.f32 %v4891, %v4975
      %v5039 = vadd.f32 %v4892, %v4977
      %v5040 = vadd.f32 %v4893, %v5026
      %v5041 = vadd.f32 %v4894, %v4979
      %v5042 = vadd.f32 %v4895, %v4981
      %v5043 = vadd.f32 %v4896, %v5029
      %s5044 = scalar_lea.vmem %s6, 80
      %v5045 = vld [vmem:[%s5044] sm:$0xf]
      %v5046 = vld [vmem:[%s5044 + $0x4] sm:$0xf]
      %v5047 = vld [vmem:[%s5044 + $0x8] sm:$0xf]
      %v5048 = vld [vmem:[%s5044 + $0xc] sm:$0xf]
      %v5053 = vunpack.c.l.b16 %v5045
      %v5054 = vunpack.c.l.b16 %v5046
      %v5055 = vunpack.c.l.b16 %v5047
      %v5056 = vunpack.c.l.b16 %v5048
      %v5057 = vpack.c.b16 %v5054, %v5053
      %v5058 = vpack.c.b16 %v5056, %v5055
      %5059 = vrot.lane.b32.xlu0 %v4341, 108
      %v5060 = vpop.permute.xlu0 %5059
      %5061 = vrot.lane.b32.xlu0 %v4342, 108
      %v5062 = vpop.permute.xlu0 %5061
      %5063 = vrot.lane.b32.xlu0 %v4343, 108
      %v5064 = vpop.permute.xlu0 %5063
      %vm5065 = vcmask 883712
      %v5066 = vsel %vm5065, %v5060, %v5062
      %v5067 = vsel %vm5065, %v5062, %v5064
      %v5072 = vsel %vm4377, %v5057, 0
      %v5075 = vsel %vm4377, %v5058, 0
      %5077 = vmatprep.subr.bf16.mxu0 %v5067
      %5078 = vmatpush1.bf16.msra.mxu0 %v5066
      %5079 = vmatprep.subr.bf16.mxu0 0
      %5080 = vmatpush1.bf16.msra.mxu0 0
      %5081 = vmatprep.subr.bf16.mxu0 0
      %5082 = vmatpush1.bf16.msra.mxu0 0
      %5083 = vmatprep.subr.bf16.mxu0 0
      %5084 = vmatpush1.bf16.msra.mxu0 0
      %5085 = vmatprep.subr.bf16.mxu0 0
      %5086 = vmatpush1.bf16.msra.mxu0 0
      %5087 = vmatprep.subr.bf16.mxu0 0
      %5088 = vmatpush1.bf16.msra.mxu0 0
      %5089 = vmatprep.subr.bf16.mxu0 0
      %5090 = vmatpush1.bf16.msra.mxu0 0
      %5091 = vmatprep.subr.bf16.mxu0 0
      %5092 = vmatpush1.bf16.msra.mxu0 0
      %5093 = vmatprep.subr.bf16.mxu0 0
      %5094 = vmatpush1.bf16.msra.mxu0 0
      %5095 = vmatprep.subr.bf16.mxu0 0
      %5096 = vmatpush1.bf16.msra.mxu0 0
      %5097 = vmatprep.subr.bf16.mxu0 0
      %5098 = vmatpush1.bf16.msra.mxu0 0
      %5099 = vmatprep.subr.bf16.mxu0 0
      %5100 = vmatpush1.bf16.msra.mxu0 0
      %5101 = vmatprep.subr.bf16.mxu0 0
      %5102 = vmatpush1.bf16.msra.mxu0 0
      %5103 = vmatprep.subr.bf16.mxu0 0
      %5104 = vmatpush1.bf16.msra.mxu0 0
      %5105 = vmatprep.subr.bf16.mxu0 0
      %5106 = vmatpush1.bf16.msra.mxu0 0
      %5107 = vmatprep.subr.bf16.mxu0 0
      %5108 = vmatpush1.bf16.msra.mxu0 0
      %5109 = vmatprep.mubr.bf16.mxu0 0
      %5110 = vmatmul.mubr.bf16.gmra.mrb[0].mxu0 %v5072
      %v5111 = vpop.f32.mrb[0].mxu0
      %v5112 = vadd.f32 0.0, %v5111
      %v5113 = vpop.f32.mrb[0].mxu0
      %v5114 = vadd.f32 0.0, %v5113
      %v5115 = vpop.f32.mrb[0].mxu0
      %v5116 = vadd.f32 0.0, %v5115
      %v5117 = vpop.f32.mrb[0].mxu0
      %v5118 = vadd.f32 0.0, %v5117
      %5119 = vmatprep.mubr.bf16.mxu0 0
      %5120 = vmatmul.mubr.bf16.gmra.mrb[0].mxu0 %v5075
      %v5121 = vpop.f32.mrb[0].mxu0
      %v5122 = vadd.f32 0.0, %v5121
      %v5123 = vpop.f32.mrb[0].mxu0
      %v5124 = vadd.f32 0.0, %v5123
      %v5125 = vpop.f32.mrb[0].mxu0
      %v5126 = vadd.f32 0.0, %v5125
      %v5127 = vpop.f32.mrb[0].mxu0
      %v5128 = vadd.f32 0.0, %v5127
      %5129 = vdwg.mxu0
      %5130 = vmatprep.subr.bf16.mxu0 0
      %5131 = vmatpush1.bf16.msra.mxu0 %v5064
      %5132 = vmatprep.subr.bf16.mxu0 0
      %5133 = vmatpush1.bf16.msra.mxu0 0
      %5134 = vmatprep.subr.bf16.mxu0 0
      %5135 = vmatpush1.bf16.msra.mxu0 0
      %5136 = vmatprep.subr.bf16.mxu0 0
      %5137 = vmatpush1.bf16.msra.mxu0 0
      %5138 = vmatprep.subr.bf16.mxu0 0
      %5139 = vmatpush1.bf16.msra.mxu0 0
      %5140 = vmatprep.subr.bf16.mxu0 0
      %5141 = vmatpush1.bf16.msra.mxu0 0
      %5142 = vmatprep.subr.bf16.mxu0 0
      %5143 = vmatpush1.bf16.msra.mxu0 0
      %5144 = vmatprep.subr.bf16.mxu0 0
      %5145 = vmatpush1.bf16.msra.mxu0 0
      %5146 = vmatprep.subr.bf16.mxu0 0
      %5147 = vmatpush1.bf16.msra.mxu0 0
      %5148 = vmatprep.subr.bf16.mxu0 0
      %5149 = vmatpush1.bf16.msra.mxu0 0
      %5150 = vmatprep.subr.bf16.mxu0 0
      %5151 = vmatpush1.bf16.msra.mxu0 0
      %5152 = vmatprep.subr.bf16.mxu0 0
      %5153 = vmatpush1.bf16.msra.mxu0 0
      %5154 = vmatprep.subr.bf16.mxu0 0
      %5155 = vmatpush1.bf16.msra.mxu0 0
      %5156 = vmatprep.subr.bf16.mxu0 0
      %5157 = vmatpush1.bf16.msra.mxu0 0
      %5158 = vmatprep.subr.bf16.mxu0 0
      %5159 = vmatpush1.bf16.msra.mxu0 0
      %5160 = vmatprep.subr.bf16.mxu0 0
      %5161 = vmatpush1.bf16.msra.mxu0 0
      %5162 = vmatprep.mubr.bf16.mxu0 0
      %5163 = vmatmul.mubr.bf16.gmra.mrb[0].mxu0 %v5072
      %v5164 = vpop.f32.mrb[0].mxu0
      %v5165 = vadd.f32 0.0, %v5164
      %v5166 = vpop.f32.mrb[0].mxu0
      %v5167 = vpop.f32.mrb[0].mxu0
      %v5168 = vadd.f32 0.0, %v5167
      %v5169 = vpop.f32.mrb[0].mxu0
      %5170 = vmatprep.mubr.bf16.mxu0 0
      %5171 = vmatmul.mubr.bf16.gmra.mrb[0].mxu0 %v5075
      %v5172 = vpop.f32.mrb[0].mxu0
      %v5173 = vadd.f32 0.0, %v5172
      %v5174 = vpop.f32.mrb[0].mxu0
      %v5175 = vpop.f32.mrb[0].mxu0
      %v5176 = vadd.f32 0.0, %v5175
      %v5177 = vpop.f32.mrb[0].mxu0
      %5178 = vdwg.mxu0
      %v5179 = vadd.f32 %v5032, %v5112
      %v5180 = vadd.f32 %v5033, %v5114
      %v5181 = vadd.f32 %v5034, %v5165
      %v5182 = vadd.f32 %v5035, %v5116
      %v5183 = vadd.f32 %v5036, %v5118
      %v5184 = vadd.f32 %v5037, %v5168
      %v5185 = vadd.f32 %v5038, %v5122
      %v5186 = vadd.f32 %v5039, %v5124
      %v5187 = vadd.f32 %v5040, %v5173
      %v5188 = vadd.f32 %v5041, %v5126
      %v5189 = vadd.f32 %v5042, %v5128
      %v5190 = vadd.f32 %v5043, %v5176
      %s5191 = scalar_lea.vmem %s6, 96
      %v5192 = vld [vmem:[%s5191] sm:$0xf]
      %v5193 = vld [vmem:[%s5191 + $0x4] sm:$0xf]
      %v5194 = vld [vmem:[%s5191 + $0x8] sm:$0xf]
      %v5195 = vld [vmem:[%s5191 + $0xc] sm:$0xf]
      %v5200 = vunpack.c.l.b16 %v5192
      %v5201 = vunpack.c.l.b16 %v5193
      %v5202 = vunpack.c.l.b16 %v5194
      %v5203 = vunpack.c.l.b16 %v5195
      %v5204 = vpack.c.b16 %v5201, %v5200
      %v5205 = vpack.c.b16 %v5203, %v5202
      %5206 = vrot.lane.b32.xlu0 %v4341, 92
      %v5207 = vpop.permute.xlu0 %5206
      %5208 = vrot.lane.b32.xlu0 %v4342, 92
      %v5209 = vpop.permute.xlu0 %5208
      %5210 = vrot.lane.b32.xlu0 %v4343, 92
      %v5211 = vpop.permute.xlu0 %5210
      %v5212 = vsel %vm1887, %v5207, %v5209
      %v5213 = vsel %vm1887, %v5209, %v5211
      %v5218 = vsel %vm4377, %v5204, 0
      %v5221 = vsel %vm4377, %v5205, 0
      %5223 = vmatprep.subr.bf16.mxu0 %v5213
      %5224 = vmatpush1.bf16.msra.mxu0 %v5212
      %5225 = vmatprep.subr.bf16.mxu0 0
      %5226 = vmatpush1.bf16.msra.mxu0 0
      %5227 = vmatprep.subr.bf16.mxu0 0
      %5228 = vmatpush1.bf16.msra.mxu0 0
      %5229 = vmatprep.subr.bf16.mxu0 0
      %5230 = vmatpush1.bf16.msra.mxu0 0
      %5231 = vmatprep.subr.bf16.mxu0 0
      %5232 = vmatpush1.bf16.msra.mxu0 0
      %5233 = vmatprep.subr.bf16.mxu0 0
      %5234 = vmatpush1.bf16.msra.mxu0 0
      %5235 = vmatprep.subr.bf16.mxu0 0
      %5236 = vmatpush1.bf16.msra.mxu0 0
      %5237 = vmatprep.subr.bf16.mxu0 0
      %5238 = vmatpush1.bf16.msra.mxu0 0
      %5239 = vmatprep.subr.bf16.mxu0 0
      %5240 = vmatpush1.bf16.msra.mxu0 0
      %5241 = vmatprep.subr.bf16.mxu0 0
      %5242 = vmatpush1.bf16.msra.mxu0 0
      %5243 = vmatprep.subr.bf16.mxu0 0
      %5244 = vmatpush1.bf16.msra.mxu0 0
      %5245 = vmatprep.subr.bf16.mxu0 0
      %5246 = vmatpush1.bf16.msra.mxu0 0
      %5247 = vmatprep.subr.bf16.mxu0 0
      %5248 = vmatpush1.bf16.msra.mxu0 0
      %5249 = vmatprep.subr.bf16.mxu0 0
      %5250 = vmatpush1.bf16.msra.mxu0 0
      %5251 = vmatprep.subr.bf16.mxu0 0
      %5252 = vmatpush1.bf16.msra.mxu0 0
      %5253 = vmatprep.subr.bf16.mxu0 0
      %5254 = vmatpush1.bf16.msra.mxu0 0
      %5255 = vmatprep.mubr.bf16.mxu0 0
      %5256 = vmatmul.mubr.bf16.gmra.mrb[0].mxu0 %v5218
      %v5257 = vpop.f32.mrb[0].mxu0
      %v5258 = vadd.f32 0.0, %v5257
      %v5259 = vpop.f32.mrb[0].mxu0
      %v5260 = vadd.f32 0.0, %v5259
      %v5261 = vpop.f32.mrb[0].mxu0
      %v5262 = vadd.f32 0.0, %v5261
      %v5263 = vpop.f32.mrb[0].mxu0
      %v5264 = vadd.f32 0.0, %v5263
      %5265 = vmatprep.mubr.bf16.mxu0 0
      %5266 = vmatmul.mubr.bf16.gmra.mrb[0].mxu0 %v5221
      %v5267 = vpop.f32.mrb[0].mxu0
      %v5268 = vadd.f32 0.0, %v5267
      %v5269 = vpop.f32.mrb[0].mxu0
      %v5270 = vadd.f32 0.0, %v5269
      %v5271 = vpop.f32.mrb[0].mxu0
      %v5272 = vadd.f32 0.0, %v5271
      %v5273 = vpop.f32.mrb[0].mxu0
      %v5274 = vadd.f32 0.0, %v5273
      %5275 = vdwg.mxu0
      %5276 = vmatprep.subr.bf16.mxu0 0
      %5277 = vmatpush1.bf16.msra.mxu0 %v5211
      %5278 = vmatprep.subr.bf16.mxu0 0
      %5279 = vmatpush1.bf16.msra.mxu0 0
      %5280 = vmatprep.subr.bf16.mxu0 0
      %5281 = vmatpush1.bf16.msra.mxu0 0
      %5282 = vmatprep.subr.bf16.mxu0 0
      %5283 = vmatpush1.bf16.msra.mxu0 0
      %5284 = vmatprep.subr.bf16.mxu0 0
      %5285 = vmatpush1.bf16.msra.mxu0 0
      %5286 = vmatprep.subr.bf16.mxu0 0
      %5287 = vmatpush1.bf16.msra.mxu0 0
      %5288 = vmatprep.subr.bf16.mxu0 0
      %5289 = vmatpush1.bf16.msra.mxu0 0
      %5290 = vmatprep.subr.bf16.mxu0 0
      %5291 = vmatpush1.bf16.msra.mxu0 0
      %5292 = vmatprep.subr.bf16.mxu0 0
      %5293 = vmatpush1.bf16.msra.mxu0 0
      %5294 = vmatprep.subr.bf16.mxu0 0
      %5295 = vmatpush1.bf16.msra.mxu0 0
      %5296 = vmatprep.subr.bf16.mxu0 0
      %5297 = vmatpush1.bf16.msra.mxu0 0
      %5298 = vmatprep.subr.bf16.mxu0 0
      %5299 = vmatpush1.bf16.msra.mxu0 0
      %5300 = vmatprep.subr.bf16.mxu0 0
      %5301 = vmatpush1.bf16.msra.mxu0 0
      %5302 = vmatprep.subr.bf16.mxu0 0
      %5303 = vmatpush1.bf16.msra.mxu0 0
      %5304 = vmatprep.subr.bf16.mxu0 0
      %5305 = vmatpush1.bf16.msra.mxu0 0
      %5306 = vmatprep.subr.bf16.mxu0 0
      %5307 = vmatpush1.bf16.msra.mxu0 0
      %5308 = vmatprep.mubr.bf16.mxu0 0
      %5309 = vmatmul.mubr.bf16.gmra.mrb[0].mxu0 %v5218
      %v5310 = vpop.f32.mrb[0].mxu0
      %v5311 = vadd.f32 0.0, %v5310
      %v5312 = vpop.f32.mrb[0].mxu0
      %v5313 = vpop.f32.mrb[0].mxu0
      %v5314 = vadd.f32 0.0, %v5313
      %v5315 = vpop.f32.mrb[0].mxu0
      %5316 = vmatprep.mubr.bf16.mxu0 0
      %5317 = vmatmul.mubr.bf16.gmra.mrb[0].mxu0 %v5221
      %v5318 = vpop.f32.mrb[0].mxu0
      %v5319 = vadd.f32 0.0, %v5318
      %v5320 = vpop.f32.mrb[0].mxu0
      %v5321 = vpop.f32.mrb[0].mxu0
      %v5322 = vadd.f32 0.0, %v5321
      %v5323 = vpop.f32.mrb[0].mxu0
      %5324 = vdwg.mxu0
      %v5325 = vadd.f32 %v5179, %v5258
      %v5326 = vadd.f32 %v5180, %v5260
      %v5327 = vadd.f32 %v5181, %v5311
      %v5328 = vadd.f32 %v5182, %v5262
      %v5329 = vadd.f32 %v5183, %v5264
      %v5330 = vadd.f32 %v5184, %v5314
      %v5331 = vadd.f32 %v5185, %v5268
      %v5332 = vadd.f32 %v5186, %v5270
      %v5333 = vadd.f32 %v5187, %v5319
      %v5334 = vadd.f32 %v5188, %v5272
      %v5335 = vadd.f32 %v5189, %v5274
      %v5336 = vadd.f32 %v5190, %v5322
      %s5337 = scalar_lea.vmem %s6, 112
      %v5338 = vld [vmem:[%s5337] sm:$0xf]
      %v5339 = vld [vmem:[%s5337 + $0x4] sm:$0xf]
      %v5340 = vld [vmem:[%s5337 + $0x8] sm:$0xf]
      %v5341 = vld [vmem:[%s5337 + $0xc] sm:$0xf]
      %v5346 = vunpack.c.l.b16 %v5338
      %v5347 = vunpack.c.l.b16 %v5339
      %v5348 = vunpack.c.l.b16 %v5340
      %v5349 = vunpack.c.l.b16 %v5341
      %v5350 = vpack.c.b16 %v5347, %v5346
      %v5351 = vpack.c.b16 %v5349, %v5348
      %5352 = vrot.lane.b32.xlu0 %v4341, 91
      %v5353 = vpop.permute.xlu0 %5352
      %5354 = vrot.lane.b32.xlu0 %v4342, 91
      %v5355 = vpop.permute.xlu0 %5354
      %5356 = vrot.lane.b32.xlu0 %v4343, 91
      %v5357 = vpop.permute.xlu0 %5356
      %vm5358 = vcmask 744448
      %v5359 = vsel %vm5358, %v5353, %v5355
      %v5360 = vsel %vm5358, %v5355, %v5357
      %v5365 = vsel %vm4377, %v5350, 0
      %v5368 = vsel %vm4377, %v5351, 0
      %5370 = vmatprep.subr.bf16.mxu0 %v5360
      %5371 = vmatpush1.bf16.msra.mxu0 %v5359
      %5372 = vmatprep.subr.bf16.mxu0 0
      %5373 = vmatpush1.bf16.msra.mxu0 0
      %5374 = vmatprep.subr.bf16.mxu0 0
      %5375 = vmatpush1.bf16.msra.mxu0 0
      %5376 = vmatprep.subr.bf16.mxu0 0
      %5377 = vmatpush1.bf16.msra.mxu0 0
      %5378 = vmatprep.subr.bf16.mxu0 0
      %5379 = vmatpush1.bf16.msra.mxu0 0
      %5380 = vmatprep.subr.bf16.mxu0 0
      %5381 = vmatpush1.bf16.msra.mxu0 0
      %5382 = vmatprep.subr.bf16.mxu0 0
      %5383 = vmatpush1.bf16.msra.mxu0 0
      %5384 = vmatprep.subr.bf16.mxu0 0
      %5385 = vmatpush1.bf16.msra.mxu0 0
      %5386 = vmatprep.subr.bf16.mxu0 0
      %5387 = vmatpush1.bf16.msra.mxu0 0
      %5388 = vmatprep.subr.bf16.mxu0 0
      %5389 = vmatpush1.bf16.msra.mxu0 0
      %5390 = vmatprep.subr.bf16.mxu0 0
      %5391 = vmatpush1.bf16.msra.mxu0 0
      %5392 = vmatprep.subr.bf16.mxu0 0
      %5393 = vmatpush1.bf16.msra.mxu0 0
      %5394 = vmatprep.subr.bf16.mxu0 0
      %5395 = vmatpush1.bf16.msra.mxu0 0
      %5396 = vmatprep.subr.bf16.mxu0 0
      %5397 = vmatpush1.bf16.msra.mxu0 0
      %5398 = vmatprep.subr.bf16.mxu0 0
      %5399 = vmatpush1.bf16.msra.mxu0 0
      %5400 = vmatprep.subr.bf16.mxu0 0
      %5401 = vmatpush1.bf16.msra.mxu0 0
      %5402 = vmatprep.mubr.bf16.mxu0 0
      %5403 = vmatmul.mubr.bf16.gmra.mrb[0].mxu0 %v5365
      %v5404 = vpop.f32.mrb[0].mxu0
      %v5405 = vadd.f32 0.0, %v5404
      %v5406 = vpop.f32.mrb[0].mxu0
      %v5407 = vadd.f32 0.0, %v5406
      %v5408 = vpop.f32.mrb[0].mxu0
      %v5409 = vadd.f32 0.0, %v5408
      %v5410 = vpop.f32.mrb[0].mxu0
      %v5411 = vadd.f32 0.0, %v5410
      %5412 = vmatprep.mubr.bf16.mxu0 0
      %5413 = vmatmul.mubr.bf16.gmra.mrb[0].mxu0 %v5368
      %v5414 = vpop.f32.mrb[0].mxu0
      %v5415 = vadd.f32 0.0, %v5414
      %v5416 = vpop.f32.mrb[0].mxu0
      %v5417 = vadd.f32 0.0, %v5416
      %v5418 = vpop.f32.mrb[0].mxu0
      %v5419 = vadd.f32 0.0, %v5418
      %v5420 = vpop.f32.mrb[0].mxu0
      %v5421 = vadd.f32 0.0, %v5420
      %5422 = vdwg.mxu0
      %5423 = vmatprep.subr.bf16.mxu0 0
      %5424 = vmatpush1.bf16.msra.mxu0 %v5357
      %5425 = vmatprep.subr.bf16.mxu0 0
      %5426 = vmatpush1.bf16.msra.mxu0 0
      %5427 = vmatprep.subr.bf16.mxu0 0
      %5428 = vmatpush1.bf16.msra.mxu0 0
      %5429 = vmatprep.subr.bf16.mxu0 0
      %5430 = vmatpush1.bf16.msra.mxu0 0
      %5431 = vmatprep.subr.bf16.mxu0 0
      %5432 = vmatpush1.bf16.msra.mxu0 0
      %5433 = vmatprep.subr.bf16.mxu0 0
      %5434 = vmatpush1.bf16.msra.mxu0 0
      %5435 = vmatprep.subr.bf16.mxu0 0
      %5436 = vmatpush1.bf16.msra.mxu0 0
      %5437 = vmatprep.subr.bf16.mxu0 0
      %5438 = vmatpush1.bf16.msra.mxu0 0
      %5439 = vmatprep.subr.bf16.mxu0 0
      %5440 = vmatpush1.bf16.msra.mxu0 0
      %5441 = vmatprep.subr.bf16.mxu0 0
      %5442 = vmatpush1.bf16.msra.mxu0 0
      %5443 = vmatprep.subr.bf16.mxu0 0
      %5444 = vmatpush1.bf16.msra.mxu0 0
      %5445 = vmatprep.subr.bf16.mxu0 0
      %5446 = vmatpush1.bf16.msra.mxu0 0
      %5447 = vmatprep.subr.bf16.mxu0 0
      %5448 = vmatpush1.bf16.msra.mxu0 0
      %5449 = vmatprep.subr.bf16.mxu0 0
      %5450 = vmatpush1.bf16.msra.mxu0 0
      %5451 = vmatprep.subr.bf16.mxu0 0
      %5452 = vmatpush1.bf16.msra.mxu0 0
      %5453 = vmatprep.subr.bf16.mxu0 0
      %5454 = vmatpush1.bf16.msra.mxu0 0
      %5455 = vmatprep.mubr.bf16.mxu0 0
      %5456 = vmatmul.mubr.bf16.gmra.mrb[0].mxu0 %v5365
      %v5457 = vpop.f32.mrb[0].mxu0
      %v5458 = vadd.f32 0.0, %v5457
      %v5459 = vpop.f32.mrb[0].mxu0
      %v5460 = vpop.f32.mrb[0].mxu0
      %v5461 = vadd.f32 0.0, %v5460
      %v5462 = vpop.f32.mrb[0].mxu0
      %5463 = vmatprep.mubr.bf16.mxu0 0
      %5464 = vmatmul.mubr.bf16.gmra.mrb[0].mxu0 %v5368
      %v5465 = vpop.f32.mrb[0].mxu0
      %v5466 = vadd.f32 0.0, %v5465
      %v5467 = vpop.f32.mrb[0].mxu0
      %v5468 = vpop.f32.mrb[0].mxu0
      %v5469 = vadd.f32 0.0, %v5468
      %v5470 = vpop.f32.mrb[0].mxu0
      %5471 = vdwg.mxu0
      %v5472 = vadd.f32 %v5325, %v5405
      %v5473 = vadd.f32 %v5326, %v5407
      %v5474 = vadd.f32 %v5327, %v5458
      %v5475 = vadd.f32 %v5328, %v5409
      %v5476 = vadd.f32 %v5329, %v5411
      %v5477 = vadd.f32 %v5330, %v5461
      %v5478 = vadd.f32 %v5331, %v5415
      %v5479 = vadd.f32 %v5332, %v5417
      %v5480 = vadd.f32 %v5333, %v5466
      %v5481 = vadd.f32 %v5334, %v5419
      %v5482 = vadd.f32 %v5335, %v5421
      %v5483 = vadd.f32 %v5336, %v5469
      %s5484 = scalar_lea.vmem %s6, 128
      %v5485 = vld [vmem:[%s5484] sm:$0xf]
      %v5486 = vld [vmem:[%s5484 + $0x4] sm:$0xf]
      %v5487 = vld [vmem:[%s5484 + $0x8] sm:$0xf]
      %v5488 = vld [vmem:[%s5484 + $0xc] sm:$0xf]
      %v5493 = vunpack.c.l.b16 %v5485
      %v5494 = vunpack.c.l.b16 %v5486
      %v5495 = vunpack.c.l.b16 %v5487
      %v5496 = vunpack.c.l.b16 %v5488
      %v5497 = vpack.c.b16 %v5494, %v5493
      %v5498 = vpack.c.b16 %v5496, %v5495
      %5499 = vrot.lane.b32.xlu0 %v4341, 90
      %v5500 = vpop.permute.xlu0 %5499
      %5501 = vrot.lane.b32.xlu0 %v4342, 90
      %v5502 = vpop.permute.xlu0 %5501
      %5503 = vrot.lane.b32.xlu0 %v4343, 90
      %v5504 = vpop.permute.xlu0 %5503
      %vm5505 = vcmask 736256
      %v5506 = vsel %vm5505, %v5500, %v5502
      %v5507 = vsel %vm5505, %v5502, %v5504
      %v5512 = vsel %vm4377, %v5497, 0
      %v5515 = vsel %vm4377, %v5498, 0
      %5517 = vmatprep.subr.bf16.mxu0 %v5507
      %5518 = vmatpush1.bf16.msra.mxu0 %v5506
      %5519 = vmatprep.subr.bf16.mxu0 0
      %5520 = vmatpush1.bf16.msra.mxu0 0
      %5521 = vmatprep.subr.bf16.mxu0 0
      %5522 = vmatpush1.bf16.msra.mxu0 0
      %5523 = vmatprep.subr.bf16.mxu0 0
      %5524 = vmatpush1.bf16.msra.mxu0 0
      %5525 = vmatprep.subr.bf16.mxu0 0
      %5526 = vmatpush1.bf16.msra.mxu0 0
      %5527 = vmatprep.subr.bf16.mxu0 0
      %5528 = vmatpush1.bf16.msra.mxu0 0
      %5529 = vmatprep.subr.bf16.mxu0 0
      %5530 = vmatpush1.bf16.msra.mxu0 0
      %5531 = vmatprep.subr.bf16.mxu0 0
      %5532 = vmatpush1.bf16.msra.mxu0 0
      %5533 = vmatprep.subr.bf16.mxu0 0
      %5534 = vmatpush1.bf16.msra.mxu0 0
      %5535 = vmatprep.subr.bf16.mxu0 0
      %5536 = vmatpush1.bf16.msra.mxu0 0
      %5537 = vmatprep.subr.bf16.mxu0 0
      %5538 = vmatpush1.bf16.msra.mxu0 0
      %5539 = vmatprep.subr.bf16.mxu0 0
      %5540 = vmatpush1.bf16.msra.mxu0 0
      %5541 = vmatprep.subr.bf16.mxu0 0
      %5542 = vmatpush1.bf16.msra.mxu0 0
      %5543 = vmatprep.subr.bf16.mxu0 0
      %5544 = vmatpush1.bf16.msra.mxu0 0
      %5545 = vmatprep.subr.bf16.mxu0 0
      %5546 = vmatpush1.bf16.msra.mxu0 0
      %5547 = vmatprep.subr.bf16.mxu0 0
      %5548 = vmatpush1.bf16.msra.mxu0 0
      %5549 = vmatprep.mubr.bf16.mxu0 0
      %5550 = vmatmul.mubr.bf16.gmra.mrb[0].mxu0 %v5512
      %v5551 = vpop.f32.mrb[0].mxu0
      %v5552 = vadd.f32 0.0, %v5551
      %v5553 = vpop.f32.mrb[0].mxu0
      %v5554 = vadd.f32 0.0, %v5553
      %v5555 = vpop.f32.mrb[0].mxu0
      %v5556 = vadd.f32 0.0, %v5555
      %v5557 = vpop.f32.mrb[0].mxu0
      %v5558 = vadd.f32 0.0, %v5557
      %5559 = vmatprep.mubr.bf16.mxu0 0
      %5560 = vmatmul.mubr.bf16.gmra.mrb[0].mxu0 %v5515
      %v5561 = vpop.f32.mrb[0].mxu0
      %v5562 = vadd.f32 0.0, %v5561
      %v5563 = vpop.f32.mrb[0].mxu0
      %v5564 = vadd.f32 0.0, %v5563
      %v5565 = vpop.f32.mrb[0].mxu0
      %v5566 = vadd.f32 0.0, %v5565
      %v5567 = vpop.f32.mrb[0].mxu0
      %v5568 = vadd.f32 0.0, %v5567
      %5569 = vdwg.mxu0
      %5570 = vmatprep.subr.bf16.mxu0 0
      %5571 = vmatpush1.bf16.msra.mxu0 %v5504
      %5572 = vmatprep.subr.bf16.mxu0 0
      %5573 = vmatpush1.bf16.msra.mxu0 0
      %5574 = vmatprep.subr.bf16.mxu0 0
      %5575 = vmatpush1.bf16.msra.mxu0 0
      %5576 = vmatprep.subr.bf16.mxu0 0
      %5577 = vmatpush1.bf16.msra.mxu0 0
      %5578 = vmatprep.subr.bf16.mxu0 0
      %5579 = vmatpush1.bf16.msra.mxu0 0
      %5580 = vmatprep.subr.bf16.mxu0 0
      %5581 = vmatpush1.bf16.msra.mxu0 0
      %5582 = vmatprep.subr.bf16.mxu0 0
      %5583 = vmatpush1.bf16.msra.mxu0 0
      %5584 = vmatprep.subr.bf16.mxu0 0
      %5585 = vmatpush1.bf16.msra.mxu0 0
      %5586 = vmatprep.subr.bf16.mxu0 0
      %5587 = vmatpush1.bf16.msra.mxu0 0
      %5588 = vmatprep.subr.bf16.mxu0 0
      %5589 = vmatpush1.bf16.msra.mxu0 0
      %5590 = vmatprep.subr.bf16.mxu0 0
      %5591 = vmatpush1.bf16.msra.mxu0 0
      %5592 = vmatprep.subr.bf16.mxu0 0
      %5593 = vmatpush1.bf16.msra.mxu0 0
      %5594 = vmatprep.subr.bf16.mxu0 0
      %5595 = vmatpush1.bf16.msra.mxu0 0
      %5596 = vmatprep.subr.bf16.mxu0 0
      %5597 = vmatpush1.bf16.msra.mxu0 0
      %5598 = vmatprep.subr.bf16.mxu0 0
      %5599 = vmatpush1.bf16.msra.mxu0 0
      %5600 = vmatprep.subr.bf16.mxu0 0
      %5601 = vmatpush1.bf16.msra.mxu0 0
      %5602 = vmatprep.mubr.bf16.mxu0 0
      %5603 = vmatmul.mubr.bf16.gmra.mrb[0].mxu0 %v5512
      %v5604 = vpop.f32.mrb[0].mxu0
      %v5605 = vadd.f32 0.0, %v5604
      %v5606 = vpop.f32.mrb[0].mxu0
      %v5607 = vpop.f32.mrb[0].mxu0
      %v5608 = vadd.f32 0.0, %v5607
      %v5609 = vpop.f32.mrb[0].mxu0
      %5610 = vmatprep.mubr.bf16.mxu0 0
      %5611 = vmatmul.mubr.bf16.gmra.mrb[0].mxu0 %v5515
      %v5612 = vpop.f32.mrb[0].mxu0
      %v5613 = vadd.f32 0.0, %v5612
      %v5614 = vpop.f32.mrb[0].mxu0
      %v5615 = vpop.f32.mrb[0].mxu0
      %v5616 = vadd.f32 0.0, %v5615
      %v5617 = vpop.f32.mrb[0].mxu0
      %5618 = vdwg.mxu0
      %v5619 = vadd.f32 %v5472, %v5552
      %v5620 = vadd.f32 %v5473, %v5554
      %v5621 = vadd.f32 %v5474, %v5605
      %v5622 = vadd.f32 %v5475, %v5556
      %v5623 = vadd.f32 %v5476, %v5558
      %v5624 = vadd.f32 %v5477, %v5608
      %v5625 = vadd.f32 %v5478, %v5562
      %v5626 = vadd.f32 %v5479, %v5564
      %v5627 = vadd.f32 %v5480, %v5613
      %v5628 = vadd.f32 %v5481, %v5566
      %v5629 = vadd.f32 %v5482, %v5568
      %v5630 = vadd.f32 %v5483, %v5616
      %v5631 = vld [vmem:[%s7] sm:$0xff]
      %v5632 = vld [vmem:[%s7 + $0x8] sm:$0xff]
      %v5633 = vld [vmem:[%s7 + $0x10] sm:$0xff]
      %v5634 = vld [vmem:[%s7 + $0x18] sm:$0xff]
      %5636 = vset.pattern.permute.xlu0 0
      %5637 = vperm.xlu0 %5636, %v5631
      %v5638 = vpop.permute.xlu0 %5637
      %5641 = vset.pattern.permute.xlu0 0
      %5642 = vperm.xlu0 %5641, %v5632
      %v5643 = vpop.permute.xlu0 %5642
      %5646 = vset.pattern.permute.xlu0 0
      %5647 = vperm.xlu0 %5646, %v5633
      %v5648 = vpop.permute.xlu0 %5647
      %5651 = vset.pattern.permute.xlu0 0
      %5652 = vperm.xlu0 %5651, %v5634
      %v5653 = vpop.permute.xlu0 %5652
      %v5655 = vadd.f32 %v5619, %v5638
      %v5656 = vadd.f32 %v5620, %v5638
      %v5657 = vadd.f32 %v5621, %v5638
      %v5658 = vadd.f32 %v5622, %v5643
      %v5659 = vadd.f32 %v5623, %v5643
      %v5660 = vadd.f32 %v5624, %v5643
      %v5661 = vadd.f32 %v5625, %v5648
      %v5662 = vadd.f32 %v5626, %v5648
      %v5663 = vadd.f32 %v5627, %v5648
      %v5664 = vadd.f32 %v5628, %v5653
      %v5665 = vadd.f32 %v5629, %v5653
      %v5666 = vadd.f32 %v5630, %v5653
      %v5667 = vmul.f32 %v5655, 0.1
      %v5668 = vmul.f32 %v5656, 0.1
      %v5669 = vmul.f32 %v5657, 0.1
      %v5670 = vmul.f32 %v5658, 0.1
      %v5671 = vmul.f32 %v5659, 0.1
      %v5672 = vmul.f32 %v5660, 0.1
      %v5673 = vmul.f32 %v5661, 0.1
      %v5674 = vmul.f32 %v5662, 0.1
      %v5675 = vmul.f32 %v5663, 0.1
      %v5676 = vmul.f32 %v5664, 0.1
      %v5677 = vmul.f32 %v5665, 0.1
      %v5678 = vmul.f32 %v5666, 0.1
      %v5679 = vmax.f32 %v5655, %v5667
      %v5680 = vmax.f32 %v5656, %v5668
      %v5681 = vmax.f32 %v5657, %v5669
      %v5682 = vmax.f32 %v5658, %v5670
      %v5683 = vmax.f32 %v5659, %v5671
      %v5684 = vmax.f32 %v5660, %v5672
      %v5685 = vmax.f32 %v5661, %v5673
      %v5686 = vmax.f32 %v5662, %v5674
      %v5687 = vmax.f32 %v5663, %v5675
      %v5688 = vmax.f32 %v5664, %v5676
      %v5689 = vmax.f32 %v5665, %v5677
      %v5690 = vmax.f32 %v5666, %v5678
      %5703 = vrot.lane.b32.xlu0 %v5679, 127
      %v5704 = vpop.permute.xlu0 %5703
      %5705 = vrot.lane.b32.xlu0 %v5680, 127
      %v5706 = vpop.permute.xlu0 %5705
      %5707 = vrot.lane.b32.xlu0 %v5681, 127
      %v5708 = vpop.permute.xlu0 %5707
      %5709 = vrot.lane.b32.xlu0 %v5682, 127
      %v5710 = vpop.permute.xlu0 %5709
      %5711 = vrot.lane.b32.xlu0 %v5683, 127
      %v5712 = vpop.permute.xlu0 %5711
      %5713 = vrot.lane.b32.xlu0 %v5684, 127
      %v5714 = vpop.permute.xlu0 %5713
      %5715 = vrot.lane.b32.xlu0 %v5685, 127
      %v5716 = vpop.permute.xlu0 %5715
      %5717 = vrot.lane.b32.xlu0 %v5686, 127
      %v5718 = vpop.permute.xlu0 %5717
      %5719 = vrot.lane.b32.xlu0 %v5687, 127
      %v5720 = vpop.permute.xlu0 %5719
      %5721 = vrot.lane.b32.xlu0 %v5688, 127
      %v5722 = vpop.permute.xlu0 %5721
      %5723 = vrot.lane.b32.xlu0 %v5689, 127
      %v5724 = vpop.permute.xlu0 %5723
      %5725 = vrot.lane.b32.xlu0 %v5690, 127
      %v5726 = vpop.permute.xlu0 %5725
      %v5727 = vsel %vm3176, %v5704, %v5706
      %v5728 = vsel %vm3176, %v5706, %v5708
      %v5729 = vsel %vm3176, %v5710, %v5712
      %v5730 = vsel %vm3176, %v5712, %v5714
      %v5731 = vsel %vm3176, %v5716, %v5718
      %v5732 = vsel %vm3176, %v5718, %v5720
      %v5733 = vsel %vm3176, %v5722, %v5724
      %v5734 = vsel %vm3176, %v5724, %v5726
      %v5747 = vmax.f32 %v5679, %v5727
      %v5748 = vmax.f32 %v5680, %v5728
      %v5749 = vmax.f32 %v5681, %v5708
      %v5750 = vmax.f32 %v5682, %v5729
      %v5751 = vmax.f32 %v5683, %v5730
      %v5752 = vmax.f32 %v5684, %v5714
      %v5753 = vmax.f32 %v5685, %v5731
      %v5754 = vmax.f32 %v5686, %v5732
      %v5755 = vmax.f32 %v5687, %v5720
      %v5756 = vmax.f32 %v5688, %v5733
      %v5757 = vmax.f32 %v5689, %v5734
      %v5758 = vmax.f32 %v5690, %v5726
      %5763 = vrot.lane.b32.xlu0 %v5747, 110
      %v5764 = vpop.permute.xlu0 %5763
      %5765 = vrot.lane.b32.xlu0 %v5750, 110
      %v5766 = vpop.permute.xlu0 %5765
      %5767 = vrot.lane.b32.xlu0 %v5753, 110
      %v5768 = vpop.permute.xlu0 %5767
      %5769 = vrot.lane.b32.xlu0 %v5756, 110
      %v5770 = vpop.permute.xlu0 %5769
      %v5775 = vmax.f32 %v5747, %v5764
      %v5776 = vmax.f32 %v5750, %v5766
      %v5777 = vmax.f32 %v5753, %v5768
      %v5778 = vmax.f32 %v5756, %v5770
      %5783 = vrot.lane.b32.xlu0 %v5748, 110
      %v5784 = vpop.permute.xlu0 %5783
      %5785 = vrot.lane.b32.xlu0 %v5751, 110
      %v5786 = vpop.permute.xlu0 %5785
      %5787 = vrot.lane.b32.xlu0 %v5754, 110
      %v5788 = vpop.permute.xlu0 %5787
      %5789 = vrot.lane.b32.xlu0 %v5757, 110
      %v5790 = vpop.permute.xlu0 %5789
      %vm5791 = vcmask 900096
      %v5792 = vsel %vm5791, %v5764, %v5784
      %v5793 = vsel %vm5791, %v5766, %v5786
      %v5794 = vsel %vm5791, %v5768, %v5788
      %v5795 = vsel %vm5791, %v5770, %v5790
      %v5800 = vmax.f32 %v5747, %v5792
      %v5801 = vmax.f32 %v5750, %v5793
      %v5802 = vmax.f32 %v5753, %v5794
      %v5803 = vmax.f32 %v5756, %v5795
      %v5808 = vmax.f32 %v5748, %v5784
      %v5809 = vmax.f32 %v5751, %v5786
      %v5810 = vmax.f32 %v5754, %v5788
      %v5811 = vmax.f32 %v5757, %v5790
      %5816 = vrot.lane.b32.xlu0 %v5749, 110
      %v5817 = vpop.permute.xlu0 %5816
      %5818 = vrot.lane.b32.xlu0 %v5752, 110
      %v5819 = vpop.permute.xlu0 %5818
      %5820 = vrot.lane.b32.xlu0 %v5755, 110
      %v5821 = vpop.permute.xlu0 %5820
      %5822 = vrot.lane.b32.xlu0 %v5758, 110
      %v5823 = vpop.permute.xlu0 %5822
      %v5828 = vmax.f32 %v5748, %v5817
      %v5829 = vmax.f32 %v5749, %v5817
      %v5830 = vmax.f32 %v5751, %v5819
      %v5831 = vmax.f32 %v5752, %v5819
      %v5832 = vmax.f32 %v5754, %v5821
      %v5833 = vmax.f32 %v5755, %v5821
      %v5834 = vmax.f32 %v5757, %v5823
      %v5835 = vmax.f32 %v5758, %v5823
      %5840 = vrot.lane.b32.xlu0 %v5775, 107
      %v5841 = vpop.permute.xlu0 %5840
      %5842 = vrot.lane.b32.xlu0 %v5776, 107
      %v5843 = vpop.permute.xlu0 %5842
      %5844 = vrot.lane.b32.xlu0 %v5777, 107
      %v5845 = vpop.permute.xlu0 %5844
      %5846 = vrot.lane.b32.xlu0 %v5778, 107
      %v5847 = vpop.permute.xlu0 %5846
      %5852 = vrot.lane.b32.xlu0 %v5775, 86
      %v5853 = vpop.permute.xlu0 %5852
      %5854 = vrot.lane.b32.xlu0 %v5776, 86
      %v5855 = vpop.permute.xlu0 %5854
      %5856 = vrot.lane.b32.xlu0 %v5777, 86
      %v5857 = vpop.permute.xlu0 %5856
      %5858 = vrot.lane.b32.xlu0 %v5778, 86
      %v5859 = vpop.permute.xlu0 %5858
      %5868 = vrot.lane.b32.xlu0 %v5800, 65
      %v5869 = vpop.permute.xlu0 %5868
      %5870 = vrot.lane.b32.xlu0 %v5801, 65
      %v5871 = vpop.permute.xlu0 %5870
      %5872 = vrot.lane.b32.xlu0 %v5802, 65
      %v5873 = vpop.permute.xlu0 %5872
      %5874 = vrot.lane.b32.xlu0 %v5803, 65
      %v5875 = vpop.permute.xlu0 %5874
      %5884 = vrot.lane.b32.xlu0 %v5808, 44
      %v5885 = vpop.permute.xlu0 %5884
      %5886 = vrot.lane.b32.xlu0 %v5809, 44
      %v5887 = vpop.permute.xlu0 %5886
      %5888 = vrot.lane.b32.xlu0 %v5810, 44
      %v5889 = vpop.permute.xlu0 %5888
      %5890 = vrot.lane.b32.xlu0 %v5811, 44
      %v5891 = vpop.permute.xlu0 %5890
      %5896 = vrot.lane.b32.xlu0 %v5808, 23
      %v5897 = vpop.permute.xlu0 %5896
      %5898 = vrot.lane.b32.xlu0 %v5809, 23
      %v5899 = vpop.permute.xlu0 %5898
      %5900 = vrot.lane.b32.xlu0 %v5810, 23
      %v5901 = vpop.permute.xlu0 %5900
      %5902 = vrot.lane.b32.xlu0 %v5811, 23
      %v5903 = vpop.permute.xlu0 %5902
      %5908 = vrot.lane.b32.xlu0 %v5808, 2
      %v5909 = vpop.permute.xlu0 %5908
      %5910 = vrot.lane.b32.xlu0 %v5809, 2
      %v5911 = vpop.permute.xlu0 %5910
      %5912 = vrot.lane.b32.xlu0 %v5810, 2
      %v5913 = vpop.permute.xlu0 %5912
      %5914 = vrot.lane.b32.xlu0 %v5811, 2
      %v5915 = vpop.permute.xlu0 %5914
      %5928 = vrot.lane.b32.xlu0 %v5828, 109
      %v5929 = vpop.permute.xlu0 %5928
      %5930 = vrot.lane.b32.xlu0 %v5829, 109
      %v5931 = vpop.permute.xlu0 %5930
      %5932 = vrot.lane.b32.xlu0 %v5830, 109
      %v5933 = vpop.permute.xlu0 %5932
      %5934 = vrot.lane.b32.xlu0 %v5831, 109
      %v5935 = vpop.permute.xlu0 %5934
      %5936 = vrot.lane.b32.xlu0 %v5832, 109
      %v5937 = vpop.permute.xlu0 %5936
      %5938 = vrot.lane.b32.xlu0 %v5833, 109
      %v5939 = vpop.permute.xlu0 %5938
      %5940 = vrot.lane.b32.xlu0 %v5834, 109
      %v5941 = vpop.permute.xlu0 %5940
      %5942 = vrot.lane.b32.xlu0 %v5835, 109
      %v5943 = vpop.permute.xlu0 %5942
      %vm5944 = vcmask 891904
      %v5945 = vsel %vm5944, %v5929, %v5931
      %v5946 = vsel %vm5944, %v5933, %v5935
      %v5947 = vsel %vm5944, %v5937, %v5939
      %v5948 = vsel %vm5944, %v5941, %v5943
      %vm5953 = vcmask 121856
      %v5954 = vsel %vm5953, %v5775, %v5841
      %v5955 = vsel %vm5953, %v5776, %v5843
      %v5956 = vsel %vm5953, %v5777, %v5845
      %v5957 = vsel %vm5953, %v5778, %v5847
      %vm5958 = vcmask 244736
      %v5959 = vsel %vm5958, %v5954, %v5853
      %v5960 = vsel %vm5958, %v5955, %v5855
      %v5961 = vsel %vm5958, %v5956, %v5857
      %v5962 = vsel %vm5958, %v5957, %v5859
      %vm5963 = vcmask 367616
      %v5964 = vsel %vm5963, %v5959, %v5869
      %v5965 = vsel %vm5963, %v5960, %v5871
      %v5966 = vsel %vm5963, %v5961, %v5873
      %v5967 = vsel %vm5963, %v5962, %v5875
      %vm5968 = vcmask 490496
      %v5969 = vsel %vm5968, %v5964, %v5885
      %v5970 = vsel %vm5968, %v5965, %v5887
      %v5971 = vsel %vm5968, %v5966, %v5889
      %v5972 = vsel %vm5968, %v5967, %v5891
      %vm5973 = vcmask 613376
      %v5974 = vsel %vm5973, %v5969, %v5897
      %v5975 = vsel %vm5973, %v5970, %v5899
      %v5976 = vsel %vm5973, %v5971, %v5901
      %v5977 = vsel %vm5973, %v5972, %v5903
      %vm5978 = vcmask 736256
      %v5979 = vsel %vm5978, %v5974, %v5909
      %v5980 = vsel %vm5978, %v5975, %v5911
      %v5981 = vsel %vm5978, %v5976, %v5913
      %v5982 = vsel %vm5978, %v5977, %v5915
      %v5983 = vsel %vm3451, %v5979, %v5945
      %v5984 = vsel %vm3451, %v5980, %v5946
      %v5985 = vsel %vm3451, %v5981, %v5947
      %v5986 = vsel %vm3451, %v5982, %v5948
      %v5987 = vpack.c.bf16 %v5984, %v5983
      %v5988 = vpack.c.bf16 %v5986, %v5985
      %v5989 = vld [vmem:[%s2] sm:$0xf]
      %v5990 = vld [vmem:[%s2 + $0x4] sm:$0xf]
      %v5991 = vld [vmem:[%s2 + $0x8] sm:$0xf]
      %v5992 = vld [vmem:[%s2 + $0xc] sm:$0xf]
      %v5993 = vld [vmem:[%s2 + $0x10] sm:$0xf]
      %v5994 = vld [vmem:[%s2 + $0x14] sm:$0xf]
      %v5995 = vld [vmem:[%s2 + $0x18] sm:$0xf]
      %v5996 = vld [vmem:[%s2 + $0x1c] sm:$0xf]
      %v5997 = vld [vmem:[%s2 + $0x20] sm:$0xf]
      %v5998 = vld [vmem:[%s2 + $0x24] sm:$0xf]
      %v5999 = vld [vmem:[%s2 + $0x28] sm:$0xf]
      %v6000 = vld [vmem:[%s2 + $0x2c] sm:$0xf]
      %v6001 = vld [vmem:[%s2 + $0x30] sm:$0xf]
      %v6002 = vld [vmem:[%s2 + $0x34] sm:$0xf]
      %v6003 = vld [vmem:[%s2 + $0x38] sm:$0xf]
      %v6019 = vunpack.c.l.b16 %v5989
      %v6020 = vunpack.c.l.b16 %v5990
      %v6021 = vunpack.c.l.b16 %v5991
      %v6022 = vunpack.c.l.b16 %v5992
      %v6023 = vunpack.c.l.b16 %v5993
      %v6024 = vunpack.c.l.b16 %v5994
      %v6025 = vunpack.c.l.b16 %v5995
      %v6026 = vunpack.c.l.b16 %v5996
      %v6027 = vunpack.c.l.b16 %v5997
      %v6028 = vunpack.c.l.b16 %v5998
      %v6029 = vunpack.c.l.b16 %v5999
      %v6030 = vunpack.c.l.b16 %v6000
      %v6031 = vunpack.c.l.b16 %v6001
      %v6032 = vunpack.c.l.b16 %v6002
      %v6033 = vunpack.c.l.b16 %v6003
      %v6034 = vpack.c.b16 %v6020, %v6019
      %v6035 = vpack.c.b16 %v6022, %v6021
      %v6036 = vpack.c.b16 %v6024, %v6023
      %v6037 = vpack.c.b16 %v6026, %v6025
      %v6038 = vpack.c.b16 %v6028, %v6027
      %v6039 = vpack.c.b16 %v6030, %v6029
      %v6040 = vpack.c.b16 %v6032, %v6031
      %v6041 = vpack.c.b16 %v6033, %v6033
      %v6050 = vsel %vm3522, %v5987, 0
      %v6053 = vsel %vm3522, %v5988, 0
      %v6056 = vsel %vm484, %v6041, 0
      %6058 = vmatprep.subr.bf16.mxu0 0
      %6059 = vmatpush1.bf16.msra.mxu0 %v6034
      %6060 = vmatprep.subr.bf16.mxu0 0
      %6061 = vmatpush1.bf16.msra.mxu0 %v6035
      %6062 = vmatprep.subr.bf16.mxu0 0
      %6063 = vmatpush1.bf16.msra.mxu0 %v6036
      %6064 = vmatprep.subr.bf16.mxu0 0
      %6065 = vmatpush1.bf16.msra.mxu0 %v6037
      %6066 = vmatprep.subr.bf16.mxu0 0
      %6067 = vmatpush1.bf16.msra.mxu0 %v6038
      %6068 = vmatprep.subr.bf16.mxu0 0
      %6069 = vmatpush1.bf16.msra.mxu0 %v6039
      %6070 = vmatprep.subr.bf16.mxu0 0
      %6071 = vmatpush1.bf16.msra.mxu0 %v6040
      %6072 = vmatprep.subr.bf16.mxu0 0
      %6073 = vmatpush1.bf16.msra.mxu0 %v6056
      %6074 = vmatprep.subr.bf16.mxu0 0
      %6075 = vmatpush1.bf16.msra.mxu0 0
      %6076 = vmatprep.subr.bf16.mxu0 0
      %6077 = vmatpush1.bf16.msra.mxu0 0
      %6078 = vmatprep.subr.bf16.mxu0 0
      %6079 = vmatpush1.bf16.msra.mxu0 0
      %6080 = vmatprep.subr.bf16.mxu0 0
      %6081 = vmatpush1.bf16.msra.mxu0 0
      %6082 = vmatprep.subr.bf16.mxu0 0
      %6083 = vmatpush1.bf16.msra.mxu0 0
      %6084 = vmatprep.subr.bf16.mxu0 0
      %6085 = vmatpush1.bf16.msra.mxu0 0
      %6086 = vmatprep.subr.bf16.mxu0 0
      %6087 = vmatpush1.bf16.msra.mxu0 0
      %6088 = vmatprep.subr.bf16.mxu0 0
      %6089 = vmatpush1.bf16.msra.mxu0 0
      %6090 = vmatprep.mubr.bf16.mxu0 0
      %6091 = vmatmul.mubr.bf16.gmra.mrb[0].mxu0 %v6050
      %v6092 = vpop.f32.mrb[0].mxu0
      %v6093 = vadd.f32 0.0, %v6092
      %v6094 = vpop.f32.mrb[0].mxu0
      %v6095 = vpop.f32.mrb[0].mxu0
      %v6096 = vadd.f32 0.0, %v6095
      %v6097 = vpop.f32.mrb[0].mxu0
      %6098 = vmatprep.mubr.bf16.mxu0 0
      %6099 = vmatmul.mubr.bf16.gmra.mrb[0].mxu0 %v6053
      %v6100 = vpop.f32.mrb[0].mxu0
      %v6101 = vadd.f32 0.0, %v6100
      %v6102 = vpop.f32.mrb[0].mxu0
      %v6103 = vpop.f32.mrb[0].mxu0
      %v6104 = vadd.f32 0.0, %v6103
      %v6105 = vpop.f32.mrb[0].mxu0
      %6106 = vdwg.mxu0
      %v6107 = vpack.c.bf16 %v6096, %v6093
      %v6108 = vpack.c.bf16 %v6104, %v6101
      %v6109 = vld [vmem:[%s8] sm:$0xf]
      %v6110 = vld [vmem:[%s8 + $0x4] sm:$0xf]
      %v6111 = vld [vmem:[%s8 + $0x8] sm:$0xf]
      %v6112 = vld [vmem:[%s8 + $0xc] sm:$0xf]
      %v6113 = vld [vmem:[%s8 + $0x10] sm:$0xf]
      %v6114 = vld [vmem:[%s8 + $0x14] sm:$0xf]
      %v6115 = vld [vmem:[%s8 + $0x18] sm:$0xf]
      %v6116 = vld [vmem:[%s8 + $0x1c] sm:$0xf]
      %s6117 = scalar_lea.vmem %s8, 32
      %v6118 = vld [vmem:[%s6117] sm:$0xf]
      %v6119 = vld [vmem:[%s6117 + $0x4] sm:$0xf]
      %v6120 = vld [vmem:[%s6117 + $0x8] sm:$0xf]
      %v6121 = vld [vmem:[%s6117 + $0xc] sm:$0xf]
      %v6122 = vld [vmem:[%s6117 + $0x10] sm:$0xf]
      %v6123 = vld [vmem:[%s6117 + $0x14] sm:$0xf]
      %v6124 = vld [vmem:[%s6117 + $0x18] sm:$0xf]
      %v6125 = vld [vmem:[%s6117 + $0x1c] sm:$0xf]
      %v6134 = vunpack.c.l.b16 %v6118
      %v6135 = vunpack.c.l.b16 %v6119
      %v6136 = vunpack.c.l.b16 %v6120
      %v6137 = vunpack.c.l.b16 %v6121
      %v6138 = vunpack.c.l.b16 %v6122
      %v6139 = vunpack.c.l.b16 %v6123
      %v6140 = vunpack.c.l.b16 %v6124
      %v6141 = vunpack.c.l.b16 %v6125
      %v6142 = vpack.c.b16 %v6135, %v6134
      %v6143 = vpack.c.b16 %v6137, %v6136
      %v6144 = vpack.c.b16 %v6139, %v6138
      %v6145 = vpack.c.b16 %v6141, %v6140
      %6148 = vrot.lane.b32.xlu0 %v6107, 127
      %v6149 = vpop.permute.xlu0 %6148
      %6150 = vrot.lane.b32.xlu0 %v6108, 127
      %v6151 = vpop.permute.xlu0 %6150
      %vm6154 = vcmask 261120
      %v6156 = vsel %vm6154, %v6142, 0
      %v6159 = vsel %vm6154, %v6143, 0
      %v6162 = vsel %vm6154, %v6144, 0
      %v6165 = vsel %vm6154, %v6145, 0
      %6167 = vmatprep.subr.bf16.mxu0 0
      %6168 = vmatpush1.bf16.msra.mxu0 %v6149
      %6169 = vmatprep.subr.bf16.mxu0 0
      %6170 = vmatpush1.bf16.msra.mxu0 %v6151
      %6171 = vmatprep.subr.bf16.mxu0 0
      %6172 = vmatpush1.bf16.msra.mxu0 0
      %6173 = vmatprep.subr.bf16.mxu0 0
      %6174 = vmatpush1.bf16.msra.mxu0 0
      %6175 = vmatprep.subr.bf16.mxu0 0
      %6176 = vmatpush1.bf16.msra.mxu0 0
      %6177 = vmatprep.subr.bf16.mxu0 0
      %6178 = vmatpush1.bf16.msra.mxu0 0
      %6179 = vmatprep.subr.bf16.mxu0 0
      %6180 = vmatpush1.bf16.msra.mxu0 0
      %6181 = vmatprep.subr.bf16.mxu0 0
      %6182 = vmatpush1.bf16.msra.mxu0 0
      %6183 = vmatprep.subr.bf16.mxu0 0
      %6184 = vmatpush1.bf16.msra.mxu0 0
      %6185 = vmatprep.subr.bf16.mxu0 0
      %6186 = vmatpush1.bf16.msra.mxu0 0
      %6187 = vmatprep.subr.bf16.mxu0 0
      %6188 = vmatpush1.bf16.msra.mxu0 0
      %6189 = vmatprep.subr.bf16.mxu0 0
      %6190 = vmatpush1.bf16.msra.mxu0 0
      %6191 = vmatprep.subr.bf16.mxu0 0
      %6192 = vmatpush1.bf16.msra.mxu0 0
      %6193 = vmatprep.subr.bf16.mxu0 0
      %6194 = vmatpush1.bf16.msra.mxu0 0
      %6195 = vmatprep.subr.bf16.mxu0 0
      %6196 = vmatpush1.bf16.msra.mxu0 0
      %6197 = vmatprep.subr.bf16.mxu0 0
      %6198 = vmatpush1.bf16.msra.mxu0 0
      %6199 = vmatprep.mubr.bf16.mxu0 0
      %6200 = vmatmul.mubr.bf16.gmra.mrb[0].mxu0 %v6156
      %v6201 = vpop.f32.mrb[0].mxu0
      %v6202 = vadd.f32 0.0, %v6201
      %v6203 = vpop.f32.mrb[0].mxu0
      %v6204 = vpop.f32.mrb[0].mxu0
      %v6205 = vadd.f32 0.0, %v6204
      %v6206 = vpop.f32.mrb[0].mxu0
      %6207 = vmatprep.mubr.bf16.mxu0 0
      %6208 = vmatmul.mubr.bf16.gmra.mrb[0].mxu0 %v6159
      %v6209 = vpop.f32.mrb[0].mxu0
      %v6210 = vadd.f32 0.0, %v6209
      %v6211 = vpop.f32.mrb[0].mxu0
      %v6212 = vpop.f32.mrb[0].mxu0
      %v6213 = vadd.f32 0.0, %v6212
      %v6214 = vpop.f32.mrb[0].mxu0
      %6215 = vmatprep.mubr.bf16.mxu0 0
      %6216 = vmatmul.mubr.bf16.gmra.mrb[0].mxu0 %v6162
      %v6217 = vpop.f32.mrb[0].mxu0
      %v6218 = vadd.f32 0.0, %v6217
      %v6219 = vpop.f32.mrb[0].mxu0
      %v6220 = vpop.f32.mrb[0].mxu0
      %v6221 = vadd.f32 0.0, %v6220
      %v6222 = vpop.f32.mrb[0].mxu0
      %6223 = vmatprep.mubr.bf16.mxu0 0
      %6224 = vmatmul.mubr.bf16.gmra.mrb[0].mxu0 %v6165
      %v6225 = vpop.f32.mrb[0].mxu0
      %v6226 = vadd.f32 0.0, %v6225
      %v6227 = vpop.f32.mrb[0].mxu0
      %v6228 = vpop.f32.mrb[0].mxu0
      %v6229 = vadd.f32 0.0, %v6228
      %v6230 = vpop.f32.mrb[0].mxu0
      %6231 = vdwg.mxu0
      %v6240 = vunpack.c.l.b16 %v6109
      %v6241 = vunpack.c.l.b16 %v6110
      %v6242 = vunpack.c.l.b16 %v6111
      %v6243 = vunpack.c.l.b16 %v6112
      %v6244 = vunpack.c.l.b16 %v6113
      %v6245 = vunpack.c.l.b16 %v6114
      %v6246 = vunpack.c.l.b16 %v6115
      %v6247 = vunpack.c.l.b16 %v6116
      %v6248 = vpack.c.b16 %v6241, %v6240
      %v6249 = vpack.c.b16 %v6243, %v6242
      %v6250 = vpack.c.b16 %v6245, %v6244
      %v6251 = vpack.c.b16 %v6247, %v6246
      %v6253 = vsel %vm6154, %v6248, 0
      %v6256 = vsel %vm6154, %v6249, 0
      %v6259 = vsel %vm6154, %v6250, 0
      %v6262 = vsel %vm6154, %v6251, 0
      %6264 = vmatprep.subr.bf16.mxu0 0
      %6265 = vmatpush1.bf16.msra.mxu0 %v6107
      %6266 = vmatprep.subr.bf16.mxu0 0
      %6267 = vmatpush1.bf16.msra.mxu0 %v6108
      %6268 = vmatprep.subr.bf16.mxu0 0
      %6269 = vmatpush1.bf16.msra.mxu0 0
      %6270 = vmatprep.subr.bf16.mxu0 0
      %6271 = vmatpush1.bf16.msra.mxu0 0
      %6272 = vmatprep.subr.bf16.mxu0 0
      %6273 = vmatpush1.bf16.msra.mxu0 0
      %6274 = vmatprep.subr.bf16.mxu0 0
      %6275 = vmatpush1.bf16.msra.mxu0 0
      %6276 = vmatprep.subr.bf16.mxu0 0
      %6277 = vmatpush1.bf16.msra.mxu0 0
      %6278 = vmatprep.subr.bf16.mxu0 0
      %6279 = vmatpush1.bf16.msra.mxu0 0
      %6280 = vmatprep.subr.bf16.mxu0 0
      %6281 = vmatpush1.bf16.msra.mxu0 0
      %6282 = vmatprep.subr.bf16.mxu0 0
      %6283 = vmatpush1.bf16.msra.mxu0 0
      %6284 = vmatprep.subr.bf16.mxu0 0
      %6285 = vmatpush1.bf16.msra.mxu0 0
      %6286 = vmatprep.subr.bf16.mxu0 0
      %6287 = vmatpush1.bf16.msra.mxu0 0
      %6288 = vmatprep.subr.bf16.mxu0 0
      %6289 = vmatpush1.bf16.msra.mxu0 0
      %6290 = vmatprep.subr.bf16.mxu0 0
      %6291 = vmatpush1.bf16.msra.mxu0 0
      %6292 = vmatprep.subr.bf16.mxu0 0
      %6293 = vmatpush1.bf16.msra.mxu0 0
      %6294 = vmatprep.subr.bf16.mxu0 0
      %6295 = vmatpush1.bf16.msra.mxu0 0
      %6296 = vmatprep.mubr.bf16.mxu0 0
      %6297 = vmatmul.mubr.bf16.gmra.mrb[0].mxu0 %v6253
      %v6298 = vpop.f32.mrb[0].mxu0
      %v6299 = vadd.f32 %v6202, %v6298
      %v6300 = vpop.f32.mrb[0].mxu0
      %v6301 = vpop.f32.mrb[0].mxu0
      %v6302 = vadd.f32 %v6205, %v6301
      %v6303 = vpop.f32.mrb[0].mxu0
      %6304 = vmatprep.mubr.bf16.mxu0 0
      %6305 = vmatmul.mubr.bf16.gmra.mrb[0].mxu0 %v6256
      %v6306 = vpop.f32.mrb[0].mxu0
      %v6307 = vadd.f32 %v6210, %v6306
      %v6308 = vpop.f32.mrb[0].mxu0
      %v6309 = vpop.f32.mrb[0].mxu0
      %v6310 = vadd.f32 %v6213, %v6309
      %v6311 = vpop.f32.mrb[0].mxu0
      %6312 = vmatprep.mubr.bf16.mxu0 0
      %6313 = vmatmul.mubr.bf16.gmra.mrb[0].mxu0 %v6259
      %v6314 = vpop.f32.mrb[0].mxu0
      %v6315 = vadd.f32 %v6218, %v6314
      %v6316 = vpop.f32.mrb[0].mxu0
      %v6317 = vpop.f32.mrb[0].mxu0
      %v6318 = vadd.f32 %v6221, %v6317
      %v6319 = vpop.f32.mrb[0].mxu0
      %6320 = vmatprep.mubr.bf16.mxu0 0
      %6321 = vmatmul.mubr.bf16.gmra.mrb[0].mxu0 %v6262
      %v6322 = vpop.f32.mrb[0].mxu0
      %v6323 = vadd.f32 %v6226, %v6322
      %v6324 = vpop.f32.mrb[0].mxu0
      %v6325 = vpop.f32.mrb[0].mxu0
      %v6326 = vadd.f32 %v6229, %v6325
      %v6327 = vpop.f32.mrb[0].mxu0
      %6328 = vdwg.mxu0
      %s6329 = scalar_lea.vmem %s8, 64
      %v6330 = vld [vmem:[%s6329] sm:$0xf]
      %v6331 = vld [vmem:[%s6329 + $0x4] sm:$0xf]
      %v6332 = vld [vmem:[%s6329 + $0x8] sm:$0xf]
      %v6333 = vld [vmem:[%s6329 + $0xc] sm:$0xf]
      %v6334 = vld [vmem:[%s6329 + $0x10] sm:$0xf]
      %v6335 = vld [vmem:[%s6329 + $0x14] sm:$0xf]
      %v6336 = vld [vmem:[%s6329 + $0x18] sm:$0xf]
      %v6337 = vld [vmem:[%s6329 + $0x1c] sm:$0xf]
      %v6346 = vunpack.c.l.b16 %v6330
      %v6347 = vunpack.c.l.b16 %v6331
      %v6348 = vunpack.c.l.b16 %v6332
      %v6349 = vunpack.c.l.b16 %v6333
      %v6350 = vunpack.c.l.b16 %v6334
      %v6351 = vunpack.c.l.b16 %v6335
      %v6352 = vunpack.c.l.b16 %v6336
      %v6353 = vunpack.c.l.b16 %v6337
      %v6354 = vpack.c.b16 %v6347, %v6346
      %v6355 = vpack.c.b16 %v6349, %v6348
      %v6356 = vpack.c.b16 %v6351, %v6350
      %v6357 = vpack.c.b16 %v6353, %v6352
      %6358 = vrot.lane.b32.xlu0 %v6107, 126
      %v6359 = vpop.permute.xlu0 %6358
      %6360 = vrot.lane.b32.xlu0 %v6108, 126
      %v6361 = vpop.permute.xlu0 %6360
      %v6365 = vsel %vm6154, %v6354, 0
      %v6368 = vsel %vm6154, %v6355, 0
      %v6371 = vsel %vm6154, %v6356, 0
      %v6374 = vsel %vm6154, %v6357, 0
      %6376 = vmatprep.subr.bf16.mxu0 0
      %6377 = vmatpush1.bf16.msra.mxu0 %v6359
      %6378 = vmatprep.subr.bf16.mxu0 0
      %6379 = vmatpush1.bf16.msra.mxu0 %v6361
      %6380 = vmatprep.subr.bf16.mxu0 0
      %6381 = vmatpush1.bf16.msra.mxu0 0
      %6382 = vmatprep.subr.bf16.mxu0 0
      %6383 = vmatpush1.bf16.msra.mxu0 0
      %6384 = vmatprep.subr.bf16.mxu0 0
      %6385 = vmatpush1.bf16.msra.mxu0 0
      %6386 = vmatprep.subr.bf16.mxu0 0
      %6387 = vmatpush1.bf16.msra.mxu0 0
      %6388 = vmatprep.subr.bf16.mxu0 0
      %6389 = vmatpush1.bf16.msra.mxu0 0
      %6390 = vmatprep.subr.bf16.mxu0 0
      %6391 = vmatpush1.bf16.msra.mxu0 0
      %6392 = vmatprep.subr.bf16.mxu0 0
      %6393 = vmatpush1.bf16.msra.mxu0 0
      %6394 = vmatprep.subr.bf16.mxu0 0
      %6395 = vmatpush1.bf16.msra.mxu0 0
      %6396 = vmatprep.subr.bf16.mxu0 0
      %6397 = vmatpush1.bf16.msra.mxu0 0
      %6398 = vmatprep.subr.bf16.mxu0 0
      %6399 = vmatpush1.bf16.msra.mxu0 0
      %6400 = vmatprep.subr.bf16.mxu0 0
      %6401 = vmatpush1.bf16.msra.mxu0 0
      %6402 = vmatprep.subr.bf16.mxu0 0
      %6403 = vmatpush1.bf16.msra.mxu0 0
      %6404 = vmatprep.subr.bf16.mxu0 0
      %6405 = vmatpush1.bf16.msra.mxu0 0
      %6406 = vmatprep.subr.bf16.mxu0 0
      %6407 = vmatpush1.bf16.msra.mxu0 0
      %6408 = vmatprep.mubr.bf16.mxu0 0
      %6409 = vmatmul.mubr.bf16.gmra.mrb[0].mxu0 %v6365
      %v6410 = vpop.f32.mrb[0].mxu0
      %v6411 = vadd.f32 0.0, %v6410
      %v6412 = vpop.f32.mrb[0].mxu0
      %v6413 = vpop.f32.mrb[0].mxu0
      %v6414 = vadd.f32 0.0, %v6413
      %v6415 = vpop.f32.mrb[0].mxu0
      %6416 = vmatprep.mubr.bf16.mxu0 0
      %6417 = vmatmul.mubr.bf16.gmra.mrb[0].mxu0 %v6368
      %v6418 = vpop.f32.mrb[0].mxu0
      %v6419 = vadd.f32 0.0, %v6418
      %v6420 = vpop.f32.mrb[0].mxu0
      %v6421 = vpop.f32.mrb[0].mxu0
      %v6422 = vadd.f32 0.0, %v6421
      %v6423 = vpop.f32.mrb[0].mxu0
      %6424 = vmatprep.mubr.bf16.mxu0 0
      %6425 = vmatmul.mubr.bf16.gmra.mrb[0].mxu0 %v6371
      %v6426 = vpop.f32.mrb[0].mxu0
      %v6427 = vadd.f32 0.0, %v6426
      %v6428 = vpop.f32.mrb[0].mxu0
      %v6429 = vpop.f32.mrb[0].mxu0
      %v6430 = vadd.f32 0.0, %v6429
      %v6431 = vpop.f32.mrb[0].mxu0
      %6432 = vmatprep.mubr.bf16.mxu0 0
      %6433 = vmatmul.mubr.bf16.gmra.mrb[0].mxu0 %v6374
      %v6434 = vpop.f32.mrb[0].mxu0
      %v6435 = vadd.f32 0.0, %v6434
      %v6436 = vpop.f32.mrb[0].mxu0
      %v6437 = vpop.f32.mrb[0].mxu0
      %v6438 = vadd.f32 0.0, %v6437
      %v6439 = vpop.f32.mrb[0].mxu0
      %6440 = vdwg.mxu0
      %v6441 = vadd.f32 %v6299, %v6411
      %v6442 = vadd.f32 %v6302, %v6414
      %v6443 = vadd.f32 %v6307, %v6419
      %v6444 = vadd.f32 %v6310, %v6422
      %v6445 = vadd.f32 %v6315, %v6427
      %v6446 = vadd.f32 %v6318, %v6430
      %v6447 = vadd.f32 %v6323, %v6435
      %v6448 = vadd.f32 %v6326, %v6438
      %s6449 = scalar_lea.vmem %s8, 96
      %v6450 = vld [vmem:[%s6449] sm:$0xf]
      %v6451 = vld [vmem:[%s6449 + $0x4] sm:$0xf]
      %v6452 = vld [vmem:[%s6449 + $0x8] sm:$0xf]
      %v6453 = vld [vmem:[%s6449 + $0xc] sm:$0xf]
      %v6454 = vld [vmem:[%s6449 + $0x10] sm:$0xf]
      %v6455 = vld [vmem:[%s6449 + $0x14] sm:$0xf]
      %v6456 = vld [vmem:[%s6449 + $0x18] sm:$0xf]
      %v6457 = vld [vmem:[%s6449 + $0x1c] sm:$0xf]
      %v6466 = vunpack.c.l.b16 %v6450
      %v6467 = vunpack.c.l.b16 %v6451
      %v6468 = vunpack.c.l.b16 %v6452
      %v6469 = vunpack.c.l.b16 %v6453
      %v6470 = vunpack.c.l.b16 %v6454
      %v6471 = vunpack.c.l.b16 %v6455
      %v6472 = vunpack.c.l.b16 %v6456
      %v6473 = vunpack.c.l.b16 %v6457
      %v6474 = vpack.c.b16 %v6467, %v6466
      %v6475 = vpack.c.b16 %v6469, %v6468
      %v6476 = vpack.c.b16 %v6471, %v6470
      %v6477 = vpack.c.b16 %v6473, %v6472
      %6478 = vrot.lane.b32.xlu0 %v6107, 118
      %v6479 = vpop.permute.xlu0 %6478
      %6480 = vrot.lane.b32.xlu0 %v6108, 118
      %v6481 = vpop.permute.xlu0 %6480
      %v6485 = vsel %vm6154, %v6474, 0
      %v6488 = vsel %vm6154, %v6475, 0
      %v6491 = vsel %vm6154, %v6476, 0
      %v6494 = vsel %vm6154, %v6477, 0
      %6496 = vmatprep.subr.bf16.mxu0 0
      %6497 = vmatpush1.bf16.msra.mxu0 %v6479
      %6498 = vmatprep.subr.bf16.mxu0 0
      %6499 = vmatpush1.bf16.msra.mxu0 %v6481
      %6500 = vmatprep.subr.bf16.mxu0 0
      %6501 = vmatpush1.bf16.msra.mxu0 0
      %6502 = vmatprep.subr.bf16.mxu0 0
      %6503 = vmatpush1.bf16.msra.mxu0 0
      %6504 = vmatprep.subr.bf16.mxu0 0
      %6505 = vmatpush1.bf16.msra.mxu0 0
      %6506 = vmatprep.subr.bf16.mxu0 0
      %6507 = vmatpush1.bf16.msra.mxu0 0
      %6508 = vmatprep.subr.bf16.mxu0 0
      %6509 = vmatpush1.bf16.msra.mxu0 0
      %6510 = vmatprep.subr.bf16.mxu0 0
      %6511 = vmatpush1.bf16.msra.mxu0 0
      %6512 = vmatprep.subr.bf16.mxu0 0
      %6513 = vmatpush1.bf16.msra.mxu0 0
      %6514 = vmatprep.subr.bf16.mxu0 0
      %6515 = vmatpush1.bf16.msra.mxu0 0
      %6516 = vmatprep.subr.bf16.mxu0 0
      %6517 = vmatpush1.bf16.msra.mxu0 0
      %6518 = vmatprep.subr.bf16.mxu0 0
      %6519 = vmatpush1.bf16.msra.mxu0 0
      %6520 = vmatprep.subr.bf16.mxu0 0
      %6521 = vmatpush1.bf16.msra.mxu0 0
      %6522 = vmatprep.subr.bf16.mxu0 0
      %6523 = vmatpush1.bf16.msra.mxu0 0
      %6524 = vmatprep.subr.bf16.mxu0 0
      %6525 = vmatpush1.bf16.msra.mxu0 0
      %6526 = vmatprep.subr.bf16.mxu0 0
      %6527 = vmatpush1.bf16.msra.mxu0 0
      %6528 = vmatprep.mubr.bf16.mxu0 0
      %6529 = vmatmul.mubr.bf16.gmra.mrb[0].mxu0 %v6485
      %v6530 = vpop.f32.mrb[0].mxu0
      %v6531 = vadd.f32 0.0, %v6530
      %v6532 = vpop.f32.mrb[0].mxu0
      %v6533 = vpop.f32.mrb[0].mxu0
      %v6534 = vadd.f32 0.0, %v6533
      %v6535 = vpop.f32.mrb[0].mxu0
      %6536 = vmatprep.mubr.bf16.mxu0 0
      %6537 = vmatmul.mubr.bf16.gmra.mrb[0].mxu0 %v6488
      %v6538 = vpop.f32.mrb[0].mxu0
      %v6539 = vadd.f32 0.0, %v6538
      %v6540 = vpop.f32.mrb[0].mxu0
      %v6541 = vpop.f32.mrb[0].mxu0
      %v6542 = vadd.f32 0.0, %v6541
      %v6543 = vpop.f32.mrb[0].mxu0
      %6544 = vmatprep.mubr.bf16.mxu0 0
      %6545 = vmatmul.mubr.bf16.gmra.mrb[0].mxu0 %v6491
      %v6546 = vpop.f32.mrb[0].mxu0
      %v6547 = vadd.f32 0.0, %v6546
      %v6548 = vpop.f32.mrb[0].mxu0
      %v6549 = vpop.f32.mrb[0].mxu0
      %v6550 = vadd.f32 0.0, %v6549
      %v6551 = vpop.f32.mrb[0].mxu0
      %6552 = vmatprep.mubr.bf16.mxu0 0
      %6553 = vmatmul.mubr.bf16.gmra.mrb[0].mxu0 %v6494
      %v6554 = vpop.f32.mrb[0].mxu0
      %v6555 = vadd.f32 0.0, %v6554
      %v6556 = vpop.f32.mrb[0].mxu0
      %v6557 = vpop.f32.mrb[0].mxu0
      %v6558 = vadd.f32 0.0, %v6557
      %v6559 = vpop.f32.mrb[0].mxu0
      %6560 = vdwg.mxu0
      %v6561 = vadd.f32 %v6441, %v6531
      %v6562 = vadd.f32 %v6442, %v6534
      %v6563 = vadd.f32 %v6443, %v6539
      %v6564 = vadd.f32 %v6444, %v6542
      %v6565 = vadd.f32 %v6445, %v6547
      %v6566 = vadd.f32 %v6446, %v6550
      %v6567 = vadd.f32 %v6447, %v6555
      %v6568 = vadd.f32 %v6448, %v6558
      %s6569 = scalar_lea.vmem %s8, 128
      %v6570 = vld [vmem:[%s6569] sm:$0xf]
      %v6571 = vld [vmem:[%s6569 + $0x4] sm:$0xf]
      %v6572 = vld [vmem:[%s6569 + $0x8] sm:$0xf]
      %v6573 = vld [vmem:[%s6569 + $0xc] sm:$0xf]
      %v6574 = vld [vmem:[%s6569 + $0x10] sm:$0xf]
      %v6575 = vld [vmem:[%s6569 + $0x14] sm:$0xf]
      %v6576 = vld [vmem:[%s6569 + $0x18] sm:$0xf]
      %v6577 = vld [vmem:[%s6569 + $0x1c] sm:$0xf]
      %v6586 = vunpack.c.l.b16 %v6570
      %v6587 = vunpack.c.l.b16 %v6571
      %v6588 = vunpack.c.l.b16 %v6572
      %v6589 = vunpack.c.l.b16 %v6573
      %v6590 = vunpack.c.l.b16 %v6574
      %v6591 = vunpack.c.l.b16 %v6575
      %v6592 = vunpack.c.l.b16 %v6576
      %v6593 = vunpack.c.l.b16 %v6577
      %v6594 = vpack.c.b16 %v6587, %v6586
      %v6595 = vpack.c.b16 %v6589, %v6588
      %v6596 = vpack.c.b16 %v6591, %v6590
      %v6597 = vpack.c.b16 %v6593, %v6592
      %6598 = vrot.lane.b32.xlu0 %v6107, 117
      %v6599 = vpop.permute.xlu0 %6598
      %6600 = vrot.lane.b32.xlu0 %v6108, 117
      %v6601 = vpop.permute.xlu0 %6600
      %v6605 = vsel %vm6154, %v6594, 0
      %v6608 = vsel %vm6154, %v6595, 0
      %v6611 = vsel %vm6154, %v6596, 0
      %v6614 = vsel %vm6154, %v6597, 0
      %6616 = vmatprep.subr.bf16.mxu0 0
      %6617 = vmatpush1.bf16.msra.mxu0 %v6599
      %6618 = vmatprep.subr.bf16.mxu0 0
      %6619 = vmatpush1.bf16.msra.mxu0 %v6601
      %6620 = vmatprep.subr.bf16.mxu0 0
      %6621 = vmatpush1.bf16.msra.mxu0 0
      %6622 = vmatprep.subr.bf16.mxu0 0
      %6623 = vmatpush1.bf16.msra.mxu0 0
      %6624 = vmatprep.subr.bf16.mxu0 0
      %6625 = vmatpush1.bf16.msra.mxu0 0
      %6626 = vmatprep.subr.bf16.mxu0 0
      %6627 = vmatpush1.bf16.msra.mxu0 0
      %6628 = vmatprep.subr.bf16.mxu0 0
      %6629 = vmatpush1.bf16.msra.mxu0 0
      %6630 = vmatprep.subr.bf16.mxu0 0
      %6631 = vmatpush1.bf16.msra.mxu0 0
      %6632 = vmatprep.subr.bf16.mxu0 0
      %6633 = vmatpush1.bf16.msra.mxu0 0
      %6634 = vmatprep.subr.bf16.mxu0 0
      %6635 = vmatpush1.bf16.msra.mxu0 0
      %6636 = vmatprep.subr.bf16.mxu0 0
      %6637 = vmatpush1.bf16.msra.mxu0 0
      %6638 = vmatprep.subr.bf16.mxu0 0
      %6639 = vmatpush1.bf16.msra.mxu0 0
      %6640 = vmatprep.subr.bf16.mxu0 0
      %6641 = vmatpush1.bf16.msra.mxu0 0
      %6642 = vmatprep.subr.bf16.mxu0 0
      %6643 = vmatpush1.bf16.msra.mxu0 0
      %6644 = vmatprep.subr.bf16.mxu0 0
      %6645 = vmatpush1.bf16.msra.mxu0 0
      %6646 = vmatprep.subr.bf16.mxu0 0
      %6647 = vmatpush1.bf16.msra.mxu0 0
      %6648 = vmatprep.mubr.bf16.mxu0 0
      %6649 = vmatmul.mubr.bf16.gmra.mrb[0].mxu0 %v6605
      %v6650 = vpop.f32.mrb[0].mxu0
      %v6651 = vadd.f32 0.0, %v6650
      %v6652 = vpop.f32.mrb[0].mxu0
      %v6653 = vpop.f32.mrb[0].mxu0
      %v6654 = vadd.f32 0.0, %v6653
      %v6655 = vpop.f32.mrb[0].mxu0
      %6656 = vmatprep.mubr.bf16.mxu0 0
      %6657 = vmatmul.mubr.bf16.gmra.mrb[0].mxu0 %v6608
      %v6658 = vpop.f32.mrb[0].mxu0
      %v6659 = vadd.f32 0.0, %v6658
      %v6660 = vpop.f32.mrb[0].mxu0
      %v6661 = vpop.f32.mrb[0].mxu0
      %v6662 = vadd.f32 0.0, %v6661
      %v6663 = vpop.f32.mrb[0].mxu0
      %6664 = vmatprep.mubr.bf16.mxu0 0
      %6665 = vmatmul.mubr.bf16.gmra.mrb[0].mxu0 %v6611
      %v6666 = vpop.f32.mrb[0].mxu0
      %v6667 = vadd.f32 0.0, %v6666
      %v6668 = vpop.f32.mrb[0].mxu0
      %v6669 = vpop.f32.mrb[0].mxu0
      %v6670 = vadd.f32 0.0, %v6669
      %v6671 = vpop.f32.mrb[0].mxu0
      %6672 = vmatprep.mubr.bf16.mxu0 0
      %6673 = vmatmul.mubr.bf16.gmra.mrb[0].mxu0 %v6614
      %v6674 = vpop.f32.mrb[0].mxu0
      %v6675 = vadd.f32 0.0, %v6674
      %v6676 = vpop.f32.mrb[0].mxu0
      %v6677 = vpop.f32.mrb[0].mxu0
      %v6678 = vadd.f32 0.0, %v6677
      %v6679 = vpop.f32.mrb[0].mxu0
      %6680 = vdwg.mxu0
      %v6681 = vadd.f32 %v6561, %v6651
      %v6682 = vadd.f32 %v6562, %v6654
      %v6683 = vadd.f32 %v6563, %v6659
      %v6684 = vadd.f32 %v6564, %v6662
      %v6685 = vadd.f32 %v6565, %v6667
      %v6686 = vadd.f32 %v6566, %v6670
      %v6687 = vadd.f32 %v6567, %v6675
      %v6688 = vadd.f32 %v6568, %v6678
      %s6689 = scalar_lea.vmem %s8, 160
      %v6690 = vld [vmem:[%s6689] sm:$0xf]
      %v6691 = vld [vmem:[%s6689 + $0x4] sm:$0xf]
      %v6692 = vld [vmem:[%s6689 + $0x8] sm:$0xf]
      %v6693 = vld [vmem:[%s6689 + $0xc] sm:$0xf]
      %v6694 = vld [vmem:[%s6689 + $0x10] sm:$0xf]
      %v6695 = vld [vmem:[%s6689 + $0x14] sm:$0xf]
      %v6696 = vld [vmem:[%s6689 + $0x18] sm:$0xf]
      %v6697 = vld [vmem:[%s6689 + $0x1c] sm:$0xf]
      %v6706 = vunpack.c.l.b16 %v6690
      %v6707 = vunpack.c.l.b16 %v6691
      %v6708 = vunpack.c.l.b16 %v6692
      %v6709 = vunpack.c.l.b16 %v6693
      %v6710 = vunpack.c.l.b16 %v6694
      %v6711 = vunpack.c.l.b16 %v6695
      %v6712 = vunpack.c.l.b16 %v6696
      %v6713 = vunpack.c.l.b16 %v6697
      %v6714 = vpack.c.b16 %v6707, %v6706
      %v6715 = vpack.c.b16 %v6709, %v6708
      %v6716 = vpack.c.b16 %v6711, %v6710
      %v6717 = vpack.c.b16 %v6713, %v6712
      %6718 = vrot.lane.b32.xlu0 %v6107, 116
      %v6719 = vpop.permute.xlu0 %6718
      %6720 = vrot.lane.b32.xlu0 %v6108, 116
      %v6721 = vpop.permute.xlu0 %6720
      %v6725 = vsel %vm6154, %v6714, 0
      %v6728 = vsel %vm6154, %v6715, 0
      %v6731 = vsel %vm6154, %v6716, 0
      %v6734 = vsel %vm6154, %v6717, 0
      %6736 = vmatprep.subr.bf16.mxu0 0
      %6737 = vmatpush1.bf16.msra.mxu0 %v6719
      %6738 = vmatprep.subr.bf16.mxu0 0
      %6739 = vmatpush1.bf16.msra.mxu0 %v6721
      %6740 = vmatprep.subr.bf16.mxu0 0
      %6741 = vmatpush1.bf16.msra.mxu0 0
      %6742 = vmatprep.subr.bf16.mxu0 0
      %6743 = vmatpush1.bf16.msra.mxu0 0
      %6744 = vmatprep.subr.bf16.mxu0 0
      %6745 = vmatpush1.bf16.msra.mxu0 0
      %6746 = vmatprep.subr.bf16.mxu0 0
      %6747 = vmatpush1.bf16.msra.mxu0 0
      %6748 = vmatprep.subr.bf16.mxu0 0
      %6749 = vmatpush1.bf16.msra.mxu0 0
      %6750 = vmatprep.subr.bf16.mxu0 0
      %6751 = vmatpush1.bf16.msra.mxu0 0
      %6752 = vmatprep.subr.bf16.mxu0 0
      %6753 = vmatpush1.bf16.msra.mxu0 0
      %6754 = vmatprep.subr.bf16.mxu0 0
      %6755 = vmatpush1.bf16.msra.mxu0 0
      %6756 = vmatprep.subr.bf16.mxu0 0
      %6757 = vmatpush1.bf16.msra.mxu0 0
      %6758 = vmatprep.subr.bf16.mxu0 0
      %6759 = vmatpush1.bf16.msra.mxu0 0
      %6760 = vmatprep.subr.bf16.mxu0 0
      %6761 = vmatpush1.bf16.msra.mxu0 0
      %6762 = vmatprep.subr.bf16.mxu0 0
      %6763 = vmatpush1.bf16.msra.mxu0 0
      %6764 = vmatprep.subr.bf16.mxu0 0
      %6765 = vmatpush1.bf16.msra.mxu0 0
      %6766 = vmatprep.subr.bf16.mxu0 0
      %6767 = vmatpush1.bf16.msra.mxu0 0
      %6768 = vmatprep.mubr.bf16.mxu0 0
      %6769 = vmatmul.mubr.bf16.gmra.mrb[0].mxu0 %v6725
      %v6770 = vpop.f32.mrb[0].mxu0
      %v6771 = vadd.f32 0.0, %v6770
      %v6772 = vpop.f32.mrb[0].mxu0
      %v6773 = vpop.f32.mrb[0].mxu0
      %v6774 = vadd.f32 0.0, %v6773
      %v6775 = vpop.f32.mrb[0].mxu0
      %6776 = vmatprep.mubr.bf16.mxu0 0
      %6777 = vmatmul.mubr.bf16.gmra.mrb[0].mxu0 %v6728
      %v6778 = vpop.f32.mrb[0].mxu0
      %v6779 = vadd.f32 0.0, %v6778
      %v6780 = vpop.f32.mrb[0].mxu0
      %v6781 = vpop.f32.mrb[0].mxu0
      %v6782 = vadd.f32 0.0, %v6781
      %v6783 = vpop.f32.mrb[0].mxu0
      %6784 = vmatprep.mubr.bf16.mxu0 0
      %6785 = vmatmul.mubr.bf16.gmra.mrb[0].mxu0 %v6731
      %v6786 = vpop.f32.mrb[0].mxu0
      %v6787 = vadd.f32 0.0, %v6786
      %v6788 = vpop.f32.mrb[0].mxu0
      %v6789 = vpop.f32.mrb[0].mxu0
      %v6790 = vadd.f32 0.0, %v6789
      %v6791 = vpop.f32.mrb[0].mxu0
      %6792 = vmatprep.mubr.bf16.mxu0 0
      %6793 = vmatmul.mubr.bf16.gmra.mrb[0].mxu0 %v6734
      %v6794 = vpop.f32.mrb[0].mxu0
      %v6795 = vadd.f32 0.0, %v6794
      %v6796 = vpop.f32.mrb[0].mxu0
      %v6797 = vpop.f32.mrb[0].mxu0
      %v6798 = vadd.f32 0.0, %v6797
      %v6799 = vpop.f32.mrb[0].mxu0
      %6800 = vdwg.mxu0
      %v6801 = vadd.f32 %v6681, %v6771
      %v6802 = vadd.f32 %v6682, %v6774
      %v6803 = vadd.f32 %v6683, %v6779
      %v6804 = vadd.f32 %v6684, %v6782
      %v6805 = vadd.f32 %v6685, %v6787
      %v6806 = vadd.f32 %v6686, %v6790
      %v6807 = vadd.f32 %v6687, %v6795
      %v6808 = vadd.f32 %v6688, %v6798
      %s6809 = scalar_lea.vmem %s8, 192
      %v6810 = vld [vmem:[%s6809] sm:$0xf]
      %v6811 = vld [vmem:[%s6809 + $0x4] sm:$0xf]
      %v6812 = vld [vmem:[%s6809 + $0x8] sm:$0xf]
      %v6813 = vld [vmem:[%s6809 + $0xc] sm:$0xf]
      %v6814 = vld [vmem:[%s6809 + $0x10] sm:$0xf]
      %v6815 = vld [vmem:[%s6809 + $0x14] sm:$0xf]
      %v6816 = vld [vmem:[%s6809 + $0x18] sm:$0xf]
      %v6817 = vld [vmem:[%s6809 + $0x1c] sm:$0xf]
      %v6826 = vunpack.c.l.b16 %v6810
      %v6827 = vunpack.c.l.b16 %v6811
      %v6828 = vunpack.c.l.b16 %v6812
      %v6829 = vunpack.c.l.b16 %v6813
      %v6830 = vunpack.c.l.b16 %v6814
      %v6831 = vunpack.c.l.b16 %v6815
      %v6832 = vunpack.c.l.b16 %v6816
      %v6833 = vunpack.c.l.b16 %v6817
      %v6834 = vpack.c.b16 %v6827, %v6826
      %v6835 = vpack.c.b16 %v6829, %v6828
      %v6836 = vpack.c.b16 %v6831, %v6830
      %v6837 = vpack.c.b16 %v6833, %v6832
      %6838 = vrot.lane.b32.xlu0 %v6107, 108
      %v6839 = vpop.permute.xlu0 %6838
      %6840 = vrot.lane.b32.xlu0 %v6108, 108
      %v6841 = vpop.permute.xlu0 %6840
      %v6845 = vsel %vm6154, %v6834, 0
      %v6848 = vsel %vm6154, %v6835, 0
      %v6851 = vsel %vm6154, %v6836, 0
      %v6854 = vsel %vm6154, %v6837, 0
      %6856 = vmatprep.subr.bf16.mxu0 0
      %6857 = vmatpush1.bf16.msra.mxu0 %v6839
      %6858 = vmatprep.subr.bf16.mxu0 0
      %6859 = vmatpush1.bf16.msra.mxu0 %v6841
      %6860 = vmatprep.subr.bf16.mxu0 0
      %6861 = vmatpush1.bf16.msra.mxu0 0
      %6862 = vmatprep.subr.bf16.mxu0 0
      %6863 = vmatpush1.bf16.msra.mxu0 0
      %6864 = vmatprep.subr.bf16.mxu0 0
      %6865 = vmatpush1.bf16.msra.mxu0 0
      %6866 = vmatprep.subr.bf16.mxu0 0
      %6867 = vmatpush1.bf16.msra.mxu0 0
      %6868 = vmatprep.subr.bf16.mxu0 0
      %6869 = vmatpush1.bf16.msra.mxu0 0
      %6870 = vmatprep.subr.bf16.mxu0 0
      %6871 = vmatpush1.bf16.msra.mxu0 0
      %6872 = vmatprep.subr.bf16.mxu0 0
      %6873 = vmatpush1.bf16.msra.mxu0 0
      %6874 = vmatprep.subr.bf16.mxu0 0
      %6875 = vmatpush1.bf16.msra.mxu0 0
      %6876 = vmatprep.subr.bf16.mxu0 0
      %6877 = vmatpush1.bf16.msra.mxu0 0
      %6878 = vmatprep.subr.bf16.mxu0 0
      %6879 = vmatpush1.bf16.msra.mxu0 0
      %6880 = vmatprep.subr.bf16.mxu0 0
      %6881 = vmatpush1.bf16.msra.mxu0 0
      %6882 = vmatprep.subr.bf16.mxu0 0
      %6883 = vmatpush1.bf16.msra.mxu0 0
      %6884 = vmatprep.subr.bf16.mxu0 0
      %6885 = vmatpush1.bf16.msra.mxu0 0
      %6886 = vmatprep.subr.bf16.mxu0 0
      %6887 = vmatpush1.bf16.msra.mxu0 0
      %6888 = vmatprep.mubr.bf16.mxu0 0
      %6889 = vmatmul.mubr.bf16.gmra.mrb[0].mxu0 %v6845
      %v6890 = vpop.f32.mrb[0].mxu0
      %v6891 = vadd.f32 0.0, %v6890
      %v6892 = vpop.f32.mrb[0].mxu0
      %v6893 = vpop.f32.mrb[0].mxu0
      %v6894 = vadd.f32 0.0, %v6893
      %v6895 = vpop.f32.mrb[0].mxu0
      %6896 = vmatprep.mubr.bf16.mxu0 0
      %6897 = vmatmul.mubr.bf16.gmra.mrb[0].mxu0 %v6848
      %v6898 = vpop.f32.mrb[0].mxu0
      %v6899 = vadd.f32 0.0, %v6898
      %v6900 = vpop.f32.mrb[0].mxu0
      %v6901 = vpop.f32.mrb[0].mxu0
      %v6902 = vadd.f32 0.0, %v6901
      %v6903 = vpop.f32.mrb[0].mxu0
      %6904 = vmatprep.mubr.bf16.mxu0 0
      %6905 = vmatmul.mubr.bf16.gmra.mrb[0].mxu0 %v6851
      %v6906 = vpop.f32.mrb[0].mxu0
      %v6907 = vadd.f32 0.0, %v6906
      %v6908 = vpop.f32.mrb[0].mxu0
      %v6909 = vpop.f32.mrb[0].mxu0
      %v6910 = vadd.f32 0.0, %v6909
      %v6911 = vpop.f32.mrb[0].mxu0
      %6912 = vmatprep.mubr.bf16.mxu0 0
      %6913 = vmatmul.mubr.bf16.gmra.mrb[0].mxu0 %v6854
      %v6914 = vpop.f32.mrb[0].mxu0
      %v6915 = vadd.f32 0.0, %v6914
      %v6916 = vpop.f32.mrb[0].mxu0
      %v6917 = vpop.f32.mrb[0].mxu0
      %v6918 = vadd.f32 0.0, %v6917
      %v6919 = vpop.f32.mrb[0].mxu0
      %6920 = vdwg.mxu0
      %v6921 = vadd.f32 %v6801, %v6891
      %v6922 = vadd.f32 %v6802, %v6894
      %v6923 = vadd.f32 %v6803, %v6899
      %v6924 = vadd.f32 %v6804, %v6902
      %v6925 = vadd.f32 %v6805, %v6907
      %v6926 = vadd.f32 %v6806, %v6910
      %v6927 = vadd.f32 %v6807, %v6915
      %v6928 = vadd.f32 %v6808, %v6918
      %s6929 = scalar_lea.vmem %s8, 224
      %v6930 = vld [vmem:[%s6929] sm:$0xf]
      %v6931 = vld [vmem:[%s6929 + $0x4] sm:$0xf]
      %v6932 = vld [vmem:[%s6929 + $0x8] sm:$0xf]
      %v6933 = vld [vmem:[%s6929 + $0xc] sm:$0xf]
      %v6934 = vld [vmem:[%s6929 + $0x10] sm:$0xf]
      %v6935 = vld [vmem:[%s6929 + $0x14] sm:$0xf]
      %v6936 = vld [vmem:[%s6929 + $0x18] sm:$0xf]
      %v6937 = vld [vmem:[%s6929 + $0x1c] sm:$0xf]
      %v6946 = vunpack.c.l.b16 %v6930
      %v6947 = vunpack.c.l.b16 %v6931
      %v6948 = vunpack.c.l.b16 %v6932
      %v6949 = vunpack.c.l.b16 %v6933
      %v6950 = vunpack.c.l.b16 %v6934
      %v6951 = vunpack.c.l.b16 %v6935
      %v6952 = vunpack.c.l.b16 %v6936
      %v6953 = vunpack.c.l.b16 %v6937
      %v6954 = vpack.c.b16 %v6947, %v6946
      %v6955 = vpack.c.b16 %v6949, %v6948
      %v6956 = vpack.c.b16 %v6951, %v6950
      %v6957 = vpack.c.b16 %v6953, %v6952
      %6958 = vrot.lane.b32.xlu0 %v6107, 107
      %v6959 = vpop.permute.xlu0 %6958
      %6960 = vrot.lane.b32.xlu0 %v6108, 107
      %v6961 = vpop.permute.xlu0 %6960
      %v6965 = vsel %vm6154, %v6954, 0
      %v6968 = vsel %vm6154, %v6955, 0
      %v6971 = vsel %vm6154, %v6956, 0
      %v6974 = vsel %vm6154, %v6957, 0
      %6976 = vmatprep.subr.bf16.mxu0 0
      %6977 = vmatpush1.bf16.msra.mxu0 %v6959
      %6978 = vmatprep.subr.bf16.mxu0 0
      %6979 = vmatpush1.bf16.msra.mxu0 %v6961
      %6980 = vmatprep.subr.bf16.mxu0 0
      %6981 = vmatpush1.bf16.msra.mxu0 0
      %6982 = vmatprep.subr.bf16.mxu0 0
      %6983 = vmatpush1.bf16.msra.mxu0 0
      %6984 = vmatprep.subr.bf16.mxu0 0
      %6985 = vmatpush1.bf16.msra.mxu0 0
      %6986 = vmatprep.subr.bf16.mxu0 0
      %6987 = vmatpush1.bf16.msra.mxu0 0
      %6988 = vmatprep.subr.bf16.mxu0 0
      %6989 = vmatpush1.bf16.msra.mxu0 0
      %6990 = vmatprep.subr.bf16.mxu0 0
      %6991 = vmatpush1.bf16.msra.mxu0 0
      %6992 = vmatprep.subr.bf16.mxu0 0
      %6993 = vmatpush1.bf16.msra.mxu0 0
      %6994 = vmatprep.subr.bf16.mxu0 0
      %6995 = vmatpush1.bf16.msra.mxu0 0
      %6996 = vmatprep.subr.bf16.mxu0 0
      %6997 = vmatpush1.bf16.msra.mxu0 0
      %6998 = vmatprep.subr.bf16.mxu0 0
      %6999 = vmatpush1.bf16.msra.mxu0 0
      %7000 = vmatprep.subr.bf16.mxu0 0
      %7001 = vmatpush1.bf16.msra.mxu0 0
      %7002 = vmatprep.subr.bf16.mxu0 0
      %7003 = vmatpush1.bf16.msra.mxu0 0
      %7004 = vmatprep.subr.bf16.mxu0 0
      %7005 = vmatpush1.bf16.msra.mxu0 0
      %7006 = vmatprep.subr.bf16.mxu0 0
      %7007 = vmatpush1.bf16.msra.mxu0 0
      %7008 = vmatprep.mubr.bf16.mxu0 0
      %7009 = vmatmul.mubr.bf16.gmra.mrb[0].mxu0 %v6965
      %v7010 = vpop.f32.mrb[0].mxu0
      %v7011 = vadd.f32 0.0, %v7010
      %v7012 = vpop.f32.mrb[0].mxu0
      %v7013 = vpop.f32.mrb[0].mxu0
      %v7014 = vadd.f32 0.0, %v7013
      %v7015 = vpop.f32.mrb[0].mxu0
      %7016 = vmatprep.mubr.bf16.mxu0 0
      %7017 = vmatmul.mubr.bf16.gmra.mrb[0].mxu0 %v6968
      %v7018 = vpop.f32.mrb[0].mxu0
      %v7019 = vadd.f32 0.0, %v7018
      %v7020 = vpop.f32.mrb[0].mxu0
      %v7021 = vpop.f32.mrb[0].mxu0
      %v7022 = vadd.f32 0.0, %v7021
      %v7023 = vpop.f32.mrb[0].mxu0
      %7024 = vmatprep.mubr.bf16.mxu0 0
      %7025 = vmatmul.mubr.bf16.gmra.mrb[0].mxu0 %v6971
      %v7026 = vpop.f32.mrb[0].mxu0
      %v7027 = vadd.f32 0.0, %v7026
      %v7028 = vpop.f32.mrb[0].mxu0
      %v7029 = vpop.f32.mrb[0].mxu0
      %v7030 = vadd.f32 0.0, %v7029
      %v7031 = vpop.f32.mrb[0].mxu0
      %7032 = vmatprep.mubr.bf16.mxu0 0
      %7033 = vmatmul.mubr.bf16.gmra.mrb[0].mxu0 %v6974
      %v7034 = vpop.f32.mrb[0].mxu0
      %v7035 = vadd.f32 0.0, %v7034
      %v7036 = vpop.f32.mrb[0].mxu0
      %v7037 = vpop.f32.mrb[0].mxu0
      %v7038 = vadd.f32 0.0, %v7037
      %v7039 = vpop.f32.mrb[0].mxu0
      %7040 = vdwg.mxu0
      %v7041 = vadd.f32 %v6921, %v7011
      %v7042 = vadd.f32 %v6922, %v7014
      %v7043 = vadd.f32 %v6923, %v7019
      %v7044 = vadd.f32 %v6924, %v7022
      %v7045 = vadd.f32 %v6925, %v7027
      %v7046 = vadd.f32 %v6926, %v7030
      %v7047 = vadd.f32 %v6927, %v7035
      %v7048 = vadd.f32 %v6928, %v7038
      %s7049 = scalar_lea.vmem %s8, 256
      %v7050 = vld [vmem:[%s7049] sm:$0xf]
      %v7051 = vld [vmem:[%s7049 + $0x4] sm:$0xf]
      %v7052 = vld [vmem:[%s7049 + $0x8] sm:$0xf]
      %v7053 = vld [vmem:[%s7049 + $0xc] sm:$0xf]
      %v7054 = vld [vmem:[%s7049 + $0x10] sm:$0xf]
      %v7055 = vld [vmem:[%s7049 + $0x14] sm:$0xf]
      %v7056 = vld [vmem:[%s7049 + $0x18] sm:$0xf]
      %v7057 = vld [vmem:[%s7049 + $0x1c] sm:$0xf]
      %v7066 = vunpack.c.l.b16 %v7050
      %v7067 = vunpack.c.l.b16 %v7051
      %v7068 = vunpack.c.l.b16 %v7052
      %v7069 = vunpack.c.l.b16 %v7053
      %v7070 = vunpack.c.l.b16 %v7054
      %v7071 = vunpack.c.l.b16 %v7055
      %v7072 = vunpack.c.l.b16 %v7056
      %v7073 = vunpack.c.l.b16 %v7057
      %v7074 = vpack.c.b16 %v7067, %v7066
      %v7075 = vpack.c.b16 %v7069, %v7068
      %v7076 = vpack.c.b16 %v7071, %v7070
      %v7077 = vpack.c.b16 %v7073, %v7072
      %7078 = vrot.lane.b32.xlu0 %v6107, 106
      %v7079 = vpop.permute.xlu0 %7078
      %7080 = vrot.lane.b32.xlu0 %v6108, 106
      %v7081 = vpop.permute.xlu0 %7080
      %v7085 = vsel %vm6154, %v7074, 0
      %v7088 = vsel %vm6154, %v7075, 0
      %v7091 = vsel %vm6154, %v7076, 0
      %v7094 = vsel %vm6154, %v7077, 0
      %7096 = vmatprep.subr.bf16.mxu0 0
      %7097 = vmatpush1.bf16.msra.mxu0 %v7079
      %7098 = vmatprep.subr.bf16.mxu0 0
      %7099 = vmatpush1.bf16.msra.mxu0 %v7081
      %7100 = vmatprep.subr.bf16.mxu0 0
      %7101 = vmatpush1.bf16.msra.mxu0 0
      %7102 = vmatprep.subr.bf16.mxu0 0
      %7103 = vmatpush1.bf16.msra.mxu0 0
      %7104 = vmatprep.subr.bf16.mxu0 0
      %7105 = vmatpush1.bf16.msra.mxu0 0
      %7106 = vmatprep.subr.bf16.mxu0 0
      %7107 = vmatpush1.bf16.msra.mxu0 0
      %7108 = vmatprep.subr.bf16.mxu0 0
      %7109 = vmatpush1.bf16.msra.mxu0 0
      %7110 = vmatprep.subr.bf16.mxu0 0
      %7111 = vmatpush1.bf16.msra.mxu0 0
      %7112 = vmatprep.subr.bf16.mxu0 0
      %7113 = vmatpush1.bf16.msra.mxu0 0
      %7114 = vmatprep.subr.bf16.mxu0 0
      %7115 = vmatpush1.bf16.msra.mxu0 0
      %7116 = vmatprep.subr.bf16.mxu0 0
      %7117 = vmatpush1.bf16.msra.mxu0 0
      %7118 = vmatprep.subr.bf16.mxu0 0
      %7119 = vmatpush1.bf16.msra.mxu0 0
      %7120 = vmatprep.subr.bf16.mxu0 0
      %7121 = vmatpush1.bf16.msra.mxu0 0
      %7122 = vmatprep.subr.bf16.mxu0 0
      %7123 = vmatpush1.bf16.msra.mxu0 0
      %7124 = vmatprep.subr.bf16.mxu0 0
      %7125 = vmatpush1.bf16.msra.mxu0 0
      %7126 = vmatprep.subr.bf16.mxu0 0
      %7127 = vmatpush1.bf16.msra.mxu0 0
      %7128 = vmatprep.mubr.bf16.mxu0 0
      %7129 = vmatmul.mubr.bf16.gmra.mrb[0].mxu0 %v7085
      %v7130 = vpop.f32.mrb[0].mxu0
      %v7131 = vadd.f32 0.0, %v7130
      %v7132 = vpop.f32.mrb[0].mxu0
      %v7133 = vpop.f32.mrb[0].mxu0
      %v7134 = vadd.f32 0.0, %v7133
      %v7135 = vpop.f32.mrb[0].mxu0
      %7136 = vmatprep.mubr.bf16.mxu0 0
      %7137 = vmatmul.mubr.bf16.gmra.mrb[0].mxu0 %v7088
      %v7138 = vpop.f32.mrb[0].mxu0
      %v7139 = vadd.f32 0.0, %v7138
      %v7140 = vpop.f32.mrb[0].mxu0
      %v7141 = vpop.f32.mrb[0].mxu0
      %v7142 = vadd.f32 0.0, %v7141
      %v7143 = vpop.f32.mrb[0].mxu0
      %7144 = vmatprep.mubr.bf16.mxu0 0
      %7145 = vmatmul.mubr.bf16.gmra.mrb[0].mxu0 %v7091
      %v7146 = vpop.f32.mrb[0].mxu0
      %v7147 = vadd.f32 0.0, %v7146
      %v7148 = vpop.f32.mrb[0].mxu0
      %v7149 = vpop.f32.mrb[0].mxu0
      %v7150 = vadd.f32 0.0, %v7149
      %v7151 = vpop.f32.mrb[0].mxu0
      %7152 = vmatprep.mubr.bf16.mxu0 0
      %7153 = vmatmul.mubr.bf16.gmra.mrb[0].mxu0 %v7094
      %v7154 = vpop.f32.mrb[0].mxu0
      %v7155 = vadd.f32 0.0, %v7154
      %v7156 = vpop.f32.mrb[0].mxu0
      %v7157 = vpop.f32.mrb[0].mxu0
      %v7158 = vadd.f32 0.0, %v7157
      %v7159 = vpop.f32.mrb[0].mxu0
      %7160 = vdwg.mxu0
      %v7161 = vadd.f32 %v7041, %v7131
      %v7162 = vadd.f32 %v7042, %v7134
      %v7163 = vadd.f32 %v7043, %v7139
      %v7164 = vadd.f32 %v7044, %v7142
      %v7165 = vadd.f32 %v7045, %v7147
      %v7166 = vadd.f32 %v7046, %v7150
      %v7167 = vadd.f32 %v7047, %v7155
      %v7168 = vadd.f32 %v7048, %v7158
      %v7169 = vld [vmem:[%s9] sm:$0xff]
      %v7170 = vld [vmem:[%s9 + $0x8] sm:$0xff]
      %v7171 = vld [vmem:[%s9 + $0x10] sm:$0xff]
      %v7172 = vld [vmem:[%s9 + $0x18] sm:$0xff]
      %v7173 = vld [vmem:[%s9 + $0x20] sm:$0xff]
      %v7174 = vld [vmem:[%s9 + $0x28] sm:$0xff]
      %v7175 = vld [vmem:[%s9 + $0x30] sm:$0xff]
      %v7176 = vld [vmem:[%s9 + $0x38] sm:$0xff]
      %7178 = vset.pattern.permute.xlu0 0
      %7179 = vperm.xlu0 %7178, %v7169
      %v7180 = vpop.permute.xlu0 %7179
      %7183 = vset.pattern.permute.xlu0 0
      %7184 = vperm.xlu0 %7183, %v7170
      %v7185 = vpop.permute.xlu0 %7184
      %7188 = vset.pattern.permute.xlu0 0
      %7189 = vperm.xlu0 %7188, %v7171
      %v7190 = vpop.permute.xlu0 %7189
      %7193 = vset.pattern.permute.xlu0 0
      %7194 = vperm.xlu0 %7193, %v7172
      %v7195 = vpop.permute.xlu0 %7194
      %7198 = vset.pattern.permute.xlu0 0
      %7199 = vperm.xlu0 %7198, %v7173
      %v7200 = vpop.permute.xlu0 %7199
      %7203 = vset.pattern.permute.xlu0 0
      %7204 = vperm.xlu0 %7203, %v7174
      %v7205 = vpop.permute.xlu0 %7204
      %7208 = vset.pattern.permute.xlu0 0
      %7209 = vperm.xlu0 %7208, %v7175
      %v7210 = vpop.permute.xlu0 %7209
      %7213 = vset.pattern.permute.xlu0 0
      %7214 = vperm.xlu0 %7213, %v7176
      %v7215 = vpop.permute.xlu0 %7214
      %v7217 = vadd.f32 %v7161, %v7180
      %v7218 = vadd.f32 %v7162, %v7185
      %v7219 = vadd.f32 %v7163, %v7190
      %v7220 = vadd.f32 %v7164, %v7195
      %v7221 = vadd.f32 %v7165, %v7200
      %v7222 = vadd.f32 %v7166, %v7205
      %v7223 = vadd.f32 %v7167, %v7210
      %v7224 = vadd.f32 %v7168, %v7215
      %v7225 = vmul.f32 %v7217, 0.1
      %v7226 = vmul.f32 %v7218, 0.1
      %v7227 = vmul.f32 %v7219, 0.1
      %v7228 = vmul.f32 %v7220, 0.1
      %v7229 = vmul.f32 %v7221, 0.1
      %v7230 = vmul.f32 %v7222, 0.1
      %v7231 = vmul.f32 %v7223, 0.1
      %v7232 = vmul.f32 %v7224, 0.1
      %v7233 = vmax.f32 %v7217, %v7225
      %v7234 = vmax.f32 %v7218, %v7226
      %v7235 = vmax.f32 %v7219, %v7227
      %v7236 = vmax.f32 %v7220, %v7228
      %v7237 = vmax.f32 %v7221, %v7229
      %v7238 = vmax.f32 %v7222, %v7230
      %v7239 = vmax.f32 %v7223, %v7231
      %v7240 = vmax.f32 %v7224, %v7232
      %v7241 = vpack.c.bf16 %v7234, %v7233
      %v7242 = vpack.c.bf16 %v7236, %v7235
      %v7243 = vpack.c.bf16 %v7238, %v7237
      %v7244 = vpack.c.bf16 %v7240, %v7239
      %v7245 = vld [vmem:[%s3] sm:$0xf]
      %v7246 = vld [vmem:[%s3 + $0x4] sm:$0xf]
      %v7247 = vld [vmem:[%s3 + $0x8] sm:$0xf]
      %v7248 = vld [vmem:[%s3 + $0xc] sm:$0xf]
      %v7249 = vld [vmem:[%s3 + $0x10] sm:$0xf]
      %v7250 = vld [vmem:[%s3 + $0x14] sm:$0xf]
      %v7251 = vld [vmem:[%s3 + $0x18] sm:$0xf]
      %v7252 = vld [vmem:[%s3 + $0x1c] sm:$0xf]
      %v7253 = vld [vmem:[%s3 + $0x20] sm:$0xf]
      %v7254 = vld [vmem:[%s3 + $0x24] sm:$0x7]
      %v7265 = vunpack.c.l.b16 %v7245
      %v7266 = vunpack.c.l.b16 %v7246
      %v7267 = vunpack.c.l.b16 %v7247
      %v7268 = vunpack.c.l.b16 %v7248
      %v7269 = vunpack.c.l.b16 %v7249
      %v7270 = vunpack.c.l.b16 %v7250
      %v7271 = vunpack.c.l.b16 %v7251
      %v7272 = vunpack.c.l.b16 %v7252
      %v7273 = vunpack.c.l.b16 %v7253
      %v7274 = vunpack.c.l.b16 %v7254
      %v7275 = vpack.c.b16 %v7266, %v7265
      %v7276 = vpack.c.b16 %v7268, %v7267
      %v7277 = vpack.c.b16 %v7270, %v7269
      %v7278 = vpack.c.b16 %v7272, %v7271
      %v7279 = vpack.c.b16 %v7274, %v7273
      %vm7284 = vcmask 637952
      %v7286 = vsel %vm7284, %v7241, 0
      %v7289 = vsel %vm7284, %v7242, 0
      %v7292 = vsel %vm7284, %v7243, 0
      %v7295 = vsel %vm7284, %v7244, 0
      %vm7297 = vcmask 1046528
      %v7299 = vsel %vm7297, %v7279, 0
      %7301 = vmatprep.subr.bf16.mxu0 0
      %7302 = vmatpush1.bf16.msra.mxu0 %v7275
      %7303 = vmatprep.subr.bf16.mxu0 0
      %7304 = vmatpush1.bf16.msra.mxu0 %v7276
      %7305 = vmatprep.subr.bf16.mxu0 0
      %7306 = vmatpush1.bf16.msra.mxu0 %v7277
      %7307 = vmatprep.subr.bf16.mxu0 0
      %7308 = vmatpush1.bf16.msra.mxu0 %v7278
      %7309 = vmatprep.subr.bf16.mxu0 0
      %7310 = vmatpush1.bf16.msra.mxu0 %v7299
      %7311 = vmatprep.subr.bf16.mxu0 0
      %7312 = vmatpush1.bf16.msra.mxu0 0
      %7313 = vmatprep.subr.bf16.mxu0 0
      %7314 = vmatpush1.bf16.msra.mxu0 0
      %7315 = vmatprep.subr.bf16.mxu0 0
      %7316 = vmatpush1.bf16.msra.mxu0 0
      %7317 = vmatprep.subr.bf16.mxu0 0
      %7318 = vmatpush1.bf16.msra.mxu0 0
      %7319 = vmatprep.subr.bf16.mxu0 0
      %7320 = vmatpush1.bf16.msra.mxu0 0
      %7321 = vmatprep.subr.bf16.mxu0 0
      %7322 = vmatpush1.bf16.msra.mxu0 0
      %7323 = vmatprep.subr.bf16.mxu0 0
      %7324 = vmatpush1.bf16.msra.mxu0 0
      %7325 = vmatprep.subr.bf16.mxu0 0
      %7326 = vmatpush1.bf16.msra.mxu0 0
      %7327 = vmatprep.subr.bf16.mxu0 0
      %7328 = vmatpush1.bf16.msra.mxu0 0
      %7329 = vmatprep.subr.bf16.mxu0 0
      %7330 = vmatpush1.bf16.msra.mxu0 0
      %7331 = vmatprep.subr.bf16.mxu0 0
      %7332 = vmatpush1.bf16.msra.mxu0 0
      %7333 = vmatprep.mubr.bf16.mxu0 0
      %7334 = vmatmul.mubr.bf16.gmra.mrb[0].mxu0 %v7286
      %v7335 = vpop.f32.mrb[0].mxu0
      %v7336 = vadd.f32 0.0, %v7335
      %v7337 = vpop.f32.mrb[0].mxu0
      %v7338 = vpop.f32.mrb[0].mxu0
      %v7339 = vadd.f32 0.0, %v7338
      %v7340 = vpop.f32.mrb[0].mxu0
      %7341 = vmatprep.mubr.bf16.mxu0 0
      %7342 = vmatmul.mubr.bf16.gmra.mrb[0].mxu0 %v7289
      %v7343 = vpop.f32.mrb[0].mxu0
      %v7344 = vadd.f32 0.0, %v7343
      %v7345 = vpop.f32.mrb[0].mxu0
      %v7346 = vpop.f32.mrb[0].mxu0
      %v7347 = vadd.f32 0.0, %v7346
      %v7348 = vpop.f32.mrb[0].mxu0
      %7349 = vmatprep.mubr.bf16.mxu0 0
      %7350 = vmatmul.mubr.bf16.gmra.mrb[0].mxu0 %v7292
      %v7351 = vpop.f32.mrb[0].mxu0
      %v7352 = vadd.f32 0.0, %v7351
      %v7353 = vpop.f32.mrb[0].mxu0
      %v7354 = vpop.f32.mrb[0].mxu0
      %v7355 = vadd.f32 0.0, %v7354
      %v7356 = vpop.f32.mrb[0].mxu0
      %7357 = vmatprep.mubr.bf16.mxu0 0
      %7358 = vmatmul.mubr.bf16.gmra.mrb[0].mxu0 %v7295
      %v7359 = vpop.f32.mrb[0].mxu0
      %v7360 = vadd.f32 0.0, %v7359
      %v7361 = vpop.f32.mrb[0].mxu0
      %v7362 = vpop.f32.mrb[0].mxu0
      %v7363 = vadd.f32 0.0, %v7362
      %v7364 = vpop.f32.mrb[0].mxu0
      %7365 = vdwg.mxu0
      %v7366 = vpack.c.bf16 %v7339, %v7336
      %v7367 = vpack.c.bf16 %v7347, %v7344
      %v7368 = vpack.c.bf16 %v7355, %v7352
      %v7369 = vpack.c.bf16 %v7363, %v7360
      %v7370 = vld [vmem:[%s10] sm:$0xf]
      %v7371 = vld [vmem:[%s10 + $0x4] sm:$0xf]
      %v7372 = vld [vmem:[%s10 + $0x8] sm:$0xf]
      %v7373 = vld [vmem:[%s10 + $0xc] sm:$0xf]
      %v7374 = vld [vmem:[%s10 + $0x10] sm:$0xf]
      %v7375 = vld [vmem:[%s10 + $0x14] sm:$0xf]
      %v7376 = vld [vmem:[%s10 + $0x18] sm:$0xf]
      %v7377 = vld [vmem:[%s10 + $0x1c] sm:$0xf]
      %v7378 = vld [vmem:[%s10 + $0x20] sm:$0xf]
      %v7379 = vld [vmem:[%s10 + $0x24] sm:$0xf]
      %v7380 = vld [vmem:[%s10 + $0x28] sm:$0xf]
      %v7381 = vld [vmem:[%s10 + $0x2c] sm:$0xf]
      %v7382 = vld [vmem:[%s10 + $0x30] sm:$0xf]
      %v7383 = vld [vmem:[%s10 + $0x34] sm:$0xf]
      %v7384 = vld [vmem:[%s10 + $0x38] sm:$0xf]
      %v7385 = vld [vmem:[%s10 + $0x3c] sm:$0xf]
      %v7386 = vld [vmem:[%s10 + $0x40] sm:$0xf]
      %v7387 = vld [vmem:[%s10 + $0x44] sm:$0xf]
      %v7388 = vld [vmem:[%s10 + $0x48] sm:$0xf]
      %v7389 = vld [vmem:[%s10 + $0x4c] sm:$0xf]
      %v7390 = vld [vmem:[%s10 + $0x50] sm:$0xf]
      %v7391 = vld [vmem:[%s10 + $0x54] sm:$0xf]
      %v7392 = vld [vmem:[%s10 + $0x58] sm:$0xf]
      %v7393 = vld [vmem:[%s10 + $0x5c] sm:$0xf]
      %v7394 = vld [vmem:[%s10 + $0x60] sm:$0xf]
      %v7395 = vld [vmem:[%s10 + $0x64] sm:$0xf]
      %v7396 = vld [vmem:[%s10 + $0x68] sm:$0xf]
      %v7397 = vld [vmem:[%s10 + $0x6c] sm:$0xf]
      %v7398 = vld [vmem:[%s10 + $0x70] sm:$0xf]
      %v7399 = vld [vmem:[%s10 + $0x74] sm:$0xf]
      %v7400 = vld [vmem:[%s10 + $0x78] sm:$0xf]
      %v7401 = vld [vmem:[%s10 + $0x7c] sm:$0xf]
      %v7402 = vld [vmem:[%s10 + $0x80] sm:$0xf]
      %v7403 = vld [vmem:[%s10 + $0x84] sm:$0xf]
      %v7404 = vld [vmem:[%s10 + $0x88] sm:$0xf]
      %v7405 = vld [vmem:[%s10 + $0x8c] sm:$0xf]
      %v7406 = vld [vmem:[%s10 + $0x90] sm:$0xf]
      %v7407 = vld [vmem:[%s10 + $0x94] sm:$0xf]
      %v7408 = vld [vmem:[%s10 + $0x98] sm:$0xf]
      %v7409 = vld [vmem:[%s10 + $0x9c] sm:$0xf]
      %v7410 = vld [vmem:[%s10 + $0xa0] sm:$0xf]
      %v7411 = vld [vmem:[%s10 + $0xa4] sm:$0xf]
      %v7412 = vld [vmem:[%s10 + $0xa8] sm:$0xf]
      %v7413 = vld [vmem:[%s10 + $0xac] sm:$0xf]
      %v7414 = vld [vmem:[%s10 + $0xb0] sm:$0xf]
      %v7415 = vld [vmem:[%s10 + $0xb4] sm:$0xf]
      %v7416 = vld [vmem:[%s10 + $0xb8] sm:$0xf]
      %v7417 = vld [vmem:[%s10 + $0xbc] sm:$0xf]
      %v7418 = vld [vmem:[%s10 + $0xc0] sm:$0xf]
      %v7419 = vld [vmem:[%s10 + $0xc4] sm:$0xf]
      %v7420 = vld [vmem:[%s10 + $0xc8] sm:$0xf]
      %v7421 = vld [vmem:[%s10 + $0xcc] sm:$0xf]
      %v7422 = vld [vmem:[%s10 + $0xd0] sm:$0xf]
      %v7423 = vld [vmem:[%s10 + $0xd4] sm:$0xf]
      %v7424 = vld [vmem:[%s11] sm:$0xff]
      %v7425 = vld [vmem:[%s11 + $0x8] sm:$0xff]
      %v7426 = vld [vmem:[%s11 + $0x10] sm:$0xff]
      %v7427 = vld [vmem:[%s11 + $0x18] sm:$0xff]
      %v7428 = vld [vmem:[%s11 + $0x20] sm:$0xff]
      %v7429 = vld [vmem:[%s11 + $0x28] sm:$0xff]
      %v7430 = vld [vmem:[%s11 + $0x30] sm:$0xff]
      %v7431 = vld [vmem:[%s11 + $0x38] sm:$0xff]
      %v7432 = vld [vmem:[%s11 + $0x40] sm:$0xff]
      %v7433 = vld [vmem:[%s11 + $0x48] sm:$0xff]
      %v7434 = vld [vmem:[%s11 + $0x50] sm:$0xff]
      %v7435 = vld [vmem:[%s11 + $0x58] sm:$0xff]
      %v7436 = vld [vmem:[%s11 + $0x60] sm:$0xff]
      %v7437 = vld [vmem:[%s11 + $0x68] sm:$0xff]
      %v7438 = vld [vmem:[%s11 + $0x70] sm:$0xff]
      %v7439 = vld [vmem:[%s11 + $0x78] sm:$0xff]
      %v7440 = vld [vmem:[%s11 + $0x80] sm:$0xff]
      %v7441 = vld [vmem:[%s11 + $0x88] sm:$0xff]
      %v7442 = vld [vmem:[%s11 + $0x90] sm:$0xff]
      %v7443 = vld [vmem:[%s11 + $0x98] sm:$0xff]
      %v7444 = vld [vmem:[%s11 + $0xa0] sm:$0xff]
      %v7445 = vld [vmem:[%s11 + $0xa8] sm:$0xff]
      %v7446 = vld [vmem:[%s11 + $0xb0] sm:$0xff]
      %v7447 = vld [vmem:[%s11 + $0xb8] sm:$0xff]
      %v7448 = vld [vmem:[%s11 + $0xc0] sm:$0xff]
      %v7449 = vld [vmem:[%s11 + $0xc8] sm:$0xff]
      %v7450 = vld [vmem:[%s11 + $0xd0] sm:$0xff]
      %v7451 = vld [vmem:[%s11 + $0xd8] sm:$0xff]
      %v7452 = vld [vmem:[%s11 + $0xe0] sm:$0xff]
      %v7453 = vld [vmem:[%s11 + $0xe8] sm:$0xff]
      %v7454 = vld [vmem:[%s11 + $0xf0] sm:$0xff]
      %v7455 = vld [vmem:[%s11 + $0xf8] sm:$0xff]
      %v7456 = vld [vmem:[%s11 + $0x100] sm:$0xff]
      %v7457 = vld [vmem:[%s11 + $0x108] sm:$0xff]
      %v7458 = vld [vmem:[%s11 + $0x110] sm:$0xff]
      %v7459 = vld [vmem:[%s11 + $0x118] sm:$0xff]
      %v7460 = vld [vmem:[%s11 + $0x120] sm:$0xff]
      %v7461 = vld [vmem:[%s11 + $0x128] sm:$0xff]
      %v7462 = vld [vmem:[%s11 + $0x130] sm:$0xff]
      %v7463 = vld [vmem:[%s11 + $0x138] sm:$0xff]
      %v7464 = vld [vmem:[%s11 + $0x140] sm:$0xff]
      %v7465 = vld [vmem:[%s11 + $0x148] sm:$0xff]
      %v7466 = vld [vmem:[%s11 + $0x150] sm:$0xff]
      %v7467 = vld [vmem:[%s11 + $0x158] sm:$0xff]
      %v7468 = vld [vmem:[%s11 + $0x160] sm:$0xff]
      %v7469 = vld [vmem:[%s11 + $0x168] sm:$0xff]
      %v7470 = vld [vmem:[%s11 + $0x170] sm:$0xff]
      %v7471 = vld [vmem:[%s11 + $0x178] sm:$0xff]
      %v7472 = vld [vmem:[%s11 + $0x180] sm:$0xff]
      %v7473 = vld [vmem:[%s11 + $0x188] sm:$0xff]
      %v7474 = vld [vmem:[%s11 + $0x190] sm:$0xff]
      %v7475 = vld [vmem:[%s11 + $0x198] sm:$0xff]
      %v7476 = vld [vmem:[%s11 + $0x1a0] sm:$0xff]
      %v7477 = vld [vmem:[%s11 + $0x1a8] sm:$0xff]
      %7479 = vset.pattern.permute.xlu0 0
      %7480 = vperm.xlu0 %7479, %v7424
      %v7481 = vpop.permute.xlu0 %7480
      %7484 = vset.pattern.permute.xlu0 0
      %7485 = vperm.xlu0 %7484, %v7425
      %v7486 = vpop.permute.xlu0 %7485
      %7489 = vset.pattern.permute.xlu0 0
      %7490 = vperm.xlu0 %7489, %v7426
      %v7491 = vpop.permute.xlu0 %7490
      %7494 = vset.pattern.permute.xlu0 0
      %7495 = vperm.xlu0 %7494, %v7427
      %v7496 = vpop.permute.xlu0 %7495
      %7499 = vset.pattern.permute.xlu0 0
      %7500 = vperm.xlu0 %7499, %v7428
      %v7501 = vpop.permute.xlu0 %7500
      %7504 = vset.pattern.permute.xlu0 0
      %7505 = vperm.xlu0 %7504, %v7429
      %v7506 = vpop.permute.xlu0 %7505
      %7509 = vset.pattern.permute.xlu0 0
      %7510 = vperm.xlu0 %7509, %v7430
      %v7511 = vpop.permute.xlu0 %7510
      %7514 = vset.pattern.permute.xlu0 0
      %7515 = vperm.xlu0 %7514, %v7431
      %v7516 = vpop.permute.xlu0 %7515
      %7519 = vset.pattern.permute.xlu0 0
      %7520 = vperm.xlu0 %7519, %v7432
      %v7521 = vpop.permute.xlu0 %7520
      %7524 = vset.pattern.permute.xlu0 0
      %7525 = vperm.xlu0 %7524, %v7433
      %v7526 = vpop.permute.xlu0 %7525
      %7529 = vset.pattern.permute.xlu0 0
      %7530 = vperm.xlu0 %7529, %v7434
      %v7531 = vpop.permute.xlu0 %7530
      %7534 = vset.pattern.permute.xlu0 0
      %7535 = vperm.xlu0 %7534, %v7435
      %v7536 = vpop.permute.xlu0 %7535
      %7539 = vset.pattern.permute.xlu0 0
      %7540 = vperm.xlu0 %7539, %v7436
      %v7541 = vpop.permute.xlu0 %7540
      %7544 = vset.pattern.permute.xlu0 0
      %7545 = vperm.xlu0 %7544, %v7437
      %v7546 = vpop.permute.xlu0 %7545
      %7549 = vset.pattern.permute.xlu0 0
      %7550 = vperm.xlu0 %7549, %v7438
      %v7551 = vpop.permute.xlu0 %7550
      %7554 = vset.pattern.permute.xlu0 0
      %7555 = vperm.xlu0 %7554, %v7439
      %v7556 = vpop.permute.xlu0 %7555
      %7559 = vset.pattern.permute.xlu0 0
      %7560 = vperm.xlu0 %7559, %v7440
      %v7561 = vpop.permute.xlu0 %7560
      %7564 = vset.pattern.permute.xlu0 0
      %7565 = vperm.xlu0 %7564, %v7441
      %v7566 = vpop.permute.xlu0 %7565
      %7569 = vset.pattern.permute.xlu0 0
      %7570 = vperm.xlu0 %7569, %v7442
      %v7571 = vpop.permute.xlu0 %7570
      %7574 = vset.pattern.permute.xlu0 0
      %7575 = vperm.xlu0 %7574, %v7443
      %v7576 = vpop.permute.xlu0 %7575
      %7579 = vset.pattern.permute.xlu0 0
      %7580 = vperm.xlu0 %7579, %v7444
      %v7581 = vpop.permute.xlu0 %7580
      %7584 = vset.pattern.permute.xlu0 0
      %7585 = vperm.xlu0 %7584, %v7445
      %v7586 = vpop.permute.xlu0 %7585
      %7589 = vset.pattern.permute.xlu0 0
      %7590 = vperm.xlu0 %7589, %v7446
      %v7591 = vpop.permute.xlu0 %7590
      %7594 = vset.pattern.permute.xlu0 0
      %7595 = vperm.xlu0 %7594, %v7447
      %v7596 = vpop.permute.xlu0 %7595
      %7599 = vset.pattern.permute.xlu0 0
      %7600 = vperm.xlu0 %7599, %v7448
      %v7601 = vpop.permute.xlu0 %7600
      %7604 = vset.pattern.permute.xlu0 0
      %7605 = vperm.xlu0 %7604, %v7449
      %v7606 = vpop.permute.xlu0 %7605
      %7609 = vset.pattern.permute.xlu0 0
      %7610 = vperm.xlu0 %7609, %v7450
      %v7611 = vpop.permute.xlu0 %7610
      %7614 = vset.pattern.permute.xlu0 0
      %7615 = vperm.xlu0 %7614, %v7451
      %v7616 = vpop.permute.xlu0 %7615
      %7619 = vset.pattern.permute.xlu0 0
      %7620 = vperm.xlu0 %7619, %v7452
      %v7621 = vpop.permute.xlu0 %7620
      %7624 = vset.pattern.permute.xlu0 0
      %7625 = vperm.xlu0 %7624, %v7453
      %v7626 = vpop.permute.xlu0 %7625
      %7629 = vset.pattern.permute.xlu0 0
      %7630 = vperm.xlu0 %7629, %v7454
      %v7631 = vpop.permute.xlu0 %7630
      %7634 = vset.pattern.permute.xlu0 0
      %7635 = vperm.xlu0 %7634, %v7455
      %v7636 = vpop.permute.xlu0 %7635
      %7639 = vset.pattern.permute.xlu0 0
      %7640 = vperm.xlu0 %7639, %v7456
      %v7641 = vpop.permute.xlu0 %7640
      %7644 = vset.pattern.permute.xlu0 0
      %7645 = vperm.xlu0 %7644, %v7457
      %v7646 = vpop.permute.xlu0 %7645
      %7649 = vset.pattern.permute.xlu0 0
      %7650 = vperm.xlu0 %7649, %v7458
      %v7651 = vpop.permute.xlu0 %7650
      %7654 = vset.pattern.permute.xlu0 0
      %7655 = vperm.xlu0 %7654, %v7459
      %v7656 = vpop.permute.xlu0 %7655
      %7659 = vset.pattern.permute.xlu0 0
      %7660 = vperm.xlu0 %7659, %v7460
      %v7661 = vpop.permute.xlu0 %7660
      %7664 = vset.pattern.permute.xlu0 0
      %7665 = vperm.xlu0 %7664, %v7461
      %v7666 = vpop.permute.xlu0 %7665
      %7669 = vset.pattern.permute.xlu0 0
      %7670 = vperm.xlu0 %7669, %v7462
      %v7671 = vpop.permute.xlu0 %7670
      %7674 = vset.pattern.permute.xlu0 0
      %7675 = vperm.xlu0 %7674, %v7463
      %v7676 = vpop.permute.xlu0 %7675
      %7679 = vset.pattern.permute.xlu0 0
      %7680 = vperm.xlu0 %7679, %v7464
      %v7681 = vpop.permute.xlu0 %7680
      %7684 = vset.pattern.permute.xlu0 0
      %7685 = vperm.xlu0 %7684, %v7465
      %v7686 = vpop.permute.xlu0 %7685
      %7689 = vset.pattern.permute.xlu0 0
      %7690 = vperm.xlu0 %7689, %v7466
      %v7691 = vpop.permute.xlu0 %7690
      %7694 = vset.pattern.permute.xlu0 0
      %7695 = vperm.xlu0 %7694, %v7467
      %v7696 = vpop.permute.xlu0 %7695
      %7699 = vset.pattern.permute.xlu0 0
      %7700 = vperm.xlu0 %7699, %v7468
      %v7701 = vpop.permute.xlu0 %7700
      %7704 = vset.pattern.permute.xlu0 0
      %7705 = vperm.xlu0 %7704, %v7469
      %v7706 = vpop.permute.xlu0 %7705
      %7709 = vset.pattern.permute.xlu0 0
      %7710 = vperm.xlu0 %7709, %v7470
      %v7711 = vpop.permute.xlu0 %7710
      %7714 = vset.pattern.permute.xlu0 0
      %7715 = vperm.xlu0 %7714, %v7471
      %v7716 = vpop.permute.xlu0 %7715
      %7719 = vset.pattern.permute.xlu0 0
      %7720 = vperm.xlu0 %7719, %v7472
      %v7721 = vpop.permute.xlu0 %7720
      %7724 = vset.pattern.permute.xlu0 0
      %7725 = vperm.xlu0 %7724, %v7473
      %v7726 = vpop.permute.xlu0 %7725
      %7729 = vset.pattern.permute.xlu0 0
      %7730 = vperm.xlu0 %7729, %v7474
      %v7731 = vpop.permute.xlu0 %7730
      %7734 = vset.pattern.permute.xlu0 0
      %7735 = vperm.xlu0 %7734, %v7475
      %v7736 = vpop.permute.xlu0 %7735
      %7739 = vset.pattern.permute.xlu0 0
      %7740 = vperm.xlu0 %7739, %v7476
      %v7741 = vpop.permute.xlu0 %7740
      %7744 = vset.pattern.permute.xlu0 0
      %7745 = vperm.xlu0 %7744, %v7477
      %v7746 = vpop.permute.xlu0 %7745
      %v7802 = vunpack.c.l.b16 %v7370
      %v7803 = vunpack.c.l.b16 %v7371
      %v7804 = vunpack.c.l.b16 %v7372
      %v7805 = vunpack.c.l.b16 %v7373
      %v7806 = vunpack.c.l.b16 %v7374
      %v7807 = vunpack.c.l.b16 %v7375
      %v7808 = vunpack.c.l.b16 %v7376
      %v7809 = vunpack.c.l.b16 %v7377
      %v7810 = vunpack.c.l.b16 %v7378
      %v7811 = vunpack.c.l.b16 %v7379
      %v7812 = vunpack.c.l.b16 %v7380
      %v7813 = vunpack.c.l.b16 %v7381
      %v7814 = vunpack.c.l.b16 %v7382
      %v7815 = vunpack.c.l.b16 %v7383
      %v7816 = vunpack.c.l.b16 %v7384
      %v7817 = vunpack.c.l.b16 %v7385
      %v7818 = vunpack.c.l.b16 %v7386
      %v7819 = vunpack.c.l.b16 %v7387
      %v7820 = vunpack.c.l.b16 %v7388
      %v7821 = vunpack.c.l.b16 %v7389
      %v7822 = vunpack.c.l.b16 %v7390
      %v7823 = vunpack.c.l.b16 %v7391
      %v7824 = vunpack.c.l.b16 %v7392
      %v7825 = vunpack.c.l.b16 %v7393
      %v7826 = vunpack.c.l.b16 %v7394
      %v7827 = vunpack.c.l.b16 %v7395
      %v7828 = vunpack.c.l.b16 %v7396
      %v7829 = vunpack.c.l.b16 %v7397
      %v7830 = vunpack.c.l.b16 %v7398
      %v7831 = vunpack.c.l.b16 %v7399
      %v7832 = vunpack.c.l.b16 %v7400
      %v7833 = vunpack.c.l.b16 %v7401
      %v7834 = vunpack.c.l.b16 %v7402
      %v7835 = vunpack.c.l.b16 %v7403
      %v7836 = vunpack.c.l.b16 %v7404
      %v7837 = vunpack.c.l.b16 %v7405
      %v7838 = vunpack.c.l.b16 %v7406
      %v7839 = vunpack.c.l.b16 %v7407
      %v7840 = vunpack.c.l.b16 %v7408
      %v7841 = vunpack.c.l.b16 %v7409
      %v7842 = vunpack.c.l.b16 %v7410
      %v7843 = vunpack.c.l.b16 %v7411
      %v7844 = vunpack.c.l.b16 %v7412
      %v7845 = vunpack.c.l.b16 %v7413
      %v7846 = vunpack.c.l.b16 %v7414
      %v7847 = vunpack.c.l.b16 %v7415
      %v7848 = vunpack.c.l.b16 %v7416
      %v7849 = vunpack.c.l.b16 %v7417
      %v7850 = vunpack.c.l.b16 %v7418
      %v7851 = vunpack.c.l.b16 %v7419
      %v7852 = vunpack.c.l.b16 %v7420
      %v7853 = vunpack.c.l.b16 %v7421
      %v7854 = vunpack.c.l.b16 %v7422
      %v7855 = vunpack.c.l.b16 %v7423
      %v7856 = vpack.c.b16 %v7803, %v7802
      %v7857 = vpack.c.b16 %v7805, %v7804
      %v7858 = vpack.c.b16 %v7807, %v7806
      %v7859 = vpack.c.b16 %v7809, %v7808
      %v7860 = vpack.c.b16 %v7811, %v7810
      %v7861 = vpack.c.b16 %v7813, %v7812
      %v7862 = vpack.c.b16 %v7815, %v7814
      %v7863 = vpack.c.b16 %v7817, %v7816
      %v7864 = vpack.c.b16 %v7819, %v7818
      %v7865 = vpack.c.b16 %v7821, %v7820
      %v7866 = vpack.c.b16 %v7823, %v7822
      %v7867 = vpack.c.b16 %v7825, %v7824
      %v7868 = vpack.c.b16 %v7827, %v7826
      %v7869 = vpack.c.b16 %v7829, %v7828
      %v7870 = vpack.c.b16 %v7831, %v7830
      %v7871 = vpack.c.b16 %v7833, %v7832
      %v7872 = vpack.c.b16 %v7835, %v7834
      %v7873 = vpack.c.b16 %v7837, %v7836
      %v7874 = vpack.c.b16 %v7839, %v7838
      %v7875 = vpack.c.b16 %v7841, %v7840
      %v7876 = vpack.c.b16 %v7843, %v7842
      %v7877 = vpack.c.b16 %v7845, %v7844
      %v7878 = vpack.c.b16 %v7847, %v7846
      %v7879 = vpack.c.b16 %v7849, %v7848
      %v7880 = vpack.c.b16 %v7851, %v7850
      %v7881 = vpack.c.b16 %v7853, %v7852
      %v7882 = vpack.c.b16 %v7855, %v7854
      %vm7883 = vcmask 523264
      %v7885 = vsel %vm7883, %v7856, 0
      %v7888 = vsel %vm7883, %v7857, 0
      %v7891 = vsel %vm7883, %v7858, 0
      %v7894 = vsel %vm7883, %v7859, 0
      %v7897 = vsel %vm7883, %v7860, 0
      %v7900 = vsel %vm7883, %v7861, 0
      %v7903 = vsel %vm7883, %v7862, 0
      %v7906 = vsel %vm7883, %v7863, 0
      %v7909 = vsel %vm7883, %v7864, 0
      %v7912 = vsel %vm7883, %v7865, 0
      %v7915 = vsel %vm7883, %v7866, 0
      %v7918 = vsel %vm7883, %v7867, 0
      %v7921 = vsel %vm7883, %v7868, 0
      %v7924 = vsel %vm7883, %v7869, 0
      %v7927 = vsel %vm7883, %v7870, 0
      %v7930 = vsel %vm7883, %v7871, 0
      %v7933 = vsel %vm7883, %v7872, 0
      %v7936 = vsel %vm7883, %v7873, 0
      %v7939 = vsel %vm7883, %v7874, 0
      %v7942 = vsel %vm7883, %v7875, 0
      %v7945 = vsel %vm7883, %v7876, 0
      %v7948 = vsel %vm7883, %v7877, 0
      %v7951 = vsel %vm7883, %v7878, 0
      %v7954 = vsel %vm7883, %v7879, 0
      %v7957 = vsel %vm7883, %v7880, 0
      %v7960 = vsel %vm7883, %v7881, 0
      %v7963 = vsel %vm7883, %v7882, 0
      %7965 = vmatprep.subr.bf16.mxu0 0
      %7966 = vmatpush1.bf16.msra.mxu0 %v7366
      %7967 = vmatprep.subr.bf16.mxu0 0
      %7968 = vmatpush1.bf16.msra.mxu0 %v7367
      %7969 = vmatprep.subr.bf16.mxu0 0
      %7970 = vmatpush1.bf16.msra.mxu0 %v7368
      %7971 = vmatprep.subr.bf16.mxu0 0
      %7972 = vmatpush1.bf16.msra.mxu0 %v7369
      %7973 = vmatprep.subr.bf16.mxu0 0
      %7974 = vmatpush1.bf16.msra.mxu0 0
      %7975 = vmatprep.subr.bf16.mxu0 0
      %7976 = vmatpush1.bf16.msra.mxu0 0
      %7977 = vmatprep.subr.bf16.mxu0 0
      %7978 = vmatpush1.bf16.msra.mxu0 0
      %7979 = vmatprep.subr.bf16.mxu0 0
      %7980 = vmatpush1.bf16.msra.mxu0 0
      %7981 = vmatprep.subr.bf16.mxu0 0
      %7982 = vmatpush1.bf16.msra.mxu0 0
      %7983 = vmatprep.subr.bf16.mxu0 0
      %7984 = vmatpush1.bf16.msra.mxu0 0
      %7985 = vmatprep.subr.bf16.mxu0 0
      %7986 = vmatpush1.bf16.msra.mxu0 0
      %7987 = vmatprep.subr.bf16.mxu0 0
      %7988 = vmatpush1.bf16.msra.mxu0 0
      %7989 = vmatprep.subr.bf16.mxu0 0
      %7990 = vmatpush1.bf16.msra.mxu0 0
      %7991 = vmatprep.subr.bf16.mxu0 0
      %7992 = vmatpush1.bf16.msra.mxu0 0
      %7993 = vmatprep.subr.bf16.mxu0 0
      %7994 = vmatpush1.bf16.msra.mxu0 0
      %7995 = vmatprep.subr.bf16.mxu0 0
      %7996 = vmatpush1.bf16.msra.mxu0 0
      %7997 = vmatprep.mubr.bf16.mxu0 0
      %7998 = vmatmul.mubr.bf16.gmra.mrb[0].mxu0 %v7885
      %v7999 = vpop.f32.mrb[0].mxu0
      %v8000 = vadd.f32 %v7481, %v7999
      %v8001 = vpop.f32.mrb[0].mxu0
      %v8002 = vpop.f32.mrb[0].mxu0
      %v8003 = vadd.f32 %v7486, %v8002
      %v8004 = vpop.f32.mrb[0].mxu0
      %8005 = vmatprep.mubr.bf16.mxu0 0
      %8006 = vmatmul.mubr.bf16.gmra.mrb[0].mxu0 %v7888
      %v8007 = vpop.f32.mrb[0].mxu0
      %v8008 = vadd.f32 %v7491, %v8007
      %v8009 = vpop.f32.mrb[0].mxu0
      %v8010 = vpop.f32.mrb[0].mxu0
      %v8011 = vadd.f32 %v7496, %v8010
      %v8012 = vpop.f32.mrb[0].mxu0
      %8013 = vmatprep.mubr.bf16.mxu0 0
      %8014 = vmatmul.mubr.bf16.gmra.mrb[0].mxu0 %v7891
      %v8015 = vpop.f32.mrb[0].mxu0
      %v8016 = vadd.f32 %v7501, %v8015
      %v8017 = vpop.f32.mrb[0].mxu0
      %v8018 = vpop.f32.mrb[0].mxu0
      %v8019 = vadd.f32 %v7506, %v8018
      %v8020 = vpop.f32.mrb[0].mxu0
      %8021 = vmatprep.mubr.bf16.mxu0 0
      %8022 = vmatmul.mubr.bf16.gmra.mrb[0].mxu0 %v7894
      %v8023 = vpop.f32.mrb[0].mxu0
      %v8024 = vadd.f32 %v7511, %v8023
      %v8025 = vpop.f32.mrb[0].mxu0
      %v8026 = vpop.f32.mrb[0].mxu0
      %v8027 = vadd.f32 %v7516, %v8026
      %v8028 = vpop.f32.mrb[0].mxu0
      %8029 = vmatprep.mubr.bf16.mxu0 0
      %8030 = vmatmul.mubr.bf16.gmra.mrb[0].mxu0 %v7897
      %v8031 = vpop.f32.mrb[0].mxu0
      %v8032 = vadd.f32 %v7521, %v8031
      %v8033 = vpop.f32.mrb[0].mxu0
      %v8034 = vpop.f32.mrb[0].mxu0
      %v8035 = vadd.f32 %v7526, %v8034
      %v8036 = vpop.f32.mrb[0].mxu0
      %8037 = vmatprep.mubr.bf16.mxu0 0
      %8038 = vmatmul.mubr.bf16.gmra.mrb[0].mxu0 %v7900
      %v8039 = vpop.f32.mrb[0].mxu0
      %v8040 = vadd.f32 %v7531, %v8039
      %v8041 = vpop.f32.mrb[0].mxu0
      %v8042 = vpop.f32.mrb[0].mxu0
      %v8043 = vadd.f32 %v7536, %v8042
      %v8044 = vpop.f32.mrb[0].mxu0
      %8045 = vmatprep.mubr.bf16.mxu0 0
      %8046 = vmatmul.mubr.bf16.gmra.mrb[0].mxu0 %v7903
      %v8047 = vpop.f32.mrb[0].mxu0
      %v8048 = vadd.f32 %v7541, %v8047
      %v8049 = vpop.f32.mrb[0].mxu0
      %v8050 = vpop.f32.mrb[0].mxu0
      %v8051 = vadd.f32 %v7546, %v8050
      %v8052 = vpop.f32.mrb[0].mxu0
      %8053 = vmatprep.mubr.bf16.mxu0 0
      %8054 = vmatmul.mubr.bf16.gmra.mrb[0].mxu0 %v7906
      %v8055 = vpop.f32.mrb[0].mxu0
      %v8056 = vadd.f32 %v7551, %v8055
      %v8057 = vpop.f32.mrb[0].mxu0
      %v8058 = vpop.f32.mrb[0].mxu0
      %v8059 = vadd.f32 %v7556, %v8058
      %v8060 = vpop.f32.mrb[0].mxu0
      %8061 = vmatprep.mubr.bf16.mxu0 0
      %8062 = vmatmul.mubr.bf16.gmra.mrb[0].mxu0 %v7909
      %v8063 = vpop.f32.mrb[0].mxu0
      %v8064 = vadd.f32 %v7561, %v8063
      %v8065 = vpop.f32.mrb[0].mxu0
      %v8066 = vpop.f32.mrb[0].mxu0
      %v8067 = vadd.f32 %v7566, %v8066
      %v8068 = vpop.f32.mrb[0].mxu0
      %8069 = vmatprep.mubr.bf16.mxu0 0
      %8070 = vmatmul.mubr.bf16.gmra.mrb[0].mxu0 %v7912
      %v8071 = vpop.f32.mrb[0].mxu0
      %v8072 = vadd.f32 %v7571, %v8071
      %v8073 = vpop.f32.mrb[0].mxu0
      %v8074 = vpop.f32.mrb[0].mxu0
      %v8075 = vadd.f32 %v7576, %v8074
      %v8076 = vpop.f32.mrb[0].mxu0
      %8077 = vmatprep.mubr.bf16.mxu0 0
      %8078 = vmatmul.mubr.bf16.gmra.mrb[0].mxu0 %v7915
      %v8079 = vpop.f32.mrb[0].mxu0
      %v8080 = vadd.f32 %v7581, %v8079
      %v8081 = vpop.f32.mrb[0].mxu0
      %v8082 = vpop.f32.mrb[0].mxu0
      %v8083 = vadd.f32 %v7586, %v8082
      %v8084 = vpop.f32.mrb[0].mxu0
      %8085 = vmatprep.mubr.bf16.mxu0 0
      %8086 = vmatmul.mubr.bf16.gmra.mrb[0].mxu0 %v7918
      %v8087 = vpop.f32.mrb[0].mxu0
      %v8088 = vadd.f32 %v7591, %v8087
      %v8089 = vpop.f32.mrb[0].mxu0
      %v8090 = vpop.f32.mrb[0].mxu0
      %v8091 = vadd.f32 %v7596, %v8090
      %v8092 = vpop.f32.mrb[0].mxu0
      %8093 = vmatprep.mubr.bf16.mxu0 0
      %8094 = vmatmul.mubr.bf16.gmra.mrb[0].mxu0 %v7921
      %v8095 = vpop.f32.mrb[0].mxu0
      %v8096 = vadd.f32 %v7601, %v8095
      %v8097 = vpop.f32.mrb[0].mxu0
      %v8098 = vpop.f32.mrb[0].mxu0
      %v8099 = vadd.f32 %v7606, %v8098
      %v8100 = vpop.f32.mrb[0].mxu0
      %8101 = vmatprep.mubr.bf16.mxu0 0
      %8102 = vmatmul.mubr.bf16.gmra.mrb[0].mxu0 %v7924
      %v8103 = vpop.f32.mrb[0].mxu0
      %v8104 = vadd.f32 %v7611, %v8103
      %v8105 = vpop.f32.mrb[0].mxu0
      %v8106 = vpop.f32.mrb[0].mxu0
      %v8107 = vadd.f32 %v7616, %v8106
      %v8108 = vpop.f32.mrb[0].mxu0
      %8109 = vmatprep.mubr.bf16.mxu0 0
      %8110 = vmatmul.mubr.bf16.gmra.mrb[0].mxu0 %v7927
      %v8111 = vpop.f32.mrb[0].mxu0
      %v8112 = vadd.f32 %v7621, %v8111
      %v8113 = vpop.f32.mrb[0].mxu0
      %v8114 = vpop.f32.mrb[0].mxu0
      %v8115 = vadd.f32 %v7626, %v8114
      %v8116 = vpop.f32.mrb[0].mxu0
      %8117 = vmatprep.mubr.bf16.mxu0 0
      %8118 = vmatmul.mubr.bf16.gmra.mrb[0].mxu0 %v7930
      %v8119 = vpop.f32.mrb[0].mxu0
      %v8120 = vadd.f32 %v7631, %v8119
      %v8121 = vpop.f32.mrb[0].mxu0
      %v8122 = vpop.f32.mrb[0].mxu0
      %v8123 = vadd.f32 %v7636, %v8122
      %v8124 = vpop.f32.mrb[0].mxu0
      %8125 = vmatprep.mubr.bf16.mxu0 0
      %8126 = vmatmul.mubr.bf16.gmra.mrb[0].mxu0 %v7933
      %v8127 = vpop.f32.mrb[0].mxu0
      %v8128 = vadd.f32 %v7641, %v8127
      %v8129 = vpop.f32.mrb[0].mxu0
      %v8130 = vpop.f32.mrb[0].mxu0
      %v8131 = vadd.f32 %v7646, %v8130
      %v8132 = vpop.f32.mrb[0].mxu0
      %8133 = vmatprep.mubr.bf16.mxu0 0
      %8134 = vmatmul.mubr.bf16.gmra.mrb[0].mxu0 %v7936
      %v8135 = vpop.f32.mrb[0].mxu0
      %v8136 = vadd.f32 %v7651, %v8135
      %v8137 = vpop.f32.mrb[0].mxu0
      %v8138 = vpop.f32.mrb[0].mxu0
      %v8139 = vadd.f32 %v7656, %v8138
      %v8140 = vpop.f32.mrb[0].mxu0
      %8141 = vmatprep.mubr.bf16.mxu0 0
      %8142 = vmatmul.mubr.bf16.gmra.mrb[0].mxu0 %v7939
      %v8143 = vpop.f32.mrb[0].mxu0
      %v8144 = vadd.f32 %v7661, %v8143
      %v8145 = vpop.f32.mrb[0].mxu0
      %v8146 = vpop.f32.mrb[0].mxu0
      %v8147 = vadd.f32 %v7666, %v8146
      %v8148 = vpop.f32.mrb[0].mxu0
      %8149 = vmatprep.mubr.bf16.mxu0 0
      %8150 = vmatmul.mubr.bf16.gmra.mrb[0].mxu0 %v7942
      %v8151 = vpop.f32.mrb[0].mxu0
      %v8152 = vadd.f32 %v7671, %v8151
      %v8153 = vpop.f32.mrb[0].mxu0
      %v8154 = vpop.f32.mrb[0].mxu0
      %v8155 = vadd.f32 %v7676, %v8154
      %v8156 = vpop.f32.mrb[0].mxu0
      %8157 = vmatprep.mubr.bf16.mxu0 0
      %8158 = vmatmul.mubr.bf16.gmra.mrb[0].mxu0 %v7945
      %v8159 = vpop.f32.mrb[0].mxu0
      %v8160 = vadd.f32 %v7681, %v8159
      %v8161 = vpop.f32.mrb[0].mxu0
      %v8162 = vpop.f32.mrb[0].mxu0
      %v8163 = vadd.f32 %v7686, %v8162
      %v8164 = vpop.f32.mrb[0].mxu0
      %8165 = vmatprep.mubr.bf16.mxu0 0
      %8166 = vmatmul.mubr.bf16.gmra.mrb[0].mxu0 %v7948
      %v8167 = vpop.f32.mrb[0].mxu0
      %v8168 = vadd.f32 %v7691, %v8167
      %v8169 = vpop.f32.mrb[0].mxu0
      %v8170 = vpop.f32.mrb[0].mxu0
      %v8171 = vadd.f32 %v7696, %v8170
      %v8172 = vpop.f32.mrb[0].mxu0
      %8173 = vmatprep.mubr.bf16.mxu0 0
      %8174 = vmatmul.mubr.bf16.gmra.mrb[0].mxu0 %v7951
      %v8175 = vpop.f32.mrb[0].mxu0
      %v8176 = vadd.f32 %v7701, %v8175
      %v8177 = vpop.f32.mrb[0].mxu0
      %v8178 = vpop.f32.mrb[0].mxu0
      %v8179 = vadd.f32 %v7706, %v8178
      %v8180 = vpop.f32.mrb[0].mxu0
      %8181 = vmatprep.mubr.bf16.mxu0 0
      %8182 = vmatmul.mubr.bf16.gmra.mrb[0].mxu0 %v7954
      %v8183 = vpop.f32.mrb[0].mxu0
      %v8184 = vadd.f32 %v7711, %v8183
      %v8185 = vpop.f32.mrb[0].mxu0
      %v8186 = vpop.f32.mrb[0].mxu0
      %v8187 = vadd.f32 %v7716, %v8186
      %v8188 = vpop.f32.mrb[0].mxu0
      %8189 = vmatprep.mubr.bf16.mxu0 0
      %8190 = vmatmul.mubr.bf16.gmra.mrb[0].mxu0 %v7957
      %v8191 = vpop.f32.mrb[0].mxu0
      %v8192 = vadd.f32 %v7721, %v8191
      %v8193 = vpop.f32.mrb[0].mxu0
      %v8194 = vpop.f32.mrb[0].mxu0
      %v8195 = vadd.f32 %v7726, %v8194
      %v8196 = vpop.f32.mrb[0].mxu0
      %8197 = vmatprep.mubr.bf16.mxu0 0
      %8198 = vmatmul.mubr.bf16.gmra.mrb[0].mxu0 %v7960
      %v8199 = vpop.f32.mrb[0].mxu0
      %v8200 = vadd.f32 %v7731, %v8199
      %v8201 = vpop.f32.mrb[0].mxu0
      %v8202 = vpop.f32.mrb[0].mxu0
      %v8203 = vadd.f32 %v7736, %v8202
      %v8204 = vpop.f32.mrb[0].mxu0
      %8205 = vmatprep.mubr.bf16.mxu0 0
      %8206 = vmatmul.mubr.bf16.gmra.mrb[0].mxu0 %v7963
      %v8207 = vpop.f32.mrb[0].mxu0
      %v8208 = vadd.f32 %v7741, %v8207
      %v8209 = vpop.f32.mrb[0].mxu0
      %v8210 = vpop.f32.mrb[0].mxu0
      %v8211 = vadd.f32 %v7746, %v8210
      %v8212 = vpop.f32.mrb[0].mxu0
      %8213 = vdwg.mxu0
      %v8214 = vpack.c.bf16 %v8003, %v8000
      %v8215 = vpack.c.bf16 %v8011, %v8008
      %v8216 = vpack.c.bf16 %v8019, %v8016
      %v8217 = vpack.c.bf16 %v8027, %v8024
      %v8218 = vpack.c.bf16 %v8035, %v8032
      %v8219 = vpack.c.bf16 %v8043, %v8040
      %v8220 = vpack.c.bf16 %v8051, %v8048
      %v8221 = vpack.c.bf16 %v8059, %v8056
      %v8222 = vpack.c.bf16 %v8067, %v8064
      %v8223 = vpack.c.bf16 %v8075, %v8072
      %v8224 = vpack.c.bf16 %v8083, %v8080
      %v8225 = vpack.c.bf16 %v8091, %v8088
      %v8226 = vpack.c.bf16 %v8099, %v8096
      %v8227 = vpack.c.bf16 %v8107, %v8104
      %v8228 = vpack.c.bf16 %v8115, %v8112
      %v8229 = vpack.c.bf16 %v8123, %v8120
      %v8230 = vpack.c.bf16 %v8131, %v8128
      %v8231 = vpack.c.bf16 %v8139, %v8136
      %v8232 = vpack.c.bf16 %v8147, %v8144
      %v8233 = vpack.c.bf16 %v8155, %v8152
      %v8234 = vpack.c.bf16 %v8163, %v8160
      %v8235 = vpack.c.bf16 %v8171, %v8168
      %v8236 = vpack.c.bf16 %v8179, %v8176
      %v8237 = vpack.c.bf16 %v8187, %v8184
      %v8238 = vpack.c.bf16 %v8195, %v8192
      %v8239 = vpack.c.bf16 %v8203, %v8200
      %v8240 = vpack.c.bf16 %v8211, %v8208
      %v8268 = vunpack.c.l.b16 %v8214
      %v8269 = vunpack.c.h.b16 %v8214
      %v8270 = vunpack.c.l.b16 %v8215
      %v8271 = vunpack.c.h.b16 %v8215
      %v8272 = vunpack.c.l.b16 %v8216
      %v8273 = vunpack.c.h.b16 %v8216
      %v8274 = vunpack.c.l.b16 %v8217
      %v8275 = vunpack.c.h.b16 %v8217
      %v8276 = vunpack.c.l.b16 %v8218
      %v8277 = vunpack.c.h.b16 %v8218
      %v8278 = vunpack.c.l.b16 %v8219
      %v8279 = vunpack.c.h.b16 %v8219
      %v8280 = vunpack.c.l.b16 %v8220
      %v8281 = vunpack.c.h.b16 %v8220
      %v8282 = vunpack.c.l.b16 %v8221
      %v8283 = vunpack.c.h.b16 %v8221
      %v8284 = vunpack.c.l.b16 %v8222
      %v8285 = vunpack.c.h.b16 %v8222
      %v8286 = vunpack.c.l.b16 %v8223
      %v8287 = vunpack.c.h.b16 %v8223
      %v8288 = vunpack.c.l.b16 %v8224
      %v8289 = vunpack.c.h.b16 %v8224
      %v8290 = vunpack.c.l.b16 %v8225
      %v8291 = vunpack.c.h.b16 %v8225
      %v8292 = vunpack.c.l.b16 %v8226
      %v8293 = vunpack.c.h.b16 %v8226
      %v8294 = vunpack.c.l.b16 %v8227
      %v8295 = vunpack.c.h.b16 %v8227
      %v8296 = vunpack.c.l.b16 %v8228
      %v8297 = vunpack.c.h.b16 %v8228
      %v8298 = vunpack.c.l.b16 %v8229
      %v8299 = vunpack.c.h.b16 %v8229
      %v8300 = vunpack.c.l.b16 %v8230
      %v8301 = vunpack.c.h.b16 %v8230
      %v8302 = vunpack.c.l.b16 %v8231
      %v8303 = vunpack.c.h.b16 %v8231
      %v8304 = vunpack.c.l.b16 %v8232
      %v8305 = vunpack.c.h.b16 %v8232
      %v8306 = vunpack.c.l.b16 %v8233
      %v8307 = vunpack.c.h.b16 %v8233
      %v8308 = vunpack.c.l.b16 %v8234
      %v8309 = vunpack.c.h.b16 %v8234
      %v8310 = vunpack.c.l.b16 %v8235
      %v8311 = vunpack.c.h.b16 %v8235
      %v8312 = vunpack.c.l.b16 %v8236
      %v8313 = vunpack.c.h.b16 %v8236
      %v8314 = vunpack.c.l.b16 %v8237
      %v8315 = vunpack.c.h.b16 %v8237
      %v8316 = vunpack.c.l.b16 %v8238
      %v8317 = vunpack.c.h.b16 %v8238
      %v8318 = vunpack.c.l.b16 %v8239
      %v8319 = vunpack.c.h.b16 %v8239
      %v8320 = vunpack.c.l.b16 %v8240
      %v8321 = vunpack.c.h.b16 %v8240
      %v8322 = vpack.c.b16 %v8268, %v8268
      %v8323 = vpack.c.b16 %v8269, %v8269
      %v8324 = vpack.c.b16 %v8270, %v8270
      %v8325 = vpack.c.b16 %v8271, %v8271
      %v8326 = vpack.c.b16 %v8272, %v8272
      %v8327 = vpack.c.b16 %v8273, %v8273
      %v8328 = vpack.c.b16 %v8274, %v8274
      %v8329 = vpack.c.b16 %v8275, %v8275
      %v8330 = vpack.c.b16 %v8276, %v8276
      %v8331 = vpack.c.b16 %v8277, %v8277
      %v8332 = vpack.c.b16 %v8278, %v8278
      %v8333 = vpack.c.b16 %v8279, %v8279
      %v8334 = vpack.c.b16 %v8280, %v8280
      %v8335 = vpack.c.b16 %v8281, %v8281
      %v8336 = vpack.c.b16 %v8282, %v8282
      %v8337 = vpack.c.b16 %v8283, %v8283
      %v8338 = vpack.c.b16 %v8284, %v8284
      %v8339 = vpack.c.b16 %v8285, %v8285
      %v8340 = vpack.c.b16 %v8286, %v8286
      %v8341 = vpack.c.b16 %v8287, %v8287
      %v8342 = vpack.c.b16 %v8288, %v8288
      %v8343 = vpack.c.b16 %v8289, %v8289
      %v8344 = vpack.c.b16 %v8290, %v8290
      %v8345 = vpack.c.b16 %v8291, %v8291
      %v8346 = vpack.c.b16 %v8292, %v8292
      %v8347 = vpack.c.b16 %v8293, %v8293
      %v8348 = vpack.c.b16 %v8294, %v8294
      %v8349 = vpack.c.b16 %v8295, %v8295
      %v8350 = vpack.c.b16 %v8296, %v8296
      %v8351 = vpack.c.b16 %v8297, %v8297
      %v8352 = vpack.c.b16 %v8298, %v8298
      %v8353 = vpack.c.b16 %v8299, %v8299
      %v8354 = vpack.c.b16 %v8300, %v8300
      %v8355 = vpack.c.b16 %v8301, %v8301
      %v8356 = vpack.c.b16 %v8302, %v8302
      %v8357 = vpack.c.b16 %v8303, %v8303
      %v8358 = vpack.c.b16 %v8304, %v8304
      %v8359 = vpack.c.b16 %v8305, %v8305
      %v8360 = vpack.c.b16 %v8306, %v8306
      %v8361 = vpack.c.b16 %v8307, %v8307
      %v8362 = vpack.c.b16 %v8308, %v8308
      %v8363 = vpack.c.b16 %v8309, %v8309
      %v8364 = vpack.c.b16 %v8310, %v8310
      %v8365 = vpack.c.b16 %v8311, %v8311
      %v8366 = vpack.c.b16 %v8312, %v8312
      %v8367 = vpack.c.b16 %v8313, %v8313
      %v8368 = vpack.c.b16 %v8314, %v8314
      %v8369 = vpack.c.b16 %v8315, %v8315
      %v8370 = vpack.c.b16 %v8316, %v8316
      %v8371 = vpack.c.b16 %v8317, %v8317
      %v8372 = vpack.c.b16 %v8318, %v8318
      %v8373 = vpack.c.b16 %v8319, %v8319
      %v8374 = vpack.c.b16 %v8320, %v8320
      %v8375 = vpack.c.b16 %v8321, %v8321
      %8430 = vst [vmem:[%s413] sm:$0xf] %v8322
      %8431 = vst [vmem:[%s413 + $0x4] sm:$0xf] %v8323
      %8432 = vst [vmem:[%s413 + $0x8] sm:$0xf] %v8324
      %8433 = vst [vmem:[%s413 + $0xc] sm:$0xf] %v8325
      %8434 = vst [vmem:[%s413 + $0x10] sm:$0xf] %v8326
      %8435 = vst [vmem:[%s413 + $0x14] sm:$0xf] %v8327
      %8436 = vst [vmem:[%s413 + $0x18] sm:$0xf] %v8328
      %8437 = vst [vmem:[%s413 + $0x1c] sm:$0xf] %v8329
      %8438 = vst [vmem:[%s413 + $0x20] sm:$0xf] %v8330
      %8439 = vst [vmem:[%s413 + $0x24] sm:$0xf] %v8331
      %8440 = vst [vmem:[%s413 + $0x28] sm:$0xf] %v8332
      %8441 = vst [vmem:[%s413 + $0x2c] sm:$0xf] %v8333
      %8442 = vst [vmem:[%s413 + $0x30] sm:$0xf] %v8334
      %8443 = vst [vmem:[%s413 + $0x34] sm:$0xf] %v8335
      %8444 = vst [vmem:[%s413 + $0x38] sm:$0xf] %v8336
      %8445 = vst [vmem:[%s413 + $0x3c] sm:$0xf] %v8337
      %8446 = vst [vmem:[%s413 + $0x40] sm:$0xf] %v8338
      %8447 = vst [vmem:[%s413 + $0x44] sm:$0xf] %v8339
      %8448 = vst [vmem:[%s413 + $0x48] sm:$0xf] %v8340
      %8449 = vst [vmem:[%s413 + $0x4c] sm:$0xf] %v8341
      %8450 = vst [vmem:[%s413 + $0x50] sm:$0xf] %v8342
      %8451 = vst [vmem:[%s413 + $0x54] sm:$0xf] %v8343
      %8452 = vst [vmem:[%s413 + $0x58] sm:$0xf] %v8344
      %8453 = vst [vmem:[%s413 + $0x5c] sm:$0xf] %v8345
      %8454 = vst [vmem:[%s413 + $0x60] sm:$0xf] %v8346
      %8455 = vst [vmem:[%s413 + $0x64] sm:$0xf] %v8347
      %8456 = vst [vmem:[%s413 + $0x68] sm:$0xf] %v8348
      %8457 = vst [vmem:[%s413 + $0x6c] sm:$0xf] %v8349
      %8458 = vst [vmem:[%s413 + $0x70] sm:$0xf] %v8350
      %8459 = vst [vmem:[%s413 + $0x74] sm:$0xf] %v8351
      %8460 = vst [vmem:[%s413 + $0x78] sm:$0xf] %v8352
      %8461 = vst [vmem:[%s413 + $0x7c] sm:$0xf] %v8353
      %8462 = vst [vmem:[%s413 + $0x80] sm:$0xf] %v8354
      %8463 = vst [vmem:[%s413 + $0x84] sm:$0xf] %v8355
      %8464 = vst [vmem:[%s413 + $0x88] sm:$0xf] %v8356
      %8465 = vst [vmem:[%s413 + $0x8c] sm:$0xf] %v8357
      %8466 = vst [vmem:[%s413 + $0x90] sm:$0xf] %v8358
      %8467 = vst [vmem:[%s413 + $0x94] sm:$0xf] %v8359
      %8468 = vst [vmem:[%s413 + $0x98] sm:$0xf] %v8360
      %8469 = vst [vmem:[%s413 + $0x9c] sm:$0xf] %v8361
      %8470 = vst [vmem:[%s413 + $0xa0] sm:$0xf] %v8362
      %8471 = vst [vmem:[%s413 + $0xa4] sm:$0xf] %v8363
      %8472 = vst [vmem:[%s413 + $0xa8] sm:$0xf] %v8364
      %8473 = vst [vmem:[%s413 + $0xac] sm:$0xf] %v8365
      %8474 = vst [vmem:[%s413 + $0xb0] sm:$0xf] %v8366
      %8475 = vst [vmem:[%s413 + $0xb4] sm:$0xf] %v8367
      %8476 = vst [vmem:[%s413 + $0xb8] sm:$0xf] %v8368
      %8477 = vst [vmem:[%s413 + $0xbc] sm:$0xf] %v8369
      %8478 = vst [vmem:[%s413 + $0xc0] sm:$0xf] %v8370
      %8479 = vst [vmem:[%s413 + $0xc4] sm:$0xf] %v8371
      %8480 = vst [vmem:[%s413 + $0xc8] sm:$0xf] %v8372
      %8481 = vst [vmem:[%s413 + $0xcc] sm:$0xf] %v8373
      %8482 = vst [vmem:[%s413 + $0xd0] sm:$0xf] %v8374
      %8483 = vst [vmem:[%s413 + $0xd4] sm:$0xf] %v8375
      %p8484 = scmp.lt.s32.totalorder %s23, 1
      %s8485 = scalar_select %p8484, %s23, 1
      %s8486 = smul.addr %s8485, 54
      %s8487 = smul.addr %s8486, 4
      %s8488 = scalar_lea.vmem %s12, %s8487
      // Predicated region
      $region69: #{yolov2_forward.1} parent=67 // pred_check
        %p8489 = pneg %p298
      $region70: #{yolov2_forward.1} parent=67 // pred_check_branch
        %8491 = sbr.rel (%p8489) target = $region72
      $region71: #{yolov2_forward.1} parent=67 // pred_region
        _
      $region72: #{yolov2_forward.1} parent=67 // pred_fallthru
        _
    $region68: #{yolov2_forward.1} parent=5 // pred_fallthru
      _
    %p8492 = scmp.le.s32.totalorder 2, %s18
    // Predicated region
    $region73: #{yolov2_forward.1} parent=5 // pred_check
      %p8493 = pneg %p8492
    $region74: #{yolov2_forward.1} parent=5 // pred_check_branch
      %8495 = sbr.rel (%p8493) target = $region76
    $region75: #{yolov2_forward.1} parent=5 // pred_region
      %s8496 = ssub.s32 %s18, 2
      // Predicated region
      $region77: #{yolov2_forward.1} parent=75 // pred_check
        %p8497 = pneg %p304
      $region78: #{yolov2_forward.1} parent=75 // pred_check_branch
        %8499 = sbr.rel (%p8497) target = $region80
      $region79: #{yolov2_forward.1} parent=75 // pred_region
        %p8500 = scmp.lt.s32.totalorder %s24, 1
        %s8501 = scalar_select %p8500, %s24, 1
        %s8502 = smul.addr %s8501, 54
        %s8503 = smul.addr %s8502, 4
        %s8504 = scalar_lea.vmem %s12, %s8503
      $region80: #{yolov2_forward.1} parent=75 // pred_fallthru
        _
    $region76: #{yolov2_forward.1} parent=5 // pred_fallthru
      _
  $region6: #{yolov2_forward.1} parent=0 // loop_footer
    %s22 = sadd.s32 1, %s18
  $region7: #{yolov2_forward.1} parent=0 // loop_footer_branch
    %17 = sbr.rel target = $region3
  $region8: #{yolov2_forward.1} parent=0 // loop_exit
    _

</llo_original>
